<compile_context>
chip_gen: v7x
topology: tpu7x:2x2x1
jax: 0.10.0
libtpu: 0.0.40
codegen_flags: <defaults>
</compile_context>

<pallas_src>
import functools

import jax
import jax.numpy as jnp
import numpy as np
from jax import lax
from jax.experimental import pallas as pl
from jax.experimental.pallas import tpu as pltpu

EPS = 1e-5


def _fused_kernel(xp_ref, valid_ref, w1_ref, g1_ref, b1_ref, w2_ref, g2_ref,
                  b2_ref, out_ref, *, n, hp, wp):
  # xp_ref:    (Cin, Mp)  f32   padded channel-major activations, Mp=N*Hp*Wp
  # valid_ref: (1, Mp)    f32   1.0 on real pixels, 0.0 on spatial padding
  # w1_ref:    (9, C1, Cin) bf16  per-tap 3x3 weights, tap = kh*3+kw
  # g1/b1:     (C1, 1)    f32
  # w2_ref:    (C2, C1)   bf16
  # g2/b2:     (C2, 1)    f32
  # out_ref:   (C2, Mp)   bf16
  mp = n * hp * wp
  m_valid = n * (hp - 2) * (wp - 2)

  x = xp_ref[...]                      # (Cin, Mp) f32
  valid = valid_ref[...]               # (1, Mp)   f32
  inv_m = 1.0 / m_valid

  # ---- conv2d110: 3x3, pad=1 -> 9 lane-shifted bf16 matmuls, f32 accum ----
  y1 = None
  for kh in range(3):
    for kw in range(3):
      s = (kh - 1) * wp + (kw - 1)     # static column shift for this tap
      xt = x if s == 0 else pltpu.roll(x, shift=(-s) % mp, axis=1)
      contrib = jnp.dot(w1_ref[kh * 3 + kw], xt.astype(jnp.bfloat16),
                        preferred_element_type=jnp.float32)  # (C1, Mp)
      y1 = contrib if y1 is None else y1 + contrib

  # ---- batchnorm2d110 (batch stats over valid pixels) as per-channel affine ----
  y1v = y1 * valid
  mean1 = jnp.sum(y1v, axis=1, keepdims=True) * inv_m               # (C1,1)
  var1 = jnp.maximum(
      jnp.sum(y1v * y1, axis=1, keepdims=True) * inv_m - mean1 * mean1, 0.0)
  scale1 = g1_ref[...] * lax.rsqrt(var1 + EPS)
  shift1 = b1_ref[...] - mean1 * scale1

  # ---- relu106 ----
  a1 = jnp.maximum(y1 * scale1 + shift1, 0.0)                       # (C1, Mp)

  # ---- conv2d111: 1x1 -> single bf16 matmul ----
  y2 = jnp.dot(w2_ref[...], a1.astype(jnp.bfloat16),
               preferred_element_type=jnp.float32)                  # (C2, Mp)

  # ---- batchnorm2d111 ----
  y2v = y2 * valid
  mean2 = jnp.sum(y2v, axis=1, keepdims=True) * inv_m               # (C2,1)
  var2 = jnp.maximum(
      jnp.sum(y2v * y2, axis=1, keepdims=True) * inv_m - mean2 * mean2, 0.0)
  scale2 = g2_ref[...] * lax.rsqrt(var2 + EPS)
  shift2 = b2_ref[...] - mean2 * scale2

  out_ref[...] = (y2 * scale2 + shift2).astype(out_ref.dtype)


def prepare_params(w1, g1, b1, w2, g2, b2):
  """One-time weight repack (kept out of the per-call hot path)."""
  c1, c_in = w1.shape[0], w1.shape[1]
  c2 = w2.shape[0]
  # (C1, Cin, 3, 3) -> (3, 3, C1, Cin) -> (9, C1, Cin), tap-major, bf16.
  w1p = jnp.transpose(w1, (2, 3, 0, 1)).reshape(9, c1, c_in).astype(jnp.bfloat16)
  w2p = w2.reshape(c2, c1).astype(jnp.bfloat16)
  return (w1p,
          g1.reshape(c1, 1).astype(jnp.float32),
          b1.reshape(c1, 1).astype(jnp.float32),
          w2p,
          g2.reshape(c2, 1).astype(jnp.float32),
          b2.reshape(c2, 1).astype(jnp.float32))


@jax.jit
def fused_forward(x, w1p, g1, b1, w2p, g2, b2):
  """x: (N, 256, H, W) NCHW f32  ->  (N, 1024, H, W) NCHW f32."""
  n, c_in, h, w = x.shape
  c1 = w1p.shape[1]
  c2 = w2p.shape[0]
  hp, wp = h + 2, w + 2
  mp = n * hp * wp

  # Channel-major padded slab (no NHWC transpose needed; N=1 transpose is free).
  xp = jnp.pad(x, ((0, 0), (0, 0), (1, 1), (1, 1)))          # (N, Cin, Hp, Wp)
  xp = jnp.transpose(xp, (1, 0, 2, 3)).reshape(c_in, mp).astype(jnp.float32)

  # Valid-pixel mask over padded columns (constant-folded by XLA at compile time).
  pos = jnp.arange(mp, dtype=jnp.int32) % (hp * wp)
  hh = pos // wp
  ww = pos % wp
  valid = (((hh >= 1) & (hh <= hp - 2) & (ww >= 1) & (ww <= wp - 2))
           .astype(jnp.float32).reshape(1, mp))

  kernel = functools.partial(_fused_kernel, n=n, hp=hp, wp=wp)

  flops = 2 * mp * c_in * c1 * 9 + 2 * mp * c1 * c2
  bytes_accessed = (c_in * mp * 4 + mp * 4 + 9 * c1 * c_in * 2 + c2 * c1 * 2
                    + (c1 + c2) * 2 * 4 + c2 * mp * 2)

  out = pl.pallas_call(
      kernel,
      out_shape=jax.ShapeDtypeStruct((c2, mp), jnp.bfloat16),
      in_specs=[pl.BlockSpec(memory_space=pltpu.MemorySpace.VMEM)] * 8,
      out_specs=pl.BlockSpec(memory_space=pltpu.MemorySpace.VMEM),
      cost_estimate=pl.CostEstimate(flops=flops, transcendentals=c1 + c2,
                                    bytes_accessed=bytes_accessed),
  )(xp, valid, w1p, g1, b1, w2p, g2, b2)

  # (C2, N*Hp*Wp) is already channel-major -> crop padding, NCHW, f32.
  out = out.reshape(c2, n, hp, wp)[:, :, 1:hp - 1, 1:wp - 1]
  return jnp.transpose(out, (1, 0, 2, 3)).astype(jnp.float32)


def reference_forward(x, w1, g1, b1, w2, g2, b2):
  """Pure-JAX reference matching PyTorch training-mode forward."""
  def bn(y, g, b):
    mean = jnp.mean(y, axis=(0, 2, 3), keepdims=True)
    var = jnp.var(y, axis=(0, 2, 3), keepdims=True)  # biased
    return (y - mean) * lax.rsqrt(var + EPS) * g.reshape(1, -1, 1, 1) \
        + b.reshape(1, -1, 1, 1)

  y = lax.conv_general_dilated(x, w1, (1, 1), ((1, 1), (1, 1)),
                               dimension_numbers=('NCHW', 'OIHW', 'NCHW'))
  y = jnp.maximum(bn(y, g1, b1), 0.0)
  y = lax.conv_general_dilated(y, w2, (1, 1), ((0, 0), (0, 0)),
                               dimension_numbers=('NCHW', 'OIHW', 'NCHW'))
  return bn(y, g2, b2)


if __name__ == "__main__":
  key = jax.random.PRNGKey(0)
  k_x, k_w1, k_w2, k_g1, k_b1, k_g2, k_b2 = jax.random.split(key, 7)

  N, C_IN, H, W = 1, 256, 14, 14
  C1, C2 = 256, 1024

  x = jax.random.normal(k_x, (N, C_IN, H, W), dtype=jnp.float32)

  # Deterministic parameter init (shapes from the module's __init__).
  w1 = jax.random.normal(k_w1, (C1, C_IN, 3, 3), dtype=jnp.float32) * 0.05
  w2 = jax.random.normal(k_w2, (C2, C1, 1, 1), dtype=jnp.float32) * 0.05
  g1 = 1.0 + 0.1 * jax.random.normal(k_g1, (C1,), dtype=jnp.float32)
  b1 = 0.1 * jax.random.normal(k_b1, (C1,), dtype=jnp.float32)
  g2 = 1.0 + 0.1 * jax.random.normal(k_g2, (C2,), dtype=jnp.float32)
  b2 = 0.1 * jax.random.normal(k_b2, (C2,), dtype=jnp.float32)

  params = prepare_params(w1, g1, b1, w2, g2, b2)   # one-time weight repack

  out = jax.block_until_ready(fused_forward(x, *params))
  ref = jax.block_until_ready(reference_forward(x, w1, g1, b1, w2, g2, b2))

  assert out.shape == (N, C2, H, W), out.shape
  # Tolerance accounts for bf16 MXU operands / bf16 output writeback.
  np.testing.assert_allclose(np.asarray(out), np.asarray(ref),
                             rtol=2e-2, atol=3e-2)

  # TODO(synk): running_mean/running_var momentum updates (a training-time
  # side effect of BatchNorm2d) are not reproduced; they do not affect x368.
  print("KERNEL_OK")
</pallas_src>

<mosaic_0001>
module attributes {stable_mosaic.version = 11 : i64} {
  func.func @_fused_kernel(%arg0: memref<256x256xf32, #tpu.memory_space<vmem>>, %arg1: memref<1x256xf32, #tpu.memory_space<vmem>>, %arg2: memref<9x256x256xbf16, #tpu.memory_space<vmem>>, %arg3: memref<256x1xf32, #tpu.memory_space<vmem>>, %arg4: memref<256x1xf32, #tpu.memory_space<vmem>>, %arg5: memref<1024x256xbf16, #tpu.memory_space<vmem>>, %arg6: memref<1024x1xf32, #tpu.memory_space<vmem>>, %arg7: memref<1024x1xf32, #tpu.memory_space<vmem>>, %arg8: memref<1024x256xbf16, #tpu.memory_space<vmem>>) attributes {dimension_semantics = [], scalar_prefetch = 0 : i64, scratch_operands = 0 : i64, tpu.core_type = #tpu.core_type<tc>} {
    %c0 = arith.constant 0 : index
    %c0_0 = arith.constant 0 : index
    %0 = vector.load %arg0[%c0, %c0_0] : memref<256x256xf32, #tpu.memory_space<vmem>>, vector<256x256xf32>
    %c0_1 = arith.constant 0 : index
    %c0_2 = arith.constant 0 : index
    %1 = vector.load %arg1[%c0_1, %c0_2] : memref<1x256xf32, #tpu.memory_space<vmem>>, vector<1x256xf32>
    %c17_i32 = arith.constant 17 : i32
    %2 = tpu.dynamic_rotate %0 by %c17_i32 dim 1 : vector<256x256xf32>, i32 -> vector<256x256xf32>
    %c0_3 = arith.constant 0 : index
    %c0_4 = arith.constant 0 : index
    %c0_5 = arith.constant 0 : index
    %3 = vector.load %arg2[%c0_3, %c0_4, %c0_5] : memref<9x256x256xbf16, #tpu.memory_space<vmem>>, vector<1x256x256xbf16>
    %4 = vector.shape_cast %3 : vector<1x256x256xbf16> to vector<256x256xbf16>
    %5 = arith.truncf %2 : vector<256x256xf32> to vector<256x256xbf16>
    %cst = arith.constant dense<0.000000e+00> : vector<256x256xf32>
    %6 = tpu.matmul %4, %5, %cst {dimension_numbers = #tpu.dot_dimension_numbers<[1], [0], [0], [1], [0, 0, 1, 1], [], []>} : vector<256x256xbf16>, vector<256x256xbf16>, vector<256x256xf32> -> vector<256x256xf32>
    %c16_i32 = arith.constant 16 : i32
    %7 = tpu.dynamic_rotate %0 by %c16_i32 dim 1 : vector<256x256xf32>, i32 -> vector<256x256xf32>
    %c1 = arith.constant 1 : index
    %c0_6 = arith.constant 0 : index
    %c0_7 = arith.constant 0 : index
    %8 = vector.load %arg2[%c1, %c0_6, %c0_7] : memref<9x256x256xbf16, #tpu.memory_space<vmem>>, vector<1x256x256xbf16>
    %9 = vector.shape_cast %8 : vector<1x256x256xbf16> to vector<256x256xbf16>
    %10 = arith.truncf %7 : vector<256x256xf32> to vector<256x256xbf16>
    %cst_8 = arith.constant dense<0.000000e+00> : vector<256x256xf32>
    %11 = tpu.matmul %9, %10, %cst_8 {dimension_numbers = #tpu.dot_dimension_numbers<[1], [0], [0], [1], [0, 0, 1, 1], [], []>} : vector<256x256xbf16>, vector<256x256xbf16>, vector<256x256xf32> -> vector<256x256xf32>
    %12 = arith.addf %6, %11 : vector<256x256xf32>
    %c15_i32 = arith.constant 15 : i32
    %13 = tpu.dynamic_rotate %0 by %c15_i32 dim 1 : vector<256x256xf32>, i32 -> vector<256x256xf32>
    %c2 = arith.constant 2 : index
    %c0_9 = arith.constant 0 : index
    %c0_10 = arith.constant 0 : index
    %14 = vector.load %arg2[%c2, %c0_9, %c0_10] : memref<9x256x256xbf16, #tpu.memory_space<vmem>>, vector<1x256x256xbf16>
    %15 = vector.shape_cast %14 : vector<1x256x256xbf16> to vector<256x256xbf16>
    %16 = arith.truncf %13 : vector<256x256xf32> to vector<256x256xbf16>
    %cst_11 = arith.constant dense<0.000000e+00> : vector<256x256xf32>
    %17 = tpu.matmul %15, %16, %cst_11 {dimension_numbers = #tpu.dot_dimension_numbers<[1], [0], [0], [1], [0, 0, 1, 1], [], []>} : vector<256x256xbf16>, vector<256x256xbf16>, vector<256x256xf32> -> vector<256x256xf32>
    %18 = arith.addf %12, %17 : vector<256x256xf32>
    %c1_i32 = arith.constant 1 : i32
    %19 = tpu.dynamic_rotate %0 by %c1_i32 dim 1 : vector<256x256xf32>, i32 -> vector<256x256xf32>
    %c3 = arith.constant 3 : index
    %c0_12 = arith.constant 0 : index
    %c0_13 = arith.constant 0 : index
    %20 = vector.load %arg2[%c3, %c0_12, %c0_13] : memref<9x256x256xbf16, #tpu.memory_space<vmem>>, vector<1x256x256xbf16>
    %21 = vector.shape_cast %20 : vector<1x256x256xbf16> to vector<256x256xbf16>
    %22 = arith.truncf %19 : vector<256x256xf32> to vector<256x256xbf16>
    %cst_14 = arith.constant dense<0.000000e+00> : vector<256x256xf32>
    %23 = tpu.matmul %21, %22, %cst_14 {dimension_numbers = #tpu.dot_dimension_numbers<[1], [0], [0], [1], [0, 0, 1, 1], [], []>} : vector<256x256xbf16>, vector<256x256xbf16>, vector<256x256xf32> -> vector<256x256xf32>
    %24 = arith.addf %18, %23 : vector<256x256xf32>
    %c4 = arith.constant 4 : index
    %c0_15 = arith.constant 0 : index
    %c0_16 = arith.constant 0 : index
    %25 = vector.load %arg2[%c4, %c0_15, %c0_16] : memref<9x256x256xbf16, #tpu.memory_space<vmem>>, vector<1x256x256xbf16>
    %26 = vector.shape_cast %25 : vector<1x256x256xbf16> to vector<256x256xbf16>
    %27 = arith.truncf %0 : vector<256x256xf32> to vector<256x256xbf16>
    %cst_17 = arith.constant dense<0.000000e+00> : vector<256x256xf32>
    %28 = tpu.matmul %26, %27, %cst_17 {dimension_numbers = #tpu.dot_dimension_numbers<[1], [0], [0], [1], [0, 0, 1, 1], [], []>} : vector<256x256xbf16>, vector<256x256xbf16>, vector<256x256xf32> -> vector<256x256xf32>
    %29 = arith.addf %24, %28 : vector<256x256xf32>
    %c255_i32 = arith.constant 255 : i32
    %30 = tpu.dynamic_rotate %0 by %c255_i32 dim 1 : vector<256x256xf32>, i32 -> vector<256x256xf32>
    %c5 = arith.constant 5 : index
    %c0_18 = arith.constant 0 : index
    %c0_19 = arith.constant 0 : index
    %31 = vector.load %arg2[%c5, %c0_18, %c0_19] : memref<9x256x256xbf16, #tpu.memory_space<vmem>>, vector<1x256x256xbf16>
    %32 = vector.shape_cast %31 : vector<1x256x256xbf16> to vector<256x256xbf16>
    %33 = arith.truncf %30 : vector<256x256xf32> to vector<256x256xbf16>
    %cst_20 = arith.constant dense<0.000000e+00> : vector<256x256xf32>
    %34 = tpu.matmul %32, %33, %cst_20 {dimension_numbers = #tpu.dot_dimension_numbers<[1], [0], [0], [1], [0, 0, 1, 1], [], []>} : vector<256x256xbf16>, vector<256x256xbf16>, vector<256x256xf32> -> vector<256x256xf32>
    %35 = arith.addf %29, %34 : vector<256x256xf32>
    %c241_i32 = arith.constant 241 : i32
    %36 = tpu.dynamic_rotate %0 by %c241_i32 dim 1 : vector<256x256xf32>, i32 -> vector<256x256xf32>
    %c6 = arith.constant 6 : index
    %c0_21 = arith.constant 0 : index
    %c0_22 = arith.constant 0 : index
    %37 = vector.load %arg2[%c6, %c0_21, %c0_22] : memref<9x256x256xbf16, #tpu.memory_space<vmem>>, vector<1x256x256xbf16>
    %38 = vector.shape_cast %37 : vector<1x256x256xbf16> to vector<256x256xbf16>
    %39 = arith.truncf %36 : vector<256x256xf32> to vector<256x256xbf16>
    %cst_23 = arith.constant dense<0.000000e+00> : vector<256x256xf32>
    %40 = tpu.matmul %38, %39, %cst_23 {dimension_numbers = #tpu.dot_dimension_numbers<[1], [0], [0], [1], [0, 0, 1, 1], [], []>} : vector<256x256xbf16>, vector<256x256xbf16>, vector<256x256xf32> -> vector<256x256xf32>
    %41 = arith.addf %35, %40 : vector<256x256xf32>
    %c240_i32 = arith.constant 240 : i32
    %42 = tpu.dynamic_rotate %0 by %c240_i32 dim 1 : vector<256x256xf32>, i32 -> vector<256x256xf32>
    %c7 = arith.constant 7 : index
    %c0_24 = arith.constant 0 : index
    %c0_25 = arith.constant 0 : index
    %43 = vector.load %arg2[%c7, %c0_24, %c0_25] : memref<9x256x256xbf16, #tpu.memory_space<vmem>>, vector<1x256x256xbf16>
    %44 = vector.shape_cast %43 : vector<1x256x256xbf16> to vector<256x256xbf16>
    %45 = arith.truncf %42 : vector<256x256xf32> to vector<256x256xbf16>
    %cst_26 = arith.constant dense<0.000000e+00> : vector<256x256xf32>
    %46 = tpu.matmul %44, %45, %cst_26 {dimension_numbers = #tpu.dot_dimension_numbers<[1], [0], [0], [1], [0, 0, 1, 1], [], []>} : vector<256x256xbf16>, vector<256x256xbf16>, vector<256x256xf32> -> vector<256x256xf32>
    %47 = arith.addf %41, %46 : vector<256x256xf32>
    %c239_i32 = arith.constant 239 : i32
    %48 = tpu.dynamic_rotate %0 by %c239_i32 dim 1 : vector<256x256xf32>, i32 -> vector<256x256xf32>
    %c8 = arith.constant 8 : index
    %c0_27 = arith.constant 0 : index
    %c0_28 = arith.constant 0 : index
    %49 = vector.load %arg2[%c8, %c0_27, %c0_28] : memref<9x256x256xbf16, #tpu.memory_space<vmem>>, vector<1x256x256xbf16>
    %50 = vector.shape_cast %49 : vector<1x256x256xbf16> to vector<256x256xbf16>
    %51 = arith.truncf %48 : vector<256x256xf32> to vector<256x256xbf16>
    %cst_29 = arith.constant dense<0.000000e+00> : vector<256x256xf32>
    %52 = tpu.matmul %50, %51, %cst_29 {dimension_numbers = #tpu.dot_dimension_numbers<[1], [0], [0], [1], [0, 0, 1, 1], [], []>} : vector<256x256xbf16>, vector<256x256xbf16>, vector<256x256xf32> -> vector<256x256xf32>
    %53 = arith.addf %47, %52 : vector<256x256xf32>
    %54 = vector.broadcast %1 : vector<1x256xf32> to vector<256x256xf32>
    %55 = arith.mulf %53, %54 : vector<256x256xf32>
    %cst_30 = arith.constant dense<0.000000e+00> : vector<256xf32>
    %56 = vector.multi_reduction <add>, %55, %cst_30 [1] : vector<256x256xf32> to vector<256xf32>
    %57 = vector.shape_cast %56 : vector<256xf32> to vector<256x1xf32>
    %cst_31 = arith.constant 0.00510204071 : f32
    %58 = vector.broadcast %cst_31 : f32 to vector<256x1xf32>
    %59 = arith.mulf %57, %58 : vector<256x1xf32>
    %60 = arith.mulf %55, %53 : vector<256x256xf32>
    %cst_32 = arith.constant dense<0.000000e+00> : vector<256xf32>
    %61 = vector.multi_reduction <add>, %60, %cst_32 [1] : vector<256x256xf32> to vector<256xf32>
    %62 = vector.shape_cast %61 : vector<256xf32> to vector<256x1xf32>
    %cst_33 = arith.constant 0.00510204071 : f32
    %63 = vector.broadcast %cst_33 : f32 to vector<256x1xf32>
    %64 = arith.mulf %62, %63 : vector<256x1xf32>
    %65 = arith.mulf %59, %59 : vector<256x1xf32>
    %66 = arith.subf %64, %65 : vector<256x1xf32>
    %cst_34 = arith.constant 0.000000e+00 : f32
    %67 = vector.broadcast %cst_34 : f32 to vector<256x1xf32>
    %68 = arith.maximumf %66, %67 : vector<256x1xf32>
    %c0_35 = arith.constant 0 : index
    %c0_36 = arith.constant 0 : index
    %69 = vector.load %arg3[%c0_35, %c0_36] : memref<256x1xf32, #tpu.memory_space<vmem>>, vector<256x1xf32>
    %cst_37 = arith.constant 9.99999974E-6 : f32
    %70 = vector.broadcast %cst_37 : f32 to vector<256x1xf32>
    %71 = arith.addf %68, %70 : vector<256x1xf32>
    %72 = math.rsqrt %71 : vector<256x1xf32>
    %73 = arith.mulf %69, %72 : vector<256x1xf32>
    %c0_38 = arith.constant 0 : index
    %c0_39 = arith.constant 0 : index
    %74 = vector.load %arg4[%c0_38, %c0_39] : memref<256x1xf32, #tpu.memory_space<vmem>>, vector<256x1xf32>
    %75 = arith.mulf %59, %73 : vector<256x1xf32>
    %76 = arith.subf %74, %75 : vector<256x1xf32>
    %77 = vector.broadcast %73 : vector<256x1xf32> to vector<256x256xf32>
    %78 = arith.mulf %53, %77 : vector<256x256xf32>
    %79 = vector.broadcast %76 : vector<256x1xf32> to vector<256x256xf32>
    %80 = arith.addf %78, %79 : vector<256x256xf32>
    %cst_40 = arith.constant 0.000000e+00 : f32
    %81 = vector.broadcast %cst_40 : f32 to vector<256x256xf32>
    %82 = arith.maximumf %80, %81 : vector<256x256xf32>
    %c0_41 = arith.constant 0 : index
    %c0_42 = arith.constant 0 : index
    %83 = vector.load %arg5[%c0_41, %c0_42] : memref<1024x256xbf16, #tpu.memory_space<vmem>>, vector<1024x256xbf16>
    %84 = arith.truncf %82 : vector<256x256xf32> to vector<256x256xbf16>
    %cst_43 = arith.constant dense<0.000000e+00> : vector<1024x256xf32>
    %85 = tpu.matmul %83, %84, %cst_43 {dimension_numbers = #tpu.dot_dimension_numbers<[1], [0], [0], [1], [0, 0, 1, 1], [], []>} : vector<1024x256xbf16>, vector<256x256xbf16>, vector<1024x256xf32> -> vector<1024x256xf32>
    %86 = vector.broadcast %1 : vector<1x256xf32> to vector<1024x256xf32>
    %87 = arith.mulf %85, %86 : vector<1024x256xf32>
    %cst_44 = arith.constant dense<0.000000e+00> : vector<1024xf32>
    %88 = vector.multi_reduction <add>, %87, %cst_44 [1] : vector<1024x256xf32> to vector<1024xf32>
    %89 = vector.shape_cast %88 : vector<1024xf32> to vector<1024x1xf32>
    %cst_45 = arith.constant 0.00510204071 : f32
    %90 = vector.broadcast %cst_45 : f32 to vector<1024x1xf32>
    %91 = arith.mulf %89, %90 : vector<1024x1xf32>
    %92 = arith.mulf %87, %85 : vector<1024x256xf32>
    %cst_46 = arith.constant dense<0.000000e+00> : vector<1024xf32>
    %93 = vector.multi_reduction <add>, %92, %cst_46 [1] : vector<1024x256xf32> to vector<1024xf32>
    %94 = vector.shape_cast %93 : vector<1024xf32> to vector<1024x1xf32>
    %cst_47 = arith.constant 0.00510204071 : f32
    %95 = vector.broadcast %cst_47 : f32 to vector<1024x1xf32>
    %96 = arith.mulf %94, %95 : vector<1024x1xf32>
    %97 = arith.mulf %91, %91 : vector<1024x1xf32>
    %98 = arith.subf %96, %97 : vector<1024x1xf32>
    %cst_48 = arith.constant 0.000000e+00 : f32
    %99 = vector.broadcast %cst_48 : f32 to vector<1024x1xf32>
    %100 = arith.maximumf %98, %99 : vector<1024x1xf32>
    %c0_49 = arith.constant 0 : index
    %c0_50 = arith.constant 0 : index
    %101 = vector.load %arg6[%c0_49, %c0_50] : memref<1024x1xf32, #tpu.memory_space<vmem>>, vector<1024x1xf32>
    %cst_51 = arith.constant 9.99999974E-6 : f32
    %102 = vector.broadcast %cst_51 : f32 to vector<1024x1xf32>
    %103 = arith.addf %100, %102 : vector<1024x1xf32>
    %104 = math.rsqrt %103 : vector<1024x1xf32>
    %105 = arith.mulf %101, %104 : vector<1024x1xf32>
    %c0_52 = arith.constant 0 : index
    %c0_53 = arith.constant 0 : index
    %106 = vector.load %arg7[%c0_52, %c0_53] : memref<1024x1xf32, #tpu.memory_space<vmem>>, vector<1024x1xf32>
    %107 = arith.mulf %91, %105 : vector<1024x1xf32>
    %108 = arith.subf %106, %107 : vector<1024x1xf32>
    %109 = vector.broadcast %105 : vector<1024x1xf32> to vector<1024x256xf32>
    %110 = arith.mulf %85, %109 : vector<1024x256xf32>
    %111 = vector.broadcast %108 : vector<1024x1xf32> to vector<1024x256xf32>
    %112 = arith.addf %110, %111 : vector<1024x256xf32>
    %113 = arith.truncf %112 : vector<1024x256xf32> to vector<1024x256xbf16>
    %c0_54 = arith.constant 0 : index
    %c0_55 = arith.constant 0 : index
    %114 = vector.load %arg8[%c0_54, %c0_55] : memref<1024x256xbf16, #tpu.memory_space<vmem>>, vector<1024x256xbf16>
    tpu.vector_store %arg8[%c0_54, %c0_55], %113 {strides = array<i32>} : memref<1024x256xbf16, #tpu.memory_space<vmem>>, vector<1024x256xbf16>,
    return
  }
}

</mosaic_0001>

<llo_original>
// kernel: fused_forward.1
$region0: #{fused_forward.1}
  #allocation0 [shape = 'u32[]', space=smem, size = 0x4, offset = 0x4, fixed_abs, tag = 'smem constant byte address 0x4 - core index']
  #allocation1 [shape = 'u32[144,128]{1,0:T(1,128)}', space=vmem, size = 0x12000, scoped, tag = 'internal scratch']
  %s0 = inlined_call_operand.vmem [shape: f32[256,256], index: 0, kind: input, shape index: {}]
  %s1 = inlined_call_operand.vmem [shape: f32[1,256], index: 1, kind: input, shape index: {}]
  %s2 = inlined_call_operand.vmem [shape: bf16[9,256,256], index: 2, kind: input, shape index: {}]
  %s3 = inlined_call_operand.vmem [shape: f32[256,1], index: 3, kind: input, shape index: {}]
  %s4 = inlined_call_operand.vmem [shape: f32[256,1], index: 4, kind: input, shape index: {}]
  %s5 = inlined_call_operand.vmem [shape: bf16[1024,256], index: 5, kind: input, shape index: {}]
  %s6 = inlined_call_operand.vmem [shape: f32[1024,1], index: 6, kind: input, shape index: {}]
  %s7 = inlined_call_operand.vmem [shape: f32[1024,1], index: 7, kind: input, shape index: {}]
  %s8 = inlined_call_operand.vmem [shape: bf16[1024,256], index: 8, kind: output, shape index: {}]
  %s9 = sld [smem:[#allocation0]]
  $region42: #{fused_forward.1} parent=0
    _
  %s11 = ssub.s32 1, %s9
  %s12 = scalar_select 0, %s11, %s9
  // Predicated region
  $region2: #{fused_forward.1} parent=0 // pred_check
    _
  $region3: #{fused_forward.1} parent=0 // pred_check_branch
    %14 = sbr.rel (0) target = $region5
  $region4: #{fused_forward.1} parent=0 // pred_region
    _
  $region5: #{fused_forward.1} parent=0 // pred_fallthru
    _
  // Predicated region
  $region6: #{fused_forward.1} parent=0 // pred_check
    _
  $region7: #{fused_forward.1} parent=0 // pred_check_branch
    %16 = sbr.rel (0) target = $region9
  $region8: #{fused_forward.1} parent=0 // pred_region
    _
  $region9: #{fused_forward.1} parent=0 // pred_fallthru
    _
  // Predicated region
  $region10: #{fused_forward.1} parent=0 // pred_check
    _
  $region11: #{fused_forward.1} parent=0 // pred_check_branch
    %18 = sbr.rel (0) target = $region13
  $region12: #{fused_forward.1} parent=0 // pred_region
    _
  $region13: #{fused_forward.1} parent=0 // pred_fallthru
    _
  // Predicated region
  $region14: #{fused_forward.1} parent=0 // pred_check
    _
  $region15: #{fused_forward.1} parent=0 // pred_check_branch
    %20 = sbr.rel (0) target = $region17
  $region16: #{fused_forward.1} parent=0 // pred_region
    _
  $region17: #{fused_forward.1} parent=0 // pred_fallthru
    _
  // Predicated region
  $region18: #{fused_forward.1} parent=0 // pred_check
    _
  $region19: #{fused_forward.1} parent=0 // pred_check_branch
    %22 = sbr.rel (0) target = $region21
  $region20: #{fused_forward.1} parent=0 // pred_region
    _
  $region21: #{fused_forward.1} parent=0 // pred_fallthru
    _
  // Predicated region
  $region22: #{fused_forward.1} parent=0 // pred_check
    _
  $region23: #{fused_forward.1} parent=0 // pred_check_branch
    %24 = sbr.rel (0) target = $region25
  $region24: #{fused_forward.1} parent=0 // pred_region
    _
  $region25: #{fused_forward.1} parent=0 // pred_fallthru
    _
  // Predicated region
  $region26: #{fused_forward.1} parent=0 // pred_check
    _
  $region27: #{fused_forward.1} parent=0 // pred_check_branch
    %26 = sbr.rel (0) target = $region29
  $region28: #{fused_forward.1} parent=0 // pred_region
    _
  $region29: #{fused_forward.1} parent=0 // pred_fallthru
    _
  // Predicated region
  $region30: #{fused_forward.1} parent=0 // pred_check
    _
  $region31: #{fused_forward.1} parent=0 // pred_check_branch
    %28 = sbr.rel (0) target = $region33
  $region32: #{fused_forward.1} parent=0 // pred_region
    _
  $region33: #{fused_forward.1} parent=0 // pred_fallthru
    _
  %v29 = vld [vmem:[%s0] sm:$0xff]
  %v30 = vld [vmem:[%s0 + $0x8] sm:$0xff]
  %v31 = vld [vmem:[%s0 + $0x10] sm:$0xff]
  %v32 = vld [vmem:[%s0 + $0x18] sm:$0xff]
  %v33 = vld [vmem:[%s0 + $0x20] sm:$0xff]
  %v34 = vld [vmem:[%s0 + $0x28] sm:$0xff]
  %v35 = vld [vmem:[%s0 + $0x30] sm:$0xff]
  %v36 = vld [vmem:[%s0 + $0x38] sm:$0xff]
  %v37 = vld [vmem:[%s0 + $0x40] sm:$0xff]
  %v38 = vld [vmem:[%s0 + $0x48] sm:$0xff]
  %v39 = vld [vmem:[%s0 + $0x50] sm:$0xff]
  %v40 = vld [vmem:[%s0 + $0x58] sm:$0xff]
  %v41 = vld [vmem:[%s0 + $0x60] sm:$0xff]
  %v42 = vld [vmem:[%s0 + $0x68] sm:$0xff]
  %v43 = vld [vmem:[%s0 + $0x70] sm:$0xff]
  %v44 = vld [vmem:[%s0 + $0x78] sm:$0xff]
  %v45 = vld [vmem:[%s0 + $0x80] sm:$0xff]
  %v46 = vld [vmem:[%s0 + $0x88] sm:$0xff]
  %v47 = vld [vmem:[%s0 + $0x90] sm:$0xff]
  %v48 = vld [vmem:[%s0 + $0x98] sm:$0xff]
  %v49 = vld [vmem:[%s0 + $0xa0] sm:$0xff]
  %v50 = vld [vmem:[%s0 + $0xa8] sm:$0xff]
  %v51 = vld [vmem:[%s0 + $0xb0] sm:$0xff]
  %v52 = vld [vmem:[%s0 + $0xb8] sm:$0xff]
  %v53 = vld [vmem:[%s0 + $0xc0] sm:$0xff]
  %v54 = vld [vmem:[%s0 + $0xc8] sm:$0xff]
  %v55 = vld [vmem:[%s0 + $0xd0] sm:$0xff]
  %v56 = vld [vmem:[%s0 + $0xd8] sm:$0xff]
  %v57 = vld [vmem:[%s0 + $0xe0] sm:$0xff]
  %v58 = vld [vmem:[%s0 + $0xe8] sm:$0xff]
  %v59 = vld [vmem:[%s0 + $0xf0] sm:$0xff]
  %v60 = vld [vmem:[%s0 + $0xf8] sm:$0xff]
  %v61 = vld [vmem:[%s0 + $0x100] sm:$0xff]
  %v62 = vld [vmem:[%s0 + $0x108] sm:$0xff]
  %v63 = vld [vmem:[%s0 + $0x110] sm:$0xff]
  %v64 = vld [vmem:[%s0 + $0x118] sm:$0xff]
  %v65 = vld [vmem:[%s0 + $0x120] sm:$0xff]
  %v66 = vld [vmem:[%s0 + $0x128] sm:$0xff]
  %v67 = vld [vmem:[%s0 + $0x130] sm:$0xff]
  %v68 = vld [vmem:[%s0 + $0x138] sm:$0xff]
  %v69 = vld [vmem:[%s0 + $0x140] sm:$0xff]
  %v70 = vld [vmem:[%s0 + $0x148] sm:$0xff]
  %v71 = vld [vmem:[%s0 + $0x150] sm:$0xff]
  %v72 = vld [vmem:[%s0 + $0x158] sm:$0xff]
  %v73 = vld [vmem:[%s0 + $0x160] sm:$0xff]
  %v74 = vld [vmem:[%s0 + $0x168] sm:$0xff]
  %v75 = vld [vmem:[%s0 + $0x170] sm:$0xff]
  %v76 = vld [vmem:[%s0 + $0x178] sm:$0xff]
  %v77 = vld [vmem:[%s0 + $0x180] sm:$0xff]
  %v78 = vld [vmem:[%s0 + $0x188] sm:$0xff]
  %v79 = vld [vmem:[%s0 + $0x190] sm:$0xff]
  %v80 = vld [vmem:[%s0 + $0x198] sm:$0xff]
  %v81 = vld [vmem:[%s0 + $0x1a0] sm:$0xff]
  %v82 = vld [vmem:[%s0 + $0x1a8] sm:$0xff]
  %v83 = vld [vmem:[%s0 + $0x1b0] sm:$0xff]
  %v84 = vld [vmem:[%s0 + $0x1b8] sm:$0xff]
  %v85 = vld [vmem:[%s0 + $0x1c0] sm:$0xff]
  %v86 = vld [vmem:[%s0 + $0x1c8] sm:$0xff]
  %v87 = vld [vmem:[%s0 + $0x1d0] sm:$0xff]
  %v88 = vld [vmem:[%s0 + $0x1d8] sm:$0xff]
  %v89 = vld [vmem:[%s0 + $0x1e0] sm:$0xff]
  %v90 = vld [vmem:[%s0 + $0x1e8] sm:$0xff]
  %v91 = vld [vmem:[%s0 + $0x1f0] sm:$0xff]
  %v92 = vld [vmem:[%s0 + $0x1f8] sm:$0xff]
  %v93 = vld [vmem:[%s1] sm:$0x3]
  %94 = vrot.lane.b32.xlu0 %v29, 17
  %v95 = vpop.permute.xlu0 %94
  %96 = vrot.lane.b32.xlu0 %v31, 17
  %v97 = vpop.permute.xlu0 %96
  %98 = vrot.lane.b32.xlu0 %v33, 17
  %v99 = vpop.permute.xlu0 %98
  %100 = vrot.lane.b32.xlu0 %v35, 17
  %v101 = vpop.permute.xlu0 %100
  %102 = vrot.lane.b32.xlu0 %v37, 17
  %v103 = vpop.permute.xlu0 %102
  %104 = vrot.lane.b32.xlu0 %v39, 17
  %v105 = vpop.permute.xlu0 %104
  %106 = vrot.lane.b32.xlu0 %v41, 17
  %v107 = vpop.permute.xlu0 %106
  %108 = vrot.lane.b32.xlu0 %v43, 17
  %v109 = vpop.permute.xlu0 %108
  %110 = vrot.lane.b32.xlu0 %v45, 17
  %v111 = vpop.permute.xlu0 %110
  %112 = vrot.lane.b32.xlu0 %v47, 17
  %v113 = vpop.permute.xlu0 %112
  %114 = vrot.lane.b32.xlu0 %v49, 17
  %v115 = vpop.permute.xlu0 %114
  %116 = vrot.lane.b32.xlu0 %v51, 17
  %v117 = vpop.permute.xlu0 %116
  %118 = vrot.lane.b32.xlu0 %v53, 17
  %v119 = vpop.permute.xlu0 %118
  %120 = vrot.lane.b32.xlu0 %v55, 17
  %v121 = vpop.permute.xlu0 %120
  %122 = vrot.lane.b32.xlu0 %v57, 17
  %v123 = vpop.permute.xlu0 %122
  %124 = vrot.lane.b32.xlu0 %v59, 17
  %v125 = vpop.permute.xlu0 %124
  %126 = vrot.lane.b32.xlu0 %v61, 17
  %v127 = vpop.permute.xlu0 %126
  %128 = vrot.lane.b32.xlu0 %v63, 17
  %v129 = vpop.permute.xlu0 %128
  %130 = vrot.lane.b32.xlu0 %v65, 17
  %v131 = vpop.permute.xlu0 %130
  %132 = vrot.lane.b32.xlu0 %v67, 17
  %v133 = vpop.permute.xlu0 %132
  %134 = vrot.lane.b32.xlu0 %v69, 17
  %v135 = vpop.permute.xlu0 %134
  %136 = vrot.lane.b32.xlu0 %v71, 17
  %v137 = vpop.permute.xlu0 %136
  %138 = vrot.lane.b32.xlu0 %v73, 17
  %v139 = vpop.permute.xlu0 %138
  %140 = vrot.lane.b32.xlu0 %v75, 17
  %v141 = vpop.permute.xlu0 %140
  %142 = vrot.lane.b32.xlu0 %v77, 17
  %v143 = vpop.permute.xlu0 %142
  %144 = vrot.lane.b32.xlu0 %v79, 17
  %v145 = vpop.permute.xlu0 %144
  %146 = vrot.lane.b32.xlu0 %v81, 17
  %v147 = vpop.permute.xlu0 %146
  %148 = vrot.lane.b32.xlu0 %v83, 17
  %v149 = vpop.permute.xlu0 %148
  %150 = vrot.lane.b32.xlu0 %v85, 17
  %v151 = vpop.permute.xlu0 %150
  %152 = vrot.lane.b32.xlu0 %v87, 17
  %v153 = vpop.permute.xlu0 %152
  %154 = vrot.lane.b32.xlu0 %v89, 17
  %v155 = vpop.permute.xlu0 %154
  %156 = vrot.lane.b32.xlu0 %v91, 17
  %v157 = vpop.permute.xlu0 %156
  %158 = vrot.lane.b32.xlu0 %v30, 17
  %v159 = vpop.permute.xlu0 %158
  %160 = vrot.lane.b32.xlu0 %v32, 17
  %v161 = vpop.permute.xlu0 %160
  %162 = vrot.lane.b32.xlu0 %v34, 17
  %v163 = vpop.permute.xlu0 %162
  %164 = vrot.lane.b32.xlu0 %v36, 17
  %v165 = vpop.permute.xlu0 %164
  %166 = vrot.lane.b32.xlu0 %v38, 17
  %v167 = vpop.permute.xlu0 %166
  %168 = vrot.lane.b32.xlu0 %v40, 17
  %v169 = vpop.permute.xlu0 %168
  %170 = vrot.lane.b32.xlu0 %v42, 17
  %v171 = vpop.permute.xlu0 %170
  %172 = vrot.lane.b32.xlu0 %v44, 17
  %v173 = vpop.permute.xlu0 %172
  %174 = vrot.lane.b32.xlu0 %v46, 17
  %v175 = vpop.permute.xlu0 %174
  %176 = vrot.lane.b32.xlu0 %v48, 17
  %v177 = vpop.permute.xlu0 %176
  %178 = vrot.lane.b32.xlu0 %v50, 17
  %v179 = vpop.permute.xlu0 %178
  %180 = vrot.lane.b32.xlu0 %v52, 17
  %v181 = vpop.permute.xlu0 %180
  %182 = vrot.lane.b32.xlu0 %v54, 17
  %v183 = vpop.permute.xlu0 %182
  %184 = vrot.lane.b32.xlu0 %v56, 17
  %v185 = vpop.permute.xlu0 %184
  %186 = vrot.lane.b32.xlu0 %v58, 17
  %v187 = vpop.permute.xlu0 %186
  %188 = vrot.lane.b32.xlu0 %v60, 17
  %v189 = vpop.permute.xlu0 %188
  %190 = vrot.lane.b32.xlu0 %v62, 17
  %v191 = vpop.permute.xlu0 %190
  %192 = vrot.lane.b32.xlu0 %v64, 17
  %v193 = vpop.permute.xlu0 %192
  %194 = vrot.lane.b32.xlu0 %v66, 17
  %v195 = vpop.permute.xlu0 %194
  %196 = vrot.lane.b32.xlu0 %v68, 17
  %v197 = vpop.permute.xlu0 %196
  %198 = vrot.lane.b32.xlu0 %v70, 17
  %v199 = vpop.permute.xlu0 %198
  %200 = vrot.lane.b32.xlu0 %v72, 17
  %v201 = vpop.permute.xlu0 %200
  %202 = vrot.lane.b32.xlu0 %v74, 17
  %v203 = vpop.permute.xlu0 %202
  %204 = vrot.lane.b32.xlu0 %v76, 17
  %v205 = vpop.permute.xlu0 %204
  %206 = vrot.lane.b32.xlu0 %v78, 17
  %v207 = vpop.permute.xlu0 %206
  %208 = vrot.lane.b32.xlu0 %v80, 17
  %v209 = vpop.permute.xlu0 %208
  %210 = vrot.lane.b32.xlu0 %v82, 17
  %v211 = vpop.permute.xlu0 %210
  %212 = vrot.lane.b32.xlu0 %v84, 17
  %v213 = vpop.permute.xlu0 %212
  %214 = vrot.lane.b32.xlu0 %v86, 17
  %v215 = vpop.permute.xlu0 %214
  %216 = vrot.lane.b32.xlu0 %v88, 17
  %v217 = vpop.permute.xlu0 %216
  %218 = vrot.lane.b32.xlu0 %v90, 17
  %v219 = vpop.permute.xlu0 %218
  %220 = vrot.lane.b32.xlu0 %v92, 17
  %v221 = vpop.permute.xlu0 %220
  %v222 = vlaneseq
  %v223 = vand.u32 %v222, 127
  %vm224 = vcmp.lt.s32.totalorder %v223, 17
  %v225 = vsel %vm224, %v95, %v159
  %v226 = vsel %vm224, %v97, %v161
  %v227 = vsel %vm224, %v99, %v163
  %v228 = vsel %vm224, %v101, %v165
  %v229 = vsel %vm224, %v103, %v167
  %v230 = vsel %vm224, %v105, %v169
  %v231 = vsel %vm224, %v107, %v171
  %v232 = vsel %vm224, %v109, %v173
  %v233 = vsel %vm224, %v111, %v175
  %v234 = vsel %vm224, %v113, %v177
  %v235 = vsel %vm224, %v115, %v179
  %v236 = vsel %vm224, %v117, %v181
  %v237 = vsel %vm224, %v119, %v183
  %v238 = vsel %vm224, %v121, %v185
  %v239 = vsel %vm224, %v123, %v187
  %v240 = vsel %vm224, %v125, %v189
  %v241 = vsel %vm224, %v127, %v191
  %v242 = vsel %vm224, %v129, %v193
  %v243 = vsel %vm224, %v131, %v195
  %v244 = vsel %vm224, %v133, %v197
  %v245 = vsel %vm224, %v135, %v199
  %v246 = vsel %vm224, %v137, %v201
  %v247 = vsel %vm224, %v139, %v203
  %v248 = vsel %vm224, %v141, %v205
  %v249 = vsel %vm224, %v143, %v207
  %v250 = vsel %vm224, %v145, %v209
  %v251 = vsel %vm224, %v147, %v211
  %v252 = vsel %vm224, %v149, %v213
  %v253 = vsel %vm224, %v151, %v215
  %v254 = vsel %vm224, %v153, %v217
  %v255 = vsel %vm224, %v155, %v219
  %v256 = vsel %vm224, %v157, %v221
  %v257 = vsel %vm224, %v159, %v95
  %v258 = vsel %vm224, %v161, %v97
  %v259 = vsel %vm224, %v163, %v99
  %v260 = vsel %vm224, %v165, %v101
  %v261 = vsel %vm224, %v167, %v103
  %v262 = vsel %vm224, %v169, %v105
  %v263 = vsel %vm224, %v171, %v107
  %v264 = vsel %vm224, %v173, %v109
  %v265 = vsel %vm224, %v175, %v111
  %v266 = vsel %vm224, %v177, %v113
  %v267 = vsel %vm224, %v179, %v115
  %v268 = vsel %vm224, %v181, %v117
  %v269 = vsel %vm224, %v183, %v119
  %v270 = vsel %vm224, %v185, %v121
  %v271 = vsel %vm224, %v187, %v123
  %v272 = vsel %vm224, %v189, %v125
  %v273 = vsel %vm224, %v191, %v127
  %v274 = vsel %vm224, %v193, %v129
  %v275 = vsel %vm224, %v195, %v131
  %v276 = vsel %vm224, %v197, %v133
  %v277 = vsel %vm224, %v199, %v135
  %v278 = vsel %vm224, %v201, %v137
  %v279 = vsel %vm224, %v203, %v139
  %v280 = vsel %vm224, %v205, %v141
  %v281 = vsel %vm224, %v207, %v143
  %v282 = vsel %vm224, %v209, %v145
  %v283 = vsel %vm224, %v211, %v147
  %v284 = vsel %vm224, %v213, %v149
  %v285 = vsel %vm224, %v215, %v151
  %v286 = vsel %vm224, %v217, %v153
  %v287 = vsel %vm224, %v219, %v155
  %v288 = vsel %vm224, %v221, %v157
  %v289 = vld [vmem:[%s2] sm:$0xff]
  %v290 = vld [vmem:[%s2 + $0x8] sm:$0xff]
  %v291 = vld [vmem:[%s2 + $0x10] sm:$0xff]
  %v292 = vld [vmem:[%s2 + $0x18] sm:$0xff]
  %v293 = vld [vmem:[%s2 + $0x20] sm:$0xff]
  %v294 = vld [vmem:[%s2 + $0x28] sm:$0xff]
  %v295 = vld [vmem:[%s2 + $0x30] sm:$0xff]
  %v296 = vld [vmem:[%s2 + $0x38] sm:$0xff]
  %v297 = vld [vmem:[%s2 + $0x40] sm:$0xff]
  %v298 = vld [vmem:[%s2 + $0x48] sm:$0xff]
  %v299 = vld [vmem:[%s2 + $0x50] sm:$0xff]
  %v300 = vld [vmem:[%s2 + $0x58] sm:$0xff]
  %v301 = vld [vmem:[%s2 + $0x60] sm:$0xff]
  %v302 = vld [vmem:[%s2 + $0x68] sm:$0xff]
  %v303 = vld [vmem:[%s2 + $0x70] sm:$0xff]
  %v304 = vld [vmem:[%s2 + $0x78] sm:$0xff]
  %v305 = vld [vmem:[%s2 + $0x80] sm:$0xff]
  %v306 = vld [vmem:[%s2 + $0x88] sm:$0xff]
  %v307 = vld [vmem:[%s2 + $0x90] sm:$0xff]
  %v308 = vld [vmem:[%s2 + $0x98] sm:$0xff]
  %v309 = vld [vmem:[%s2 + $0xa0] sm:$0xff]
  %v310 = vld [vmem:[%s2 + $0xa8] sm:$0xff]
  %v311 = vld [vmem:[%s2 + $0xb0] sm:$0xff]
  %v312 = vld [vmem:[%s2 + $0xb8] sm:$0xff]
  %v313 = vld [vmem:[%s2 + $0xc0] sm:$0xff]
  %v314 = vld [vmem:[%s2 + $0xc8] sm:$0xff]
  %v315 = vld [vmem:[%s2 + $0xd0] sm:$0xff]
  %v316 = vld [vmem:[%s2 + $0xd8] sm:$0xff]
  %v317 = vld [vmem:[%s2 + $0xe0] sm:$0xff]
  %v318 = vld [vmem:[%s2 + $0xe8] sm:$0xff]
  %v319 = vld [vmem:[%s2 + $0xf0] sm:$0xff]
  %v320 = vld [vmem:[%s2 + $0xf8] sm:$0xff]
  %v321 = vpack.c.bf16 %v258, %v257
  %v322 = vpack.c.bf16 %v226, %v225
  %v323 = vpack.c.bf16 %v260, %v259
  %v324 = vpack.c.bf16 %v228, %v227
  %v325 = vpack.c.bf16 %v262, %v261
  %v326 = vpack.c.bf16 %v230, %v229
  %v327 = vpack.c.bf16 %v264, %v263
  %v328 = vpack.c.bf16 %v232, %v231
  %v329 = vpack.c.bf16 %v266, %v265
  %v330 = vpack.c.bf16 %v234, %v233
  %v331 = vpack.c.bf16 %v268, %v267
  %v332 = vpack.c.bf16 %v236, %v235
  %v333 = vpack.c.bf16 %v270, %v269
  %v334 = vpack.c.bf16 %v238, %v237
  %v335 = vpack.c.bf16 %v272, %v271
  %v336 = vpack.c.bf16 %v240, %v239
  %v337 = vpack.c.bf16 %v274, %v273
  %v338 = vpack.c.bf16 %v242, %v241
  %v339 = vpack.c.bf16 %v276, %v275
  %v340 = vpack.c.bf16 %v244, %v243
  %v341 = vpack.c.bf16 %v278, %v277
  %v342 = vpack.c.bf16 %v246, %v245
  %v343 = vpack.c.bf16 %v280, %v279
  %v344 = vpack.c.bf16 %v248, %v247
  %v345 = vpack.c.bf16 %v282, %v281
  %v346 = vpack.c.bf16 %v250, %v249
  %v347 = vpack.c.bf16 %v284, %v283
  %v348 = vpack.c.bf16 %v252, %v251
  %v349 = vpack.c.bf16 %v286, %v285
  %v350 = vpack.c.bf16 %v254, %v253
  %v351 = vpack.c.bf16 %v288, %v287
  %v352 = vpack.c.bf16 %v256, %v255
  %353 = vrot.lane.b32.xlu0 %v29, 16
  %v354 = vpop.permute.xlu0 %353
  %355 = vrot.lane.b32.xlu0 %v31, 16
  %v356 = vpop.permute.xlu0 %355
  %357 = vrot.lane.b32.xlu0 %v33, 16
  %v358 = vpop.permute.xlu0 %357
  %359 = vrot.lane.b32.xlu0 %v35, 16
  %v360 = vpop.permute.xlu0 %359
  %361 = vrot.lane.b32.xlu0 %v37, 16
  %v362 = vpop.permute.xlu0 %361
  %363 = vrot.lane.b32.xlu0 %v39, 16
  %v364 = vpop.permute.xlu0 %363
  %365 = vrot.lane.b32.xlu0 %v41, 16
  %v366 = vpop.permute.xlu0 %365
  %367 = vrot.lane.b32.xlu0 %v43, 16
  %v368 = vpop.permute.xlu0 %367
  %369 = vrot.lane.b32.xlu0 %v45, 16
  %v370 = vpop.permute.xlu0 %369
  %371 = vrot.lane.b32.xlu0 %v47, 16
  %v372 = vpop.permute.xlu0 %371
  %373 = vrot.lane.b32.xlu0 %v49, 16
  %v374 = vpop.permute.xlu0 %373
  %375 = vrot.lane.b32.xlu0 %v51, 16
  %v376 = vpop.permute.xlu0 %375
  %377 = vrot.lane.b32.xlu0 %v53, 16
  %v378 = vpop.permute.xlu0 %377
  %379 = vrot.lane.b32.xlu0 %v55, 16
  %v380 = vpop.permute.xlu0 %379
  %381 = vrot.lane.b32.xlu0 %v57, 16
  %v382 = vpop.permute.xlu0 %381
  %383 = vrot.lane.b32.xlu0 %v59, 16
  %v384 = vpop.permute.xlu0 %383
  %385 = vrot.lane.b32.xlu0 %v61, 16
  %v386 = vpop.permute.xlu0 %385
  %387 = vrot.lane.b32.xlu0 %v63, 16
  %v388 = vpop.permute.xlu0 %387
  %389 = vrot.lane.b32.xlu0 %v65, 16
  %v390 = vpop.permute.xlu0 %389
  %391 = vrot.lane.b32.xlu0 %v67, 16
  %v392 = vpop.permute.xlu0 %391
  %393 = vrot.lane.b32.xlu0 %v69, 16
  %v394 = vpop.permute.xlu0 %393
  %395 = vrot.lane.b32.xlu0 %v71, 16
  %v396 = vpop.permute.xlu0 %395
  %397 = vrot.lane.b32.xlu0 %v73, 16
  %v398 = vpop.permute.xlu0 %397
  %399 = vrot.lane.b32.xlu0 %v75, 16
  %v400 = vpop.permute.xlu0 %399
  %401 = vrot.lane.b32.xlu0 %v77, 16
  %v402 = vpop.permute.xlu0 %401
  %403 = vrot.lane.b32.xlu0 %v79, 16
  %v404 = vpop.permute.xlu0 %403
  %405 = vrot.lane.b32.xlu0 %v81, 16
  %v406 = vpop.permute.xlu0 %405
  %407 = vrot.lane.b32.xlu0 %v83, 16
  %v408 = vpop.permute.xlu0 %407
  %409 = vrot.lane.b32.xlu0 %v85, 16
  %v410 = vpop.permute.xlu0 %409
  %411 = vrot.lane.b32.xlu0 %v87, 16
  %v412 = vpop.permute.xlu0 %411
  %413 = vrot.lane.b32.xlu0 %v89, 16
  %v414 = vpop.permute.xlu0 %413
  %415 = vrot.lane.b32.xlu0 %v91, 16
  %v416 = vpop.permute.xlu0 %415
  %417 = vrot.lane.b32.xlu0 %v30, 16
  %v418 = vpop.permute.xlu0 %417
  %419 = vrot.lane.b32.xlu0 %v32, 16
  %v420 = vpop.permute.xlu0 %419
  %421 = vrot.lane.b32.xlu0 %v34, 16
  %v422 = vpop.permute.xlu0 %421
  %423 = vrot.lane.b32.xlu0 %v36, 16
  %v424 = vpop.permute.xlu0 %423
  %425 = vrot.lane.b32.xlu0 %v38, 16
  %v426 = vpop.permute.xlu0 %425
  %427 = vrot.lane.b32.xlu0 %v40, 16
  %v428 = vpop.permute.xlu0 %427
  %429 = vrot.lane.b32.xlu0 %v42, 16
  %v430 = vpop.permute.xlu0 %429
  %431 = vrot.lane.b32.xlu0 %v44, 16
  %v432 = vpop.permute.xlu0 %431
  %433 = vrot.lane.b32.xlu0 %v46, 16
  %v434 = vpop.permute.xlu0 %433
  %435 = vrot.lane.b32.xlu0 %v48, 16
  %v436 = vpop.permute.xlu0 %435
  %437 = vrot.lane.b32.xlu0 %v50, 16
  %v438 = vpop.permute.xlu0 %437
  %439 = vrot.lane.b32.xlu0 %v52, 16
  %v440 = vpop.permute.xlu0 %439
  %441 = vrot.lane.b32.xlu0 %v54, 16
  %v442 = vpop.permute.xlu0 %441
  %443 = vrot.lane.b32.xlu0 %v56, 16
  %v444 = vpop.permute.xlu0 %443
  %445 = vrot.lane.b32.xlu0 %v58, 16
  %v446 = vpop.permute.xlu0 %445
  %447 = vrot.lane.b32.xlu0 %v60, 16
  %v448 = vpop.permute.xlu0 %447
  %449 = vrot.lane.b32.xlu0 %v62, 16
  %v450 = vpop.permute.xlu0 %449
  %451 = vrot.lane.b32.xlu0 %v64, 16
  %v452 = vpop.permute.xlu0 %451
  %453 = vrot.lane.b32.xlu0 %v66, 16
  %v454 = vpop.permute.xlu0 %453
  %455 = vrot.lane.b32.xlu0 %v68, 16
  %v456 = vpop.permute.xlu0 %455
  %457 = vrot.lane.b32.xlu0 %v70, 16
  %v458 = vpop.permute.xlu0 %457
  %459 = vrot.lane.b32.xlu0 %v72, 16
  %v460 = vpop.permute.xlu0 %459
  %461 = vrot.lane.b32.xlu0 %v74, 16
  %v462 = vpop.permute.xlu0 %461
  %463 = vrot.lane.b32.xlu0 %v76, 16
  %v464 = vpop.permute.xlu0 %463
  %465 = vrot.lane.b32.xlu0 %v78, 16
  %v466 = vpop.permute.xlu0 %465
  %467 = vrot.lane.b32.xlu0 %v80, 16
  %v468 = vpop.permute.xlu0 %467
  %469 = vrot.lane.b32.xlu0 %v82, 16
  %v470 = vpop.permute.xlu0 %469
  %471 = vrot.lane.b32.xlu0 %v84, 16
  %v472 = vpop.permute.xlu0 %471
  %473 = vrot.lane.b32.xlu0 %v86, 16
  %v474 = vpop.permute.xlu0 %473
  %475 = vrot.lane.b32.xlu0 %v88, 16
  %v476 = vpop.permute.xlu0 %475
  %477 = vrot.lane.b32.xlu0 %v90, 16
  %v478 = vpop.permute.xlu0 %477
  %479 = vrot.lane.b32.xlu0 %v92, 16
  %v480 = vpop.permute.xlu0 %479
  %vm481 = vcmp.lt.s32.totalorder %v223, 16
  %v482 = vsel %vm481, %v354, %v418
  %v483 = vsel %vm481, %v356, %v420
  %v484 = vsel %vm481, %v358, %v422
  %v485 = vsel %vm481, %v360, %v424
  %v486 = vsel %vm481, %v362, %v426
  %v487 = vsel %vm481, %v364, %v428
  %v488 = vsel %vm481, %v366, %v430
  %v489 = vsel %vm481, %v368, %v432
  %v490 = vsel %vm481, %v370, %v434
  %v491 = vsel %vm481, %v372, %v436
  %v492 = vsel %vm481, %v374, %v438
  %v493 = vsel %vm481, %v376, %v440
  %v494 = vsel %vm481, %v378, %v442
  %v495 = vsel %vm481, %v380, %v444
  %v496 = vsel %vm481, %v382, %v446
  %v497 = vsel %vm481, %v384, %v448
  %v498 = vsel %vm481, %v386, %v450
  %v499 = vsel %vm481, %v388, %v452
  %v500 = vsel %vm481, %v390, %v454
  %v501 = vsel %vm481, %v392, %v456
  %v502 = vsel %vm481, %v394, %v458
  %v503 = vsel %vm481, %v396, %v460
  %v504 = vsel %vm481, %v398, %v462
  %v505 = vsel %vm481, %v400, %v464
  %v506 = vsel %vm481, %v402, %v466
  %v507 = vsel %vm481, %v404, %v468
  %v508 = vsel %vm481, %v406, %v470
  %v509 = vsel %vm481, %v408, %v472
  %v510 = vsel %vm481, %v410, %v474
  %v511 = vsel %vm481, %v412, %v476
  %v512 = vsel %vm481, %v414, %v478
  %v513 = vsel %vm481, %v416, %v480
  %v514 = vsel %vm481, %v418, %v354
  %v515 = vsel %vm481, %v420, %v356
  %v516 = vsel %vm481, %v422, %v358
  %v517 = vsel %vm481, %v424, %v360
  %v518 = vsel %vm481, %v426, %v362
  %v519 = vsel %vm481, %v428, %v364
  %v520 = vsel %vm481, %v430, %v366
  %v521 = vsel %vm481, %v432, %v368
  %v522 = vsel %vm481, %v434, %v370
  %v523 = vsel %vm481, %v436, %v372
  %v524 = vsel %vm481, %v438, %v374
  %v525 = vsel %vm481, %v440, %v376
  %v526 = vsel %vm481, %v442, %v378
  %v527 = vsel %vm481, %v444, %v380
  %v528 = vsel %vm481, %v446, %v382
  %v529 = vsel %vm481, %v448, %v384
  %v530 = vsel %vm481, %v450, %v386
  %v531 = vsel %vm481, %v452, %v388
  %v532 = vsel %vm481, %v454, %v390
  %v533 = vsel %vm481, %v456, %v392
  %v534 = vsel %vm481, %v458, %v394
  %v535 = vsel %vm481, %v460, %v396
  %v536 = vsel %vm481, %v462, %v398
  %v537 = vsel %vm481, %v464, %v400
  %v538 = vsel %vm481, %v466, %v402
  %v539 = vsel %vm481, %v468, %v404
  %v540 = vsel %vm481, %v470, %v406
  %v541 = vsel %vm481, %v472, %v408
  %v542 = vsel %vm481, %v474, %v410
  %v543 = vsel %vm481, %v476, %v412
  %v544 = vsel %vm481, %v478, %v414
  %v545 = vsel %vm481, %v480, %v416
  %s546 = scalar_lea.vmem %s2, 256
  %v547 = vld [vmem:[%s546] sm:$0xff]
  %v548 = vld [vmem:[%s546 + $0x8] sm:$0xff]
  %v549 = vld [vmem:[%s546 + $0x10] sm:$0xff]
  %v550 = vld [vmem:[%s546 + $0x18] sm:$0xff]
  %v551 = vld [vmem:[%s546 + $0x20] sm:$0xff]
  %v552 = vld [vmem:[%s546 + $0x28] sm:$0xff]
  %v553 = vld [vmem:[%s546 + $0x30] sm:$0xff]
  %v554 = vld [vmem:[%s546 + $0x38] sm:$0xff]
  %v555 = vld [vmem:[%s546 + $0x40] sm:$0xff]
  %v556 = vld [vmem:[%s546 + $0x48] sm:$0xff]
  %v557 = vld [vmem:[%s546 + $0x50] sm:$0xff]
  %v558 = vld [vmem:[%s546 + $0x58] sm:$0xff]
  %v559 = vld [vmem:[%s546 + $0x60] sm:$0xff]
  %v560 = vld [vmem:[%s546 + $0x68] sm:$0xff]
  %v561 = vld [vmem:[%s546 + $0x70] sm:$0xff]
  %v562 = vld [vmem:[%s546 + $0x78] sm:$0xff]
  %v563 = vld [vmem:[%s546 + $0x80] sm:$0xff]
  %v564 = vld [vmem:[%s546 + $0x88] sm:$0xff]
  %v565 = vld [vmem:[%s546 + $0x90] sm:$0xff]
  %v566 = vld [vmem:[%s546 + $0x98] sm:$0xff]
  %v567 = vld [vmem:[%s546 + $0xa0] sm:$0xff]
  %v568 = vld [vmem:[%s546 + $0xa8] sm:$0xff]
  %v569 = vld [vmem:[%s546 + $0xb0] sm:$0xff]
  %v570 = vld [vmem:[%s546 + $0xb8] sm:$0xff]
  %v571 = vld [vmem:[%s546 + $0xc0] sm:$0xff]
  %v572 = vld [vmem:[%s546 + $0xc8] sm:$0xff]
  %v573 = vld [vmem:[%s546 + $0xd0] sm:$0xff]
  %v574 = vld [vmem:[%s546 + $0xd8] sm:$0xff]
  %v575 = vld [vmem:[%s546 + $0xe0] sm:$0xff]
  %v576 = vld [vmem:[%s546 + $0xe8] sm:$0xff]
  %v577 = vld [vmem:[%s546 + $0xf0] sm:$0xff]
  %v578 = vld [vmem:[%s546 + $0xf8] sm:$0xff]
  %v579 = vpack.c.bf16 %v515, %v514
  %v580 = vpack.c.bf16 %v483, %v482
  %v581 = vpack.c.bf16 %v517, %v516
  %v582 = vpack.c.bf16 %v485, %v484
  %v583 = vpack.c.bf16 %v519, %v518
  %v584 = vpack.c.bf16 %v487, %v486
  %v585 = vpack.c.bf16 %v521, %v520
  %v586 = vpack.c.bf16 %v489, %v488
  %v587 = vpack.c.bf16 %v523, %v522
  %v588 = vpack.c.bf16 %v491, %v490
  %v589 = vpack.c.bf16 %v525, %v524
  %v590 = vpack.c.bf16 %v493, %v492
  %v591 = vpack.c.bf16 %v527, %v526
  %v592 = vpack.c.bf16 %v495, %v494
  %v593 = vpack.c.bf16 %v529, %v528
  %v594 = vpack.c.bf16 %v497, %v496
  %v595 = vpack.c.bf16 %v531, %v530
  %v596 = vpack.c.bf16 %v499, %v498
  %v597 = vpack.c.bf16 %v533, %v532
  %v598 = vpack.c.bf16 %v501, %v500
  %v599 = vpack.c.bf16 %v535, %v534
  %v600 = vpack.c.bf16 %v503, %v502
  %v601 = vpack.c.bf16 %v537, %v536
  %v602 = vpack.c.bf16 %v505, %v504
  %v603 = vpack.c.bf16 %v539, %v538
  %v604 = vpack.c.bf16 %v507, %v506
  %v605 = vpack.c.bf16 %v541, %v540
  %v606 = vpack.c.bf16 %v509, %v508
  %v607 = vpack.c.bf16 %v543, %v542
  %v608 = vpack.c.bf16 %v511, %v510
  %v609 = vpack.c.bf16 %v545, %v544
  %v610 = vpack.c.bf16 %v513, %v512
  %v643 = vunpack.c.l.b16 %v547
  %v644 = vunpack.c.h.b16 %v547
  %v645 = vunpack.c.l.b16 %v548
  %v646 = vunpack.c.h.b16 %v548
  %v647 = vunpack.c.l.b16 %v549
  %v648 = vunpack.c.h.b16 %v549
  %v649 = vunpack.c.l.b16 %v550
  %v650 = vunpack.c.h.b16 %v550
  %v651 = vunpack.c.l.b16 %v551
  %v652 = vunpack.c.h.b16 %v551
  %v653 = vunpack.c.l.b16 %v552
  %v654 = vunpack.c.h.b16 %v552
  %v655 = vunpack.c.l.b16 %v553
  %v656 = vunpack.c.h.b16 %v553
  %v657 = vunpack.c.l.b16 %v554
  %v658 = vunpack.c.h.b16 %v554
  %v659 = vunpack.c.l.b16 %v555
  %v660 = vunpack.c.h.b16 %v555
  %v661 = vunpack.c.l.b16 %v556
  %v662 = vunpack.c.h.b16 %v556
  %v663 = vunpack.c.l.b16 %v557
  %v664 = vunpack.c.h.b16 %v557
  %v665 = vunpack.c.l.b16 %v558
  %v666 = vunpack.c.h.b16 %v558
  %v667 = vunpack.c.l.b16 %v559
  %v668 = vunpack.c.h.b16 %v559
  %v669 = vunpack.c.l.b16 %v560
  %v670 = vunpack.c.h.b16 %v560
  %v671 = vunpack.c.l.b16 %v561
  %v672 = vunpack.c.h.b16 %v561
  %v673 = vunpack.c.l.b16 %v562
  %v674 = vunpack.c.h.b16 %v562
  %v675 = vunpack.c.l.b16 %v563
  %v676 = vunpack.c.h.b16 %v563
  %v677 = vunpack.c.l.b16 %v564
  %v678 = vunpack.c.h.b16 %v564
  %v679 = vunpack.c.l.b16 %v565
  %v680 = vunpack.c.h.b16 %v565
  %v681 = vunpack.c.l.b16 %v566
  %v682 = vunpack.c.h.b16 %v566
  %v683 = vunpack.c.l.b16 %v567
  %v684 = vunpack.c.h.b16 %v567
  %v685 = vunpack.c.l.b16 %v568
  %v686 = vunpack.c.h.b16 %v568
  %v687 = vunpack.c.l.b16 %v569
  %v688 = vunpack.c.h.b16 %v569
  %v689 = vunpack.c.l.b16 %v570
  %v690 = vunpack.c.h.b16 %v570
  %v691 = vunpack.c.l.b16 %v571
  %v692 = vunpack.c.h.b16 %v571
  %v693 = vunpack.c.l.b16 %v572
  %v694 = vunpack.c.h.b16 %v572
  %v695 = vunpack.c.l.b16 %v573
  %v696 = vunpack.c.h.b16 %v573
  %v697 = vunpack.c.l.b16 %v574
  %v698 = vunpack.c.h.b16 %v574
  %v699 = vunpack.c.l.b16 %v575
  %v700 = vunpack.c.h.b16 %v575
  %v701 = vunpack.c.l.b16 %v576
  %v702 = vunpack.c.h.b16 %v576
  %v703 = vunpack.c.l.b16 %v577
  %v704 = vunpack.c.h.b16 %v577
  %v705 = vunpack.c.l.b16 %v578
  %v706 = vunpack.c.h.b16 %v578
  %v707 = vpack.c.b16 %v645, %v643
  %v708 = vpack.c.b16 %v646, %v644
  %v709 = vpack.c.b16 %v649, %v647
  %v710 = vpack.c.b16 %v650, %v648
  %v711 = vpack.c.b16 %v653, %v651
  %v712 = vpack.c.b16 %v654, %v652
  %v713 = vpack.c.b16 %v657, %v655
  %v714 = vpack.c.b16 %v658, %v656
  %v715 = vpack.c.b16 %v661, %v659
  %v716 = vpack.c.b16 %v662, %v660
  %v717 = vpack.c.b16 %v665, %v663
  %v718 = vpack.c.b16 %v666, %v664
  %v719 = vpack.c.b16 %v669, %v667
  %v720 = vpack.c.b16 %v670, %v668
  %v721 = vpack.c.b16 %v673, %v671
  %v722 = vpack.c.b16 %v674, %v672
  %v723 = vpack.c.b16 %v677, %v675
  %v724 = vpack.c.b16 %v678, %v676
  %v725 = vpack.c.b16 %v681, %v679
  %v726 = vpack.c.b16 %v682, %v680
  %v727 = vpack.c.b16 %v685, %v683
  %v728 = vpack.c.b16 %v686, %v684
  %v729 = vpack.c.b16 %v689, %v687
  %v730 = vpack.c.b16 %v690, %v688
  %v731 = vpack.c.b16 %v693, %v691
  %v732 = vpack.c.b16 %v694, %v692
  %v733 = vpack.c.b16 %v697, %v695
  %v734 = vpack.c.b16 %v698, %v696
  %v735 = vpack.c.b16 %v701, %v699
  %v736 = vpack.c.b16 %v702, %v700
  %v737 = vpack.c.b16 %v705, %v703
  %v738 = vpack.c.b16 %v706, %v704
  %771 = vmatprep.subr.bf16.mxu0 %v580
  %772 = vmatpush1.bf16.msra.mxu0 %v579
  %773 = vmatprep.subr.bf16.mxu0 %v582
  %774 = vmatpush1.bf16.msra.mxu0 %v581
  %775 = vmatprep.subr.bf16.mxu0 %v584
  %776 = vmatpush1.bf16.msra.mxu0 %v583
  %777 = vmatprep.subr.bf16.mxu0 %v586
  %778 = vmatpush1.bf16.msra.mxu0 %v585
  %779 = vmatprep.subr.bf16.mxu0 %v588
  %780 = vmatpush1.bf16.msra.mxu0 %v587
  %781 = vmatprep.subr.bf16.mxu0 %v590
  %782 = vmatpush1.bf16.msra.mxu0 %v589
  %783 = vmatprep.subr.bf16.mxu0 %v592
  %784 = vmatpush1.bf16.msra.mxu0 %v591
  %785 = vmatprep.subr.bf16.mxu0 %v594
  %786 = vmatpush1.bf16.msra.mxu0 %v593
  %787 = vmatprep.subr.bf16.mxu0 %v596
  %788 = vmatpush1.bf16.msra.mxu0 %v595
  %789 = vmatprep.subr.bf16.mxu0 %v598
  %790 = vmatpush1.bf16.msra.mxu0 %v597
  %791 = vmatprep.subr.bf16.mxu0 %v600
  %792 = vmatpush1.bf16.msra.mxu0 %v599
  %793 = vmatprep.subr.bf16.mxu0 %v602
  %794 = vmatpush1.bf16.msra.mxu0 %v601
  %795 = vmatprep.subr.bf16.mxu0 %v604
  %796 = vmatpush1.bf16.msra.mxu0 %v603
  %797 = vmatprep.subr.bf16.mxu0 %v606
  %798 = vmatpush1.bf16.msra.mxu0 %v605
  %799 = vmatprep.subr.bf16.mxu0 %v608
  %800 = vmatpush1.bf16.msra.mxu0 %v607
  %801 = vmatprep.subr.bf16.mxu0 %v610
  %802 = vmatpush1.bf16.msra.mxu0 %v609
  %803 = vmatprep.mubr.bf16.mxu0 %v708
  %804 = vmatmul.mubr.bf16.gmra.mrb[0].mxu0 %v707
  %v805 = vpop.f32.mrb[0].mxu0
  %v806 = vadd.f32 0.0, %v805
  %v807 = vpop.f32.mrb[0].mxu0
  %v808 = vadd.f32 0.0, %v807
  %v809 = vpop.f32.mrb[0].mxu0
  %v810 = vadd.f32 0.0, %v809
  %v811 = vpop.f32.mrb[0].mxu0
  %v812 = vadd.f32 0.0, %v811
  %813 = vmatprep.mubr.bf16.mxu0 %v710
  %814 = vmatmul.mubr.bf16.gmra.mrb[0].mxu0 %v709
  %v815 = vpop.f32.mrb[0].mxu0
  %v816 = vadd.f32 0.0, %v815
  %v817 = vpop.f32.mrb[0].mxu0
  %v818 = vadd.f32 0.0, %v817
  %v819 = vpop.f32.mrb[0].mxu0
  %v820 = vadd.f32 0.0, %v819
  %v821 = vpop.f32.mrb[0].mxu0
  %v822 = vadd.f32 0.0, %v821
  %823 = vmatprep.mubr.bf16.mxu0 %v712
  %824 = vmatmul.mubr.bf16.gmra.mrb[0].mxu0 %v711
  %v825 = vpop.f32.mrb[0].mxu0
  %v826 = vadd.f32 0.0, %v825
  %v827 = vpop.f32.mrb[0].mxu0
  %v828 = vadd.f32 0.0, %v827
  %v829 = vpop.f32.mrb[0].mxu0
  %v830 = vadd.f32 0.0, %v829
  %v831 = vpop.f32.mrb[0].mxu0
  %v832 = vadd.f32 0.0, %v831
  %833 = vmatprep.mubr.bf16.mxu0 %v714
  %834 = vmatmul.mubr.bf16.gmra.mrb[0].mxu0 %v713
  %v835 = vpop.f32.mrb[0].mxu0
  %v836 = vadd.f32 0.0, %v835
  %v837 = vpop.f32.mrb[0].mxu0
  %v838 = vadd.f32 0.0, %v837
  %v839 = vpop.f32.mrb[0].mxu0
  %v840 = vadd.f32 0.0, %v839
  %v841 = vpop.f32.mrb[0].mxu0
  %v842 = vadd.f32 0.0, %v841
  %843 = vmatprep.mubr.bf16.mxu0 %v716
  %844 = vmatmul.mubr.bf16.gmra.mrb[0].mxu0 %v715
  %v845 = vpop.f32.mrb[0].mxu0
  %v846 = vadd.f32 0.0, %v845
  %v847 = vpop.f32.mrb[0].mxu0
  %v848 = vadd.f32 0.0, %v847
  %v849 = vpop.f32.mrb[0].mxu0
  %v850 = vadd.f32 0.0, %v849
  %v851 = vpop.f32.mrb[0].mxu0
  %v852 = vadd.f32 0.0, %v851
  %853 = vmatprep.mubr.bf16.mxu0 %v718
  %854 = vmatmul.mubr.bf16.gmra.mrb[0].mxu0 %v717
  %v855 = vpop.f32.mrb[0].mxu0
  %v856 = vadd.f32 0.0, %v855
  %v857 = vpop.f32.mrb[0].mxu0
  %v858 = vadd.f32 0.0, %v857
  %v859 = vpop.f32.mrb[0].mxu0
  %v860 = vadd.f32 0.0, %v859
  %v861 = vpop.f32.mrb[0].mxu0
  %v862 = vadd.f32 0.0, %v861
  %863 = vmatprep.mubr.bf16.mxu0 %v720
  %864 = vmatmul.mubr.bf16.gmra.mrb[0].mxu0 %v719
  %v865 = vpop.f32.mrb[0].mxu0
  %v866 = vadd.f32 0.0, %v865
  %v867 = vpop.f32.mrb[0].mxu0
  %v868 = vadd.f32 0.0, %v867
  %v869 = vpop.f32.mrb[0].mxu0
  %v870 = vadd.f32 0.0, %v869
  %v871 = vpop.f32.mrb[0].mxu0
  %v872 = vadd.f32 0.0, %v871
  %873 = vmatprep.mubr.bf16.mxu0 %v722
  %874 = vmatmul.mubr.bf16.gmra.mrb[0].mxu0 %v721
  %v875 = vpop.f32.mrb[0].mxu0
  %v876 = vadd.f32 0.0, %v875
  %v877 = vpop.f32.mrb[0].mxu0
  %v878 = vadd.f32 0.0, %v877
  %v879 = vpop.f32.mrb[0].mxu0
  %v880 = vadd.f32 0.0, %v879
  %v881 = vpop.f32.mrb[0].mxu0
  %v882 = vadd.f32 0.0, %v881
  %883 = vmatprep.mubr.bf16.mxu0 %v724
  %884 = vmatmul.mubr.bf16.gmra.mrb[0].mxu0 %v723
  %v885 = vpop.f32.mrb[0].mxu0
  %v886 = vadd.f32 0.0, %v885
  %v887 = vpop.f32.mrb[0].mxu0
  %v888 = vadd.f32 0.0, %v887
  %v889 = vpop.f32.mrb[0].mxu0
  %v890 = vadd.f32 0.0, %v889
  %v891 = vpop.f32.mrb[0].mxu0
  %v892 = vadd.f32 0.0, %v891
  %893 = vmatprep.mubr.bf16.mxu0 %v726
  %894 = vmatmul.mubr.bf16.gmra.mrb[0].mxu0 %v725
  %v895 = vpop.f32.mrb[0].mxu0
  %v896 = vadd.f32 0.0, %v895
  %v897 = vpop.f32.mrb[0].mxu0
  %v898 = vadd.f32 0.0, %v897
  %v899 = vpop.f32.mrb[0].mxu0
  %v900 = vadd.f32 0.0, %v899
  %v901 = vpop.f32.mrb[0].mxu0
  %v902 = vadd.f32 0.0, %v901
  %903 = vmatprep.mubr.bf16.mxu0 %v728
  %904 = vmatmul.mubr.bf16.gmra.mrb[0].mxu0 %v727
  %v905 = vpop.f32.mrb[0].mxu0
  %v906 = vadd.f32 0.0, %v905
  %v907 = vpop.f32.mrb[0].mxu0
  %v908 = vadd.f32 0.0, %v907
  %v909 = vpop.f32.mrb[0].mxu0
  %v910 = vadd.f32 0.0, %v909
  %v911 = vpop.f32.mrb[0].mxu0
  %v912 = vadd.f32 0.0, %v911
  %913 = vmatprep.mubr.bf16.mxu0 %v730
  %914 = vmatmul.mubr.bf16.gmra.mrb[0].mxu0 %v729
  %v915 = vpop.f32.mrb[0].mxu0
  %v916 = vadd.f32 0.0, %v915
  %v917 = vpop.f32.mrb[0].mxu0
  %v918 = vadd.f32 0.0, %v917
  %v919 = vpop.f32.mrb[0].mxu0
  %v920 = vadd.f32 0.0, %v919
  %v921 = vpop.f32.mrb[0].mxu0
  %v922 = vadd.f32 0.0, %v921
  %923 = vmatprep.mubr.bf16.mxu0 %v732
  %924 = vmatmul.mubr.bf16.gmra.mrb[0].mxu0 %v731
  %v925 = vpop.f32.mrb[0].mxu0
  %v926 = vadd.f32 0.0, %v925
  %v927 = vpop.f32.mrb[0].mxu0
  %v928 = vadd.f32 0.0, %v927
  %v929 = vpop.f32.mrb[0].mxu0
  %v930 = vadd.f32 0.0, %v929
  %v931 = vpop.f32.mrb[0].mxu0
  %v932 = vadd.f32 0.0, %v931
  %933 = vmatprep.mubr.bf16.mxu0 %v734
  %934 = vmatmul.mubr.bf16.gmra.mrb[0].mxu0 %v733
  %v935 = vpop.f32.mrb[0].mxu0
  %v936 = vadd.f32 0.0, %v935
  %v937 = vpop.f32.mrb[0].mxu0
  %v938 = vadd.f32 0.0, %v937
  %v939 = vpop.f32.mrb[0].mxu0
  %v940 = vadd.f32 0.0, %v939
  %v941 = vpop.f32.mrb[0].mxu0
  %v942 = vadd.f32 0.0, %v941
  %943 = vmatprep.mubr.bf16.mxu0 %v736
  %944 = vmatmul.mubr.bf16.gmra.mrb[0].mxu0 %v735
  %v945 = vpop.f32.mrb[0].mxu0
  %v946 = vadd.f32 0.0, %v945
  %v947 = vpop.f32.mrb[0].mxu0
  %v948 = vadd.f32 0.0, %v947
  %v949 = vpop.f32.mrb[0].mxu0
  %v950 = vadd.f32 0.0, %v949
  %v951 = vpop.f32.mrb[0].mxu0
  %v952 = vadd.f32 0.0, %v951
  %953 = vmatprep.mubr.bf16.mxu0 %v738
  %954 = vmatmul.mubr.bf16.gmra.mrb[0].mxu0 %v737
  %v955 = vpop.f32.mrb[0].mxu0
  %v956 = vadd.f32 0.0, %v955
  %v957 = vpop.f32.mrb[0].mxu0
  %v958 = vadd.f32 0.0, %v957
  %v959 = vpop.f32.mrb[0].mxu0
  %v960 = vadd.f32 0.0, %v959
  %v961 = vpop.f32.mrb[0].mxu0
  %v962 = vadd.f32 0.0, %v961
  %963 = vdwg.mxu0
  %v996 = vunpack.c.l.b16 %v289
  %v997 = vunpack.c.h.b16 %v289
  %v998 = vunpack.c.l.b16 %v290
  %v999 = vunpack.c.h.b16 %v290
  %v1000 = vunpack.c.l.b16 %v291
  %v1001 = vunpack.c.h.b16 %v291
  %v1002 = vunpack.c.l.b16 %v292
  %v1003 = vunpack.c.h.b16 %v292
  %v1004 = vunpack.c.l.b16 %v293
  %v1005 = vunpack.c.h.b16 %v293
  %v1006 = vunpack.c.l.b16 %v294
  %v1007 = vunpack.c.h.b16 %v294
  %v1008 = vunpack.c.l.b16 %v295
  %v1009 = vunpack.c.h.b16 %v295
  %v1010 = vunpack.c.l.b16 %v296
  %v1011 = vunpack.c.h.b16 %v296
  %v1012 = vunpack.c.l.b16 %v297
  %v1013 = vunpack.c.h.b16 %v297
  %v1014 = vunpack.c.l.b16 %v298
  %v1015 = vunpack.c.h.b16 %v298
  %v1016 = vunpack.c.l.b16 %v299
  %v1017 = vunpack.c.h.b16 %v299
  %v1018 = vunpack.c.l.b16 %v300
  %v1019 = vunpack.c.h.b16 %v300
  %v1020 = vunpack.c.l.b16 %v301
  %v1021 = vunpack.c.h.b16 %v301
  %v1022 = vunpack.c.l.b16 %v302
  %v1023 = vunpack.c.h.b16 %v302
  %v1024 = vunpack.c.l.b16 %v303
  %v1025 = vunpack.c.h.b16 %v303
  %v1026 = vunpack.c.l.b16 %v304
  %v1027 = vunpack.c.h.b16 %v304
  %v1028 = vunpack.c.l.b16 %v305
  %v1029 = vunpack.c.h.b16 %v305
  %v1030 = vunpack.c.l.b16 %v306
  %v1031 = vunpack.c.h.b16 %v306
  %v1032 = vunpack.c.l.b16 %v307
  %v1033 = vunpack.c.h.b16 %v307
  %v1034 = vunpack.c.l.b16 %v308
  %v1035 = vunpack.c.h.b16 %v308
  %v1036 = vunpack.c.l.b16 %v309
  %v1037 = vunpack.c.h.b16 %v309
  %v1038 = vunpack.c.l.b16 %v310
  %v1039 = vunpack.c.h.b16 %v310
  %v1040 = vunpack.c.l.b16 %v311
  %v1041 = vunpack.c.h.b16 %v311
  %v1042 = vunpack.c.l.b16 %v312
  %v1043 = vunpack.c.h.b16 %v312
  %v1044 = vunpack.c.l.b16 %v313
  %v1045 = vunpack.c.h.b16 %v313
  %v1046 = vunpack.c.l.b16 %v314
  %v1047 = vunpack.c.h.b16 %v314
  %v1048 = vunpack.c.l.b16 %v315
  %v1049 = vunpack.c.h.b16 %v315
  %v1050 = vunpack.c.l.b16 %v316
  %v1051 = vunpack.c.h.b16 %v316
  %v1052 = vunpack.c.l.b16 %v317
  %v1053 = vunpack.c.h.b16 %v317
  %v1054 = vunpack.c.l.b16 %v318
  %v1055 = vunpack.c.h.b16 %v318
  %v1056 = vunpack.c.l.b16 %v319
  %v1057 = vunpack.c.h.b16 %v319
  %v1058 = vunpack.c.l.b16 %v320
  %v1059 = vunpack.c.h.b16 %v320
  %v1060 = vpack.c.b16 %v998, %v996
  %v1061 = vpack.c.b16 %v999, %v997
  %v1062 = vpack.c.b16 %v1002, %v1000
  %v1063 = vpack.c.b16 %v1003, %v1001
  %v1064 = vpack.c.b16 %v1006, %v1004
  %v1065 = vpack.c.b16 %v1007, %v1005
  %v1066 = vpack.c.b16 %v1010, %v1008
  %v1067 = vpack.c.b16 %v1011, %v1009
  %v1068 = vpack.c.b16 %v1014, %v1012
  %v1069 = vpack.c.b16 %v1015, %v1013
  %v1070 = vpack.c.b16 %v1018, %v1016
  %v1071 = vpack.c.b16 %v1019, %v1017
  %v1072 = vpack.c.b16 %v1022, %v1020
  %v1073 = vpack.c.b16 %v1023, %v1021
  %v1074 = vpack.c.b16 %v1026, %v1024
  %v1075 = vpack.c.b16 %v1027, %v1025
  %v1076 = vpack.c.b16 %v1030, %v1028
  %v1077 = vpack.c.b16 %v1031, %v1029
  %v1078 = vpack.c.b16 %v1034, %v1032
  %v1079 = vpack.c.b16 %v1035, %v1033
  %v1080 = vpack.c.b16 %v1038, %v1036
  %v1081 = vpack.c.b16 %v1039, %v1037
  %v1082 = vpack.c.b16 %v1042, %v1040
  %v1083 = vpack.c.b16 %v1043, %v1041
  %v1084 = vpack.c.b16 %v1046, %v1044
  %v1085 = vpack.c.b16 %v1047, %v1045
  %v1086 = vpack.c.b16 %v1050, %v1048
  %v1087 = vpack.c.b16 %v1051, %v1049
  %v1088 = vpack.c.b16 %v1054, %v1052
  %v1089 = vpack.c.b16 %v1055, %v1053
  %v1090 = vpack.c.b16 %v1058, %v1056
  %v1091 = vpack.c.b16 %v1059, %v1057
  %1124 = vmatprep.subr.bf16.mxu0 %v322
  %1125 = vmatpush1.bf16.msra.mxu0 %v321
  %1126 = vmatprep.subr.bf16.mxu0 %v324
  %1127 = vmatpush1.bf16.msra.mxu0 %v323
  %1128 = vmatprep.subr.bf16.mxu0 %v326
  %1129 = vmatpush1.bf16.msra.mxu0 %v325
  %1130 = vmatprep.subr.bf16.mxu0 %v328
  %1131 = vmatpush1.bf16.msra.mxu0 %v327
  %1132 = vmatprep.subr.bf16.mxu0 %v330
  %1133 = vmatpush1.bf16.msra.mxu0 %v329
  %1134 = vmatprep.subr.bf16.mxu0 %v332
  %1135 = vmatpush1.bf16.msra.mxu0 %v331
  %1136 = vmatprep.subr.bf16.mxu0 %v334
  %1137 = vmatpush1.bf16.msra.mxu0 %v333
  %1138 = vmatprep.subr.bf16.mxu0 %v336
  %1139 = vmatpush1.bf16.msra.mxu0 %v335
  %1140 = vmatprep.subr.bf16.mxu0 %v338
  %1141 = vmatpush1.bf16.msra.mxu0 %v337
  %1142 = vmatprep.subr.bf16.mxu0 %v340
  %1143 = vmatpush1.bf16.msra.mxu0 %v339
  %1144 = vmatprep.subr.bf16.mxu0 %v342
  %1145 = vmatpush1.bf16.msra.mxu0 %v341
  %1146 = vmatprep.subr.bf16.mxu0 %v344
  %1147 = vmatpush1.bf16.msra.mxu0 %v343
  %1148 = vmatprep.subr.bf16.mxu0 %v346
  %1149 = vmatpush1.bf16.msra.mxu0 %v345
  %1150 = vmatprep.subr.bf16.mxu0 %v348
  %1151 = vmatpush1.bf16.msra.mxu0 %v347
  %1152 = vmatprep.subr.bf16.mxu0 %v350
  %1153 = vmatpush1.bf16.msra.mxu0 %v349
  %1154 = vmatprep.subr.bf16.mxu0 %v352
  %1155 = vmatpush1.bf16.msra.mxu0 %v351
  %1156 = vmatprep.mubr.bf16.mxu0 %v1061
  %1157 = vmatmul.mubr.bf16.gmra.mrb[0].mxu0 %v1060
  %v1158 = vpop.f32.mrb[0].mxu0
  %v1159 = vadd.f32 %v806, %v1158
  %v1160 = vpop.f32.mrb[0].mxu0
  %v1161 = vadd.f32 %v808, %v1160
  %v1162 = vpop.f32.mrb[0].mxu0
  %v1163 = vadd.f32 %v810, %v1162
  %v1164 = vpop.f32.mrb[0].mxu0
  %v1165 = vadd.f32 %v812, %v1164
  %1166 = vmatprep.mubr.bf16.mxu0 %v1063
  %1167 = vmatmul.mubr.bf16.gmra.mrb[0].mxu0 %v1062
  %v1168 = vpop.f32.mrb[0].mxu0
  %v1169 = vadd.f32 %v816, %v1168
  %v1170 = vpop.f32.mrb[0].mxu0
  %v1171 = vadd.f32 %v818, %v1170
  %v1172 = vpop.f32.mrb[0].mxu0
  %v1173 = vadd.f32 %v820, %v1172
  %v1174 = vpop.f32.mrb[0].mxu0
  %v1175 = vadd.f32 %v822, %v1174
  %1176 = vmatprep.mubr.bf16.mxu0 %v1065
  %1177 = vmatmul.mubr.bf16.gmra.mrb[0].mxu0 %v1064
  %v1178 = vpop.f32.mrb[0].mxu0
  %v1179 = vadd.f32 %v826, %v1178
  %v1180 = vpop.f32.mrb[0].mxu0
  %v1181 = vadd.f32 %v828, %v1180
  %v1182 = vpop.f32.mrb[0].mxu0
  %v1183 = vadd.f32 %v830, %v1182
  %v1184 = vpop.f32.mrb[0].mxu0
  %v1185 = vadd.f32 %v832, %v1184
  %1186 = vmatprep.mubr.bf16.mxu0 %v1067
  %1187 = vmatmul.mubr.bf16.gmra.mrb[0].mxu0 %v1066
  %v1188 = vpop.f32.mrb[0].mxu0
  %v1189 = vadd.f32 %v836, %v1188
  %v1190 = vpop.f32.mrb[0].mxu0
  %v1191 = vadd.f32 %v838, %v1190
  %v1192 = vpop.f32.mrb[0].mxu0
  %v1193 = vadd.f32 %v840, %v1192
  %v1194 = vpop.f32.mrb[0].mxu0
  %v1195 = vadd.f32 %v842, %v1194
  %1196 = vmatprep.mubr.bf16.mxu0 %v1069
  %1197 = vmatmul.mubr.bf16.gmra.mrb[0].mxu0 %v1068
  %v1198 = vpop.f32.mrb[0].mxu0
  %v1199 = vadd.f32 %v846, %v1198
  %v1200 = vpop.f32.mrb[0].mxu0
  %v1201 = vadd.f32 %v848, %v1200
  %v1202 = vpop.f32.mrb[0].mxu0
  %v1203 = vadd.f32 %v850, %v1202
  %v1204 = vpop.f32.mrb[0].mxu0
  %v1205 = vadd.f32 %v852, %v1204
  %1206 = vmatprep.mubr.bf16.mxu0 %v1071
  %1207 = vmatmul.mubr.bf16.gmra.mrb[0].mxu0 %v1070
  %v1208 = vpop.f32.mrb[0].mxu0
  %v1209 = vadd.f32 %v856, %v1208
  %v1210 = vpop.f32.mrb[0].mxu0
  %v1211 = vadd.f32 %v858, %v1210
  %v1212 = vpop.f32.mrb[0].mxu0
  %v1213 = vadd.f32 %v860, %v1212
  %v1214 = vpop.f32.mrb[0].mxu0
  %v1215 = vadd.f32 %v862, %v1214
  %1216 = vmatprep.mubr.bf16.mxu0 %v1073
  %1217 = vmatmul.mubr.bf16.gmra.mrb[0].mxu0 %v1072
  %v1218 = vpop.f32.mrb[0].mxu0
  %v1219 = vadd.f32 %v866, %v1218
  %v1220 = vpop.f32.mrb[0].mxu0
  %v1221 = vadd.f32 %v868, %v1220
  %v1222 = vpop.f32.mrb[0].mxu0
  %v1223 = vadd.f32 %v870, %v1222
  %v1224 = vpop.f32.mrb[0].mxu0
  %v1225 = vadd.f32 %v872, %v1224
  %1226 = vmatprep.mubr.bf16.mxu0 %v1075
  %1227 = vmatmul.mubr.bf16.gmra.mrb[0].mxu0 %v1074
  %v1228 = vpop.f32.mrb[0].mxu0
  %v1229 = vadd.f32 %v876, %v1228
  %v1230 = vpop.f32.mrb[0].mxu0
  %v1231 = vadd.f32 %v878, %v1230
  %v1232 = vpop.f32.mrb[0].mxu0
  %v1233 = vadd.f32 %v880, %v1232
  %v1234 = vpop.f32.mrb[0].mxu0
  %v1235 = vadd.f32 %v882, %v1234
  %1236 = vmatprep.mubr.bf16.mxu0 %v1077
  %1237 = vmatmul.mubr.bf16.gmra.mrb[0].mxu0 %v1076
  %v1238 = vpop.f32.mrb[0].mxu0
  %v1239 = vadd.f32 %v886, %v1238
  %v1240 = vpop.f32.mrb[0].mxu0
  %v1241 = vadd.f32 %v888, %v1240
  %v1242 = vpop.f32.mrb[0].mxu0
  %v1243 = vadd.f32 %v890, %v1242
  %v1244 = vpop.f32.mrb[0].mxu0
  %v1245 = vadd.f32 %v892, %v1244
  %1246 = vmatprep.mubr.bf16.mxu0 %v1079
  %1247 = vmatmul.mubr.bf16.gmra.mrb[0].mxu0 %v1078
  %v1248 = vpop.f32.mrb[0].mxu0
  %v1249 = vadd.f32 %v896, %v1248
  %v1250 = vpop.f32.mrb[0].mxu0
  %v1251 = vadd.f32 %v898, %v1250
  %v1252 = vpop.f32.mrb[0].mxu0
  %v1253 = vadd.f32 %v900, %v1252
  %v1254 = vpop.f32.mrb[0].mxu0
  %v1255 = vadd.f32 %v902, %v1254
  %1256 = vmatprep.mubr.bf16.mxu0 %v1081
  %1257 = vmatmul.mubr.bf16.gmra.mrb[0].mxu0 %v1080
  %v1258 = vpop.f32.mrb[0].mxu0
  %v1259 = vadd.f32 %v906, %v1258
  %v1260 = vpop.f32.mrb[0].mxu0
  %v1261 = vadd.f32 %v908, %v1260
  %v1262 = vpop.f32.mrb[0].mxu0
  %v1263 = vadd.f32 %v910, %v1262
  %v1264 = vpop.f32.mrb[0].mxu0
  %v1265 = vadd.f32 %v912, %v1264
  %1266 = vmatprep.mubr.bf16.mxu0 %v1083
  %1267 = vmatmul.mubr.bf16.gmra.mrb[0].mxu0 %v1082
  %v1268 = vpop.f32.mrb[0].mxu0
  %v1269 = vadd.f32 %v916, %v1268
  %v1270 = vpop.f32.mrb[0].mxu0
  %v1271 = vadd.f32 %v918, %v1270
  %v1272 = vpop.f32.mrb[0].mxu0
  %v1273 = vadd.f32 %v920, %v1272
  %v1274 = vpop.f32.mrb[0].mxu0
  %v1275 = vadd.f32 %v922, %v1274
  %1276 = vmatprep.mubr.bf16.mxu0 %v1085
  %1277 = vmatmul.mubr.bf16.gmra.mrb[0].mxu0 %v1084
  %v1278 = vpop.f32.mrb[0].mxu0
  %v1279 = vadd.f32 %v926, %v1278
  %v1280 = vpop.f32.mrb[0].mxu0
  %v1281 = vadd.f32 %v928, %v1280
  %v1282 = vpop.f32.mrb[0].mxu0
  %v1283 = vadd.f32 %v930, %v1282
  %v1284 = vpop.f32.mrb[0].mxu0
  %v1285 = vadd.f32 %v932, %v1284
  %1286 = vmatprep.mubr.bf16.mxu0 %v1087
  %1287 = vmatmul.mubr.bf16.gmra.mrb[0].mxu0 %v1086
  %v1288 = vpop.f32.mrb[0].mxu0
  %v1289 = vadd.f32 %v936, %v1288
  %v1290 = vpop.f32.mrb[0].mxu0
  %v1291 = vadd.f32 %v938, %v1290
  %v1292 = vpop.f32.mrb[0].mxu0
  %v1293 = vadd.f32 %v940, %v1292
  %v1294 = vpop.f32.mrb[0].mxu0
  %v1295 = vadd.f32 %v942, %v1294
  %1296 = vmatprep.mubr.bf16.mxu0 %v1089
  %1297 = vmatmul.mubr.bf16.gmra.mrb[0].mxu0 %v1088
  %v1298 = vpop.f32.mrb[0].mxu0
  %v1299 = vadd.f32 %v946, %v1298
  %v1300 = vpop.f32.mrb[0].mxu0
  %v1301 = vadd.f32 %v948, %v1300
  %v1302 = vpop.f32.mrb[0].mxu0
  %v1303 = vadd.f32 %v950, %v1302
  %v1304 = vpop.f32.mrb[0].mxu0
  %v1305 = vadd.f32 %v952, %v1304
  %1306 = vmatprep.mubr.bf16.mxu0 %v1091
  %1307 = vmatmul.mubr.bf16.gmra.mrb[0].mxu0 %v1090
  %v1308 = vpop.f32.mrb[0].mxu0
  %v1309 = vadd.f32 %v956, %v1308
  %v1310 = vpop.f32.mrb[0].mxu0
  %v1311 = vadd.f32 %v958, %v1310
  %v1312 = vpop.f32.mrb[0].mxu0
  %v1313 = vadd.f32 %v960, %v1312
  %v1314 = vpop.f32.mrb[0].mxu0
  %v1315 = vadd.f32 %v962, %v1314
  %1316 = vdwg.mxu0
  %1317 = vrot.lane.b32.xlu0 %v29, 15
  %v1318 = vpop.permute.xlu0 %1317
  %1319 = vrot.lane.b32.xlu0 %v31, 15
  %v1320 = vpop.permute.xlu0 %1319
  %1321 = vrot.lane.b32.xlu0 %v33, 15
  %v1322 = vpop.permute.xlu0 %1321
  %1323 = vrot.lane.b32.xlu0 %v35, 15
  %v1324 = vpop.permute.xlu0 %1323
  %1325 = vrot.lane.b32.xlu0 %v37, 15
  %v1326 = vpop.permute.xlu0 %1325
  %1327 = vrot.lane.b32.xlu0 %v39, 15
  %v1328 = vpop.permute.xlu0 %1327
  %1329 = vrot.lane.b32.xlu0 %v41, 15
  %v1330 = vpop.permute.xlu0 %1329
  %1331 = vrot.lane.b32.xlu0 %v43, 15
  %v1332 = vpop.permute.xlu0 %1331
  %1333 = vrot.lane.b32.xlu0 %v45, 15
  %v1334 = vpop.permute.xlu0 %1333
  %1335 = vrot.lane.b32.xlu0 %v47, 15
  %v1336 = vpop.permute.xlu0 %1335
  %1337 = vrot.lane.b32.xlu0 %v49, 15
  %v1338 = vpop.permute.xlu0 %1337
  %1339 = vrot.lane.b32.xlu0 %v51, 15
  %v1340 = vpop.permute.xlu0 %1339
  %1341 = vrot.lane.b32.xlu0 %v53, 15
  %v1342 = vpop.permute.xlu0 %1341
  %1343 = vrot.lane.b32.xlu0 %v55, 15
  %v1344 = vpop.permute.xlu0 %1343
  %1345 = vrot.lane.b32.xlu0 %v57, 15
  %v1346 = vpop.permute.xlu0 %1345
  %1347 = vrot.lane.b32.xlu0 %v59, 15
  %v1348 = vpop.permute.xlu0 %1347
  %1349 = vrot.lane.b32.xlu0 %v61, 15
  %v1350 = vpop.permute.xlu0 %1349
  %1351 = vrot.lane.b32.xlu0 %v63, 15
  %v1352 = vpop.permute.xlu0 %1351
  %1353 = vrot.lane.b32.xlu0 %v65, 15
  %v1354 = vpop.permute.xlu0 %1353
  %1355 = vrot.lane.b32.xlu0 %v67, 15
  %v1356 = vpop.permute.xlu0 %1355
  %1357 = vrot.lane.b32.xlu0 %v69, 15
  %v1358 = vpop.permute.xlu0 %1357
  %1359 = vrot.lane.b32.xlu0 %v71, 15
  %v1360 = vpop.permute.xlu0 %1359
  %1361 = vrot.lane.b32.xlu0 %v73, 15
  %v1362 = vpop.permute.xlu0 %1361
  %1363 = vrot.lane.b32.xlu0 %v75, 15
  %v1364 = vpop.permute.xlu0 %1363
  %1365 = vrot.lane.b32.xlu0 %v77, 15
  %v1366 = vpop.permute.xlu0 %1365
  %1367 = vrot.lane.b32.xlu0 %v79, 15
  %v1368 = vpop.permute.xlu0 %1367
  %1369 = vrot.lane.b32.xlu0 %v81, 15
  %v1370 = vpop.permute.xlu0 %1369
  %1371 = vrot.lane.b32.xlu0 %v83, 15
  %v1372 = vpop.permute.xlu0 %1371
  %1373 = vrot.lane.b32.xlu0 %v85, 15
  %v1374 = vpop.permute.xlu0 %1373
  %1375 = vrot.lane.b32.xlu0 %v87, 15
  %v1376 = vpop.permute.xlu0 %1375
  %1377 = vrot.lane.b32.xlu0 %v89, 15
  %v1378 = vpop.permute.xlu0 %1377
  %1379 = vrot.lane.b32.xlu0 %v91, 15
  %v1380 = vpop.permute.xlu0 %1379
  %1381 = vrot.lane.b32.xlu0 %v30, 15
  %v1382 = vpop.permute.xlu0 %1381
  %1383 = vrot.lane.b32.xlu0 %v32, 15
  %v1384 = vpop.permute.xlu0 %1383
  %1385 = vrot.lane.b32.xlu0 %v34, 15
  %v1386 = vpop.permute.xlu0 %1385
  %1387 = vrot.lane.b32.xlu0 %v36, 15
  %v1388 = vpop.permute.xlu0 %1387
  %1389 = vrot.lane.b32.xlu0 %v38, 15
  %v1390 = vpop.permute.xlu0 %1389
  %1391 = vrot.lane.b32.xlu0 %v40, 15
  %v1392 = vpop.permute.xlu0 %1391
  %1393 = vrot.lane.b32.xlu0 %v42, 15
  %v1394 = vpop.permute.xlu0 %1393
  %1395 = vrot.lane.b32.xlu0 %v44, 15
  %v1396 = vpop.permute.xlu0 %1395
  %1397 = vrot.lane.b32.xlu0 %v46, 15
  %v1398 = vpop.permute.xlu0 %1397
  %1399 = vrot.lane.b32.xlu0 %v48, 15
  %v1400 = vpop.permute.xlu0 %1399
  %1401 = vrot.lane.b32.xlu0 %v50, 15
  %v1402 = vpop.permute.xlu0 %1401
  %1403 = vrot.lane.b32.xlu0 %v52, 15
  %v1404 = vpop.permute.xlu0 %1403
  %1405 = vrot.lane.b32.xlu0 %v54, 15
  %v1406 = vpop.permute.xlu0 %1405
  %1407 = vrot.lane.b32.xlu0 %v56, 15
  %v1408 = vpop.permute.xlu0 %1407
  %1409 = vrot.lane.b32.xlu0 %v58, 15
  %v1410 = vpop.permute.xlu0 %1409
  %1411 = vrot.lane.b32.xlu0 %v60, 15
  %v1412 = vpop.permute.xlu0 %1411
  %1413 = vrot.lane.b32.xlu0 %v62, 15
  %v1414 = vpop.permute.xlu0 %1413
  %1415 = vrot.lane.b32.xlu0 %v64, 15
  %v1416 = vpop.permute.xlu0 %1415
  %1417 = vrot.lane.b32.xlu0 %v66, 15
  %v1418 = vpop.permute.xlu0 %1417
  %1419 = vrot.lane.b32.xlu0 %v68, 15
  %v1420 = vpop.permute.xlu0 %1419
  %1421 = vrot.lane.b32.xlu0 %v70, 15
  %v1422 = vpop.permute.xlu0 %1421
  %1423 = vrot.lane.b32.xlu0 %v72, 15
  %v1424 = vpop.permute.xlu0 %1423
  %1425 = vrot.lane.b32.xlu0 %v74, 15
  %v1426 = vpop.permute.xlu0 %1425
  %1427 = vrot.lane.b32.xlu0 %v76, 15
  %v1428 = vpop.permute.xlu0 %1427
  %1429 = vrot.lane.b32.xlu0 %v78, 15
  %v1430 = vpop.permute.xlu0 %1429
  %1431 = vrot.lane.b32.xlu0 %v80, 15
  %v1432 = vpop.permute.xlu0 %1431
  %1433 = vrot.lane.b32.xlu0 %v82, 15
  %v1434 = vpop.permute.xlu0 %1433
  %1435 = vrot.lane.b32.xlu0 %v84, 15
  %v1436 = vpop.permute.xlu0 %1435
  %1437 = vrot.lane.b32.xlu0 %v86, 15
  %v1438 = vpop.permute.xlu0 %1437
  %1439 = vrot.lane.b32.xlu0 %v88, 15
  %v1440 = vpop.permute.xlu0 %1439
  %1441 = vrot.lane.b32.xlu0 %v90, 15
  %v1442 = vpop.permute.xlu0 %1441
  %1443 = vrot.lane.b32.xlu0 %v92, 15
  %v1444 = vpop.permute.xlu0 %1443
  %vm1445 = vcmp.lt.s32.totalorder %v223, 15
  %v1446 = vsel %vm1445, %v1318, %v1382
  %v1447 = vsel %vm1445, %v1320, %v1384
  %v1448 = vsel %vm1445, %v1322, %v1386
  %v1449 = vsel %vm1445, %v1324, %v1388
  %v1450 = vsel %vm1445, %v1326, %v1390
  %v1451 = vsel %vm1445, %v1328, %v1392
  %v1452 = vsel %vm1445, %v1330, %v1394
  %v1453 = vsel %vm1445, %v1332, %v1396
  %v1454 = vsel %vm1445, %v1334, %v1398
  %v1455 = vsel %vm1445, %v1336, %v1400
  %v1456 = vsel %vm1445, %v1338, %v1402
  %v1457 = vsel %vm1445, %v1340, %v1404
  %v1458 = vsel %vm1445, %v1342, %v1406
  %v1459 = vsel %vm1445, %v1344, %v1408
  %v1460 = vsel %vm1445, %v1346, %v1410
  %v1461 = vsel %vm1445, %v1348, %v1412
  %v1462 = vsel %vm1445, %v1350, %v1414
  %v1463 = vsel %vm1445, %v1352, %v1416
  %v1464 = vsel %vm1445, %v1354, %v1418
  %v1465 = vsel %vm1445, %v1356, %v1420
  %v1466 = vsel %vm1445, %v1358, %v1422
  %v1467 = vsel %vm1445, %v1360, %v1424
  %v1468 = vsel %vm1445, %v1362, %v1426
  %v1469 = vsel %vm1445, %v1364, %v1428
  %v1470 = vsel %vm1445, %v1366, %v1430
  %v1471 = vsel %vm1445, %v1368, %v1432
  %v1472 = vsel %vm1445, %v1370, %v1434
  %v1473 = vsel %vm1445, %v1372, %v1436
  %v1474 = vsel %vm1445, %v1374, %v1438
  %v1475 = vsel %vm1445, %v1376, %v1440
  %v1476 = vsel %vm1445, %v1378, %v1442
  %v1477 = vsel %vm1445, %v1380, %v1444
  %v1478 = vsel %vm1445, %v1382, %v1318
  %v1479 = vsel %vm1445, %v1384, %v1320
  %v1480 = vsel %vm1445, %v1386, %v1322
  %v1481 = vsel %vm1445, %v1388, %v1324
  %v1482 = vsel %vm1445, %v1390, %v1326
  %v1483 = vsel %vm1445, %v1392, %v1328
  %v1484 = vsel %vm1445, %v1394, %v1330
  %v1485 = vsel %vm1445, %v1396, %v1332
  %v1486 = vsel %vm1445, %v1398, %v1334
  %v1487 = vsel %vm1445, %v1400, %v1336
  %v1488 = vsel %vm1445, %v1402, %v1338
  %v1489 = vsel %vm1445, %v1404, %v1340
  %v1490 = vsel %vm1445, %v1406, %v1342
  %v1491 = vsel %vm1445, %v1408, %v1344
  %v1492 = vsel %vm1445, %v1410, %v1346
  %v1493 = vsel %vm1445, %v1412, %v1348
  %v1494 = vsel %vm1445, %v1414, %v1350
  %v1495 = vsel %vm1445, %v1416, %v1352
  %v1496 = vsel %vm1445, %v1418, %v1354
  %v1497 = vsel %vm1445, %v1420, %v1356
  %v1498 = vsel %vm1445, %v1422, %v1358
  %v1499 = vsel %vm1445, %v1424, %v1360
  %v1500 = vsel %vm1445, %v1426, %v1362
  %v1501 = vsel %vm1445, %v1428, %v1364
  %v1502 = vsel %vm1445, %v1430, %v1366
  %v1503 = vsel %vm1445, %v1432, %v1368
  %v1504 = vsel %vm1445, %v1434, %v1370
  %v1505 = vsel %vm1445, %v1436, %v1372
  %v1506 = vsel %vm1445, %v1438, %v1374
  %v1507 = vsel %vm1445, %v1440, %v1376
  %v1508 = vsel %vm1445, %v1442, %v1378
  %v1509 = vsel %vm1445, %v1444, %v1380
  %s1510 = scalar_lea.vmem %s2, 512
  %v1511 = vld [vmem:[%s1510] sm:$0xff]
  %v1512 = vld [vmem:[%s1510 + $0x8] sm:$0xff]
  %v1513 = vld [vmem:[%s1510 + $0x10] sm:$0xff]
  %v1514 = vld [vmem:[%s1510 + $0x18] sm:$0xff]
  %v1515 = vld [vmem:[%s1510 + $0x20] sm:$0xff]
  %v1516 = vld [vmem:[%s1510 + $0x28] sm:$0xff]
  %v1517 = vld [vmem:[%s1510 + $0x30] sm:$0xff]
  %v1518 = vld [vmem:[%s1510 + $0x38] sm:$0xff]
  %v1519 = vld [vmem:[%s1510 + $0x40] sm:$0xff]
  %v1520 = vld [vmem:[%s1510 + $0x48] sm:$0xff]
  %v1521 = vld [vmem:[%s1510 + $0x50] sm:$0xff]
  %v1522 = vld [vmem:[%s1510 + $0x58] sm:$0xff]
  %v1523 = vld [vmem:[%s1510 + $0x60] sm:$0xff]
  %v1524 = vld [vmem:[%s1510 + $0x68] sm:$0xff]
  %v1525 = vld [vmem:[%s1510 + $0x70] sm:$0xff]
  %v1526 = vld [vmem:[%s1510 + $0x78] sm:$0xff]
  %v1527 = vld [vmem:[%s1510 + $0x80] sm:$0xff]
  %v1528 = vld [vmem:[%s1510 + $0x88] sm:$0xff]
  %v1529 = vld [vmem:[%s1510 + $0x90] sm:$0xff]
  %v1530 = vld [vmem:[%s1510 + $0x98] sm:$0xff]
  %v1531 = vld [vmem:[%s1510 + $0xa0] sm:$0xff]
  %v1532 = vld [vmem:[%s1510 + $0xa8] sm:$0xff]
  %v1533 = vld [vmem:[%s1510 + $0xb0] sm:$0xff]
  %v1534 = vld [vmem:[%s1510 + $0xb8] sm:$0xff]
  %v1535 = vld [vmem:[%s1510 + $0xc0] sm:$0xff]
  %v1536 = vld [vmem:[%s1510 + $0xc8] sm:$0xff]
  %v1537 = vld [vmem:[%s1510 + $0xd0] sm:$0xff]
  %v1538 = vld [vmem:[%s1510 + $0xd8] sm:$0xff]
  %v1539 = vld [vmem:[%s1510 + $0xe0] sm:$0xff]
  %v1540 = vld [vmem:[%s1510 + $0xe8] sm:$0xff]
  %v1541 = vld [vmem:[%s1510 + $0xf0] sm:$0xff]
  %v1542 = vld [vmem:[%s1510 + $0xf8] sm:$0xff]
  %v1543 = vpack.c.bf16 %v1479, %v1478
  %v1544 = vpack.c.bf16 %v1447, %v1446
  %v1545 = vpack.c.bf16 %v1481, %v1480
  %v1546 = vpack.c.bf16 %v1449, %v1448
  %v1547 = vpack.c.bf16 %v1483, %v1482
  %v1548 = vpack.c.bf16 %v1451, %v1450
  %v1549 = vpack.c.bf16 %v1485, %v1484
  %v1550 = vpack.c.bf16 %v1453, %v1452
  %v1551 = vpack.c.bf16 %v1487, %v1486
  %v1552 = vpack.c.bf16 %v1455, %v1454
  %v1553 = vpack.c.bf16 %v1489, %v1488
  %v1554 = vpack.c.bf16 %v1457, %v1456
  %v1555 = vpack.c.bf16 %v1491, %v1490
  %v1556 = vpack.c.bf16 %v1459, %v1458
  %v1557 = vpack.c.bf16 %v1493, %v1492
  %v1558 = vpack.c.bf16 %v1461, %v1460
  %v1559 = vpack.c.bf16 %v1495, %v1494
  %v1560 = vpack.c.bf16 %v1463, %v1462
  %v1561 = vpack.c.bf16 %v1497, %v1496
  %v1562 = vpack.c.bf16 %v1465, %v1464
  %v1563 = vpack.c.bf16 %v1499, %v1498
  %v1564 = vpack.c.bf16 %v1467, %v1466
  %v1565 = vpack.c.bf16 %v1501, %v1500
  %v1566 = vpack.c.bf16 %v1469, %v1468
  %v1567 = vpack.c.bf16 %v1503, %v1502
  %v1568 = vpack.c.bf16 %v1471, %v1470
  %v1569 = vpack.c.bf16 %v1505, %v1504
  %v1570 = vpack.c.bf16 %v1473, %v1472
  %v1571 = vpack.c.bf16 %v1507, %v1506
  %v1572 = vpack.c.bf16 %v1475, %v1474
  %v1573 = vpack.c.bf16 %v1509, %v1508
  %v1574 = vpack.c.bf16 %v1477, %v1476
  %v1607 = vunpack.c.l.b16 %v1511
  %v1608 = vunpack.c.h.b16 %v1511
  %v1609 = vunpack.c.l.b16 %v1512
  %v1610 = vunpack.c.h.b16 %v1512
  %v1611 = vunpack.c.l.b16 %v1513
  %v1612 = vunpack.c.h.b16 %v1513
  %v1613 = vunpack.c.l.b16 %v1514
  %v1614 = vunpack.c.h.b16 %v1514
  %v1615 = vunpack.c.l.b16 %v1515
  %v1616 = vunpack.c.h.b16 %v1515
  %v1617 = vunpack.c.l.b16 %v1516
  %v1618 = vunpack.c.h.b16 %v1516
  %v1619 = vunpack.c.l.b16 %v1517
  %v1620 = vunpack.c.h.b16 %v1517
  %v1621 = vunpack.c.l.b16 %v1518
  %v1622 = vunpack.c.h.b16 %v1518
  %v1623 = vunpack.c.l.b16 %v1519
  %v1624 = vunpack.c.h.b16 %v1519
  %v1625 = vunpack.c.l.b16 %v1520
  %v1626 = vunpack.c.h.b16 %v1520
  %v1627 = vunpack.c.l.b16 %v1521
  %v1628 = vunpack.c.h.b16 %v1521
  %v1629 = vunpack.c.l.b16 %v1522
  %v1630 = vunpack.c.h.b16 %v1522
  %v1631 = vunpack.c.l.b16 %v1523
  %v1632 = vunpack.c.h.b16 %v1523
  %v1633 = vunpack.c.l.b16 %v1524
  %v1634 = vunpack.c.h.b16 %v1524
  %v1635 = vunpack.c.l.b16 %v1525
  %v1636 = vunpack.c.h.b16 %v1525
  %v1637 = vunpack.c.l.b16 %v1526
  %v1638 = vunpack.c.h.b16 %v1526
  %v1639 = vunpack.c.l.b16 %v1527
  %v1640 = vunpack.c.h.b16 %v1527
  %v1641 = vunpack.c.l.b16 %v1528
  %v1642 = vunpack.c.h.b16 %v1528
  %v1643 = vunpack.c.l.b16 %v1529
  %v1644 = vunpack.c.h.b16 %v1529
  %v1645 = vunpack.c.l.b16 %v1530
  %v1646 = vunpack.c.h.b16 %v1530
  %v1647 = vunpack.c.l.b16 %v1531
  %v1648 = vunpack.c.h.b16 %v1531
  %v1649 = vunpack.c.l.b16 %v1532
  %v1650 = vunpack.c.h.b16 %v1532
  %v1651 = vunpack.c.l.b16 %v1533
  %v1652 = vunpack.c.h.b16 %v1533
  %v1653 = vunpack.c.l.b16 %v1534
  %v1654 = vunpack.c.h.b16 %v1534
  %v1655 = vunpack.c.l.b16 %v1535
  %v1656 = vunpack.c.h.b16 %v1535
  %v1657 = vunpack.c.l.b16 %v1536
  %v1658 = vunpack.c.h.b16 %v1536
  %v1659 = vunpack.c.l.b16 %v1537
  %v1660 = vunpack.c.h.b16 %v1537
  %v1661 = vunpack.c.l.b16 %v1538
  %v1662 = vunpack.c.h.b16 %v1538
  %v1663 = vunpack.c.l.b16 %v1539
  %v1664 = vunpack.c.h.b16 %v1539
  %v1665 = vunpack.c.l.b16 %v1540
  %v1666 = vunpack.c.h.b16 %v1540
  %v1667 = vunpack.c.l.b16 %v1541
  %v1668 = vunpack.c.h.b16 %v1541
  %v1669 = vunpack.c.l.b16 %v1542
  %v1670 = vunpack.c.h.b16 %v1542
  %v1671 = vpack.c.b16 %v1609, %v1607
  %v1672 = vpack.c.b16 %v1610, %v1608
  %v1673 = vpack.c.b16 %v1613, %v1611
  %v1674 = vpack.c.b16 %v1614, %v1612
  %v1675 = vpack.c.b16 %v1617, %v1615
  %v1676 = vpack.c.b16 %v1618, %v1616
  %v1677 = vpack.c.b16 %v1621, %v1619
  %v1678 = vpack.c.b16 %v1622, %v1620
  %v1679 = vpack.c.b16 %v1625, %v1623
  %v1680 = vpack.c.b16 %v1626, %v1624
  %v1681 = vpack.c.b16 %v1629, %v1627
  %v1682 = vpack.c.b16 %v1630, %v1628
  %v1683 = vpack.c.b16 %v1633, %v1631
  %v1684 = vpack.c.b16 %v1634, %v1632
  %v1685 = vpack.c.b16 %v1637, %v1635
  %v1686 = vpack.c.b16 %v1638, %v1636
  %v1687 = vpack.c.b16 %v1641, %v1639
  %v1688 = vpack.c.b16 %v1642, %v1640
  %v1689 = vpack.c.b16 %v1645, %v1643
  %v1690 = vpack.c.b16 %v1646, %v1644
  %v1691 = vpack.c.b16 %v1649, %v1647
  %v1692 = vpack.c.b16 %v1650, %v1648
  %v1693 = vpack.c.b16 %v1653, %v1651
  %v1694 = vpack.c.b16 %v1654, %v1652
  %v1695 = vpack.c.b16 %v1657, %v1655
  %v1696 = vpack.c.b16 %v1658, %v1656
  %v1697 = vpack.c.b16 %v1661, %v1659
  %v1698 = vpack.c.b16 %v1662, %v1660
  %v1699 = vpack.c.b16 %v1665, %v1663
  %v1700 = vpack.c.b16 %v1666, %v1664
  %v1701 = vpack.c.b16 %v1669, %v1667
  %v1702 = vpack.c.b16 %v1670, %v1668
  %1735 = vmatprep.subr.bf16.mxu0 %v1544
  %1736 = vmatpush1.bf16.msra.mxu0 %v1543
  %1737 = vmatprep.subr.bf16.mxu0 %v1546
  %1738 = vmatpush1.bf16.msra.mxu0 %v1545
  %1739 = vmatprep.subr.bf16.mxu0 %v1548
  %1740 = vmatpush1.bf16.msra.mxu0 %v1547
  %1741 = vmatprep.subr.bf16.mxu0 %v1550
  %1742 = vmatpush1.bf16.msra.mxu0 %v1549
  %1743 = vmatprep.subr.bf16.mxu0 %v1552
  %1744 = vmatpush1.bf16.msra.mxu0 %v1551
  %1745 = vmatprep.subr.bf16.mxu0 %v1554
  %1746 = vmatpush1.bf16.msra.mxu0 %v1553
  %1747 = vmatprep.subr.bf16.mxu0 %v1556
  %1748 = vmatpush1.bf16.msra.mxu0 %v1555
  %1749 = vmatprep.subr.bf16.mxu0 %v1558
  %1750 = vmatpush1.bf16.msra.mxu0 %v1557
  %1751 = vmatprep.subr.bf16.mxu0 %v1560
  %1752 = vmatpush1.bf16.msra.mxu0 %v1559
  %1753 = vmatprep.subr.bf16.mxu0 %v1562
  %1754 = vmatpush1.bf16.msra.mxu0 %v1561
  %1755 = vmatprep.subr.bf16.mxu0 %v1564
  %1756 = vmatpush1.bf16.msra.mxu0 %v1563
  %1757 = vmatprep.subr.bf16.mxu0 %v1566
  %1758 = vmatpush1.bf16.msra.mxu0 %v1565
  %1759 = vmatprep.subr.bf16.mxu0 %v1568
  %1760 = vmatpush1.bf16.msra.mxu0 %v1567
  %1761 = vmatprep.subr.bf16.mxu0 %v1570
  %1762 = vmatpush1.bf16.msra.mxu0 %v1569
  %1763 = vmatprep.subr.bf16.mxu0 %v1572
  %1764 = vmatpush1.bf16.msra.mxu0 %v1571
  %1765 = vmatprep.subr.bf16.mxu0 %v1574
  %1766 = vmatpush1.bf16.msra.mxu0 %v1573
  %1767 = vmatprep.mubr.bf16.mxu0 %v1672
  %1768 = vmatmul.mubr.bf16.gmra.mrb[0].mxu0 %v1671
  %v1769 = vpop.f32.mrb[0].mxu0
  %v1770 = vadd.f32 0.0, %v1769
  %v1771 = vpop.f32.mrb[0].mxu0
  %v1772 = vadd.f32 0.0, %v1771
  %v1773 = vpop.f32.mrb[0].mxu0
  %v1774 = vadd.f32 0.0, %v1773
  %v1775 = vpop.f32.mrb[0].mxu0
  %v1776 = vadd.f32 0.0, %v1775
  %1777 = vmatprep.mubr.bf16.mxu0 %v1674
  %1778 = vmatmul.mubr.bf16.gmra.mrb[0].mxu0 %v1673
  %v1779 = vpop.f32.mrb[0].mxu0
  %v1780 = vadd.f32 0.0, %v1779
  %v1781 = vpop.f32.mrb[0].mxu0
  %v1782 = vadd.f32 0.0, %v1781
  %v1783 = vpop.f32.mrb[0].mxu0
  %v1784 = vadd.f32 0.0, %v1783
  %v1785 = vpop.f32.mrb[0].mxu0
  %v1786 = vadd.f32 0.0, %v1785
  %1787 = vmatprep.mubr.bf16.mxu0 %v1676
  %1788 = vmatmul.mubr.bf16.gmra.mrb[0].mxu0 %v1675
  %v1789 = vpop.f32.mrb[0].mxu0
  %v1790 = vadd.f32 0.0, %v1789
  %v1791 = vpop.f32.mrb[0].mxu0
  %v1792 = vadd.f32 0.0, %v1791
  %v1793 = vpop.f32.mrb[0].mxu0
  %v1794 = vadd.f32 0.0, %v1793
  %v1795 = vpop.f32.mrb[0].mxu0
  %v1796 = vadd.f32 0.0, %v1795
  %1797 = vmatprep.mubr.bf16.mxu0 %v1678
  %1798 = vmatmul.mubr.bf16.gmra.mrb[0].mxu0 %v1677
  %v1799 = vpop.f32.mrb[0].mxu0
  %v1800 = vadd.f32 0.0, %v1799
  %v1801 = vpop.f32.mrb[0].mxu0
  %v1802 = vadd.f32 0.0, %v1801
  %v1803 = vpop.f32.mrb[0].mxu0
  %v1804 = vadd.f32 0.0, %v1803
  %v1805 = vpop.f32.mrb[0].mxu0
  %v1806 = vadd.f32 0.0, %v1805
  %1807 = vmatprep.mubr.bf16.mxu0 %v1680
  %1808 = vmatmul.mubr.bf16.gmra.mrb[0].mxu0 %v1679
  %v1809 = vpop.f32.mrb[0].mxu0
  %v1810 = vadd.f32 0.0, %v1809
  %v1811 = vpop.f32.mrb[0].mxu0
  %v1812 = vadd.f32 0.0, %v1811
  %v1813 = vpop.f32.mrb[0].mxu0
  %v1814 = vadd.f32 0.0, %v1813
  %v1815 = vpop.f32.mrb[0].mxu0
  %v1816 = vadd.f32 0.0, %v1815
  %1817 = vmatprep.mubr.bf16.mxu0 %v1682
  %1818 = vmatmul.mubr.bf16.gmra.mrb[0].mxu0 %v1681
  %v1819 = vpop.f32.mrb[0].mxu0
  %v1820 = vadd.f32 0.0, %v1819
  %v1821 = vpop.f32.mrb[0].mxu0
  %v1822 = vadd.f32 0.0, %v1821
  %v1823 = vpop.f32.mrb[0].mxu0
  %v1824 = vadd.f32 0.0, %v1823
  %v1825 = vpop.f32.mrb[0].mxu0
  %v1826 = vadd.f32 0.0, %v1825
  %1827 = vmatprep.mubr.bf16.mxu0 %v1684
  %1828 = vmatmul.mubr.bf16.gmra.mrb[0].mxu0 %v1683
  %v1829 = vpop.f32.mrb[0].mxu0
  %v1830 = vadd.f32 0.0, %v1829
  %v1831 = vpop.f32.mrb[0].mxu0
  %v1832 = vadd.f32 0.0, %v1831
  %v1833 = vpop.f32.mrb[0].mxu0
  %v1834 = vadd.f32 0.0, %v1833
  %v1835 = vpop.f32.mrb[0].mxu0
  %v1836 = vadd.f32 0.0, %v1835
  %1837 = vmatprep.mubr.bf16.mxu0 %v1686
  %1838 = vmatmul.mubr.bf16.gmra.mrb[0].mxu0 %v1685
  %v1839 = vpop.f32.mrb[0].mxu0
  %v1840 = vadd.f32 0.0, %v1839
  %v1841 = vpop.f32.mrb[0].mxu0
  %v1842 = vadd.f32 0.0, %v1841
  %v1843 = vpop.f32.mrb[0].mxu0
  %v1844 = vadd.f32 0.0, %v1843
  %v1845 = vpop.f32.mrb[0].mxu0
  %v1846 = vadd.f32 0.0, %v1845
  %1847 = vmatprep.mubr.bf16.mxu0 %v1688
  %1848 = vmatmul.mubr.bf16.gmra.mrb[0].mxu0 %v1687
  %v1849 = vpop.f32.mrb[0].mxu0
  %v1850 = vadd.f32 0.0, %v1849
  %v1851 = vpop.f32.mrb[0].mxu0
  %v1852 = vadd.f32 0.0, %v1851
  %v1853 = vpop.f32.mrb[0].mxu0
  %v1854 = vadd.f32 0.0, %v1853
  %v1855 = vpop.f32.mrb[0].mxu0
  %v1856 = vadd.f32 0.0, %v1855
  %1857 = vmatprep.mubr.bf16.mxu0 %v1690
  %1858 = vmatmul.mubr.bf16.gmra.mrb[0].mxu0 %v1689
  %v1859 = vpop.f32.mrb[0].mxu0
  %v1860 = vadd.f32 0.0, %v1859
  %v1861 = vpop.f32.mrb[0].mxu0
  %v1862 = vadd.f32 0.0, %v1861
  %v1863 = vpop.f32.mrb[0].mxu0
  %v1864 = vadd.f32 0.0, %v1863
  %v1865 = vpop.f32.mrb[0].mxu0
  %v1866 = vadd.f32 0.0, %v1865
  %1867 = vmatprep.mubr.bf16.mxu0 %v1692
  %1868 = vmatmul.mubr.bf16.gmra.mrb[0].mxu0 %v1691
  %v1869 = vpop.f32.mrb[0].mxu0
  %v1870 = vadd.f32 0.0, %v1869
  %v1871 = vpop.f32.mrb[0].mxu0
  %v1872 = vadd.f32 0.0, %v1871
  %v1873 = vpop.f32.mrb[0].mxu0
  %v1874 = vadd.f32 0.0, %v1873
  %v1875 = vpop.f32.mrb[0].mxu0
  %v1876 = vadd.f32 0.0, %v1875
  %1877 = vmatprep.mubr.bf16.mxu0 %v1694
  %1878 = vmatmul.mubr.bf16.gmra.mrb[0].mxu0 %v1693
  %v1879 = vpop.f32.mrb[0].mxu0
  %v1880 = vadd.f32 0.0, %v1879
  %v1881 = vpop.f32.mrb[0].mxu0
  %v1882 = vadd.f32 0.0, %v1881
  %v1883 = vpop.f32.mrb[0].mxu0
  %v1884 = vadd.f32 0.0, %v1883
  %v1885 = vpop.f32.mrb[0].mxu0
  %v1886 = vadd.f32 0.0, %v1885
  %1887 = vmatprep.mubr.bf16.mxu0 %v1696
  %1888 = vmatmul.mubr.bf16.gmra.mrb[0].mxu0 %v1695
  %v1889 = vpop.f32.mrb[0].mxu0
  %v1890 = vadd.f32 0.0, %v1889
  %v1891 = vpop.f32.mrb[0].mxu0
  %v1892 = vadd.f32 0.0, %v1891
  %v1893 = vpop.f32.mrb[0].mxu0
  %v1894 = vadd.f32 0.0, %v1893
  %v1895 = vpop.f32.mrb[0].mxu0
  %v1896 = vadd.f32 0.0, %v1895
  %1897 = vmatprep.mubr.bf16.mxu0 %v1698
  %1898 = vmatmul.mubr.bf16.gmra.mrb[0].mxu0 %v1697
  %v1899 = vpop.f32.mrb[0].mxu0
  %v1900 = vadd.f32 0.0, %v1899
  %v1901 = vpop.f32.mrb[0].mxu0
  %v1902 = vadd.f32 0.0, %v1901
  %v1903 = vpop.f32.mrb[0].mxu0
  %v1904 = vadd.f32 0.0, %v1903
  %v1905 = vpop.f32.mrb[0].mxu0
  %v1906 = vadd.f32 0.0, %v1905
  %1907 = vmatprep.mubr.bf16.mxu0 %v1700
  %1908 = vmatmul.mubr.bf16.gmra.mrb[0].mxu0 %v1699
  %v1909 = vpop.f32.mrb[0].mxu0
  %v1910 = vadd.f32 0.0, %v1909
  %v1911 = vpop.f32.mrb[0].mxu0
  %v1912 = vadd.f32 0.0, %v1911
  %v1913 = vpop.f32.mrb[0].mxu0
  %v1914 = vadd.f32 0.0, %v1913
  %v1915 = vpop.f32.mrb[0].mxu0
  %v1916 = vadd.f32 0.0, %v1915
  %1917 = vmatprep.mubr.bf16.mxu0 %v1702
  %1918 = vmatmul.mubr.bf16.gmra.mrb[0].mxu0 %v1701
  %v1919 = vpop.f32.mrb[0].mxu0
  %v1920 = vadd.f32 0.0, %v1919
  %v1921 = vpop.f32.mrb[0].mxu0
  %v1922 = vadd.f32 0.0, %v1921
  %v1923 = vpop.f32.mrb[0].mxu0
  %v1924 = vadd.f32 0.0, %v1923
  %v1925 = vpop.f32.mrb[0].mxu0
  %v1926 = vadd.f32 0.0, %v1925
  %1927 = vdwg.mxu0
  %v1928 = vadd.f32 %v1159, %v1770
  %v1929 = vadd.f32 %v1161, %v1772
  %v1930 = vadd.f32 %v1163, %v1774
  %v1931 = vadd.f32 %v1165, %v1776
  %v1932 = vadd.f32 %v1169, %v1780
  %v1933 = vadd.f32 %v1171, %v1782
  %v1934 = vadd.f32 %v1173, %v1784
  %v1935 = vadd.f32 %v1175, %v1786
  %v1936 = vadd.f32 %v1179, %v1790
  %v1937 = vadd.f32 %v1181, %v1792
  %v1938 = vadd.f32 %v1183, %v1794
  %v1939 = vadd.f32 %v1185, %v1796
  %v1940 = vadd.f32 %v1189, %v1800
  %v1941 = vadd.f32 %v1191, %v1802
  %v1942 = vadd.f32 %v1193, %v1804
  %v1943 = vadd.f32 %v1195, %v1806
  %v1944 = vadd.f32 %v1199, %v1810
  %v1945 = vadd.f32 %v1201, %v1812
  %v1946 = vadd.f32 %v1203, %v1814
  %v1947 = vadd.f32 %v1205, %v1816
  %v1948 = vadd.f32 %v1209, %v1820
  %v1949 = vadd.f32 %v1211, %v1822
  %v1950 = vadd.f32 %v1213, %v1824
  %v1951 = vadd.f32 %v1215, %v1826
  %v1952 = vadd.f32 %v1219, %v1830
  %v1953 = vadd.f32 %v1221, %v1832
  %v1954 = vadd.f32 %v1223, %v1834
  %v1955 = vadd.f32 %v1225, %v1836
  %v1956 = vadd.f32 %v1229, %v1840
  %v1957 = vadd.f32 %v1231, %v1842
  %v1958 = vadd.f32 %v1233, %v1844
  %v1959 = vadd.f32 %v1235, %v1846
  %v1960 = vadd.f32 %v1239, %v1850
  %v1961 = vadd.f32 %v1241, %v1852
  %v1962 = vadd.f32 %v1243, %v1854
  %v1963 = vadd.f32 %v1245, %v1856
  %v1964 = vadd.f32 %v1249, %v1860
  %v1965 = vadd.f32 %v1251, %v1862
  %v1966 = vadd.f32 %v1253, %v1864
  %v1967 = vadd.f32 %v1255, %v1866
  %v1968 = vadd.f32 %v1259, %v1870
  %v1969 = vadd.f32 %v1261, %v1872
  %v1970 = vadd.f32 %v1263, %v1874
  %v1971 = vadd.f32 %v1265, %v1876
  %v1972 = vadd.f32 %v1269, %v1880
  %v1973 = vadd.f32 %v1271, %v1882
  %v1974 = vadd.f32 %v1273, %v1884
  %v1975 = vadd.f32 %v1275, %v1886
  %v1976 = vadd.f32 %v1279, %v1890
  %v1977 = vadd.f32 %v1281, %v1892
  %v1978 = vadd.f32 %v1283, %v1894
  %v1979 = vadd.f32 %v1285, %v1896
  %v1980 = vadd.f32 %v1289, %v1900
  %v1981 = vadd.f32 %v1291, %v1902
  %v1982 = vadd.f32 %v1293, %v1904
  %v1983 = vadd.f32 %v1295, %v1906
  %v1984 = vadd.f32 %v1299, %v1910
  %v1985 = vadd.f32 %v1301, %v1912
  %v1986 = vadd.f32 %v1303, %v1914
  %v1987 = vadd.f32 %v1305, %v1916
  %v1988 = vadd.f32 %v1309, %v1920
  %v1989 = vadd.f32 %v1311, %v1922
  %v1990 = vadd.f32 %v1313, %v1924
  %v1991 = vadd.f32 %v1315, %v1926
  %1992 = vrot.lane.b32.xlu0 %v29, 1
  %v1993 = vpop.permute.xlu0 %1992
  %1994 = vrot.lane.b32.xlu0 %v31, 1
  %v1995 = vpop.permute.xlu0 %1994
  %1996 = vrot.lane.b32.xlu0 %v33, 1
  %v1997 = vpop.permute.xlu0 %1996
  %1998 = vrot.lane.b32.xlu0 %v35, 1
  %v1999 = vpop.permute.xlu0 %1998
  %2000 = vrot.lane.b32.xlu0 %v37, 1
  %v2001 = vpop.permute.xlu0 %2000
  %2002 = vrot.lane.b32.xlu0 %v39, 1
  %v2003 = vpop.permute.xlu0 %2002
  %2004 = vrot.lane.b32.xlu0 %v41, 1
  %v2005 = vpop.permute.xlu0 %2004
  %2006 = vrot.lane.b32.xlu0 %v43, 1
  %v2007 = vpop.permute.xlu0 %2006
  %2008 = vrot.lane.b32.xlu0 %v45, 1
  %v2009 = vpop.permute.xlu0 %2008
  %2010 = vrot.lane.b32.xlu0 %v47, 1
  %v2011 = vpop.permute.xlu0 %2010
  %2012 = vrot.lane.b32.xlu0 %v49, 1
  %v2013 = vpop.permute.xlu0 %2012
  %2014 = vrot.lane.b32.xlu0 %v51, 1
  %v2015 = vpop.permute.xlu0 %2014
  %2016 = vrot.lane.b32.xlu0 %v53, 1
  %v2017 = vpop.permute.xlu0 %2016
  %2018 = vrot.lane.b32.xlu0 %v55, 1
  %v2019 = vpop.permute.xlu0 %2018
  %2020 = vrot.lane.b32.xlu0 %v57, 1
  %v2021 = vpop.permute.xlu0 %2020
  %2022 = vrot.lane.b32.xlu0 %v59, 1
  %v2023 = vpop.permute.xlu0 %2022
  %2024 = vrot.lane.b32.xlu0 %v61, 1
  %v2025 = vpop.permute.xlu0 %2024
  %2026 = vrot.lane.b32.xlu0 %v63, 1
  %v2027 = vpop.permute.xlu0 %2026
  %2028 = vrot.lane.b32.xlu0 %v65, 1
  %v2029 = vpop.permute.xlu0 %2028
  %2030 = vrot.lane.b32.xlu0 %v67, 1
  %v2031 = vpop.permute.xlu0 %2030
  %2032 = vrot.lane.b32.xlu0 %v69, 1
  %v2033 = vpop.permute.xlu0 %2032
  %2034 = vrot.lane.b32.xlu0 %v71, 1
  %v2035 = vpop.permute.xlu0 %2034
  %2036 = vrot.lane.b32.xlu0 %v73, 1
  %v2037 = vpop.permute.xlu0 %2036
  %2038 = vrot.lane.b32.xlu0 %v75, 1
  %v2039 = vpop.permute.xlu0 %2038
  %2040 = vrot.lane.b32.xlu0 %v77, 1
  %v2041 = vpop.permute.xlu0 %2040
  %2042 = vrot.lane.b32.xlu0 %v79, 1
  %v2043 = vpop.permute.xlu0 %2042
  %2044 = vrot.lane.b32.xlu0 %v81, 1
  %v2045 = vpop.permute.xlu0 %2044
  %2046 = vrot.lane.b32.xlu0 %v83, 1
  %v2047 = vpop.permute.xlu0 %2046
  %2048 = vrot.lane.b32.xlu0 %v85, 1
  %v2049 = vpop.permute.xlu0 %2048
  %2050 = vrot.lane.b32.xlu0 %v87, 1
  %v2051 = vpop.permute.xlu0 %2050
  %2052 = vrot.lane.b32.xlu0 %v89, 1
  %v2053 = vpop.permute.xlu0 %2052
  %2054 = vrot.lane.b32.xlu0 %v91, 1
  %v2055 = vpop.permute.xlu0 %2054
  %2056 = vrot.lane.b32.xlu0 %v30, 1
  %v2057 = vpop.permute.xlu0 %2056
  %2058 = vrot.lane.b32.xlu0 %v32, 1
  %v2059 = vpop.permute.xlu0 %2058
  %2060 = vrot.lane.b32.xlu0 %v34, 1
  %v2061 = vpop.permute.xlu0 %2060
  %2062 = vrot.lane.b32.xlu0 %v36, 1
  %v2063 = vpop.permute.xlu0 %2062
  %2064 = vrot.lane.b32.xlu0 %v38, 1
  %v2065 = vpop.permute.xlu0 %2064
  %2066 = vrot.lane.b32.xlu0 %v40, 1
  %v2067 = vpop.permute.xlu0 %2066
  %2068 = vrot.lane.b32.xlu0 %v42, 1
  %v2069 = vpop.permute.xlu0 %2068
  %2070 = vrot.lane.b32.xlu0 %v44, 1
  %v2071 = vpop.permute.xlu0 %2070
  %2072 = vrot.lane.b32.xlu0 %v46, 1
  %v2073 = vpop.permute.xlu0 %2072
  %2074 = vrot.lane.b32.xlu0 %v48, 1
  %v2075 = vpop.permute.xlu0 %2074
  %2076 = vrot.lane.b32.xlu0 %v50, 1
  %v2077 = vpop.permute.xlu0 %2076
  %2078 = vrot.lane.b32.xlu0 %v52, 1
  %v2079 = vpop.permute.xlu0 %2078
  %2080 = vrot.lane.b32.xlu0 %v54, 1
  %v2081 = vpop.permute.xlu0 %2080
  %2082 = vrot.lane.b32.xlu0 %v56, 1
  %v2083 = vpop.permute.xlu0 %2082
  %2084 = vrot.lane.b32.xlu0 %v58, 1
  %v2085 = vpop.permute.xlu0 %2084
  %2086 = vrot.lane.b32.xlu0 %v60, 1
  %v2087 = vpop.permute.xlu0 %2086
  %2088 = vrot.lane.b32.xlu0 %v62, 1
  %v2089 = vpop.permute.xlu0 %2088
  %2090 = vrot.lane.b32.xlu0 %v64, 1
  %v2091 = vpop.permute.xlu0 %2090
  %2092 = vrot.lane.b32.xlu0 %v66, 1
  %v2093 = vpop.permute.xlu0 %2092
  %2094 = vrot.lane.b32.xlu0 %v68, 1
  %v2095 = vpop.permute.xlu0 %2094
  %2096 = vrot.lane.b32.xlu0 %v70, 1
  %v2097 = vpop.permute.xlu0 %2096
  %2098 = vrot.lane.b32.xlu0 %v72, 1
  %v2099 = vpop.permute.xlu0 %2098
  %2100 = vrot.lane.b32.xlu0 %v74, 1
  %v2101 = vpop.permute.xlu0 %2100
  %2102 = vrot.lane.b32.xlu0 %v76, 1
  %v2103 = vpop.permute.xlu0 %2102
  %2104 = vrot.lane.b32.xlu0 %v78, 1
  %v2105 = vpop.permute.xlu0 %2104
  %2106 = vrot.lane.b32.xlu0 %v80, 1
  %v2107 = vpop.permute.xlu0 %2106
  %2108 = vrot.lane.b32.xlu0 %v82, 1
  %v2109 = vpop.permute.xlu0 %2108
  %2110 = vrot.lane.b32.xlu0 %v84, 1
  %v2111 = vpop.permute.xlu0 %2110
  %2112 = vrot.lane.b32.xlu0 %v86, 1
  %v2113 = vpop.permute.xlu0 %2112
  %2114 = vrot.lane.b32.xlu0 %v88, 1
  %v2115 = vpop.permute.xlu0 %2114
  %2116 = vrot.lane.b32.xlu0 %v90, 1
  %v2117 = vpop.permute.xlu0 %2116
  %2118 = vrot.lane.b32.xlu0 %v92, 1
  %v2119 = vpop.permute.xlu0 %2118
  %vm2120 = vcmp.lt.s32.totalorder %v223, 1
  %v2121 = vsel %vm2120, %v1993, %v2057
  %v2122 = vsel %vm2120, %v1995, %v2059
  %v2123 = vsel %vm2120, %v1997, %v2061
  %v2124 = vsel %vm2120, %v1999, %v2063
  %v2125 = vsel %vm2120, %v2001, %v2065
  %v2126 = vsel %vm2120, %v2003, %v2067
  %v2127 = vsel %vm2120, %v2005, %v2069
  %v2128 = vsel %vm2120, %v2007, %v2071
  %v2129 = vsel %vm2120, %v2009, %v2073
  %v2130 = vsel %vm2120, %v2011, %v2075
  %v2131 = vsel %vm2120, %v2013, %v2077
  %v2132 = vsel %vm2120, %v2015, %v2079
  %v2133 = vsel %vm2120, %v2017, %v2081
  %v2134 = vsel %vm2120, %v2019, %v2083
  %v2135 = vsel %vm2120, %v2021, %v2085
  %v2136 = vsel %vm2120, %v2023, %v2087
  %v2137 = vsel %vm2120, %v2025, %v2089
  %v2138 = vsel %vm2120, %v2027, %v2091
  %v2139 = vsel %vm2120, %v2029, %v2093
  %v2140 = vsel %vm2120, %v2031, %v2095
  %v2141 = vsel %vm2120, %v2033, %v2097
  %v2142 = vsel %vm2120, %v2035, %v2099
  %v2143 = vsel %vm2120, %v2037, %v2101
  %v2144 = vsel %vm2120, %v2039, %v2103
  %v2145 = vsel %vm2120, %v2041, %v2105
  %v2146 = vsel %vm2120, %v2043, %v2107
  %v2147 = vsel %vm2120, %v2045, %v2109
  %v2148 = vsel %vm2120, %v2047, %v2111
  %v2149 = vsel %vm2120, %v2049, %v2113
  %v2150 = vsel %vm2120, %v2051, %v2115
  %v2151 = vsel %vm2120, %v2053, %v2117
  %v2152 = vsel %vm2120, %v2055, %v2119
  %v2153 = vsel %vm2120, %v2057, %v1993
  %v2154 = vsel %vm2120, %v2059, %v1995
  %v2155 = vsel %vm2120, %v2061, %v1997
  %v2156 = vsel %vm2120, %v2063, %v1999
  %v2157 = vsel %vm2120, %v2065, %v2001
  %v2158 = vsel %vm2120, %v2067, %v2003
  %v2159 = vsel %vm2120, %v2069, %v2005
  %v2160 = vsel %vm2120, %v2071, %v2007
  %v2161 = vsel %vm2120, %v2073, %v2009
  %v2162 = vsel %vm2120, %v2075, %v2011
  %v2163 = vsel %vm2120, %v2077, %v2013
  %v2164 = vsel %vm2120, %v2079, %v2015
  %v2165 = vsel %vm2120, %v2081, %v2017
  %v2166 = vsel %vm2120, %v2083, %v2019
  %v2167 = vsel %vm2120, %v2085, %v2021
  %v2168 = vsel %vm2120, %v2087, %v2023
  %v2169 = vsel %vm2120, %v2089, %v2025
  %v2170 = vsel %vm2120, %v2091, %v2027
  %v2171 = vsel %vm2120, %v2093, %v2029
  %v2172 = vsel %vm2120, %v2095, %v2031
  %v2173 = vsel %vm2120, %v2097, %v2033
  %v2174 = vsel %vm2120, %v2099, %v2035
  %v2175 = vsel %vm2120, %v2101, %v2037
  %v2176 = vsel %vm2120, %v2103, %v2039
  %v2177 = vsel %vm2120, %v2105, %v2041
  %v2178 = vsel %vm2120, %v2107, %v2043
  %v2179 = vsel %vm2120, %v2109, %v2045
  %v2180 = vsel %vm2120, %v2111, %v2047
  %v2181 = vsel %vm2120, %v2113, %v2049
  %v2182 = vsel %vm2120, %v2115, %v2051
  %v2183 = vsel %vm2120, %v2117, %v2053
  %v2184 = vsel %vm2120, %v2119, %v2055
  %s2185 = scalar_lea.vmem %s2, 768
  %v2186 = vld [vmem:[%s2185] sm:$0xff]
  %v2187 = vld [vmem:[%s2185 + $0x8] sm:$0xff]
  %v2188 = vld [vmem:[%s2185 + $0x10] sm:$0xff]
  %v2189 = vld [vmem:[%s2185 + $0x18] sm:$0xff]
  %v2190 = vld [vmem:[%s2185 + $0x20] sm:$0xff]
  %v2191 = vld [vmem:[%s2185 + $0x28] sm:$0xff]
  %v2192 = vld [vmem:[%s2185 + $0x30] sm:$0xff]
  %v2193 = vld [vmem:[%s2185 + $0x38] sm:$0xff]
  %v2194 = vld [vmem:[%s2185 + $0x40] sm:$0xff]
  %v2195 = vld [vmem:[%s2185 + $0x48] sm:$0xff]
  %v2196 = vld [vmem:[%s2185 + $0x50] sm:$0xff]
  %v2197 = vld [vmem:[%s2185 + $0x58] sm:$0xff]
  %v2198 = vld [vmem:[%s2185 + $0x60] sm:$0xff]
  %v2199 = vld [vmem:[%s2185 + $0x68] sm:$0xff]
  %v2200 = vld [vmem:[%s2185 + $0x70] sm:$0xff]
  %v2201 = vld [vmem:[%s2185 + $0x78] sm:$0xff]
  %v2202 = vld [vmem:[%s2185 + $0x80] sm:$0xff]
  %v2203 = vld [vmem:[%s2185 + $0x88] sm:$0xff]
  %v2204 = vld [vmem:[%s2185 + $0x90] sm:$0xff]
  %v2205 = vld [vmem:[%s2185 + $0x98] sm:$0xff]
  %v2206 = vld [vmem:[%s2185 + $0xa0] sm:$0xff]
  %v2207 = vld [vmem:[%s2185 + $0xa8] sm:$0xff]
  %v2208 = vld [vmem:[%s2185 + $0xb0] sm:$0xff]
  %v2209 = vld [vmem:[%s2185 + $0xb8] sm:$0xff]
  %v2210 = vld [vmem:[%s2185 + $0xc0] sm:$0xff]
  %v2211 = vld [vmem:[%s2185 + $0xc8] sm:$0xff]
  %v2212 = vld [vmem:[%s2185 + $0xd0] sm:$0xff]
  %v2213 = vld [vmem:[%s2185 + $0xd8] sm:$0xff]
  %v2214 = vld [vmem:[%s2185 + $0xe0] sm:$0xff]
  %v2215 = vld [vmem:[%s2185 + $0xe8] sm:$0xff]
  %v2216 = vld [vmem:[%s2185 + $0xf0] sm:$0xff]
  %v2217 = vld [vmem:[%s2185 + $0xf8] sm:$0xff]
  %v2218 = vpack.c.bf16 %v2154, %v2153
  %v2219 = vpack.c.bf16 %v2122, %v2121
  %v2220 = vpack.c.bf16 %v2156, %v2155
  %v2221 = vpack.c.bf16 %v2124, %v2123
  %v2222 = vpack.c.bf16 %v2158, %v2157
  %v2223 = vpack.c.bf16 %v2126, %v2125
  %v2224 = vpack.c.bf16 %v2160, %v2159
  %v2225 = vpack.c.bf16 %v2128, %v2127
  %v2226 = vpack.c.bf16 %v2162, %v2161
  %v2227 = vpack.c.bf16 %v2130, %v2129
  %v2228 = vpack.c.bf16 %v2164, %v2163
  %v2229 = vpack.c.bf16 %v2132, %v2131
  %v2230 = vpack.c.bf16 %v2166, %v2165
  %v2231 = vpack.c.bf16 %v2134, %v2133
  %v2232 = vpack.c.bf16 %v2168, %v2167
  %v2233 = vpack.c.bf16 %v2136, %v2135
  %v2234 = vpack.c.bf16 %v2170, %v2169
  %v2235 = vpack.c.bf16 %v2138, %v2137
  %v2236 = vpack.c.bf16 %v2172, %v2171
  %v2237 = vpack.c.bf16 %v2140, %v2139
  %v2238 = vpack.c.bf16 %v2174, %v2173
  %v2239 = vpack.c.bf16 %v2142, %v2141
  %v2240 = vpack.c.bf16 %v2176, %v2175
  %v2241 = vpack.c.bf16 %v2144, %v2143
  %v2242 = vpack.c.bf16 %v2178, %v2177
  %v2243 = vpack.c.bf16 %v2146, %v2145
  %v2244 = vpack.c.bf16 %v2180, %v2179
  %v2245 = vpack.c.bf16 %v2148, %v2147
  %v2246 = vpack.c.bf16 %v2182, %v2181
  %v2247 = vpack.c.bf16 %v2150, %v2149
  %v2248 = vpack.c.bf16 %v2184, %v2183
  %v2249 = vpack.c.bf16 %v2152, %v2151
  %v2282 = vunpack.c.l.b16 %v2186
  %v2283 = vunpack.c.h.b16 %v2186
  %v2284 = vunpack.c.l.b16 %v2187
  %v2285 = vunpack.c.h.b16 %v2187
  %v2286 = vunpack.c.l.b16 %v2188
  %v2287 = vunpack.c.h.b16 %v2188
  %v2288 = vunpack.c.l.b16 %v2189
  %v2289 = vunpack.c.h.b16 %v2189
  %v2290 = vunpack.c.l.b16 %v2190
  %v2291 = vunpack.c.h.b16 %v2190
  %v2292 = vunpack.c.l.b16 %v2191
  %v2293 = vunpack.c.h.b16 %v2191
  %v2294 = vunpack.c.l.b16 %v2192
  %v2295 = vunpack.c.h.b16 %v2192
  %v2296 = vunpack.c.l.b16 %v2193
  %v2297 = vunpack.c.h.b16 %v2193
  %v2298 = vunpack.c.l.b16 %v2194
  %v2299 = vunpack.c.h.b16 %v2194
  %v2300 = vunpack.c.l.b16 %v2195
  %v2301 = vunpack.c.h.b16 %v2195
  %v2302 = vunpack.c.l.b16 %v2196
  %v2303 = vunpack.c.h.b16 %v2196
  %v2304 = vunpack.c.l.b16 %v2197
  %v2305 = vunpack.c.h.b16 %v2197
  %v2306 = vunpack.c.l.b16 %v2198
  %v2307 = vunpack.c.h.b16 %v2198
  %v2308 = vunpack.c.l.b16 %v2199
  %v2309 = vunpack.c.h.b16 %v2199
  %v2310 = vunpack.c.l.b16 %v2200
  %v2311 = vunpack.c.h.b16 %v2200
  %v2312 = vunpack.c.l.b16 %v2201
  %v2313 = vunpack.c.h.b16 %v2201
  %v2314 = vunpack.c.l.b16 %v2202
  %v2315 = vunpack.c.h.b16 %v2202
  %v2316 = vunpack.c.l.b16 %v2203
  %v2317 = vunpack.c.h.b16 %v2203
  %v2318 = vunpack.c.l.b16 %v2204
  %v2319 = vunpack.c.h.b16 %v2204
  %v2320 = vunpack.c.l.b16 %v2205
  %v2321 = vunpack.c.h.b16 %v2205
  %v2322 = vunpack.c.l.b16 %v2206
  %v2323 = vunpack.c.h.b16 %v2206
  %v2324 = vunpack.c.l.b16 %v2207
  %v2325 = vunpack.c.h.b16 %v2207
  %v2326 = vunpack.c.l.b16 %v2208
  %v2327 = vunpack.c.h.b16 %v2208
  %v2328 = vunpack.c.l.b16 %v2209
  %v2329 = vunpack.c.h.b16 %v2209
  %v2330 = vunpack.c.l.b16 %v2210
  %v2331 = vunpack.c.h.b16 %v2210
  %v2332 = vunpack.c.l.b16 %v2211
  %v2333 = vunpack.c.h.b16 %v2211
  %v2334 = vunpack.c.l.b16 %v2212
  %v2335 = vunpack.c.h.b16 %v2212
  %v2336 = vunpack.c.l.b16 %v2213
  %v2337 = vunpack.c.h.b16 %v2213
  %v2338 = vunpack.c.l.b16 %v2214
  %v2339 = vunpack.c.h.b16 %v2214
  %v2340 = vunpack.c.l.b16 %v2215
  %v2341 = vunpack.c.h.b16 %v2215
  %v2342 = vunpack.c.l.b16 %v2216
  %v2343 = vunpack.c.h.b16 %v2216
  %v2344 = vunpack.c.l.b16 %v2217
  %v2345 = vunpack.c.h.b16 %v2217
  %v2346 = vpack.c.b16 %v2284, %v2282
  %v2347 = vpack.c.b16 %v2285, %v2283
  %v2348 = vpack.c.b16 %v2288, %v2286
  %v2349 = vpack.c.b16 %v2289, %v2287
  %v2350 = vpack.c.b16 %v2292, %v2290
  %v2351 = vpack.c.b16 %v2293, %v2291
  %v2352 = vpack.c.b16 %v2296, %v2294
  %v2353 = vpack.c.b16 %v2297, %v2295
  %v2354 = vpack.c.b16 %v2300, %v2298
  %v2355 = vpack.c.b16 %v2301, %v2299
  %v2356 = vpack.c.b16 %v2304, %v2302
  %v2357 = vpack.c.b16 %v2305, %v2303
  %v2358 = vpack.c.b16 %v2308, %v2306
  %v2359 = vpack.c.b16 %v2309, %v2307
  %v2360 = vpack.c.b16 %v2312, %v2310
  %v2361 = vpack.c.b16 %v2313, %v2311
  %v2362 = vpack.c.b16 %v2316, %v2314
  %v2363 = vpack.c.b16 %v2317, %v2315
  %v2364 = vpack.c.b16 %v2320, %v2318
  %v2365 = vpack.c.b16 %v2321, %v2319
  %v2366 = vpack.c.b16 %v2324, %v2322
  %v2367 = vpack.c.b16 %v2325, %v2323
  %v2368 = vpack.c.b16 %v2328, %v2326
  %v2369 = vpack.c.b16 %v2329, %v2327
  %v2370 = vpack.c.b16 %v2332, %v2330
  %v2371 = vpack.c.b16 %v2333, %v2331
  %v2372 = vpack.c.b16 %v2336, %v2334
  %v2373 = vpack.c.b16 %v2337, %v2335
  %v2374 = vpack.c.b16 %v2340, %v2338
  %v2375 = vpack.c.b16 %v2341, %v2339
  %v2376 = vpack.c.b16 %v2344, %v2342
  %v2377 = vpack.c.b16 %v2345, %v2343
  %2410 = vmatprep.subr.bf16.mxu0 %v2219
  %2411 = vmatpush1.bf16.msra.mxu0 %v2218
  %2412 = vmatprep.subr.bf16.mxu0 %v2221
  %2413 = vmatpush1.bf16.msra.mxu0 %v2220
  %2414 = vmatprep.subr.bf16.mxu0 %v2223
  %2415 = vmatpush1.bf16.msra.mxu0 %v2222
  %2416 = vmatprep.subr.bf16.mxu0 %v2225
  %2417 = vmatpush1.bf16.msra.mxu0 %v2224
  %2418 = vmatprep.subr.bf16.mxu0 %v2227
  %2419 = vmatpush1.bf16.msra.mxu0 %v2226
  %2420 = vmatprep.subr.bf16.mxu0 %v2229
  %2421 = vmatpush1.bf16.msra.mxu0 %v2228
  %2422 = vmatprep.subr.bf16.mxu0 %v2231
  %2423 = vmatpush1.bf16.msra.mxu0 %v2230
  %2424 = vmatprep.subr.bf16.mxu0 %v2233
  %2425 = vmatpush1.bf16.msra.mxu0 %v2232
  %2426 = vmatprep.subr.bf16.mxu0 %v2235
  %2427 = vmatpush1.bf16.msra.mxu0 %v2234
  %2428 = vmatprep.subr.bf16.mxu0 %v2237
  %2429 = vmatpush1.bf16.msra.mxu0 %v2236
  %2430 = vmatprep.subr.bf16.mxu0 %v2239
  %2431 = vmatpush1.bf16.msra.mxu0 %v2238
  %2432 = vmatprep.subr.bf16.mxu0 %v2241
  %2433 = vmatpush1.bf16.msra.mxu0 %v2240
  %2434 = vmatprep.subr.bf16.mxu0 %v2243
  %2435 = vmatpush1.bf16.msra.mxu0 %v2242
  %2436 = vmatprep.subr.bf16.mxu0 %v2245
  %2437 = vmatpush1.bf16.msra.mxu0 %v2244
  %2438 = vmatprep.subr.bf16.mxu0 %v2247
  %2439 = vmatpush1.bf16.msra.mxu0 %v2246
  %2440 = vmatprep.subr.bf16.mxu0 %v2249
  %2441 = vmatpush1.bf16.msra.mxu0 %v2248
  %2442 = vmatprep.mubr.bf16.mxu0 %v2347
  %2443 = vmatmul.mubr.bf16.gmra.mrb[0].mxu0 %v2346
  %v2444 = vpop.f32.mrb[0].mxu0
  %v2445 = vadd.f32 0.0, %v2444
  %v2446 = vpop.f32.mrb[0].mxu0
  %v2447 = vadd.f32 0.0, %v2446
  %v2448 = vpop.f32.mrb[0].mxu0
  %v2449 = vadd.f32 0.0, %v2448
  %v2450 = vpop.f32.mrb[0].mxu0
  %v2451 = vadd.f32 0.0, %v2450
  %2452 = vmatprep.mubr.bf16.mxu0 %v2349
  %2453 = vmatmul.mubr.bf16.gmra.mrb[0].mxu0 %v2348
  %v2454 = vpop.f32.mrb[0].mxu0
  %v2455 = vadd.f32 0.0, %v2454
  %v2456 = vpop.f32.mrb[0].mxu0
  %v2457 = vadd.f32 0.0, %v2456
  %v2458 = vpop.f32.mrb[0].mxu0
  %v2459 = vadd.f32 0.0, %v2458
  %v2460 = vpop.f32.mrb[0].mxu0
  %v2461 = vadd.f32 0.0, %v2460
  %2462 = vmatprep.mubr.bf16.mxu0 %v2351
  %2463 = vmatmul.mubr.bf16.gmra.mrb[0].mxu0 %v2350
  %v2464 = vpop.f32.mrb[0].mxu0
  %v2465 = vadd.f32 0.0, %v2464
  %v2466 = vpop.f32.mrb[0].mxu0
  %v2467 = vadd.f32 0.0, %v2466
  %v2468 = vpop.f32.mrb[0].mxu0
  %v2469 = vadd.f32 0.0, %v2468
  %v2470 = vpop.f32.mrb[0].mxu0
  %v2471 = vadd.f32 0.0, %v2470
  %2472 = vmatprep.mubr.bf16.mxu0 %v2353
  %2473 = vmatmul.mubr.bf16.gmra.mrb[0].mxu0 %v2352
  %v2474 = vpop.f32.mrb[0].mxu0
  %v2475 = vadd.f32 0.0, %v2474
  %v2476 = vpop.f32.mrb[0].mxu0
  %v2477 = vadd.f32 0.0, %v2476
  %v2478 = vpop.f32.mrb[0].mxu0
  %v2479 = vadd.f32 0.0, %v2478
  %v2480 = vpop.f32.mrb[0].mxu0
  %v2481 = vadd.f32 0.0, %v2480
  %2482 = vmatprep.mubr.bf16.mxu0 %v2355
  %2483 = vmatmul.mubr.bf16.gmra.mrb[0].mxu0 %v2354
  %v2484 = vpop.f32.mrb[0].mxu0
  %v2485 = vadd.f32 0.0, %v2484
  %v2486 = vpop.f32.mrb[0].mxu0
  %v2487 = vadd.f32 0.0, %v2486
  %v2488 = vpop.f32.mrb[0].mxu0
  %v2489 = vadd.f32 0.0, %v2488
  %v2490 = vpop.f32.mrb[0].mxu0
  %v2491 = vadd.f32 0.0, %v2490
  %2492 = vmatprep.mubr.bf16.mxu0 %v2357
  %2493 = vmatmul.mubr.bf16.gmra.mrb[0].mxu0 %v2356
  %v2494 = vpop.f32.mrb[0].mxu0
  %v2495 = vadd.f32 0.0, %v2494
  %v2496 = vpop.f32.mrb[0].mxu0
  %v2497 = vadd.f32 0.0, %v2496
  %v2498 = vpop.f32.mrb[0].mxu0
  %v2499 = vadd.f32 0.0, %v2498
  %v2500 = vpop.f32.mrb[0].mxu0
  %v2501 = vadd.f32 0.0, %v2500
  %2502 = vmatprep.mubr.bf16.mxu0 %v2359
  %2503 = vmatmul.mubr.bf16.gmra.mrb[0].mxu0 %v2358
  %v2504 = vpop.f32.mrb[0].mxu0
  %v2505 = vadd.f32 0.0, %v2504
  %v2506 = vpop.f32.mrb[0].mxu0
  %v2507 = vadd.f32 0.0, %v2506
  %v2508 = vpop.f32.mrb[0].mxu0
  %v2509 = vadd.f32 0.0, %v2508
  %v2510 = vpop.f32.mrb[0].mxu0
  %v2511 = vadd.f32 0.0, %v2510
  %2512 = vmatprep.mubr.bf16.mxu0 %v2361
  %2513 = vmatmul.mubr.bf16.gmra.mrb[0].mxu0 %v2360
  %v2514 = vpop.f32.mrb[0].mxu0
  %v2515 = vadd.f32 0.0, %v2514
  %v2516 = vpop.f32.mrb[0].mxu0
  %v2517 = vadd.f32 0.0, %v2516
  %v2518 = vpop.f32.mrb[0].mxu0
  %v2519 = vadd.f32 0.0, %v2518
  %v2520 = vpop.f32.mrb[0].mxu0
  %v2521 = vadd.f32 0.0, %v2520
  %2522 = vmatprep.mubr.bf16.mxu0 %v2363
  %2523 = vmatmul.mubr.bf16.gmra.mrb[0].mxu0 %v2362
  %v2524 = vpop.f32.mrb[0].mxu0
  %v2525 = vadd.f32 0.0, %v2524
  %v2526 = vpop.f32.mrb[0].mxu0
  %v2527 = vadd.f32 0.0, %v2526
  %v2528 = vpop.f32.mrb[0].mxu0
  %v2529 = vadd.f32 0.0, %v2528
  %v2530 = vpop.f32.mrb[0].mxu0
  %v2531 = vadd.f32 0.0, %v2530
  %2532 = vmatprep.mubr.bf16.mxu0 %v2365
  %2533 = vmatmul.mubr.bf16.gmra.mrb[0].mxu0 %v2364
  %v2534 = vpop.f32.mrb[0].mxu0
  %v2535 = vadd.f32 0.0, %v2534
  %v2536 = vpop.f32.mrb[0].mxu0
  %v2537 = vadd.f32 0.0, %v2536
  %v2538 = vpop.f32.mrb[0].mxu0
  %v2539 = vadd.f32 0.0, %v2538
  %v2540 = vpop.f32.mrb[0].mxu0
  %v2541 = vadd.f32 0.0, %v2540
  %2542 = vmatprep.mubr.bf16.mxu0 %v2367
  %2543 = vmatmul.mubr.bf16.gmra.mrb[0].mxu0 %v2366
  %v2544 = vpop.f32.mrb[0].mxu0
  %v2545 = vadd.f32 0.0, %v2544
  %v2546 = vpop.f32.mrb[0].mxu0
  %v2547 = vadd.f32 0.0, %v2546
  %v2548 = vpop.f32.mrb[0].mxu0
  %v2549 = vadd.f32 0.0, %v2548
  %v2550 = vpop.f32.mrb[0].mxu0
  %v2551 = vadd.f32 0.0, %v2550
  %2552 = vmatprep.mubr.bf16.mxu0 %v2369
  %2553 = vmatmul.mubr.bf16.gmra.mrb[0].mxu0 %v2368
  %v2554 = vpop.f32.mrb[0].mxu0
  %v2555 = vadd.f32 0.0, %v2554
  %v2556 = vpop.f32.mrb[0].mxu0
  %v2557 = vadd.f32 0.0, %v2556
  %v2558 = vpop.f32.mrb[0].mxu0
  %v2559 = vadd.f32 0.0, %v2558
  %v2560 = vpop.f32.mrb[0].mxu0
  %v2561 = vadd.f32 0.0, %v2560
  %2562 = vmatprep.mubr.bf16.mxu0 %v2371
  %2563 = vmatmul.mubr.bf16.gmra.mrb[0].mxu0 %v2370
  %v2564 = vpop.f32.mrb[0].mxu0
  %v2565 = vadd.f32 0.0, %v2564
  %v2566 = vpop.f32.mrb[0].mxu0
  %v2567 = vadd.f32 0.0, %v2566
  %v2568 = vpop.f32.mrb[0].mxu0
  %v2569 = vadd.f32 0.0, %v2568
  %v2570 = vpop.f32.mrb[0].mxu0
  %v2571 = vadd.f32 0.0, %v2570
  %2572 = vmatprep.mubr.bf16.mxu0 %v2373
  %2573 = vmatmul.mubr.bf16.gmra.mrb[0].mxu0 %v2372
  %v2574 = vpop.f32.mrb[0].mxu0
  %v2575 = vadd.f32 0.0, %v2574
  %v2576 = vpop.f32.mrb[0].mxu0
  %v2577 = vadd.f32 0.0, %v2576
  %v2578 = vpop.f32.mrb[0].mxu0
  %v2579 = vadd.f32 0.0, %v2578
  %v2580 = vpop.f32.mrb[0].mxu0
  %v2581 = vadd.f32 0.0, %v2580
  %2582 = vmatprep.mubr.bf16.mxu0 %v2375
  %2583 = vmatmul.mubr.bf16.gmra.mrb[0].mxu0 %v2374
  %v2584 = vpop.f32.mrb[0].mxu0
  %v2585 = vadd.f32 0.0, %v2584
  %v2586 = vpop.f32.mrb[0].mxu0
  %v2587 = vadd.f32 0.0, %v2586
  %v2588 = vpop.f32.mrb[0].mxu0
  %v2589 = vadd.f32 0.0, %v2588
  %v2590 = vpop.f32.mrb[0].mxu0
  %v2591 = vadd.f32 0.0, %v2590
  %2592 = vmatprep.mubr.bf16.mxu0 %v2377
  %2593 = vmatmul.mubr.bf16.gmra.mrb[0].mxu0 %v2376
  %v2594 = vpop.f32.mrb[0].mxu0
  %v2595 = vadd.f32 0.0, %v2594
  %v2596 = vpop.f32.mrb[0].mxu0
  %v2597 = vadd.f32 0.0, %v2596
  %v2598 = vpop.f32.mrb[0].mxu0
  %v2599 = vadd.f32 0.0, %v2598
  %v2600 = vpop.f32.mrb[0].mxu0
  %v2601 = vadd.f32 0.0, %v2600
  %2602 = vdwg.mxu0
  %v2603 = vadd.f32 %v1928, %v2445
  %v2604 = vadd.f32 %v1929, %v2447
  %v2605 = vadd.f32 %v1930, %v2449
  %v2606 = vadd.f32 %v1931, %v2451
  %v2607 = vadd.f32 %v1932, %v2455
  %v2608 = vadd.f32 %v1933, %v2457
  %v2609 = vadd.f32 %v1934, %v2459
  %v2610 = vadd.f32 %v1935, %v2461
  %v2611 = vadd.f32 %v1936, %v2465
  %v2612 = vadd.f32 %v1937, %v2467
  %v2613 = vadd.f32 %v1938, %v2469
  %v2614 = vadd.f32 %v1939, %v2471
  %v2615 = vadd.f32 %v1940, %v2475
  %v2616 = vadd.f32 %v1941, %v2477
  %v2617 = vadd.f32 %v1942, %v2479
  %v2618 = vadd.f32 %v1943, %v2481
  %v2619 = vadd.f32 %v1944, %v2485
  %v2620 = vadd.f32 %v1945, %v2487
  %v2621 = vadd.f32 %v1946, %v2489
  %v2622 = vadd.f32 %v1947, %v2491
  %v2623 = vadd.f32 %v1948, %v2495
  %v2624 = vadd.f32 %v1949, %v2497
  %v2625 = vadd.f32 %v1950, %v2499
  %v2626 = vadd.f32 %v1951, %v2501
  %v2627 = vadd.f32 %v1952, %v2505
  %v2628 = vadd.f32 %v1953, %v2507
  %v2629 = vadd.f32 %v1954, %v2509
  %v2630 = vadd.f32 %v1955, %v2511
  %v2631 = vadd.f32 %v1956, %v2515
  %v2632 = vadd.f32 %v1957, %v2517
  %v2633 = vadd.f32 %v1958, %v2519
  %v2634 = vadd.f32 %v1959, %v2521
  %v2635 = vadd.f32 %v1960, %v2525
  %v2636 = vadd.f32 %v1961, %v2527
  %v2637 = vadd.f32 %v1962, %v2529
  %v2638 = vadd.f32 %v1963, %v2531
  %v2639 = vadd.f32 %v1964, %v2535
  %v2640 = vadd.f32 %v1965, %v2537
  %v2641 = vadd.f32 %v1966, %v2539
  %v2642 = vadd.f32 %v1967, %v2541
  %v2643 = vadd.f32 %v1968, %v2545
  %v2644 = vadd.f32 %v1969, %v2547
  %v2645 = vadd.f32 %v1970, %v2549
  %v2646 = vadd.f32 %v1971, %v2551
  %v2647 = vadd.f32 %v1972, %v2555
  %v2648 = vadd.f32 %v1973, %v2557
  %v2649 = vadd.f32 %v1974, %v2559
  %v2650 = vadd.f32 %v1975, %v2561
  %v2651 = vadd.f32 %v1976, %v2565
  %v2652 = vadd.f32 %v1977, %v2567
  %v2653 = vadd.f32 %v1978, %v2569
  %v2654 = vadd.f32 %v1979, %v2571
  %v2655 = vadd.f32 %v1980, %v2575
  %v2656 = vadd.f32 %v1981, %v2577
  %v2657 = vadd.f32 %v1982, %v2579
  %v2658 = vadd.f32 %v1983, %v2581
  %v2659 = vadd.f32 %v1984, %v2585
  %v2660 = vadd.f32 %v1985, %v2587
  %v2661 = vadd.f32 %v1986, %v2589
  %v2662 = vadd.f32 %v1987, %v2591
  %v2663 = vadd.f32 %v1988, %v2595
  %v2664 = vadd.f32 %v1989, %v2597
  %v2665 = vadd.f32 %v1990, %v2599
  %v2666 = vadd.f32 %v1991, %v2601
  %s2667 = scalar_lea.vmem %s2, 1024
  %v2668 = vld [vmem:[%s2667] sm:$0xff]
  %v2669 = vld [vmem:[%s2667 + $0x8] sm:$0xff]
  %v2670 = vld [vmem:[%s2667 + $0x10] sm:$0xff]
  %v2671 = vld [vmem:[%s2667 + $0x18] sm:$0xff]
  %v2672 = vld [vmem:[%s2667 + $0x20] sm:$0xff]
  %v2673 = vld [vmem:[%s2667 + $0x28] sm:$0xff]
  %v2674 = vld [vmem:[%s2667 + $0x30] sm:$0xff]
  %v2675 = vld [vmem:[%s2667 + $0x38] sm:$0xff]
  %v2676 = vld [vmem:[%s2667 + $0x40] sm:$0xff]
  %v2677 = vld [vmem:[%s2667 + $0x48] sm:$0xff]
  %v2678 = vld [vmem:[%s2667 + $0x50] sm:$0xff]
  %v2679 = vld [vmem:[%s2667 + $0x58] sm:$0xff]
  %v2680 = vld [vmem:[%s2667 + $0x60] sm:$0xff]
  %v2681 = vld [vmem:[%s2667 + $0x68] sm:$0xff]
  %v2682 = vld [vmem:[%s2667 + $0x70] sm:$0xff]
  %v2683 = vld [vmem:[%s2667 + $0x78] sm:$0xff]
  %v2684 = vld [vmem:[%s2667 + $0x80] sm:$0xff]
  %v2685 = vld [vmem:[%s2667 + $0x88] sm:$0xff]
  %v2686 = vld [vmem:[%s2667 + $0x90] sm:$0xff]
  %v2687 = vld [vmem:[%s2667 + $0x98] sm:$0xff]
  %v2688 = vld [vmem:[%s2667 + $0xa0] sm:$0xff]
  %v2689 = vld [vmem:[%s2667 + $0xa8] sm:$0xff]
  %v2690 = vld [vmem:[%s2667 + $0xb0] sm:$0xff]
  %v2691 = vld [vmem:[%s2667 + $0xb8] sm:$0xff]
  %v2692 = vld [vmem:[%s2667 + $0xc0] sm:$0xff]
  %v2693 = vld [vmem:[%s2667 + $0xc8] sm:$0xff]
  %v2694 = vld [vmem:[%s2667 + $0xd0] sm:$0xff]
  %v2695 = vld [vmem:[%s2667 + $0xd8] sm:$0xff]
  %v2696 = vld [vmem:[%s2667 + $0xe0] sm:$0xff]
  %v2697 = vld [vmem:[%s2667 + $0xe8] sm:$0xff]
  %v2698 = vld [vmem:[%s2667 + $0xf0] sm:$0xff]
  %v2699 = vld [vmem:[%s2667 + $0xf8] sm:$0xff]
  %v2700 = vpack.c.bf16 %v31, %v29
  %v2701 = vpack.c.bf16 %v32, %v30
  %v2702 = vpack.c.bf16 %v35, %v33
  %v2703 = vpack.c.bf16 %v36, %v34
  %v2704 = vpack.c.bf16 %v39, %v37
  %v2705 = vpack.c.bf16 %v40, %v38
  %v2706 = vpack.c.bf16 %v43, %v41
  %v2707 = vpack.c.bf16 %v44, %v42
  %v2708 = vpack.c.bf16 %v47, %v45
  %v2709 = vpack.c.bf16 %v48, %v46
  %v2710 = vpack.c.bf16 %v51, %v49
  %v2711 = vpack.c.bf16 %v52, %v50
  %v2712 = vpack.c.bf16 %v55, %v53
  %v2713 = vpack.c.bf16 %v56, %v54
  %v2714 = vpack.c.bf16 %v59, %v57
  %v2715 = vpack.c.bf16 %v60, %v58
  %v2716 = vpack.c.bf16 %v63, %v61
  %v2717 = vpack.c.bf16 %v64, %v62
  %v2718 = vpack.c.bf16 %v67, %v65
  %v2719 = vpack.c.bf16 %v68, %v66
  %v2720 = vpack.c.bf16 %v71, %v69
  %v2721 = vpack.c.bf16 %v72, %v70
  %v2722 = vpack.c.bf16 %v75, %v73
  %v2723 = vpack.c.bf16 %v76, %v74
  %v2724 = vpack.c.bf16 %v79, %v77
  %v2725 = vpack.c.bf16 %v80, %v78
  %v2726 = vpack.c.bf16 %v83, %v81
  %v2727 = vpack.c.bf16 %v84, %v82
  %v2728 = vpack.c.bf16 %v87, %v85
  %v2729 = vpack.c.bf16 %v88, %v86
  %v2730 = vpack.c.bf16 %v91, %v89
  %v2731 = vpack.c.bf16 %v92, %v90
  %v2764 = vunpack.c.l.b16 %v2668
  %v2765 = vunpack.c.h.b16 %v2668
  %v2766 = vunpack.c.l.b16 %v2669
  %v2767 = vunpack.c.h.b16 %v2669
  %v2768 = vunpack.c.l.b16 %v2670
  %v2769 = vunpack.c.h.b16 %v2670
  %v2770 = vunpack.c.l.b16 %v2671
  %v2771 = vunpack.c.h.b16 %v2671
  %v2772 = vunpack.c.l.b16 %v2672
  %v2773 = vunpack.c.h.b16 %v2672
  %v2774 = vunpack.c.l.b16 %v2673
  %v2775 = vunpack.c.h.b16 %v2673
  %v2776 = vunpack.c.l.b16 %v2674
  %v2777 = vunpack.c.h.b16 %v2674
  %v2778 = vunpack.c.l.b16 %v2675
  %v2779 = vunpack.c.h.b16 %v2675
  %v2780 = vunpack.c.l.b16 %v2676
  %v2781 = vunpack.c.h.b16 %v2676
  %v2782 = vunpack.c.l.b16 %v2677
  %v2783 = vunpack.c.h.b16 %v2677
  %v2784 = vunpack.c.l.b16 %v2678
  %v2785 = vunpack.c.h.b16 %v2678
  %v2786 = vunpack.c.l.b16 %v2679
  %v2787 = vunpack.c.h.b16 %v2679
  %v2788 = vunpack.c.l.b16 %v2680
  %v2789 = vunpack.c.h.b16 %v2680
  %v2790 = vunpack.c.l.b16 %v2681
  %v2791 = vunpack.c.h.b16 %v2681
  %v2792 = vunpack.c.l.b16 %v2682
  %v2793 = vunpack.c.h.b16 %v2682
  %v2794 = vunpack.c.l.b16 %v2683
  %v2795 = vunpack.c.h.b16 %v2683
  %v2796 = vunpack.c.l.b16 %v2684
  %v2797 = vunpack.c.h.b16 %v2684
  %v2798 = vunpack.c.l.b16 %v2685
  %v2799 = vunpack.c.h.b16 %v2685
  %v2800 = vunpack.c.l.b16 %v2686
  %v2801 = vunpack.c.h.b16 %v2686
  %v2802 = vunpack.c.l.b16 %v2687
  %v2803 = vunpack.c.h.b16 %v2687
  %v2804 = vunpack.c.l.b16 %v2688
  %v2805 = vunpack.c.h.b16 %v2688
  %v2806 = vunpack.c.l.b16 %v2689
  %v2807 = vunpack.c.h.b16 %v2689
  %v2808 = vunpack.c.l.b16 %v2690
  %v2809 = vunpack.c.h.b16 %v2690
  %v2810 = vunpack.c.l.b16 %v2691
  %v2811 = vunpack.c.h.b16 %v2691
  %v2812 = vunpack.c.l.b16 %v2692
  %v2813 = vunpack.c.h.b16 %v2692
  %v2814 = vunpack.c.l.b16 %v2693
  %v2815 = vunpack.c.h.b16 %v2693
  %v2816 = vunpack.c.l.b16 %v2694
  %v2817 = vunpack.c.h.b16 %v2694
  %v2818 = vunpack.c.l.b16 %v2695
  %v2819 = vunpack.c.h.b16 %v2695
  %v2820 = vunpack.c.l.b16 %v2696
  %v2821 = vunpack.c.h.b16 %v2696
  %v2822 = vunpack.c.l.b16 %v2697
  %v2823 = vunpack.c.h.b16 %v2697
  %v2824 = vunpack.c.l.b16 %v2698
  %v2825 = vunpack.c.h.b16 %v2698
  %v2826 = vunpack.c.l.b16 %v2699
  %v2827 = vunpack.c.h.b16 %v2699
  %v2828 = vpack.c.b16 %v2766, %v2764
  %v2829 = vpack.c.b16 %v2767, %v2765
  %v2830 = vpack.c.b16 %v2770, %v2768
  %v2831 = vpack.c.b16 %v2771, %v2769
  %v2832 = vpack.c.b16 %v2774, %v2772
  %v2833 = vpack.c.b16 %v2775, %v2773
  %v2834 = vpack.c.b16 %v2778, %v2776
  %v2835 = vpack.c.b16 %v2779, %v2777
  %v2836 = vpack.c.b16 %v2782, %v2780
  %v2837 = vpack.c.b16 %v2783, %v2781
  %v2838 = vpack.c.b16 %v2786, %v2784
  %v2839 = vpack.c.b16 %v2787, %v2785
  %v2840 = vpack.c.b16 %v2790, %v2788
  %v2841 = vpack.c.b16 %v2791, %v2789
  %v2842 = vpack.c.b16 %v2794, %v2792
  %v2843 = vpack.c.b16 %v2795, %v2793
  %v2844 = vpack.c.b16 %v2798, %v2796
  %v2845 = vpack.c.b16 %v2799, %v2797
  %v2846 = vpack.c.b16 %v2802, %v2800
  %v2847 = vpack.c.b16 %v2803, %v2801
  %v2848 = vpack.c.b16 %v2806, %v2804
  %v2849 = vpack.c.b16 %v2807, %v2805
  %v2850 = vpack.c.b16 %v2810, %v2808
  %v2851 = vpack.c.b16 %v2811, %v2809
  %v2852 = vpack.c.b16 %v2814, %v2812
  %v2853 = vpack.c.b16 %v2815, %v2813
  %v2854 = vpack.c.b16 %v2818, %v2816
  %v2855 = vpack.c.b16 %v2819, %v2817
  %v2856 = vpack.c.b16 %v2822, %v2820
  %v2857 = vpack.c.b16 %v2823, %v2821
  %v2858 = vpack.c.b16 %v2826, %v2824
  %v2859 = vpack.c.b16 %v2827, %v2825
  %2892 = vmatprep.subr.bf16.mxu0 %v2701
  %2893 = vmatpush1.bf16.msra.mxu0 %v2700
  %2894 = vmatprep.subr.bf16.mxu0 %v2703
  %2895 = vmatpush1.bf16.msra.mxu0 %v2702
  %2896 = vmatprep.subr.bf16.mxu0 %v2705
  %2897 = vmatpush1.bf16.msra.mxu0 %v2704
  %2898 = vmatprep.subr.bf16.mxu0 %v2707
  %2899 = vmatpush1.bf16.msra.mxu0 %v2706
  %2900 = vmatprep.subr.bf16.mxu0 %v2709
  %2901 = vmatpush1.bf16.msra.mxu0 %v2708
  %2902 = vmatprep.subr.bf16.mxu0 %v2711
  %2903 = vmatpush1.bf16.msra.mxu0 %v2710
  %2904 = vmatprep.subr.bf16.mxu0 %v2713
  %2905 = vmatpush1.bf16.msra.mxu0 %v2712
  %2906 = vmatprep.subr.bf16.mxu0 %v2715
  %2907 = vmatpush1.bf16.msra.mxu0 %v2714
  %2908 = vmatprep.subr.bf16.mxu0 %v2717
  %2909 = vmatpush1.bf16.msra.mxu0 %v2716
  %2910 = vmatprep.subr.bf16.mxu0 %v2719
  %2911 = vmatpush1.bf16.msra.mxu0 %v2718
  %2912 = vmatprep.subr.bf16.mxu0 %v2721
  %2913 = vmatpush1.bf16.msra.mxu0 %v2720
  %2914 = vmatprep.subr.bf16.mxu0 %v2723
  %2915 = vmatpush1.bf16.msra.mxu0 %v2722
  %2916 = vmatprep.subr.bf16.mxu0 %v2725
  %2917 = vmatpush1.bf16.msra.mxu0 %v2724
  %2918 = vmatprep.subr.bf16.mxu0 %v2727
  %2919 = vmatpush1.bf16.msra.mxu0 %v2726
  %2920 = vmatprep.subr.bf16.mxu0 %v2729
  %2921 = vmatpush1.bf16.msra.mxu0 %v2728
  %2922 = vmatprep.subr.bf16.mxu0 %v2731
  %2923 = vmatpush1.bf16.msra.mxu0 %v2730
  %2924 = vmatprep.mubr.bf16.mxu0 %v2829
  %2925 = vmatmul.mubr.bf16.gmra.mrb[0].mxu0 %v2828
  %v2926 = vpop.f32.mrb[0].mxu0
  %v2927 = vadd.f32 0.0, %v2926
  %v2928 = vpop.f32.mrb[0].mxu0
  %v2929 = vadd.f32 0.0, %v2928
  %v2930 = vpop.f32.mrb[0].mxu0
  %v2931 = vadd.f32 0.0, %v2930
  %v2932 = vpop.f32.mrb[0].mxu0
  %v2933 = vadd.f32 0.0, %v2932
  %2934 = vmatprep.mubr.bf16.mxu0 %v2831
  %2935 = vmatmul.mubr.bf16.gmra.mrb[0].mxu0 %v2830
  %v2936 = vpop.f32.mrb[0].mxu0
  %v2937 = vadd.f32 0.0, %v2936
  %v2938 = vpop.f32.mrb[0].mxu0
  %v2939 = vadd.f32 0.0, %v2938
  %v2940 = vpop.f32.mrb[0].mxu0
  %v2941 = vadd.f32 0.0, %v2940
  %v2942 = vpop.f32.mrb[0].mxu0
  %v2943 = vadd.f32 0.0, %v2942
  %2944 = vmatprep.mubr.bf16.mxu0 %v2833
  %2945 = vmatmul.mubr.bf16.gmra.mrb[0].mxu0 %v2832
  %v2946 = vpop.f32.mrb[0].mxu0
  %v2947 = vadd.f32 0.0, %v2946
  %v2948 = vpop.f32.mrb[0].mxu0
  %v2949 = vadd.f32 0.0, %v2948
  %v2950 = vpop.f32.mrb[0].mxu0
  %v2951 = vadd.f32 0.0, %v2950
  %v2952 = vpop.f32.mrb[0].mxu0
  %v2953 = vadd.f32 0.0, %v2952
  %2954 = vmatprep.mubr.bf16.mxu0 %v2835
  %2955 = vmatmul.mubr.bf16.gmra.mrb[0].mxu0 %v2834
  %v2956 = vpop.f32.mrb[0].mxu0
  %v2957 = vadd.f32 0.0, %v2956
  %v2958 = vpop.f32.mrb[0].mxu0
  %v2959 = vadd.f32 0.0, %v2958
  %v2960 = vpop.f32.mrb[0].mxu0
  %v2961 = vadd.f32 0.0, %v2960
  %v2962 = vpop.f32.mrb[0].mxu0
  %v2963 = vadd.f32 0.0, %v2962
  %2964 = vmatprep.mubr.bf16.mxu0 %v2837
  %2965 = vmatmul.mubr.bf16.gmra.mrb[0].mxu0 %v2836
  %v2966 = vpop.f32.mrb[0].mxu0
  %v2967 = vadd.f32 0.0, %v2966
  %v2968 = vpop.f32.mrb[0].mxu0
  %v2969 = vadd.f32 0.0, %v2968
  %v2970 = vpop.f32.mrb[0].mxu0
  %v2971 = vadd.f32 0.0, %v2970
  %v2972 = vpop.f32.mrb[0].mxu0
  %v2973 = vadd.f32 0.0, %v2972
  %2974 = vmatprep.mubr.bf16.mxu0 %v2839
  %2975 = vmatmul.mubr.bf16.gmra.mrb[0].mxu0 %v2838
  %v2976 = vpop.f32.mrb[0].mxu0
  %v2977 = vadd.f32 0.0, %v2976
  %v2978 = vpop.f32.mrb[0].mxu0
  %v2979 = vadd.f32 0.0, %v2978
  %v2980 = vpop.f32.mrb[0].mxu0
  %v2981 = vadd.f32 0.0, %v2980
  %v2982 = vpop.f32.mrb[0].mxu0
  %v2983 = vadd.f32 0.0, %v2982
  %2984 = vmatprep.mubr.bf16.mxu0 %v2841
  %2985 = vmatmul.mubr.bf16.gmra.mrb[0].mxu0 %v2840
  %v2986 = vpop.f32.mrb[0].mxu0
  %v2987 = vadd.f32 0.0, %v2986
  %v2988 = vpop.f32.mrb[0].mxu0
  %v2989 = vadd.f32 0.0, %v2988
  %v2990 = vpop.f32.mrb[0].mxu0
  %v2991 = vadd.f32 0.0, %v2990
  %v2992 = vpop.f32.mrb[0].mxu0
  %v2993 = vadd.f32 0.0, %v2992
  %2994 = vmatprep.mubr.bf16.mxu0 %v2843
  %2995 = vmatmul.mubr.bf16.gmra.mrb[0].mxu0 %v2842
  %v2996 = vpop.f32.mrb[0].mxu0
  %v2997 = vadd.f32 0.0, %v2996
  %v2998 = vpop.f32.mrb[0].mxu0
  %v2999 = vadd.f32 0.0, %v2998
  %v3000 = vpop.f32.mrb[0].mxu0
  %v3001 = vadd.f32 0.0, %v3000
  %v3002 = vpop.f32.mrb[0].mxu0
  %v3003 = vadd.f32 0.0, %v3002
  %3004 = vmatprep.mubr.bf16.mxu0 %v2845
  %3005 = vmatmul.mubr.bf16.gmra.mrb[0].mxu0 %v2844
  %v3006 = vpop.f32.mrb[0].mxu0
  %v3007 = vadd.f32 0.0, %v3006
  %v3008 = vpop.f32.mrb[0].mxu0
  %v3009 = vadd.f32 0.0, %v3008
  %v3010 = vpop.f32.mrb[0].mxu0
  %v3011 = vadd.f32 0.0, %v3010
  %v3012 = vpop.f32.mrb[0].mxu0
  %v3013 = vadd.f32 0.0, %v3012
  %3014 = vmatprep.mubr.bf16.mxu0 %v2847
  %3015 = vmatmul.mubr.bf16.gmra.mrb[0].mxu0 %v2846
  %v3016 = vpop.f32.mrb[0].mxu0
  %v3017 = vadd.f32 0.0, %v3016
  %v3018 = vpop.f32.mrb[0].mxu0
  %v3019 = vadd.f32 0.0, %v3018
  %v3020 = vpop.f32.mrb[0].mxu0
  %v3021 = vadd.f32 0.0, %v3020
  %v3022 = vpop.f32.mrb[0].mxu0
  %v3023 = vadd.f32 0.0, %v3022
  %3024 = vmatprep.mubr.bf16.mxu0 %v2849
  %3025 = vmatmul.mubr.bf16.gmra.mrb[0].mxu0 %v2848
  %v3026 = vpop.f32.mrb[0].mxu0
  %v3027 = vadd.f32 0.0, %v3026
  %v3028 = vpop.f32.mrb[0].mxu0
  %v3029 = vadd.f32 0.0, %v3028
  %v3030 = vpop.f32.mrb[0].mxu0
  %v3031 = vadd.f32 0.0, %v3030
  %v3032 = vpop.f32.mrb[0].mxu0
  %v3033 = vadd.f32 0.0, %v3032
  %3034 = vmatprep.mubr.bf16.mxu0 %v2851
  %3035 = vmatmul.mubr.bf16.gmra.mrb[0].mxu0 %v2850
  %v3036 = vpop.f32.mrb[0].mxu0
  %v3037 = vadd.f32 0.0, %v3036
  %v3038 = vpop.f32.mrb[0].mxu0
  %v3039 = vadd.f32 0.0, %v3038
  %v3040 = vpop.f32.mrb[0].mxu0
  %v3041 = vadd.f32 0.0, %v3040
  %v3042 = vpop.f32.mrb[0].mxu0
  %v3043 = vadd.f32 0.0, %v3042
  %3044 = vmatprep.mubr.bf16.mxu0 %v2853
  %3045 = vmatmul.mubr.bf16.gmra.mrb[0].mxu0 %v2852
  %v3046 = vpop.f32.mrb[0].mxu0
  %v3047 = vadd.f32 0.0, %v3046
  %v3048 = vpop.f32.mrb[0].mxu0
  %v3049 = vadd.f32 0.0, %v3048
  %v3050 = vpop.f32.mrb[0].mxu0
  %v3051 = vadd.f32 0.0, %v3050
  %v3052 = vpop.f32.mrb[0].mxu0
  %v3053 = vadd.f32 0.0, %v3052
  %3054 = vmatprep.mubr.bf16.mxu0 %v2855
  %3055 = vmatmul.mubr.bf16.gmra.mrb[0].mxu0 %v2854
  %v3056 = vpop.f32.mrb[0].mxu0
  %v3057 = vadd.f32 0.0, %v3056
  %v3058 = vpop.f32.mrb[0].mxu0
  %v3059 = vadd.f32 0.0, %v3058
  %v3060 = vpop.f32.mrb[0].mxu0
  %v3061 = vadd.f32 0.0, %v3060
  %v3062 = vpop.f32.mrb[0].mxu0
  %v3063 = vadd.f32 0.0, %v3062
  %3064 = vmatprep.mubr.bf16.mxu0 %v2857
  %3065 = vmatmul.mubr.bf16.gmra.mrb[0].mxu0 %v2856
  %v3066 = vpop.f32.mrb[0].mxu0
  %v3067 = vadd.f32 0.0, %v3066
  %v3068 = vpop.f32.mrb[0].mxu0
  %v3069 = vadd.f32 0.0, %v3068
  %v3070 = vpop.f32.mrb[0].mxu0
  %v3071 = vadd.f32 0.0, %v3070
  %v3072 = vpop.f32.mrb[0].mxu0
  %v3073 = vadd.f32 0.0, %v3072
  %3074 = vmatprep.mubr.bf16.mxu0 %v2859
  %3075 = vmatmul.mubr.bf16.gmra.mrb[0].mxu0 %v2858
  %v3076 = vpop.f32.mrb[0].mxu0
  %v3077 = vadd.f32 0.0, %v3076
  %v3078 = vpop.f32.mrb[0].mxu0
  %v3079 = vadd.f32 0.0, %v3078
  %v3080 = vpop.f32.mrb[0].mxu0
  %v3081 = vadd.f32 0.0, %v3080
  %v3082 = vpop.f32.mrb[0].mxu0
  %v3083 = vadd.f32 0.0, %v3082
  %3084 = vdwg.mxu0
  %v3085 = vadd.f32 %v2603, %v2927
  %v3086 = vadd.f32 %v2604, %v2929
  %v3087 = vadd.f32 %v2605, %v2931
  %v3088 = vadd.f32 %v2606, %v2933
  %v3089 = vadd.f32 %v2607, %v2937
  %v3090 = vadd.f32 %v2608, %v2939
  %v3091 = vadd.f32 %v2609, %v2941
  %v3092 = vadd.f32 %v2610, %v2943
  %v3093 = vadd.f32 %v2611, %v2947
  %v3094 = vadd.f32 %v2612, %v2949
  %v3095 = vadd.f32 %v2613, %v2951
  %v3096 = vadd.f32 %v2614, %v2953
  %v3097 = vadd.f32 %v2615, %v2957
  %v3098 = vadd.f32 %v2616, %v2959
  %v3099 = vadd.f32 %v2617, %v2961
  %v3100 = vadd.f32 %v2618, %v2963
  %v3101 = vadd.f32 %v2619, %v2967
  %v3102 = vadd.f32 %v2620, %v2969
  %v3103 = vadd.f32 %v2621, %v2971
  %v3104 = vadd.f32 %v2622, %v2973
  %v3105 = vadd.f32 %v2623, %v2977
  %v3106 = vadd.f32 %v2624, %v2979
  %v3107 = vadd.f32 %v2625, %v2981
  %v3108 = vadd.f32 %v2626, %v2983
  %v3109 = vadd.f32 %v2627, %v2987
  %v3110 = vadd.f32 %v2628, %v2989
  %v3111 = vadd.f32 %v2629, %v2991
  %v3112 = vadd.f32 %v2630, %v2993
  %v3113 = vadd.f32 %v2631, %v2997
  %v3114 = vadd.f32 %v2632, %v2999
  %v3115 = vadd.f32 %v2633, %v3001
  %v3116 = vadd.f32 %v2634, %v3003
  %v3117 = vadd.f32 %v2635, %v3007
  %v3118 = vadd.f32 %v2636, %v3009
  %v3119 = vadd.f32 %v2637, %v3011
  %v3120 = vadd.f32 %v2638, %v3013
  %v3121 = vadd.f32 %v2639, %v3017
  %v3122 = vadd.f32 %v2640, %v3019
  %v3123 = vadd.f32 %v2641, %v3021
  %v3124 = vadd.f32 %v2642, %v3023
  %v3125 = vadd.f32 %v2643, %v3027
  %v3126 = vadd.f32 %v2644, %v3029
  %v3127 = vadd.f32 %v2645, %v3031
  %v3128 = vadd.f32 %v2646, %v3033
  %v3129 = vadd.f32 %v2647, %v3037
  %v3130 = vadd.f32 %v2648, %v3039
  %v3131 = vadd.f32 %v2649, %v3041
  %v3132 = vadd.f32 %v2650, %v3043
  %v3133 = vadd.f32 %v2651, %v3047
  %v3134 = vadd.f32 %v2652, %v3049
  %v3135 = vadd.f32 %v2653, %v3051
  %v3136 = vadd.f32 %v2654, %v3053
  %v3137 = vadd.f32 %v2655, %v3057
  %v3138 = vadd.f32 %v2656, %v3059
  %v3139 = vadd.f32 %v2657, %v3061
  %v3140 = vadd.f32 %v2658, %v3063
  %v3141 = vadd.f32 %v2659, %v3067
  %v3142 = vadd.f32 %v2660, %v3069
  %v3143 = vadd.f32 %v2661, %v3071
  %v3144 = vadd.f32 %v2662, %v3073
  %v3145 = vadd.f32 %v2663, %v3077
  %v3146 = vadd.f32 %v2664, %v3079
  %v3147 = vadd.f32 %v2665, %v3081
  %v3148 = vadd.f32 %v2666, %v3083
  %3149 = vrot.lane.b32.xlu0 %v29, 127
  %v3150 = vpop.permute.xlu0 %3149
  %3151 = vrot.lane.b32.xlu0 %v31, 127
  %v3152 = vpop.permute.xlu0 %3151
  %3153 = vrot.lane.b32.xlu0 %v33, 127
  %v3154 = vpop.permute.xlu0 %3153
  %3155 = vrot.lane.b32.xlu0 %v35, 127
  %v3156 = vpop.permute.xlu0 %3155
  %3157 = vrot.lane.b32.xlu0 %v37, 127
  %v3158 = vpop.permute.xlu0 %3157
  %3159 = vrot.lane.b32.xlu0 %v39, 127
  %v3160 = vpop.permute.xlu0 %3159
  %3161 = vrot.lane.b32.xlu0 %v41, 127
  %v3162 = vpop.permute.xlu0 %3161
  %3163 = vrot.lane.b32.xlu0 %v43, 127
  %v3164 = vpop.permute.xlu0 %3163
  %3165 = vrot.lane.b32.xlu0 %v45, 127
  %v3166 = vpop.permute.xlu0 %3165
  %3167 = vrot.lane.b32.xlu0 %v47, 127
  %v3168 = vpop.permute.xlu0 %3167
  %3169 = vrot.lane.b32.xlu0 %v49, 127
  %v3170 = vpop.permute.xlu0 %3169
  %3171 = vrot.lane.b32.xlu0 %v51, 127
  %v3172 = vpop.permute.xlu0 %3171
  %3173 = vrot.lane.b32.xlu0 %v53, 127
  %v3174 = vpop.permute.xlu0 %3173
  %3175 = vrot.lane.b32.xlu0 %v55, 127
  %v3176 = vpop.permute.xlu0 %3175
  %3177 = vrot.lane.b32.xlu0 %v57, 127
  %v3178 = vpop.permute.xlu0 %3177
  %3179 = vrot.lane.b32.xlu0 %v59, 127
  %v3180 = vpop.permute.xlu0 %3179
  %3181 = vrot.lane.b32.xlu0 %v61, 127
  %v3182 = vpop.permute.xlu0 %3181
  %3183 = vrot.lane.b32.xlu0 %v63, 127
  %v3184 = vpop.permute.xlu0 %3183
  %3185 = vrot.lane.b32.xlu0 %v65, 127
  %v3186 = vpop.permute.xlu0 %3185
  %3187 = vrot.lane.b32.xlu0 %v67, 127
  %v3188 = vpop.permute.xlu0 %3187
  %3189 = vrot.lane.b32.xlu0 %v69, 127
  %v3190 = vpop.permute.xlu0 %3189
  %3191 = vrot.lane.b32.xlu0 %v71, 127
  %v3192 = vpop.permute.xlu0 %3191
  %3193 = vrot.lane.b32.xlu0 %v73, 127
  %v3194 = vpop.permute.xlu0 %3193
  %3195 = vrot.lane.b32.xlu0 %v75, 127
  %v3196 = vpop.permute.xlu0 %3195
  %3197 = vrot.lane.b32.xlu0 %v77, 127
  %v3198 = vpop.permute.xlu0 %3197
  %3199 = vrot.lane.b32.xlu0 %v79, 127
  %v3200 = vpop.permute.xlu0 %3199
  %3201 = vrot.lane.b32.xlu0 %v81, 127
  %v3202 = vpop.permute.xlu0 %3201
  %3203 = vrot.lane.b32.xlu0 %v83, 127
  %v3204 = vpop.permute.xlu0 %3203
  %3205 = vrot.lane.b32.xlu0 %v85, 127
  %v3206 = vpop.permute.xlu0 %3205
  %3207 = vrot.lane.b32.xlu0 %v87, 127
  %v3208 = vpop.permute.xlu0 %3207
  %3209 = vrot.lane.b32.xlu0 %v89, 127
  %v3210 = vpop.permute.xlu0 %3209
  %3211 = vrot.lane.b32.xlu0 %v91, 127
  %v3212 = vpop.permute.xlu0 %3211
  %3213 = vrot.lane.b32.xlu0 %v30, 127
  %v3214 = vpop.permute.xlu0 %3213
  %3215 = vrot.lane.b32.xlu0 %v32, 127
  %v3216 = vpop.permute.xlu0 %3215
  %3217 = vrot.lane.b32.xlu0 %v34, 127
  %v3218 = vpop.permute.xlu0 %3217
  %3219 = vrot.lane.b32.xlu0 %v36, 127
  %v3220 = vpop.permute.xlu0 %3219
  %3221 = vrot.lane.b32.xlu0 %v38, 127
  %v3222 = vpop.permute.xlu0 %3221
  %3223 = vrot.lane.b32.xlu0 %v40, 127
  %v3224 = vpop.permute.xlu0 %3223
  %3225 = vrot.lane.b32.xlu0 %v42, 127
  %v3226 = vpop.permute.xlu0 %3225
  %3227 = vrot.lane.b32.xlu0 %v44, 127
  %v3228 = vpop.permute.xlu0 %3227
  %3229 = vrot.lane.b32.xlu0 %v46, 127
  %v3230 = vpop.permute.xlu0 %3229
  %3231 = vrot.lane.b32.xlu0 %v48, 127
  %v3232 = vpop.permute.xlu0 %3231
  %3233 = vrot.lane.b32.xlu0 %v50, 127
  %v3234 = vpop.permute.xlu0 %3233
  %3235 = vrot.lane.b32.xlu0 %v52, 127
  %v3236 = vpop.permute.xlu0 %3235
  %3237 = vrot.lane.b32.xlu0 %v54, 127
  %v3238 = vpop.permute.xlu0 %3237
  %3239 = vrot.lane.b32.xlu0 %v56, 127
  %v3240 = vpop.permute.xlu0 %3239
  %3241 = vrot.lane.b32.xlu0 %v58, 127
  %v3242 = vpop.permute.xlu0 %3241
  %3243 = vrot.lane.b32.xlu0 %v60, 127
  %v3244 = vpop.permute.xlu0 %3243
  %3245 = vrot.lane.b32.xlu0 %v62, 127
  %v3246 = vpop.permute.xlu0 %3245
  %3247 = vrot.lane.b32.xlu0 %v64, 127
  %v3248 = vpop.permute.xlu0 %3247
  %3249 = vrot.lane.b32.xlu0 %v66, 127
  %v3250 = vpop.permute.xlu0 %3249
  %3251 = vrot.lane.b32.xlu0 %v68, 127
  %v3252 = vpop.permute.xlu0 %3251
  %3253 = vrot.lane.b32.xlu0 %v70, 127
  %v3254 = vpop.permute.xlu0 %3253
  %3255 = vrot.lane.b32.xlu0 %v72, 127
  %v3256 = vpop.permute.xlu0 %3255
  %3257 = vrot.lane.b32.xlu0 %v74, 127
  %v3258 = vpop.permute.xlu0 %3257
  %3259 = vrot.lane.b32.xlu0 %v76, 127
  %v3260 = vpop.permute.xlu0 %3259
  %3261 = vrot.lane.b32.xlu0 %v78, 127
  %v3262 = vpop.permute.xlu0 %3261
  %3263 = vrot.lane.b32.xlu0 %v80, 127
  %v3264 = vpop.permute.xlu0 %3263
  %3265 = vrot.lane.b32.xlu0 %v82, 127
  %v3266 = vpop.permute.xlu0 %3265
  %3267 = vrot.lane.b32.xlu0 %v84, 127
  %v3268 = vpop.permute.xlu0 %3267
  %3269 = vrot.lane.b32.xlu0 %v86, 127
  %v3270 = vpop.permute.xlu0 %3269
  %3271 = vrot.lane.b32.xlu0 %v88, 127
  %v3272 = vpop.permute.xlu0 %3271
  %3273 = vrot.lane.b32.xlu0 %v90, 127
  %v3274 = vpop.permute.xlu0 %3273
  %3275 = vrot.lane.b32.xlu0 %v92, 127
  %v3276 = vpop.permute.xlu0 %3275
  %vm3277 = vcmp.lt.s32.totalorder %v223, 127
  %v3278 = vsel %vm3277, %v3150, %v3214
  %v3279 = vsel %vm3277, %v3152, %v3216
  %v3280 = vsel %vm3277, %v3154, %v3218
  %v3281 = vsel %vm3277, %v3156, %v3220
  %v3282 = vsel %vm3277, %v3158, %v3222
  %v3283 = vsel %vm3277, %v3160, %v3224
  %v3284 = vsel %vm3277, %v3162, %v3226
  %v3285 = vsel %vm3277, %v3164, %v3228
  %v3286 = vsel %vm3277, %v3166, %v3230
  %v3287 = vsel %vm3277, %v3168, %v3232
  %v3288 = vsel %vm3277, %v3170, %v3234
  %v3289 = vsel %vm3277, %v3172, %v3236
  %v3290 = vsel %vm3277, %v3174, %v3238
  %v3291 = vsel %vm3277, %v3176, %v3240
  %v3292 = vsel %vm3277, %v3178, %v3242
  %v3293 = vsel %vm3277, %v3180, %v3244
  %v3294 = vsel %vm3277, %v3182, %v3246
  %v3295 = vsel %vm3277, %v3184, %v3248
  %v3296 = vsel %vm3277, %v3186, %v3250
  %v3297 = vsel %vm3277, %v3188, %v3252
  %v3298 = vsel %vm3277, %v3190, %v3254
  %v3299 = vsel %vm3277, %v3192, %v3256
  %v3300 = vsel %vm3277, %v3194, %v3258
  %v3301 = vsel %vm3277, %v3196, %v3260
  %v3302 = vsel %vm3277, %v3198, %v3262
  %v3303 = vsel %vm3277, %v3200, %v3264
  %v3304 = vsel %vm3277, %v3202, %v3266
  %v3305 = vsel %vm3277, %v3204, %v3268
  %v3306 = vsel %vm3277, %v3206, %v3270
  %v3307 = vsel %vm3277, %v3208, %v3272
  %v3308 = vsel %vm3277, %v3210, %v3274
  %v3309 = vsel %vm3277, %v3212, %v3276
  %v3310 = vsel %vm3277, %v3214, %v3150
  %v3311 = vsel %vm3277, %v3216, %v3152
  %v3312 = vsel %vm3277, %v3218, %v3154
  %v3313 = vsel %vm3277, %v3220, %v3156
  %v3314 = vsel %vm3277, %v3222, %v3158
  %v3315 = vsel %vm3277, %v3224, %v3160
  %v3316 = vsel %vm3277, %v3226, %v3162
  %v3317 = vsel %vm3277, %v3228, %v3164
  %v3318 = vsel %vm3277, %v3230, %v3166
  %v3319 = vsel %vm3277, %v3232, %v3168
  %v3320 = vsel %vm3277, %v3234, %v3170
  %v3321 = vsel %vm3277, %v3236, %v3172
  %v3322 = vsel %vm3277, %v3238, %v3174
  %v3323 = vsel %vm3277, %v3240, %v3176
  %v3324 = vsel %vm3277, %v3242, %v3178
  %v3325 = vsel %vm3277, %v3244, %v3180
  %v3326 = vsel %vm3277, %v3246, %v3182
  %v3327 = vsel %vm3277, %v3248, %v3184
  %v3328 = vsel %vm3277, %v3250, %v3186
  %v3329 = vsel %vm3277, %v3252, %v3188
  %v3330 = vsel %vm3277, %v3254, %v3190
  %v3331 = vsel %vm3277, %v3256, %v3192
  %v3332 = vsel %vm3277, %v3258, %v3194
  %v3333 = vsel %vm3277, %v3260, %v3196
  %v3334 = vsel %vm3277, %v3262, %v3198
  %v3335 = vsel %vm3277, %v3264, %v3200
  %v3336 = vsel %vm3277, %v3266, %v3202
  %v3337 = vsel %vm3277, %v3268, %v3204
  %v3338 = vsel %vm3277, %v3270, %v3206
  %v3339 = vsel %vm3277, %v3272, %v3208
  %v3340 = vsel %vm3277, %v3274, %v3210
  %v3341 = vsel %vm3277, %v3276, %v3212
  %s3342 = scalar_lea.vmem %s2, 1280
  %v3343 = vld [vmem:[%s3342] sm:$0xff]
  %v3344 = vld [vmem:[%s3342 + $0x8] sm:$0xff]
  %v3345 = vld [vmem:[%s3342 + $0x10] sm:$0xff]
  %v3346 = vld [vmem:[%s3342 + $0x18] sm:$0xff]
  %v3347 = vld [vmem:[%s3342 + $0x20] sm:$0xff]
  %v3348 = vld [vmem:[%s3342 + $0x28] sm:$0xff]
  %v3349 = vld [vmem:[%s3342 + $0x30] sm:$0xff]
  %v3350 = vld [vmem:[%s3342 + $0x38] sm:$0xff]
  %v3351 = vld [vmem:[%s3342 + $0x40] sm:$0xff]
  %v3352 = vld [vmem:[%s3342 + $0x48] sm:$0xff]
  %v3353 = vld [vmem:[%s3342 + $0x50] sm:$0xff]
  %v3354 = vld [vmem:[%s3342 + $0x58] sm:$0xff]
  %v3355 = vld [vmem:[%s3342 + $0x60] sm:$0xff]
  %v3356 = vld [vmem:[%s3342 + $0x68] sm:$0xff]
  %v3357 = vld [vmem:[%s3342 + $0x70] sm:$0xff]
  %v3358 = vld [vmem:[%s3342 + $0x78] sm:$0xff]
  %v3359 = vld [vmem:[%s3342 + $0x80] sm:$0xff]
  %v3360 = vld [vmem:[%s3342 + $0x88] sm:$0xff]
  %v3361 = vld [vmem:[%s3342 + $0x90] sm:$0xff]
  %v3362 = vld [vmem:[%s3342 + $0x98] sm:$0xff]
  %v3363 = vld [vmem:[%s3342 + $0xa0] sm:$0xff]
  %v3364 = vld [vmem:[%s3342 + $0xa8] sm:$0xff]
  %v3365 = vld [vmem:[%s3342 + $0xb0] sm:$0xff]
  %v3366 = vld [vmem:[%s3342 + $0xb8] sm:$0xff]
  %v3367 = vld [vmem:[%s3342 + $0xc0] sm:$0xff]
  %v3368 = vld [vmem:[%s3342 + $0xc8] sm:$0xff]
  %v3369 = vld [vmem:[%s3342 + $0xd0] sm:$0xff]
  %v3370 = vld [vmem:[%s3342 + $0xd8] sm:$0xff]
  %v3371 = vld [vmem:[%s3342 + $0xe0] sm:$0xff]
  %v3372 = vld [vmem:[%s3342 + $0xe8] sm:$0xff]
  %v3373 = vld [vmem:[%s3342 + $0xf0] sm:$0xff]
  %v3374 = vld [vmem:[%s3342 + $0xf8] sm:$0xff]
  %v3375 = vpack.c.bf16 %v3279, %v3278
  %v3376 = vpack.c.bf16 %v3311, %v3310
  %v3377 = vpack.c.bf16 %v3281, %v3280
  %v3378 = vpack.c.bf16 %v3313, %v3312
  %v3379 = vpack.c.bf16 %v3283, %v3282
  %v3380 = vpack.c.bf16 %v3315, %v3314
  %v3381 = vpack.c.bf16 %v3285, %v3284
  %v3382 = vpack.c.bf16 %v3317, %v3316
  %v3383 = vpack.c.bf16 %v3287, %v3286
  %v3384 = vpack.c.bf16 %v3319, %v3318
  %v3385 = vpack.c.bf16 %v3289, %v3288
  %v3386 = vpack.c.bf16 %v3321, %v3320
  %v3387 = vpack.c.bf16 %v3291, %v3290
  %v3388 = vpack.c.bf16 %v3323, %v3322
  %v3389 = vpack.c.bf16 %v3293, %v3292
  %v3390 = vpack.c.bf16 %v3325, %v3324
  %v3391 = vpack.c.bf16 %v3295, %v3294
  %v3392 = vpack.c.bf16 %v3327, %v3326
  %v3393 = vpack.c.bf16 %v3297, %v3296
  %v3394 = vpack.c.bf16 %v3329, %v3328
  %v3395 = vpack.c.bf16 %v3299, %v3298
  %v3396 = vpack.c.bf16 %v3331, %v3330
  %v3397 = vpack.c.bf16 %v3301, %v3300
  %v3398 = vpack.c.bf16 %v3333, %v3332
  %v3399 = vpack.c.bf16 %v3303, %v3302
  %v3400 = vpack.c.bf16 %v3335, %v3334
  %v3401 = vpack.c.bf16 %v3305, %v3304
  %v3402 = vpack.c.bf16 %v3337, %v3336
  %v3403 = vpack.c.bf16 %v3307, %v3306
  %v3404 = vpack.c.bf16 %v3339, %v3338
  %v3405 = vpack.c.bf16 %v3309, %v3308
  %v3406 = vpack.c.bf16 %v3341, %v3340
  %v3439 = vunpack.c.l.b16 %v3343
  %v3440 = vunpack.c.h.b16 %v3343
  %v3441 = vunpack.c.l.b16 %v3344
  %v3442 = vunpack.c.h.b16 %v3344
  %v3443 = vunpack.c.l.b16 %v3345
  %v3444 = vunpack.c.h.b16 %v3345
  %v3445 = vunpack.c.l.b16 %v3346
  %v3446 = vunpack.c.h.b16 %v3346
  %v3447 = vunpack.c.l.b16 %v3347
  %v3448 = vunpack.c.h.b16 %v3347
  %v3449 = vunpack.c.l.b16 %v3348
  %v3450 = vunpack.c.h.b16 %v3348
  %v3451 = vunpack.c.l.b16 %v3349
  %v3452 = vunpack.c.h.b16 %v3349
  %v3453 = vunpack.c.l.b16 %v3350
  %v3454 = vunpack.c.h.b16 %v3350
  %v3455 = vunpack.c.l.b16 %v3351
  %v3456 = vunpack.c.h.b16 %v3351
  %v3457 = vunpack.c.l.b16 %v3352
  %v3458 = vunpack.c.h.b16 %v3352
  %v3459 = vunpack.c.l.b16 %v3353
  %v3460 = vunpack.c.h.b16 %v3353
  %v3461 = vunpack.c.l.b16 %v3354
  %v3462 = vunpack.c.h.b16 %v3354
  %v3463 = vunpack.c.l.b16 %v3355
  %v3464 = vunpack.c.h.b16 %v3355
  %v3465 = vunpack.c.l.b16 %v3356
  %v3466 = vunpack.c.h.b16 %v3356
  %v3467 = vunpack.c.l.b16 %v3357
  %v3468 = vunpack.c.h.b16 %v3357
  %v3469 = vunpack.c.l.b16 %v3358
  %v3470 = vunpack.c.h.b16 %v3358
  %v3471 = vunpack.c.l.b16 %v3359
  %v3472 = vunpack.c.h.b16 %v3359
  %v3473 = vunpack.c.l.b16 %v3360
  %v3474 = vunpack.c.h.b16 %v3360
  %v3475 = vunpack.c.l.b16 %v3361
  %v3476 = vunpack.c.h.b16 %v3361
  %v3477 = vunpack.c.l.b16 %v3362
  %v3478 = vunpack.c.h.b16 %v3362
  %v3479 = vunpack.c.l.b16 %v3363
  %v3480 = vunpack.c.h.b16 %v3363
  %v3481 = vunpack.c.l.b16 %v3364
  %v3482 = vunpack.c.h.b16 %v3364
  %v3483 = vunpack.c.l.b16 %v3365
  %v3484 = vunpack.c.h.b16 %v3365
  %v3485 = vunpack.c.l.b16 %v3366
  %v3486 = vunpack.c.h.b16 %v3366
  %v3487 = vunpack.c.l.b16 %v3367
  %v3488 = vunpack.c.h.b16 %v3367
  %v3489 = vunpack.c.l.b16 %v3368
  %v3490 = vunpack.c.h.b16 %v3368
  %v3491 = vunpack.c.l.b16 %v3369
  %v3492 = vunpack.c.h.b16 %v3369
  %v3493 = vunpack.c.l.b16 %v3370
  %v3494 = vunpack.c.h.b16 %v3370
  %v3495 = vunpack.c.l.b16 %v3371
  %v3496 = vunpack.c.h.b16 %v3371
  %v3497 = vunpack.c.l.b16 %v3372
  %v3498 = vunpack.c.h.b16 %v3372
  %v3499 = vunpack.c.l.b16 %v3373
  %v3500 = vunpack.c.h.b16 %v3373
  %v3501 = vunpack.c.l.b16 %v3374
  %v3502 = vunpack.c.h.b16 %v3374
  %v3503 = vpack.c.b16 %v3441, %v3439
  %v3504 = vpack.c.b16 %v3442, %v3440
  %v3505 = vpack.c.b16 %v3445, %v3443
  %v3506 = vpack.c.b16 %v3446, %v3444
  %v3507 = vpack.c.b16 %v3449, %v3447
  %v3508 = vpack.c.b16 %v3450, %v3448
  %v3509 = vpack.c.b16 %v3453, %v3451
  %v3510 = vpack.c.b16 %v3454, %v3452
  %v3511 = vpack.c.b16 %v3457, %v3455
  %v3512 = vpack.c.b16 %v3458, %v3456
  %v3513 = vpack.c.b16 %v3461, %v3459
  %v3514 = vpack.c.b16 %v3462, %v3460
  %v3515 = vpack.c.b16 %v3465, %v3463
  %v3516 = vpack.c.b16 %v3466, %v3464
  %v3517 = vpack.c.b16 %v3469, %v3467
  %v3518 = vpack.c.b16 %v3470, %v3468
  %v3519 = vpack.c.b16 %v3473, %v3471
  %v3520 = vpack.c.b16 %v3474, %v3472
  %v3521 = vpack.c.b16 %v3477, %v3475
  %v3522 = vpack.c.b16 %v3478, %v3476
  %v3523 = vpack.c.b16 %v3481, %v3479
  %v3524 = vpack.c.b16 %v3482, %v3480
  %v3525 = vpack.c.b16 %v3485, %v3483
  %v3526 = vpack.c.b16 %v3486, %v3484
  %v3527 = vpack.c.b16 %v3489, %v3487
  %v3528 = vpack.c.b16 %v3490, %v3488
  %v3529 = vpack.c.b16 %v3493, %v3491
  %v3530 = vpack.c.b16 %v3494, %v3492
  %v3531 = vpack.c.b16 %v3497, %v3495
  %v3532 = vpack.c.b16 %v3498, %v3496
  %v3533 = vpack.c.b16 %v3501, %v3499
  %v3534 = vpack.c.b16 %v3502, %v3500
  %3567 = vmatprep.subr.bf16.mxu0 %v3376
  %3568 = vmatpush1.bf16.msra.mxu0 %v3375
  %3569 = vmatprep.subr.bf16.mxu0 %v3378
  %3570 = vmatpush1.bf16.msra.mxu0 %v3377
  %3571 = vmatprep.subr.bf16.mxu0 %v3380
  %3572 = vmatpush1.bf16.msra.mxu0 %v3379
  %3573 = vmatprep.subr.bf16.mxu0 %v3382
  %3574 = vmatpush1.bf16.msra.mxu0 %v3381
  %3575 = vmatprep.subr.bf16.mxu0 %v3384
  %3576 = vmatpush1.bf16.msra.mxu0 %v3383
  %3577 = vmatprep.subr.bf16.mxu0 %v3386
  %3578 = vmatpush1.bf16.msra.mxu0 %v3385
  %3579 = vmatprep.subr.bf16.mxu0 %v3388
  %3580 = vmatpush1.bf16.msra.mxu0 %v3387
  %3581 = vmatprep.subr.bf16.mxu0 %v3390
  %3582 = vmatpush1.bf16.msra.mxu0 %v3389
  %3583 = vmatprep.subr.bf16.mxu0 %v3392
  %3584 = vmatpush1.bf16.msra.mxu0 %v3391
  %3585 = vmatprep.subr.bf16.mxu0 %v3394
  %3586 = vmatpush1.bf16.msra.mxu0 %v3393
  %3587 = vmatprep.subr.bf16.mxu0 %v3396
  %3588 = vmatpush1.bf16.msra.mxu0 %v3395
  %3589 = vmatprep.subr.bf16.mxu0 %v3398
  %3590 = vmatpush1.bf16.msra.mxu0 %v3397
  %3591 = vmatprep.subr.bf16.mxu0 %v3400
  %3592 = vmatpush1.bf16.msra.mxu0 %v3399
  %3593 = vmatprep.subr.bf16.mxu0 %v3402
  %3594 = vmatpush1.bf16.msra.mxu0 %v3401
  %3595 = vmatprep.subr.bf16.mxu0 %v3404
  %3596 = vmatpush1.bf16.msra.mxu0 %v3403
  %3597 = vmatprep.subr.bf16.mxu0 %v3406
  %3598 = vmatpush1.bf16.msra.mxu0 %v3405
  %3599 = vmatprep.mubr.bf16.mxu0 %v3504
  %3600 = vmatmul.mubr.bf16.gmra.mrb[0].mxu0 %v3503
  %v3601 = vpop.f32.mrb[0].mxu0
  %v3602 = vadd.f32 0.0, %v3601
  %v3603 = vpop.f32.mrb[0].mxu0
  %v3604 = vadd.f32 0.0, %v3603
  %v3605 = vpop.f32.mrb[0].mxu0
  %v3606 = vadd.f32 0.0, %v3605
  %v3607 = vpop.f32.mrb[0].mxu0
  %v3608 = vadd.f32 0.0, %v3607
  %3609 = vmatprep.mubr.bf16.mxu0 %v3506
  %3610 = vmatmul.mubr.bf16.gmra.mrb[0].mxu0 %v3505
  %v3611 = vpop.f32.mrb[0].mxu0
  %v3612 = vadd.f32 0.0, %v3611
  %v3613 = vpop.f32.mrb[0].mxu0
  %v3614 = vadd.f32 0.0, %v3613
  %v3615 = vpop.f32.mrb[0].mxu0
  %v3616 = vadd.f32 0.0, %v3615
  %v3617 = vpop.f32.mrb[0].mxu0
  %v3618 = vadd.f32 0.0, %v3617
  %3619 = vmatprep.mubr.bf16.mxu0 %v3508
  %3620 = vmatmul.mubr.bf16.gmra.mrb[0].mxu0 %v3507
  %v3621 = vpop.f32.mrb[0].mxu0
  %v3622 = vadd.f32 0.0, %v3621
  %v3623 = vpop.f32.mrb[0].mxu0
  %v3624 = vadd.f32 0.0, %v3623
  %v3625 = vpop.f32.mrb[0].mxu0
  %v3626 = vadd.f32 0.0, %v3625
  %v3627 = vpop.f32.mrb[0].mxu0
  %v3628 = vadd.f32 0.0, %v3627
  %3629 = vmatprep.mubr.bf16.mxu0 %v3510
  %3630 = vmatmul.mubr.bf16.gmra.mrb[0].mxu0 %v3509
  %v3631 = vpop.f32.mrb[0].mxu0
  %v3632 = vadd.f32 0.0, %v3631
  %v3633 = vpop.f32.mrb[0].mxu0
  %v3634 = vadd.f32 0.0, %v3633
  %v3635 = vpop.f32.mrb[0].mxu0
  %v3636 = vadd.f32 0.0, %v3635
  %v3637 = vpop.f32.mrb[0].mxu0
  %v3638 = vadd.f32 0.0, %v3637
  %3639 = vmatprep.mubr.bf16.mxu0 %v3512
  %3640 = vmatmul.mubr.bf16.gmra.mrb[0].mxu0 %v3511
  %v3641 = vpop.f32.mrb[0].mxu0
  %v3642 = vadd.f32 0.0, %v3641
  %v3643 = vpop.f32.mrb[0].mxu0
  %v3644 = vadd.f32 0.0, %v3643
  %v3645 = vpop.f32.mrb[0].mxu0
  %v3646 = vadd.f32 0.0, %v3645
  %v3647 = vpop.f32.mrb[0].mxu0
  %v3648 = vadd.f32 0.0, %v3647
  %3649 = vmatprep.mubr.bf16.mxu0 %v3514
  %3650 = vmatmul.mubr.bf16.gmra.mrb[0].mxu0 %v3513
  %v3651 = vpop.f32.mrb[0].mxu0
  %v3652 = vadd.f32 0.0, %v3651
  %v3653 = vpop.f32.mrb[0].mxu0
  %v3654 = vadd.f32 0.0, %v3653
  %v3655 = vpop.f32.mrb[0].mxu0
  %v3656 = vadd.f32 0.0, %v3655
  %v3657 = vpop.f32.mrb[0].mxu0
  %v3658 = vadd.f32 0.0, %v3657
  %3659 = vmatprep.mubr.bf16.mxu0 %v3516
  %3660 = vmatmul.mubr.bf16.gmra.mrb[0].mxu0 %v3515
  %v3661 = vpop.f32.mrb[0].mxu0
  %v3662 = vadd.f32 0.0, %v3661
  %v3663 = vpop.f32.mrb[0].mxu0
  %v3664 = vadd.f32 0.0, %v3663
  %v3665 = vpop.f32.mrb[0].mxu0
  %v3666 = vadd.f32 0.0, %v3665
  %v3667 = vpop.f32.mrb[0].mxu0
  %v3668 = vadd.f32 0.0, %v3667
  %3669 = vmatprep.mubr.bf16.mxu0 %v3518
  %3670 = vmatmul.mubr.bf16.gmra.mrb[0].mxu0 %v3517
  %v3671 = vpop.f32.mrb[0].mxu0
  %v3672 = vadd.f32 0.0, %v3671
  %v3673 = vpop.f32.mrb[0].mxu0
  %v3674 = vadd.f32 0.0, %v3673
  %v3675 = vpop.f32.mrb[0].mxu0
  %v3676 = vadd.f32 0.0, %v3675
  %v3677 = vpop.f32.mrb[0].mxu0
  %v3678 = vadd.f32 0.0, %v3677
  %3679 = vmatprep.mubr.bf16.mxu0 %v3520
  %3680 = vmatmul.mubr.bf16.gmra.mrb[0].mxu0 %v3519
  %v3681 = vpop.f32.mrb[0].mxu0
  %v3682 = vadd.f32 0.0, %v3681
  %v3683 = vpop.f32.mrb[0].mxu0
  %v3684 = vadd.f32 0.0, %v3683
  %v3685 = vpop.f32.mrb[0].mxu0
  %v3686 = vadd.f32 0.0, %v3685
  %v3687 = vpop.f32.mrb[0].mxu0
  %v3688 = vadd.f32 0.0, %v3687
  %3689 = vmatprep.mubr.bf16.mxu0 %v3522
  %3690 = vmatmul.mubr.bf16.gmra.mrb[0].mxu0 %v3521
  %v3691 = vpop.f32.mrb[0].mxu0
  %v3692 = vadd.f32 0.0, %v3691
  %v3693 = vpop.f32.mrb[0].mxu0
  %v3694 = vadd.f32 0.0, %v3693
  %v3695 = vpop.f32.mrb[0].mxu0
  %v3696 = vadd.f32 0.0, %v3695
  %v3697 = vpop.f32.mrb[0].mxu0
  %v3698 = vadd.f32 0.0, %v3697
  %3699 = vmatprep.mubr.bf16.mxu0 %v3524
  %3700 = vmatmul.mubr.bf16.gmra.mrb[0].mxu0 %v3523
  %v3701 = vpop.f32.mrb[0].mxu0
  %v3702 = vadd.f32 0.0, %v3701
  %v3703 = vpop.f32.mrb[0].mxu0
  %v3704 = vadd.f32 0.0, %v3703
  %v3705 = vpop.f32.mrb[0].mxu0
  %v3706 = vadd.f32 0.0, %v3705
  %v3707 = vpop.f32.mrb[0].mxu0
  %v3708 = vadd.f32 0.0, %v3707
  %3709 = vmatprep.mubr.bf16.mxu0 %v3526
  %3710 = vmatmul.mubr.bf16.gmra.mrb[0].mxu0 %v3525
  %v3711 = vpop.f32.mrb[0].mxu0
  %v3712 = vadd.f32 0.0, %v3711
  %v3713 = vpop.f32.mrb[0].mxu0
  %v3714 = vadd.f32 0.0, %v3713
  %v3715 = vpop.f32.mrb[0].mxu0
  %v3716 = vadd.f32 0.0, %v3715
  %v3717 = vpop.f32.mrb[0].mxu0
  %v3718 = vadd.f32 0.0, %v3717
  %3719 = vmatprep.mubr.bf16.mxu0 %v3528
  %3720 = vmatmul.mubr.bf16.gmra.mrb[0].mxu0 %v3527
  %v3721 = vpop.f32.mrb[0].mxu0
  %v3722 = vadd.f32 0.0, %v3721
  %v3723 = vpop.f32.mrb[0].mxu0
  %v3724 = vadd.f32 0.0, %v3723
  %v3725 = vpop.f32.mrb[0].mxu0
  %v3726 = vadd.f32 0.0, %v3725
  %v3727 = vpop.f32.mrb[0].mxu0
  %v3728 = vadd.f32 0.0, %v3727
  %3729 = vmatprep.mubr.bf16.mxu0 %v3530
  %3730 = vmatmul.mubr.bf16.gmra.mrb[0].mxu0 %v3529
  %v3731 = vpop.f32.mrb[0].mxu0
  %v3732 = vadd.f32 0.0, %v3731
  %v3733 = vpop.f32.mrb[0].mxu0
  %v3734 = vadd.f32 0.0, %v3733
  %v3735 = vpop.f32.mrb[0].mxu0
  %v3736 = vadd.f32 0.0, %v3735
  %v3737 = vpop.f32.mrb[0].mxu0
  %v3738 = vadd.f32 0.0, %v3737
  %3739 = vmatprep.mubr.bf16.mxu0 %v3532
  %3740 = vmatmul.mubr.bf16.gmra.mrb[0].mxu0 %v3531
  %v3741 = vpop.f32.mrb[0].mxu0
  %v3742 = vadd.f32 0.0, %v3741
  %v3743 = vpop.f32.mrb[0].mxu0
  %v3744 = vadd.f32 0.0, %v3743
  %v3745 = vpop.f32.mrb[0].mxu0
  %v3746 = vadd.f32 0.0, %v3745
  %v3747 = vpop.f32.mrb[0].mxu0
  %v3748 = vadd.f32 0.0, %v3747
  %3749 = vmatprep.mubr.bf16.mxu0 %v3534
  %3750 = vmatmul.mubr.bf16.gmra.mrb[0].mxu0 %v3533
  %v3751 = vpop.f32.mrb[0].mxu0
  %v3752 = vadd.f32 0.0, %v3751
  %v3753 = vpop.f32.mrb[0].mxu0
  %v3754 = vadd.f32 0.0, %v3753
  %v3755 = vpop.f32.mrb[0].mxu0
  %v3756 = vadd.f32 0.0, %v3755
  %v3757 = vpop.f32.mrb[0].mxu0
  %v3758 = vadd.f32 0.0, %v3757
  %3759 = vdwg.mxu0
  %v3760 = vadd.f32 %v3085, %v3602
  %v3761 = vadd.f32 %v3086, %v3604
  %v3762 = vadd.f32 %v3087, %v3606
  %v3763 = vadd.f32 %v3088, %v3608
  %v3764 = vadd.f32 %v3089, %v3612
  %v3765 = vadd.f32 %v3090, %v3614
  %v3766 = vadd.f32 %v3091, %v3616
  %v3767 = vadd.f32 %v3092, %v3618
  %v3768 = vadd.f32 %v3093, %v3622
  %v3769 = vadd.f32 %v3094, %v3624
  %v3770 = vadd.f32 %v3095, %v3626
  %v3771 = vadd.f32 %v3096, %v3628
  %v3772 = vadd.f32 %v3097, %v3632
  %v3773 = vadd.f32 %v3098, %v3634
  %v3774 = vadd.f32 %v3099, %v3636
  %v3775 = vadd.f32 %v3100, %v3638
  %v3776 = vadd.f32 %v3101, %v3642
  %v3777 = vadd.f32 %v3102, %v3644
  %v3778 = vadd.f32 %v3103, %v3646
  %v3779 = vadd.f32 %v3104, %v3648
  %v3780 = vadd.f32 %v3105, %v3652
  %v3781 = vadd.f32 %v3106, %v3654
  %v3782 = vadd.f32 %v3107, %v3656
  %v3783 = vadd.f32 %v3108, %v3658
  %v3784 = vadd.f32 %v3109, %v3662
  %v3785 = vadd.f32 %v3110, %v3664
  %v3786 = vadd.f32 %v3111, %v3666
  %v3787 = vadd.f32 %v3112, %v3668
  %v3788 = vadd.f32 %v3113, %v3672
  %v3789 = vadd.f32 %v3114, %v3674
  %v3790 = vadd.f32 %v3115, %v3676
  %v3791 = vadd.f32 %v3116, %v3678
  %v3792 = vadd.f32 %v3117, %v3682
  %v3793 = vadd.f32 %v3118, %v3684
  %v3794 = vadd.f32 %v3119, %v3686
  %v3795 = vadd.f32 %v3120, %v3688
  %v3796 = vadd.f32 %v3121, %v3692
  %v3797 = vadd.f32 %v3122, %v3694
  %v3798 = vadd.f32 %v3123, %v3696
  %v3799 = vadd.f32 %v3124, %v3698
  %v3800 = vadd.f32 %v3125, %v3702
  %v3801 = vadd.f32 %v3126, %v3704
  %v3802 = vadd.f32 %v3127, %v3706
  %v3803 = vadd.f32 %v3128, %v3708
  %v3804 = vadd.f32 %v3129, %v3712
  %v3805 = vadd.f32 %v3130, %v3714
  %v3806 = vadd.f32 %v3131, %v3716
  %v3807 = vadd.f32 %v3132, %v3718
  %v3808 = vadd.f32 %v3133, %v3722
  %v3809 = vadd.f32 %v3134, %v3724
  %v3810 = vadd.f32 %v3135, %v3726
  %v3811 = vadd.f32 %v3136, %v3728
  %v3812 = vadd.f32 %v3137, %v3732
  %v3813 = vadd.f32 %v3138, %v3734
  %v3814 = vadd.f32 %v3139, %v3736
  %v3815 = vadd.f32 %v3140, %v3738
  %v3816 = vadd.f32 %v3141, %v3742
  %v3817 = vadd.f32 %v3142, %v3744
  %v3818 = vadd.f32 %v3143, %v3746
  %v3819 = vadd.f32 %v3144, %v3748
  %v3820 = vadd.f32 %v3145, %v3752
  %v3821 = vadd.f32 %v3146, %v3754
  %v3822 = vadd.f32 %v3147, %v3756
  %v3823 = vadd.f32 %v3148, %v3758
  %3824 = vrot.lane.b32.xlu0 %v29, 113
  %v3825 = vpop.permute.xlu0 %3824
  %3826 = vrot.lane.b32.xlu0 %v31, 113
  %v3827 = vpop.permute.xlu0 %3826
  %3828 = vrot.lane.b32.xlu0 %v33, 113
  %v3829 = vpop.permute.xlu0 %3828
  %3830 = vrot.lane.b32.xlu0 %v35, 113
  %v3831 = vpop.permute.xlu0 %3830
  %3832 = vrot.lane.b32.xlu0 %v37, 113
  %v3833 = vpop.permute.xlu0 %3832
  %3834 = vrot.lane.b32.xlu0 %v39, 113
  %v3835 = vpop.permute.xlu0 %3834
  %3836 = vrot.lane.b32.xlu0 %v41, 113
  %v3837 = vpop.permute.xlu0 %3836
  %3838 = vrot.lane.b32.xlu0 %v43, 113
  %v3839 = vpop.permute.xlu0 %3838
  %3840 = vrot.lane.b32.xlu0 %v45, 113
  %v3841 = vpop.permute.xlu0 %3840
  %3842 = vrot.lane.b32.xlu0 %v47, 113
  %v3843 = vpop.permute.xlu0 %3842
  %3844 = vrot.lane.b32.xlu0 %v49, 113
  %v3845 = vpop.permute.xlu0 %3844
  %3846 = vrot.lane.b32.xlu0 %v51, 113
  %v3847 = vpop.permute.xlu0 %3846
  %3848 = vrot.lane.b32.xlu0 %v53, 113
  %v3849 = vpop.permute.xlu0 %3848
  %3850 = vrot.lane.b32.xlu0 %v55, 113
  %v3851 = vpop.permute.xlu0 %3850
  %3852 = vrot.lane.b32.xlu0 %v57, 113
  %v3853 = vpop.permute.xlu0 %3852
  %3854 = vrot.lane.b32.xlu0 %v59, 113
  %v3855 = vpop.permute.xlu0 %3854
  %3856 = vrot.lane.b32.xlu0 %v61, 113
  %v3857 = vpop.permute.xlu0 %3856
  %3858 = vrot.lane.b32.xlu0 %v63, 113
  %v3859 = vpop.permute.xlu0 %3858
  %3860 = vrot.lane.b32.xlu0 %v65, 113
  %v3861 = vpop.permute.xlu0 %3860
  %3862 = vrot.lane.b32.xlu0 %v67, 113
  %v3863 = vpop.permute.xlu0 %3862
  %3864 = vrot.lane.b32.xlu0 %v69, 113
  %v3865 = vpop.permute.xlu0 %3864
  %3866 = vrot.lane.b32.xlu0 %v71, 113
  %v3867 = vpop.permute.xlu0 %3866
  %3868 = vrot.lane.b32.xlu0 %v73, 113
  %v3869 = vpop.permute.xlu0 %3868
  %3870 = vrot.lane.b32.xlu0 %v75, 113
  %v3871 = vpop.permute.xlu0 %3870
  %3872 = vrot.lane.b32.xlu0 %v77, 113
  %v3873 = vpop.permute.xlu0 %3872
  %3874 = vrot.lane.b32.xlu0 %v79, 113
  %v3875 = vpop.permute.xlu0 %3874
  %3876 = vrot.lane.b32.xlu0 %v81, 113
  %v3877 = vpop.permute.xlu0 %3876
  %3878 = vrot.lane.b32.xlu0 %v83, 113
  %v3879 = vpop.permute.xlu0 %3878
  %3880 = vrot.lane.b32.xlu0 %v85, 113
  %v3881 = vpop.permute.xlu0 %3880
  %3882 = vrot.lane.b32.xlu0 %v87, 113
  %v3883 = vpop.permute.xlu0 %3882
  %3884 = vrot.lane.b32.xlu0 %v89, 113
  %v3885 = vpop.permute.xlu0 %3884
  %3886 = vrot.lane.b32.xlu0 %v91, 113
  %v3887 = vpop.permute.xlu0 %3886
  %3888 = vrot.lane.b32.xlu0 %v30, 113
  %v3889 = vpop.permute.xlu0 %3888
  %3890 = vrot.lane.b32.xlu0 %v32, 113
  %v3891 = vpop.permute.xlu0 %3890
  %3892 = vrot.lane.b32.xlu0 %v34, 113
  %v3893 = vpop.permute.xlu0 %3892
  %3894 = vrot.lane.b32.xlu0 %v36, 113
  %v3895 = vpop.permute.xlu0 %3894
  %3896 = vrot.lane.b32.xlu0 %v38, 113
  %v3897 = vpop.permute.xlu0 %3896
  %3898 = vrot.lane.b32.xlu0 %v40, 113
  %v3899 = vpop.permute.xlu0 %3898
  %3900 = vrot.lane.b32.xlu0 %v42, 113
  %v3901 = vpop.permute.xlu0 %3900
  %3902 = vrot.lane.b32.xlu0 %v44, 113
  %v3903 = vpop.permute.xlu0 %3902
  %3904 = vrot.lane.b32.xlu0 %v46, 113
  %v3905 = vpop.permute.xlu0 %3904
  %3906 = vrot.lane.b32.xlu0 %v48, 113
  %v3907 = vpop.permute.xlu0 %3906
  %3908 = vrot.lane.b32.xlu0 %v50, 113
  %v3909 = vpop.permute.xlu0 %3908
  %3910 = vrot.lane.b32.xlu0 %v52, 113
  %v3911 = vpop.permute.xlu0 %3910
  %3912 = vrot.lane.b32.xlu0 %v54, 113
  %v3913 = vpop.permute.xlu0 %3912
  %3914 = vrot.lane.b32.xlu0 %v56, 113
  %v3915 = vpop.permute.xlu0 %3914
  %3916 = vrot.lane.b32.xlu0 %v58, 113
  %v3917 = vpop.permute.xlu0 %3916
  %3918 = vrot.lane.b32.xlu0 %v60, 113
  %v3919 = vpop.permute.xlu0 %3918
  %3920 = vrot.lane.b32.xlu0 %v62, 113
  %v3921 = vpop.permute.xlu0 %3920
  %3922 = vrot.lane.b32.xlu0 %v64, 113
  %v3923 = vpop.permute.xlu0 %3922
  %3924 = vrot.lane.b32.xlu0 %v66, 113
  %v3925 = vpop.permute.xlu0 %3924
  %3926 = vrot.lane.b32.xlu0 %v68, 113
  %v3927 = vpop.permute.xlu0 %3926
  %3928 = vrot.lane.b32.xlu0 %v70, 113
  %v3929 = vpop.permute.xlu0 %3928
  %3930 = vrot.lane.b32.xlu0 %v72, 113
  %v3931 = vpop.permute.xlu0 %3930
  %3932 = vrot.lane.b32.xlu0 %v74, 113
  %v3933 = vpop.permute.xlu0 %3932
  %3934 = vrot.lane.b32.xlu0 %v76, 113
  %v3935 = vpop.permute.xlu0 %3934
  %3936 = vrot.lane.b32.xlu0 %v78, 113
  %v3937 = vpop.permute.xlu0 %3936
  %3938 = vrot.lane.b32.xlu0 %v80, 113
  %v3939 = vpop.permute.xlu0 %3938
  %3940 = vrot.lane.b32.xlu0 %v82, 113
  %v3941 = vpop.permute.xlu0 %3940
  %3942 = vrot.lane.b32.xlu0 %v84, 113
  %v3943 = vpop.permute.xlu0 %3942
  %3944 = vrot.lane.b32.xlu0 %v86, 113
  %v3945 = vpop.permute.xlu0 %3944
  %3946 = vrot.lane.b32.xlu0 %v88, 113
  %v3947 = vpop.permute.xlu0 %3946
  %3948 = vrot.lane.b32.xlu0 %v90, 113
  %v3949 = vpop.permute.xlu0 %3948
  %3950 = vrot.lane.b32.xlu0 %v92, 113
  %v3951 = vpop.permute.xlu0 %3950
  %vm3952 = vcmp.lt.s32.totalorder %v223, 113
  %v3953 = vsel %vm3952, %v3825, %v3889
  %v3954 = vsel %vm3952, %v3827, %v3891
  %v3955 = vsel %vm3952, %v3829, %v3893
  %v3956 = vsel %vm3952, %v3831, %v3895
  %v3957 = vsel %vm3952, %v3833, %v3897
  %v3958 = vsel %vm3952, %v3835, %v3899
  %v3959 = vsel %vm3952, %v3837, %v3901
  %v3960 = vsel %vm3952, %v3839, %v3903
  %v3961 = vsel %vm3952, %v3841, %v3905
  %v3962 = vsel %vm3952, %v3843, %v3907
  %v3963 = vsel %vm3952, %v3845, %v3909
  %v3964 = vsel %vm3952, %v3847, %v3911
  %v3965 = vsel %vm3952, %v3849, %v3913
  %v3966 = vsel %vm3952, %v3851, %v3915
  %v3967 = vsel %vm3952, %v3853, %v3917
  %v3968 = vsel %vm3952, %v3855, %v3919
  %v3969 = vsel %vm3952, %v3857, %v3921
  %v3970 = vsel %vm3952, %v3859, %v3923
  %v3971 = vsel %vm3952, %v3861, %v3925
  %v3972 = vsel %vm3952, %v3863, %v3927
  %v3973 = vsel %vm3952, %v3865, %v3929
  %v3974 = vsel %vm3952, %v3867, %v3931
  %v3975 = vsel %vm3952, %v3869, %v3933
  %v3976 = vsel %vm3952, %v3871, %v3935
  %v3977 = vsel %vm3952, %v3873, %v3937
  %v3978 = vsel %vm3952, %v3875, %v3939
  %v3979 = vsel %vm3952, %v3877, %v3941
  %v3980 = vsel %vm3952, %v3879, %v3943
  %v3981 = vsel %vm3952, %v3881, %v3945
  %v3982 = vsel %vm3952, %v3883, %v3947
  %v3983 = vsel %vm3952, %v3885, %v3949
  %v3984 = vsel %vm3952, %v3887, %v3951
  %v3985 = vsel %vm3952, %v3889, %v3825
  %v3986 = vsel %vm3952, %v3891, %v3827
  %v3987 = vsel %vm3952, %v3893, %v3829
  %v3988 = vsel %vm3952, %v3895, %v3831
  %v3989 = vsel %vm3952, %v3897, %v3833
  %v3990 = vsel %vm3952, %v3899, %v3835
  %v3991 = vsel %vm3952, %v3901, %v3837
  %v3992 = vsel %vm3952, %v3903, %v3839
  %v3993 = vsel %vm3952, %v3905, %v3841
  %v3994 = vsel %vm3952, %v3907, %v3843
  %v3995 = vsel %vm3952, %v3909, %v3845
  %v3996 = vsel %vm3952, %v3911, %v3847
  %v3997 = vsel %vm3952, %v3913, %v3849
  %v3998 = vsel %vm3952, %v3915, %v3851
  %v3999 = vsel %vm3952, %v3917, %v3853
  %v4000 = vsel %vm3952, %v3919, %v3855
  %v4001 = vsel %vm3952, %v3921, %v3857
  %v4002 = vsel %vm3952, %v3923, %v3859
  %v4003 = vsel %vm3952, %v3925, %v3861
  %v4004 = vsel %vm3952, %v3927, %v3863
  %v4005 = vsel %vm3952, %v3929, %v3865
  %v4006 = vsel %vm3952, %v3931, %v3867
  %v4007 = vsel %vm3952, %v3933, %v3869
  %v4008 = vsel %vm3952, %v3935, %v3871
  %v4009 = vsel %vm3952, %v3937, %v3873
  %v4010 = vsel %vm3952, %v3939, %v3875
  %v4011 = vsel %vm3952, %v3941, %v3877
  %v4012 = vsel %vm3952, %v3943, %v3879
  %v4013 = vsel %vm3952, %v3945, %v3881
  %v4014 = vsel %vm3952, %v3947, %v3883
  %v4015 = vsel %vm3952, %v3949, %v3885
  %v4016 = vsel %vm3952, %v3951, %v3887
  %s4017 = scalar_lea.vmem %s2, 1536
  %v4018 = vld [vmem:[%s4017] sm:$0xff]
  %v4019 = vld [vmem:[%s4017 + $0x8] sm:$0xff]
  %v4020 = vld [vmem:[%s4017 + $0x10] sm:$0xff]
  %v4021 = vld [vmem:[%s4017 + $0x18] sm:$0xff]
  %v4022 = vld [vmem:[%s4017 + $0x20] sm:$0xff]
  %v4023 = vld [vmem:[%s4017 + $0x28] sm:$0xff]
  %v4024 = vld [vmem:[%s4017 + $0x30] sm:$0xff]
  %v4025 = vld [vmem:[%s4017 + $0x38] sm:$0xff]
  %v4026 = vld [vmem:[%s4017 + $0x40] sm:$0xff]
  %v4027 = vld [vmem:[%s4017 + $0x48] sm:$0xff]
  %v4028 = vld [vmem:[%s4017 + $0x50] sm:$0xff]
  %v4029 = vld [vmem:[%s4017 + $0x58] sm:$0xff]
  %v4030 = vld [vmem:[%s4017 + $0x60] sm:$0xff]
  %v4031 = vld [vmem:[%s4017 + $0x68] sm:$0xff]
  %v4032 = vld [vmem:[%s4017 + $0x70] sm:$0xff]
  %v4033 = vld [vmem:[%s4017 + $0x78] sm:$0xff]
  %v4034 = vld [vmem:[%s4017 + $0x80] sm:$0xff]
  %v4035 = vld [vmem:[%s4017 + $0x88] sm:$0xff]
  %v4036 = vld [vmem:[%s4017 + $0x90] sm:$0xff]
  %v4037 = vld [vmem:[%s4017 + $0x98] sm:$0xff]
  %v4038 = vld [vmem:[%s4017 + $0xa0] sm:$0xff]
  %v4039 = vld [vmem:[%s4017 + $0xa8] sm:$0xff]
  %v4040 = vld [vmem:[%s4017 + $0xb0] sm:$0xff]
  %v4041 = vld [vmem:[%s4017 + $0xb8] sm:$0xff]
  %v4042 = vld [vmem:[%s4017 + $0xc0] sm:$0xff]
  %v4043 = vld [vmem:[%s4017 + $0xc8] sm:$0xff]
  %v4044 = vld [vmem:[%s4017 + $0xd0] sm:$0xff]
  %v4045 = vld [vmem:[%s4017 + $0xd8] sm:$0xff]
  %v4046 = vld [vmem:[%s4017 + $0xe0] sm:$0xff]
  %v4047 = vld [vmem:[%s4017 + $0xe8] sm:$0xff]
  %v4048 = vld [vmem:[%s4017 + $0xf0] sm:$0xff]
  %v4049 = vld [vmem:[%s4017 + $0xf8] sm:$0xff]
  %v4050 = vpack.c.bf16 %v3954, %v3953
  %v4051 = vpack.c.bf16 %v3986, %v3985
  %v4052 = vpack.c.bf16 %v3956, %v3955
  %v4053 = vpack.c.bf16 %v3988, %v3987
  %v4054 = vpack.c.bf16 %v3958, %v3957
  %v4055 = vpack.c.bf16 %v3990, %v3989
  %v4056 = vpack.c.bf16 %v3960, %v3959
  %v4057 = vpack.c.bf16 %v3992, %v3991
  %v4058 = vpack.c.bf16 %v3962, %v3961
  %v4059 = vpack.c.bf16 %v3994, %v3993
  %v4060 = vpack.c.bf16 %v3964, %v3963
  %v4061 = vpack.c.bf16 %v3996, %v3995
  %v4062 = vpack.c.bf16 %v3966, %v3965
  %v4063 = vpack.c.bf16 %v3998, %v3997
  %v4064 = vpack.c.bf16 %v3968, %v3967
  %v4065 = vpack.c.bf16 %v4000, %v3999
  %v4066 = vpack.c.bf16 %v3970, %v3969
  %v4067 = vpack.c.bf16 %v4002, %v4001
  %v4068 = vpack.c.bf16 %v3972, %v3971
  %v4069 = vpack.c.bf16 %v4004, %v4003
  %v4070 = vpack.c.bf16 %v3974, %v3973
  %v4071 = vpack.c.bf16 %v4006, %v4005
  %v4072 = vpack.c.bf16 %v3976, %v3975
  %v4073 = vpack.c.bf16 %v4008, %v4007
  %v4074 = vpack.c.bf16 %v3978, %v3977
  %v4075 = vpack.c.bf16 %v4010, %v4009
  %v4076 = vpack.c.bf16 %v3980, %v3979
  %v4077 = vpack.c.bf16 %v4012, %v4011
  %v4078 = vpack.c.bf16 %v3982, %v3981
  %v4079 = vpack.c.bf16 %v4014, %v4013
  %v4080 = vpack.c.bf16 %v3984, %v3983
  %v4081 = vpack.c.bf16 %v4016, %v4015
  %v4114 = vunpack.c.l.b16 %v4018
  %v4115 = vunpack.c.h.b16 %v4018
  %v4116 = vunpack.c.l.b16 %v4019
  %v4117 = vunpack.c.h.b16 %v4019
  %v4118 = vunpack.c.l.b16 %v4020
  %v4119 = vunpack.c.h.b16 %v4020
  %v4120 = vunpack.c.l.b16 %v4021
  %v4121 = vunpack.c.h.b16 %v4021
  %v4122 = vunpack.c.l.b16 %v4022
  %v4123 = vunpack.c.h.b16 %v4022
  %v4124 = vunpack.c.l.b16 %v4023
  %v4125 = vunpack.c.h.b16 %v4023
  %v4126 = vunpack.c.l.b16 %v4024
  %v4127 = vunpack.c.h.b16 %v4024
  %v4128 = vunpack.c.l.b16 %v4025
  %v4129 = vunpack.c.h.b16 %v4025
  %v4130 = vunpack.c.l.b16 %v4026
  %v4131 = vunpack.c.h.b16 %v4026
  %v4132 = vunpack.c.l.b16 %v4027
  %v4133 = vunpack.c.h.b16 %v4027
  %v4134 = vunpack.c.l.b16 %v4028
  %v4135 = vunpack.c.h.b16 %v4028
  %v4136 = vunpack.c.l.b16 %v4029
  %v4137 = vunpack.c.h.b16 %v4029
  %v4138 = vunpack.c.l.b16 %v4030
  %v4139 = vunpack.c.h.b16 %v4030
  %v4140 = vunpack.c.l.b16 %v4031
  %v4141 = vunpack.c.h.b16 %v4031
  %v4142 = vunpack.c.l.b16 %v4032
  %v4143 = vunpack.c.h.b16 %v4032
  %v4144 = vunpack.c.l.b16 %v4033
  %v4145 = vunpack.c.h.b16 %v4033
  %v4146 = vunpack.c.l.b16 %v4034
  %v4147 = vunpack.c.h.b16 %v4034
  %v4148 = vunpack.c.l.b16 %v4035
  %v4149 = vunpack.c.h.b16 %v4035
  %v4150 = vunpack.c.l.b16 %v4036
  %v4151 = vunpack.c.h.b16 %v4036
  %v4152 = vunpack.c.l.b16 %v4037
  %v4153 = vunpack.c.h.b16 %v4037
  %v4154 = vunpack.c.l.b16 %v4038
  %v4155 = vunpack.c.h.b16 %v4038
  %v4156 = vunpack.c.l.b16 %v4039
  %v4157 = vunpack.c.h.b16 %v4039
  %v4158 = vunpack.c.l.b16 %v4040
  %v4159 = vunpack.c.h.b16 %v4040
  %v4160 = vunpack.c.l.b16 %v4041
  %v4161 = vunpack.c.h.b16 %v4041
  %v4162 = vunpack.c.l.b16 %v4042
  %v4163 = vunpack.c.h.b16 %v4042
  %v4164 = vunpack.c.l.b16 %v4043
  %v4165 = vunpack.c.h.b16 %v4043
  %v4166 = vunpack.c.l.b16 %v4044
  %v4167 = vunpack.c.h.b16 %v4044
  %v4168 = vunpack.c.l.b16 %v4045
  %v4169 = vunpack.c.h.b16 %v4045
  %v4170 = vunpack.c.l.b16 %v4046
  %v4171 = vunpack.c.h.b16 %v4046
  %v4172 = vunpack.c.l.b16 %v4047
  %v4173 = vunpack.c.h.b16 %v4047
  %v4174 = vunpack.c.l.b16 %v4048
  %v4175 = vunpack.c.h.b16 %v4048
  %v4176 = vunpack.c.l.b16 %v4049
  %v4177 = vunpack.c.h.b16 %v4049
  %v4178 = vpack.c.b16 %v4116, %v4114
  %v4179 = vpack.c.b16 %v4117, %v4115
  %v4180 = vpack.c.b16 %v4120, %v4118
  %v4181 = vpack.c.b16 %v4121, %v4119
  %v4182 = vpack.c.b16 %v4124, %v4122
  %v4183 = vpack.c.b16 %v4125, %v4123
  %v4184 = vpack.c.b16 %v4128, %v4126
  %v4185 = vpack.c.b16 %v4129, %v4127
  %v4186 = vpack.c.b16 %v4132, %v4130
  %v4187 = vpack.c.b16 %v4133, %v4131
  %v4188 = vpack.c.b16 %v4136, %v4134
  %v4189 = vpack.c.b16 %v4137, %v4135
  %v4190 = vpack.c.b16 %v4140, %v4138
  %v4191 = vpack.c.b16 %v4141, %v4139
  %v4192 = vpack.c.b16 %v4144, %v4142
  %v4193 = vpack.c.b16 %v4145, %v4143
  %v4194 = vpack.c.b16 %v4148, %v4146
  %v4195 = vpack.c.b16 %v4149, %v4147
  %v4196 = vpack.c.b16 %v4152, %v4150
  %v4197 = vpack.c.b16 %v4153, %v4151
  %v4198 = vpack.c.b16 %v4156, %v4154
  %v4199 = vpack.c.b16 %v4157, %v4155
  %v4200 = vpack.c.b16 %v4160, %v4158
  %v4201 = vpack.c.b16 %v4161, %v4159
  %v4202 = vpack.c.b16 %v4164, %v4162
  %v4203 = vpack.c.b16 %v4165, %v4163
  %v4204 = vpack.c.b16 %v4168, %v4166
  %v4205 = vpack.c.b16 %v4169, %v4167
  %v4206 = vpack.c.b16 %v4172, %v4170
  %v4207 = vpack.c.b16 %v4173, %v4171
  %v4208 = vpack.c.b16 %v4176, %v4174
  %v4209 = vpack.c.b16 %v4177, %v4175
  %4242 = vmatprep.subr.bf16.mxu0 %v4051
  %4243 = vmatpush1.bf16.msra.mxu0 %v4050
  %4244 = vmatprep.subr.bf16.mxu0 %v4053
  %4245 = vmatpush1.bf16.msra.mxu0 %v4052
  %4246 = vmatprep.subr.bf16.mxu0 %v4055
  %4247 = vmatpush1.bf16.msra.mxu0 %v4054
  %4248 = vmatprep.subr.bf16.mxu0 %v4057
  %4249 = vmatpush1.bf16.msra.mxu0 %v4056
  %4250 = vmatprep.subr.bf16.mxu0 %v4059
  %4251 = vmatpush1.bf16.msra.mxu0 %v4058
  %4252 = vmatprep.subr.bf16.mxu0 %v4061
  %4253 = vmatpush1.bf16.msra.mxu0 %v4060
  %4254 = vmatprep.subr.bf16.mxu0 %v4063
  %4255 = vmatpush1.bf16.msra.mxu0 %v4062
  %4256 = vmatprep.subr.bf16.mxu0 %v4065
  %4257 = vmatpush1.bf16.msra.mxu0 %v4064
  %4258 = vmatprep.subr.bf16.mxu0 %v4067
  %4259 = vmatpush1.bf16.msra.mxu0 %v4066
  %4260 = vmatprep.subr.bf16.mxu0 %v4069
  %4261 = vmatpush1.bf16.msra.mxu0 %v4068
  %4262 = vmatprep.subr.bf16.mxu0 %v4071
  %4263 = vmatpush1.bf16.msra.mxu0 %v4070
  %4264 = vmatprep.subr.bf16.mxu0 %v4073
  %4265 = vmatpush1.bf16.msra.mxu0 %v4072
  %4266 = vmatprep.subr.bf16.mxu0 %v4075
  %4267 = vmatpush1.bf16.msra.mxu0 %v4074
  %4268 = vmatprep.subr.bf16.mxu0 %v4077
  %4269 = vmatpush1.bf16.msra.mxu0 %v4076
  %4270 = vmatprep.subr.bf16.mxu0 %v4079
  %4271 = vmatpush1.bf16.msra.mxu0 %v4078
  %4272 = vmatprep.subr.bf16.mxu0 %v4081
  %4273 = vmatpush1.bf16.msra.mxu0 %v4080
  %4274 = vmatprep.mubr.bf16.mxu0 %v4179
  %4275 = vmatmul.mubr.bf16.gmra.mrb[0].mxu0 %v4178
  %v4276 = vpop.f32.mrb[0].mxu0
  %v4277 = vadd.f32 0.0, %v4276
  %v4278 = vpop.f32.mrb[0].mxu0
  %v4279 = vadd.f32 0.0, %v4278
  %v4280 = vpop.f32.mrb[0].mxu0
  %v4281 = vadd.f32 0.0, %v4280
  %v4282 = vpop.f32.mrb[0].mxu0
  %v4283 = vadd.f32 0.0, %v4282
  %4284 = vmatprep.mubr.bf16.mxu0 %v4181
  %4285 = vmatmul.mubr.bf16.gmra.mrb[0].mxu0 %v4180
  %v4286 = vpop.f32.mrb[0].mxu0
  %v4287 = vadd.f32 0.0, %v4286
  %v4288 = vpop.f32.mrb[0].mxu0
  %v4289 = vadd.f32 0.0, %v4288
  %v4290 = vpop.f32.mrb[0].mxu0
  %v4291 = vadd.f32 0.0, %v4290
  %v4292 = vpop.f32.mrb[0].mxu0
  %v4293 = vadd.f32 0.0, %v4292
  %4294 = vmatprep.mubr.bf16.mxu0 %v4183
  %4295 = vmatmul.mubr.bf16.gmra.mrb[0].mxu0 %v4182
  %v4296 = vpop.f32.mrb[0].mxu0
  %v4297 = vadd.f32 0.0, %v4296
  %v4298 = vpop.f32.mrb[0].mxu0
  %v4299 = vadd.f32 0.0, %v4298
  %v4300 = vpop.f32.mrb[0].mxu0
  %v4301 = vadd.f32 0.0, %v4300
  %v4302 = vpop.f32.mrb[0].mxu0
  %v4303 = vadd.f32 0.0, %v4302
  %4304 = vmatprep.mubr.bf16.mxu0 %v4185
  %4305 = vmatmul.mubr.bf16.gmra.mrb[0].mxu0 %v4184
  %v4306 = vpop.f32.mrb[0].mxu0
  %v4307 = vadd.f32 0.0, %v4306
  %v4308 = vpop.f32.mrb[0].mxu0
  %v4309 = vadd.f32 0.0, %v4308
  %v4310 = vpop.f32.mrb[0].mxu0
  %v4311 = vadd.f32 0.0, %v4310
  %v4312 = vpop.f32.mrb[0].mxu0
  %v4313 = vadd.f32 0.0, %v4312
  %4314 = vmatprep.mubr.bf16.mxu0 %v4187
  %4315 = vmatmul.mubr.bf16.gmra.mrb[0].mxu0 %v4186
  %v4316 = vpop.f32.mrb[0].mxu0
  %v4317 = vadd.f32 0.0, %v4316
  %v4318 = vpop.f32.mrb[0].mxu0
  %v4319 = vadd.f32 0.0, %v4318
  %v4320 = vpop.f32.mrb[0].mxu0
  %v4321 = vadd.f32 0.0, %v4320
  %v4322 = vpop.f32.mrb[0].mxu0
  %v4323 = vadd.f32 0.0, %v4322
  %4324 = vmatprep.mubr.bf16.mxu0 %v4189
  %4325 = vmatmul.mubr.bf16.gmra.mrb[0].mxu0 %v4188
  %v4326 = vpop.f32.mrb[0].mxu0
  %v4327 = vadd.f32 0.0, %v4326
  %v4328 = vpop.f32.mrb[0].mxu0
  %v4329 = vadd.f32 0.0, %v4328
  %v4330 = vpop.f32.mrb[0].mxu0
  %v4331 = vadd.f32 0.0, %v4330
  %v4332 = vpop.f32.mrb[0].mxu0
  %v4333 = vadd.f32 0.0, %v4332
  %4334 = vmatprep.mubr.bf16.mxu0 %v4191
  %4335 = vmatmul.mubr.bf16.gmra.mrb[0].mxu0 %v4190
  %v4336 = vpop.f32.mrb[0].mxu0
  %v4337 = vadd.f32 0.0, %v4336
  %v4338 = vpop.f32.mrb[0].mxu0
  %v4339 = vadd.f32 0.0, %v4338
  %v4340 = vpop.f32.mrb[0].mxu0
  %v4341 = vadd.f32 0.0, %v4340
  %v4342 = vpop.f32.mrb[0].mxu0
  %v4343 = vadd.f32 0.0, %v4342
  %4344 = vmatprep.mubr.bf16.mxu0 %v4193
  %4345 = vmatmul.mubr.bf16.gmra.mrb[0].mxu0 %v4192
  %v4346 = vpop.f32.mrb[0].mxu0
  %v4347 = vadd.f32 0.0, %v4346
  %v4348 = vpop.f32.mrb[0].mxu0
  %v4349 = vadd.f32 0.0, %v4348
  %v4350 = vpop.f32.mrb[0].mxu0
  %v4351 = vadd.f32 0.0, %v4350
  %v4352 = vpop.f32.mrb[0].mxu0
  %v4353 = vadd.f32 0.0, %v4352
  %4354 = vmatprep.mubr.bf16.mxu0 %v4195
  %4355 = vmatmul.mubr.bf16.gmra.mrb[0].mxu0 %v4194
  %v4356 = vpop.f32.mrb[0].mxu0
  %v4357 = vadd.f32 0.0, %v4356
  %v4358 = vpop.f32.mrb[0].mxu0
  %v4359 = vadd.f32 0.0, %v4358
  %v4360 = vpop.f32.mrb[0].mxu0
  %v4361 = vadd.f32 0.0, %v4360
  %v4362 = vpop.f32.mrb[0].mxu0
  %v4363 = vadd.f32 0.0, %v4362
  %4364 = vmatprep.mubr.bf16.mxu0 %v4197
  %4365 = vmatmul.mubr.bf16.gmra.mrb[0].mxu0 %v4196
  %v4366 = vpop.f32.mrb[0].mxu0
  %v4367 = vadd.f32 0.0, %v4366
  %v4368 = vpop.f32.mrb[0].mxu0
  %v4369 = vadd.f32 0.0, %v4368
  %v4370 = vpop.f32.mrb[0].mxu0
  %v4371 = vadd.f32 0.0, %v4370
  %v4372 = vpop.f32.mrb[0].mxu0
  %v4373 = vadd.f32 0.0, %v4372
  %4374 = vmatprep.mubr.bf16.mxu0 %v4199
  %4375 = vmatmul.mubr.bf16.gmra.mrb[0].mxu0 %v4198
  %v4376 = vpop.f32.mrb[0].mxu0
  %v4377 = vadd.f32 0.0, %v4376
  %v4378 = vpop.f32.mrb[0].mxu0
  %v4379 = vadd.f32 0.0, %v4378
  %v4380 = vpop.f32.mrb[0].mxu0
  %v4381 = vadd.f32 0.0, %v4380
  %v4382 = vpop.f32.mrb[0].mxu0
  %v4383 = vadd.f32 0.0, %v4382
  %4384 = vmatprep.mubr.bf16.mxu0 %v4201
  %4385 = vmatmul.mubr.bf16.gmra.mrb[0].mxu0 %v4200
  %v4386 = vpop.f32.mrb[0].mxu0
  %v4387 = vadd.f32 0.0, %v4386
  %v4388 = vpop.f32.mrb[0].mxu0
  %v4389 = vadd.f32 0.0, %v4388
  %v4390 = vpop.f32.mrb[0].mxu0
  %v4391 = vadd.f32 0.0, %v4390
  %v4392 = vpop.f32.mrb[0].mxu0
  %v4393 = vadd.f32 0.0, %v4392
  %4394 = vmatprep.mubr.bf16.mxu0 %v4203
  %4395 = vmatmul.mubr.bf16.gmra.mrb[0].mxu0 %v4202
  %v4396 = vpop.f32.mrb[0].mxu0
  %v4397 = vadd.f32 0.0, %v4396
  %v4398 = vpop.f32.mrb[0].mxu0
  %v4399 = vadd.f32 0.0, %v4398
  %v4400 = vpop.f32.mrb[0].mxu0
  %v4401 = vadd.f32 0.0, %v4400
  %v4402 = vpop.f32.mrb[0].mxu0
  %v4403 = vadd.f32 0.0, %v4402
  %4404 = vmatprep.mubr.bf16.mxu0 %v4205
  %4405 = vmatmul.mubr.bf16.gmra.mrb[0].mxu0 %v4204
  %v4406 = vpop.f32.mrb[0].mxu0
  %v4407 = vadd.f32 0.0, %v4406
  %v4408 = vpop.f32.mrb[0].mxu0
  %v4409 = vadd.f32 0.0, %v4408
  %v4410 = vpop.f32.mrb[0].mxu0
  %v4411 = vadd.f32 0.0, %v4410
  %v4412 = vpop.f32.mrb[0].mxu0
  %v4413 = vadd.f32 0.0, %v4412
  %4414 = vmatprep.mubr.bf16.mxu0 %v4207
  %4415 = vmatmul.mubr.bf16.gmra.mrb[0].mxu0 %v4206
  %v4416 = vpop.f32.mrb[0].mxu0
  %v4417 = vadd.f32 0.0, %v4416
  %v4418 = vpop.f32.mrb[0].mxu0
  %v4419 = vadd.f32 0.0, %v4418
  %v4420 = vpop.f32.mrb[0].mxu0
  %v4421 = vadd.f32 0.0, %v4420
  %v4422 = vpop.f32.mrb[0].mxu0
  %v4423 = vadd.f32 0.0, %v4422
  %4424 = vmatprep.mubr.bf16.mxu0 %v4209
  %4425 = vmatmul.mubr.bf16.gmra.mrb[0].mxu0 %v4208
  %v4426 = vpop.f32.mrb[0].mxu0
  %v4427 = vadd.f32 0.0, %v4426
  %v4428 = vpop.f32.mrb[0].mxu0
  %v4429 = vadd.f32 0.0, %v4428
  %v4430 = vpop.f32.mrb[0].mxu0
  %v4431 = vadd.f32 0.0, %v4430
  %v4432 = vpop.f32.mrb[0].mxu0
  %v4433 = vadd.f32 0.0, %v4432
  %4434 = vdwg.mxu0
  %v4435 = vadd.f32 %v3760, %v4277
  %v4436 = vadd.f32 %v3761, %v4279
  %v4437 = vadd.f32 %v3762, %v4281
  %v4438 = vadd.f32 %v3763, %v4283
  %v4439 = vadd.f32 %v3764, %v4287
  %v4440 = vadd.f32 %v3765, %v4289
  %v4441 = vadd.f32 %v3766, %v4291
  %v4442 = vadd.f32 %v3767, %v4293
  %v4443 = vadd.f32 %v3768, %v4297
  %v4444 = vadd.f32 %v3769, %v4299
  %v4445 = vadd.f32 %v3770, %v4301
  %v4446 = vadd.f32 %v3771, %v4303
  %v4447 = vadd.f32 %v3772, %v4307
  %v4448 = vadd.f32 %v3773, %v4309
  %v4449 = vadd.f32 %v3774, %v4311
  %v4450 = vadd.f32 %v3775, %v4313
  %v4451 = vadd.f32 %v3776, %v4317
  %v4452 = vadd.f32 %v3777, %v4319
  %v4453 = vadd.f32 %v3778, %v4321
  %v4454 = vadd.f32 %v3779, %v4323
  %v4455 = vadd.f32 %v3780, %v4327
  %v4456 = vadd.f32 %v3781, %v4329
  %v4457 = vadd.f32 %v3782, %v4331
  %v4458 = vadd.f32 %v3783, %v4333
  %v4459 = vadd.f32 %v3784, %v4337
  %v4460 = vadd.f32 %v3785, %v4339
  %v4461 = vadd.f32 %v3786, %v4341
  %v4462 = vadd.f32 %v3787, %v4343
  %v4463 = vadd.f32 %v3788, %v4347
  %v4464 = vadd.f32 %v3789, %v4349
  %v4465 = vadd.f32 %v3790, %v4351
  %v4466 = vadd.f32 %v3791, %v4353
  %v4467 = vadd.f32 %v3792, %v4357
  %v4468 = vadd.f32 %v3793, %v4359
  %v4469 = vadd.f32 %v3794, %v4361
  %v4470 = vadd.f32 %v3795, %v4363
  %v4471 = vadd.f32 %v3796, %v4367
  %v4472 = vadd.f32 %v3797, %v4369
  %v4473 = vadd.f32 %v3798, %v4371
  %v4474 = vadd.f32 %v3799, %v4373
  %v4475 = vadd.f32 %v3800, %v4377
  %v4476 = vadd.f32 %v3801, %v4379
  %v4477 = vadd.f32 %v3802, %v4381
  %v4478 = vadd.f32 %v3803, %v4383
  %v4479 = vadd.f32 %v3804, %v4387
  %v4480 = vadd.f32 %v3805, %v4389
  %v4481 = vadd.f32 %v3806, %v4391
  %v4482 = vadd.f32 %v3807, %v4393
  %v4483 = vadd.f32 %v3808, %v4397
  %v4484 = vadd.f32 %v3809, %v4399
  %v4485 = vadd.f32 %v3810, %v4401
  %v4486 = vadd.f32 %v3811, %v4403
  %v4487 = vadd.f32 %v3812, %v4407
  %v4488 = vadd.f32 %v3813, %v4409
  %v4489 = vadd.f32 %v3814, %v4411
  %v4490 = vadd.f32 %v3815, %v4413
  %v4491 = vadd.f32 %v3816, %v4417
  %v4492 = vadd.f32 %v3817, %v4419
  %v4493 = vadd.f32 %v3818, %v4421
  %v4494 = vadd.f32 %v3819, %v4423
  %v4495 = vadd.f32 %v3820, %v4427
  %v4496 = vadd.f32 %v3821, %v4429
  %v4497 = vadd.f32 %v3822, %v4431
  %v4498 = vadd.f32 %v3823, %v4433
  %4499 = vrot.lane.b32.xlu0 %v29, 112
  %v4500 = vpop.permute.xlu0 %4499
  %4501 = vrot.lane.b32.xlu0 %v31, 112
  %v4502 = vpop.permute.xlu0 %4501
  %4503 = vrot.lane.b32.xlu0 %v33, 112
  %v4504 = vpop.permute.xlu0 %4503
  %4505 = vrot.lane.b32.xlu0 %v35, 112
  %v4506 = vpop.permute.xlu0 %4505
  %4507 = vrot.lane.b32.xlu0 %v37, 112
  %v4508 = vpop.permute.xlu0 %4507
  %4509 = vrot.lane.b32.xlu0 %v39, 112
  %v4510 = vpop.permute.xlu0 %4509
  %4511 = vrot.lane.b32.xlu0 %v41, 112
  %v4512 = vpop.permute.xlu0 %4511
  %4513 = vrot.lane.b32.xlu0 %v43, 112
  %v4514 = vpop.permute.xlu0 %4513
  %4515 = vrot.lane.b32.xlu0 %v45, 112
  %v4516 = vpop.permute.xlu0 %4515
  %4517 = vrot.lane.b32.xlu0 %v47, 112
  %v4518 = vpop.permute.xlu0 %4517
  %4519 = vrot.lane.b32.xlu0 %v49, 112
  %v4520 = vpop.permute.xlu0 %4519
  %4521 = vrot.lane.b32.xlu0 %v51, 112
  %v4522 = vpop.permute.xlu0 %4521
  %4523 = vrot.lane.b32.xlu0 %v53, 112
  %v4524 = vpop.permute.xlu0 %4523
  %4525 = vrot.lane.b32.xlu0 %v55, 112
  %v4526 = vpop.permute.xlu0 %4525
  %4527 = vrot.lane.b32.xlu0 %v57, 112
  %v4528 = vpop.permute.xlu0 %4527
  %4529 = vrot.lane.b32.xlu0 %v59, 112
  %v4530 = vpop.permute.xlu0 %4529
  %4531 = vrot.lane.b32.xlu0 %v61, 112
  %v4532 = vpop.permute.xlu0 %4531
  %4533 = vrot.lane.b32.xlu0 %v63, 112
  %v4534 = vpop.permute.xlu0 %4533
  %4535 = vrot.lane.b32.xlu0 %v65, 112
  %v4536 = vpop.permute.xlu0 %4535
  %4537 = vrot.lane.b32.xlu0 %v67, 112
  %v4538 = vpop.permute.xlu0 %4537
  %4539 = vrot.lane.b32.xlu0 %v69, 112
  %v4540 = vpop.permute.xlu0 %4539
  %4541 = vrot.lane.b32.xlu0 %v71, 112
  %v4542 = vpop.permute.xlu0 %4541
  %4543 = vrot.lane.b32.xlu0 %v73, 112
  %v4544 = vpop.permute.xlu0 %4543
  %4545 = vrot.lane.b32.xlu0 %v75, 112
  %v4546 = vpop.permute.xlu0 %4545
  %4547 = vrot.lane.b32.xlu0 %v77, 112
  %v4548 = vpop.permute.xlu0 %4547
  %4549 = vrot.lane.b32.xlu0 %v79, 112
  %v4550 = vpop.permute.xlu0 %4549
  %4551 = vrot.lane.b32.xlu0 %v81, 112
  %v4552 = vpop.permute.xlu0 %4551
  %4553 = vrot.lane.b32.xlu0 %v83, 112
  %v4554 = vpop.permute.xlu0 %4553
  %4555 = vrot.lane.b32.xlu0 %v85, 112
  %v4556 = vpop.permute.xlu0 %4555
  %4557 = vrot.lane.b32.xlu0 %v87, 112
  %v4558 = vpop.permute.xlu0 %4557
  %4559 = vrot.lane.b32.xlu0 %v89, 112
  %v4560 = vpop.permute.xlu0 %4559
  %4561 = vrot.lane.b32.xlu0 %v91, 112
  %v4562 = vpop.permute.xlu0 %4561
  %4563 = vrot.lane.b32.xlu0 %v30, 112
  %v4564 = vpop.permute.xlu0 %4563
  %4565 = vrot.lane.b32.xlu0 %v32, 112
  %v4566 = vpop.permute.xlu0 %4565
  %4567 = vrot.lane.b32.xlu0 %v34, 112
  %v4568 = vpop.permute.xlu0 %4567
  %4569 = vrot.lane.b32.xlu0 %v36, 112
  %v4570 = vpop.permute.xlu0 %4569
  %4571 = vrot.lane.b32.xlu0 %v38, 112
  %v4572 = vpop.permute.xlu0 %4571
  %4573 = vrot.lane.b32.xlu0 %v40, 112
  %v4574 = vpop.permute.xlu0 %4573
  %4575 = vrot.lane.b32.xlu0 %v42, 112
  %v4576 = vpop.permute.xlu0 %4575
  %4577 = vrot.lane.b32.xlu0 %v44, 112
  %v4578 = vpop.permute.xlu0 %4577
  %4579 = vrot.lane.b32.xlu0 %v46, 112
  %v4580 = vpop.permute.xlu0 %4579
  %4581 = vrot.lane.b32.xlu0 %v48, 112
  %v4582 = vpop.permute.xlu0 %4581
  %4583 = vrot.lane.b32.xlu0 %v50, 112
  %v4584 = vpop.permute.xlu0 %4583
  %4585 = vrot.lane.b32.xlu0 %v52, 112
  %v4586 = vpop.permute.xlu0 %4585
  %4587 = vrot.lane.b32.xlu0 %v54, 112
  %v4588 = vpop.permute.xlu0 %4587
  %4589 = vrot.lane.b32.xlu0 %v56, 112
  %v4590 = vpop.permute.xlu0 %4589
  %4591 = vrot.lane.b32.xlu0 %v58, 112
  %v4592 = vpop.permute.xlu0 %4591
  %4593 = vrot.lane.b32.xlu0 %v60, 112
  %v4594 = vpop.permute.xlu0 %4593
  %4595 = vrot.lane.b32.xlu0 %v62, 112
  %v4596 = vpop.permute.xlu0 %4595
  %4597 = vrot.lane.b32.xlu0 %v64, 112
  %v4598 = vpop.permute.xlu0 %4597
  %4599 = vrot.lane.b32.xlu0 %v66, 112
  %v4600 = vpop.permute.xlu0 %4599
  %4601 = vrot.lane.b32.xlu0 %v68, 112
  %v4602 = vpop.permute.xlu0 %4601
  %4603 = vrot.lane.b32.xlu0 %v70, 112
  %v4604 = vpop.permute.xlu0 %4603
  %4605 = vrot.lane.b32.xlu0 %v72, 112
  %v4606 = vpop.permute.xlu0 %4605
  %4607 = vrot.lane.b32.xlu0 %v74, 112
  %v4608 = vpop.permute.xlu0 %4607
  %4609 = vrot.lane.b32.xlu0 %v76, 112
  %v4610 = vpop.permute.xlu0 %4609
  %4611 = vrot.lane.b32.xlu0 %v78, 112
  %v4612 = vpop.permute.xlu0 %4611
  %4613 = vrot.lane.b32.xlu0 %v80, 112
  %v4614 = vpop.permute.xlu0 %4613
  %4615 = vrot.lane.b32.xlu0 %v82, 112
  %v4616 = vpop.permute.xlu0 %4615
  %4617 = vrot.lane.b32.xlu0 %v84, 112
  %v4618 = vpop.permute.xlu0 %4617
  %4619 = vrot.lane.b32.xlu0 %v86, 112
  %v4620 = vpop.permute.xlu0 %4619
  %4621 = vrot.lane.b32.xlu0 %v88, 112
  %v4622 = vpop.permute.xlu0 %4621
  %4623 = vrot.lane.b32.xlu0 %v90, 112
  %v4624 = vpop.permute.xlu0 %4623
  %4625 = vrot.lane.b32.xlu0 %v92, 112
  %v4626 = vpop.permute.xlu0 %4625
  %vm4627 = vcmp.lt.s32.totalorder %v223, 112
  %v4628 = vsel %vm4627, %v4500, %v4564
  %v4629 = vsel %vm4627, %v4502, %v4566
  %v4630 = vsel %vm4627, %v4504, %v4568
  %v4631 = vsel %vm4627, %v4506, %v4570
  %v4632 = vsel %vm4627, %v4508, %v4572
  %v4633 = vsel %vm4627, %v4510, %v4574
  %v4634 = vsel %vm4627, %v4512, %v4576
  %v4635 = vsel %vm4627, %v4514, %v4578
  %v4636 = vsel %vm4627, %v4516, %v4580
  %v4637 = vsel %vm4627, %v4518, %v4582
  %v4638 = vsel %vm4627, %v4520, %v4584
  %v4639 = vsel %vm4627, %v4522, %v4586
  %v4640 = vsel %vm4627, %v4524, %v4588
  %v4641 = vsel %vm4627, %v4526, %v4590
  %v4642 = vsel %vm4627, %v4528, %v4592
  %v4643 = vsel %vm4627, %v4530, %v4594
  %v4644 = vsel %vm4627, %v4532, %v4596
  %v4645 = vsel %vm4627, %v4534, %v4598
  %v4646 = vsel %vm4627, %v4536, %v4600
  %v4647 = vsel %vm4627, %v4538, %v4602
  %v4648 = vsel %vm4627, %v4540, %v4604
  %v4649 = vsel %vm4627, %v4542, %v4606
  %v4650 = vsel %vm4627, %v4544, %v4608
  %v4651 = vsel %vm4627, %v4546, %v4610
  %v4652 = vsel %vm4627, %v4548, %v4612
  %v4653 = vsel %vm4627, %v4550, %v4614
  %v4654 = vsel %vm4627, %v4552, %v4616
  %v4655 = vsel %vm4627, %v4554, %v4618
  %v4656 = vsel %vm4627, %v4556, %v4620
  %v4657 = vsel %vm4627, %v4558, %v4622
  %v4658 = vsel %vm4627, %v4560, %v4624
  %v4659 = vsel %vm4627, %v4562, %v4626
  %v4660 = vsel %vm4627, %v4564, %v4500
  %v4661 = vsel %vm4627, %v4566, %v4502
  %v4662 = vsel %vm4627, %v4568, %v4504
  %v4663 = vsel %vm4627, %v4570, %v4506
  %v4664 = vsel %vm4627, %v4572, %v4508
  %v4665 = vsel %vm4627, %v4574, %v4510
  %v4666 = vsel %vm4627, %v4576, %v4512
  %v4667 = vsel %vm4627, %v4578, %v4514
  %v4668 = vsel %vm4627, %v4580, %v4516
  %v4669 = vsel %vm4627, %v4582, %v4518
  %v4670 = vsel %vm4627, %v4584, %v4520
  %v4671 = vsel %vm4627, %v4586, %v4522
  %v4672 = vsel %vm4627, %v4588, %v4524
  %v4673 = vsel %vm4627, %v4590, %v4526
  %v4674 = vsel %vm4627, %v4592, %v4528
  %v4675 = vsel %vm4627, %v4594, %v4530
  %v4676 = vsel %vm4627, %v4596, %v4532
  %v4677 = vsel %vm4627, %v4598, %v4534
  %v4678 = vsel %vm4627, %v4600, %v4536
  %v4679 = vsel %vm4627, %v4602, %v4538
  %v4680 = vsel %vm4627, %v4604, %v4540
  %v4681 = vsel %vm4627, %v4606, %v4542
  %v4682 = vsel %vm4627, %v4608, %v4544
  %v4683 = vsel %vm4627, %v4610, %v4546
  %v4684 = vsel %vm4627, %v4612, %v4548
  %v4685 = vsel %vm4627, %v4614, %v4550
  %v4686 = vsel %vm4627, %v4616, %v4552
  %v4687 = vsel %vm4627, %v4618, %v4554
  %v4688 = vsel %vm4627, %v4620, %v4556
  %v4689 = vsel %vm4627, %v4622, %v4558
  %v4690 = vsel %vm4627, %v4624, %v4560
  %v4691 = vsel %vm4627, %v4626, %v4562
  %s4692 = scalar_lea.vmem %s2, 1792
  %v4693 = vld [vmem:[%s4692] sm:$0xff]
  %v4694 = vld [vmem:[%s4692 + $0x8] sm:$0xff]
  %v4695 = vld [vmem:[%s4692 + $0x10] sm:$0xff]
  %v4696 = vld [vmem:[%s4692 + $0x18] sm:$0xff]
  %v4697 = vld [vmem:[%s4692 + $0x20] sm:$0xff]
  %v4698 = vld [vmem:[%s4692 + $0x28] sm:$0xff]
  %v4699 = vld [vmem:[%s4692 + $0x30] sm:$0xff]
  %v4700 = vld [vmem:[%s4692 + $0x38] sm:$0xff]
  %v4701 = vld [vmem:[%s4692 + $0x40] sm:$0xff]
  %v4702 = vld [vmem:[%s4692 + $0x48] sm:$0xff]
  %v4703 = vld [vmem:[%s4692 + $0x50] sm:$0xff]
  %v4704 = vld [vmem:[%s4692 + $0x58] sm:$0xff]
  %v4705 = vld [vmem:[%s4692 + $0x60] sm:$0xff]
  %v4706 = vld [vmem:[%s4692 + $0x68] sm:$0xff]
  %v4707 = vld [vmem:[%s4692 + $0x70] sm:$0xff]
  %v4708 = vld [vmem:[%s4692 + $0x78] sm:$0xff]
  %v4709 = vld [vmem:[%s4692 + $0x80] sm:$0xff]
  %v4710 = vld [vmem:[%s4692 + $0x88] sm:$0xff]
  %v4711 = vld [vmem:[%s4692 + $0x90] sm:$0xff]
  %v4712 = vld [vmem:[%s4692 + $0x98] sm:$0xff]
  %v4713 = vld [vmem:[%s4692 + $0xa0] sm:$0xff]
  %v4714 = vld [vmem:[%s4692 + $0xa8] sm:$0xff]
  %v4715 = vld [vmem:[%s4692 + $0xb0] sm:$0xff]
  %v4716 = vld [vmem:[%s4692 + $0xb8] sm:$0xff]
  %v4717 = vld [vmem:[%s4692 + $0xc0] sm:$0xff]
  %v4718 = vld [vmem:[%s4692 + $0xc8] sm:$0xff]
  %v4719 = vld [vmem:[%s4692 + $0xd0] sm:$0xff]
  %v4720 = vld [vmem:[%s4692 + $0xd8] sm:$0xff]
  %v4721 = vld [vmem:[%s4692 + $0xe0] sm:$0xff]
  %v4722 = vld [vmem:[%s4692 + $0xe8] sm:$0xff]
  %v4723 = vld [vmem:[%s4692 + $0xf0] sm:$0xff]
  %v4724 = vld [vmem:[%s4692 + $0xf8] sm:$0xff]
  %v4725 = vpack.c.bf16 %v4629, %v4628
  %v4726 = vpack.c.bf16 %v4661, %v4660
  %v4727 = vpack.c.bf16 %v4631, %v4630
  %v4728 = vpack.c.bf16 %v4663, %v4662
  %v4729 = vpack.c.bf16 %v4633, %v4632
  %v4730 = vpack.c.bf16 %v4665, %v4664
  %v4731 = vpack.c.bf16 %v4635, %v4634
  %v4732 = vpack.c.bf16 %v4667, %v4666
  %v4733 = vpack.c.bf16 %v4637, %v4636
  %v4734 = vpack.c.bf16 %v4669, %v4668
  %v4735 = vpack.c.bf16 %v4639, %v4638
  %v4736 = vpack.c.bf16 %v4671, %v4670
  %v4737 = vpack.c.bf16 %v4641, %v4640
  %v4738 = vpack.c.bf16 %v4673, %v4672
  %v4739 = vpack.c.bf16 %v4643, %v4642
  %v4740 = vpack.c.bf16 %v4675, %v4674
  %v4741 = vpack.c.bf16 %v4645, %v4644
  %v4742 = vpack.c.bf16 %v4677, %v4676
  %v4743 = vpack.c.bf16 %v4647, %v4646
  %v4744 = vpack.c.bf16 %v4679, %v4678
  %v4745 = vpack.c.bf16 %v4649, %v4648
  %v4746 = vpack.c.bf16 %v4681, %v4680
  %v4747 = vpack.c.bf16 %v4651, %v4650
  %v4748 = vpack.c.bf16 %v4683, %v4682
  %v4749 = vpack.c.bf16 %v4653, %v4652
  %v4750 = vpack.c.bf16 %v4685, %v4684
  %v4751 = vpack.c.bf16 %v4655, %v4654
  %v4752 = vpack.c.bf16 %v4687, %v4686
  %v4753 = vpack.c.bf16 %v4657, %v4656
  %v4754 = vpack.c.bf16 %v4689, %v4688
  %v4755 = vpack.c.bf16 %v4659, %v4658
  %v4756 = vpack.c.bf16 %v4691, %v4690
  %v4789 = vunpack.c.l.b16 %v4693
  %v4790 = vunpack.c.h.b16 %v4693
  %v4791 = vunpack.c.l.b16 %v4694
  %v4792 = vunpack.c.h.b16 %v4694
  %v4793 = vunpack.c.l.b16 %v4695
  %v4794 = vunpack.c.h.b16 %v4695
  %v4795 = vunpack.c.l.b16 %v4696
  %v4796 = vunpack.c.h.b16 %v4696
  %v4797 = vunpack.c.l.b16 %v4697
  %v4798 = vunpack.c.h.b16 %v4697
  %v4799 = vunpack.c.l.b16 %v4698
  %v4800 = vunpack.c.h.b16 %v4698
  %v4801 = vunpack.c.l.b16 %v4699
  %v4802 = vunpack.c.h.b16 %v4699
  %v4803 = vunpack.c.l.b16 %v4700
  %v4804 = vunpack.c.h.b16 %v4700
  %v4805 = vunpack.c.l.b16 %v4701
  %v4806 = vunpack.c.h.b16 %v4701
  %v4807 = vunpack.c.l.b16 %v4702
  %v4808 = vunpack.c.h.b16 %v4702
  %v4809 = vunpack.c.l.b16 %v4703
  %v4810 = vunpack.c.h.b16 %v4703
  %v4811 = vunpack.c.l.b16 %v4704
  %v4812 = vunpack.c.h.b16 %v4704
  %v4813 = vunpack.c.l.b16 %v4705
  %v4814 = vunpack.c.h.b16 %v4705
  %v4815 = vunpack.c.l.b16 %v4706
  %v4816 = vunpack.c.h.b16 %v4706
  %v4817 = vunpack.c.l.b16 %v4707
  %v4818 = vunpack.c.h.b16 %v4707
  %v4819 = vunpack.c.l.b16 %v4708
  %v4820 = vunpack.c.h.b16 %v4708
  %v4821 = vunpack.c.l.b16 %v4709
  %v4822 = vunpack.c.h.b16 %v4709
  %v4823 = vunpack.c.l.b16 %v4710
  %v4824 = vunpack.c.h.b16 %v4710
  %v4825 = vunpack.c.l.b16 %v4711
  %v4826 = vunpack.c.h.b16 %v4711
  %v4827 = vunpack.c.l.b16 %v4712
  %v4828 = vunpack.c.h.b16 %v4712
  %v4829 = vunpack.c.l.b16 %v4713
  %v4830 = vunpack.c.h.b16 %v4713
  %v4831 = vunpack.c.l.b16 %v4714
  %v4832 = vunpack.c.h.b16 %v4714
  %v4833 = vunpack.c.l.b16 %v4715
  %v4834 = vunpack.c.h.b16 %v4715
  %v4835 = vunpack.c.l.b16 %v4716
  %v4836 = vunpack.c.h.b16 %v4716
  %v4837 = vunpack.c.l.b16 %v4717
  %v4838 = vunpack.c.h.b16 %v4717
  %v4839 = vunpack.c.l.b16 %v4718
  %v4840 = vunpack.c.h.b16 %v4718
  %v4841 = vunpack.c.l.b16 %v4719
  %v4842 = vunpack.c.h.b16 %v4719
  %v4843 = vunpack.c.l.b16 %v4720
  %v4844 = vunpack.c.h.b16 %v4720
  %v4845 = vunpack.c.l.b16 %v4721
  %v4846 = vunpack.c.h.b16 %v4721
  %v4847 = vunpack.c.l.b16 %v4722
  %v4848 = vunpack.c.h.b16 %v4722
  %v4849 = vunpack.c.l.b16 %v4723
  %v4850 = vunpack.c.h.b16 %v4723
  %v4851 = vunpack.c.l.b16 %v4724
  %v4852 = vunpack.c.h.b16 %v4724
  %v4853 = vpack.c.b16 %v4791, %v4789
  %v4854 = vpack.c.b16 %v4792, %v4790
  %v4855 = vpack.c.b16 %v4795, %v4793
  %v4856 = vpack.c.b16 %v4796, %v4794
  %v4857 = vpack.c.b16 %v4799, %v4797
  %v4858 = vpack.c.b16 %v4800, %v4798
  %v4859 = vpack.c.b16 %v4803, %v4801
  %v4860 = vpack.c.b16 %v4804, %v4802
  %v4861 = vpack.c.b16 %v4807, %v4805
  %v4862 = vpack.c.b16 %v4808, %v4806
  %v4863 = vpack.c.b16 %v4811, %v4809
  %v4864 = vpack.c.b16 %v4812, %v4810
  %v4865 = vpack.c.b16 %v4815, %v4813
  %v4866 = vpack.c.b16 %v4816, %v4814
  %v4867 = vpack.c.b16 %v4819, %v4817
  %v4868 = vpack.c.b16 %v4820, %v4818
  %v4869 = vpack.c.b16 %v4823, %v4821
  %v4870 = vpack.c.b16 %v4824, %v4822
  %v4871 = vpack.c.b16 %v4827, %v4825
  %v4872 = vpack.c.b16 %v4828, %v4826
  %v4873 = vpack.c.b16 %v4831, %v4829
  %v4874 = vpack.c.b16 %v4832, %v4830
  %v4875 = vpack.c.b16 %v4835, %v4833
  %v4876 = vpack.c.b16 %v4836, %v4834
  %v4877 = vpack.c.b16 %v4839, %v4837
  %v4878 = vpack.c.b16 %v4840, %v4838
  %v4879 = vpack.c.b16 %v4843, %v4841
  %v4880 = vpack.c.b16 %v4844, %v4842
  %v4881 = vpack.c.b16 %v4847, %v4845
  %v4882 = vpack.c.b16 %v4848, %v4846
  %v4883 = vpack.c.b16 %v4851, %v4849
  %v4884 = vpack.c.b16 %v4852, %v4850
  %4917 = vmatprep.subr.bf16.mxu0 %v4726
  %4918 = vmatpush1.bf16.msra.mxu0 %v4725
  %4919 = vmatprep.subr.bf16.mxu0 %v4728
  %4920 = vmatpush1.bf16.msra.mxu0 %v4727
  %4921 = vmatprep.subr.bf16.mxu0 %v4730
  %4922 = vmatpush1.bf16.msra.mxu0 %v4729
  %4923 = vmatprep.subr.bf16.mxu0 %v4732
  %4924 = vmatpush1.bf16.msra.mxu0 %v4731
  %4925 = vmatprep.subr.bf16.mxu0 %v4734
  %4926 = vmatpush1.bf16.msra.mxu0 %v4733
  %4927 = vmatprep.subr.bf16.mxu0 %v4736
  %4928 = vmatpush1.bf16.msra.mxu0 %v4735
  %4929 = vmatprep.subr.bf16.mxu0 %v4738
  %4930 = vmatpush1.bf16.msra.mxu0 %v4737
  %4931 = vmatprep.subr.bf16.mxu0 %v4740
  %4932 = vmatpush1.bf16.msra.mxu0 %v4739
  %4933 = vmatprep.subr.bf16.mxu0 %v4742
  %4934 = vmatpush1.bf16.msra.mxu0 %v4741
  %4935 = vmatprep.subr.bf16.mxu0 %v4744
  %4936 = vmatpush1.bf16.msra.mxu0 %v4743
  %4937 = vmatprep.subr.bf16.mxu0 %v4746
  %4938 = vmatpush1.bf16.msra.mxu0 %v4745
  %4939 = vmatprep.subr.bf16.mxu0 %v4748
  %4940 = vmatpush1.bf16.msra.mxu0 %v4747
  %4941 = vmatprep.subr.bf16.mxu0 %v4750
  %4942 = vmatpush1.bf16.msra.mxu0 %v4749
  %4943 = vmatprep.subr.bf16.mxu0 %v4752
  %4944 = vmatpush1.bf16.msra.mxu0 %v4751
  %4945 = vmatprep.subr.bf16.mxu0 %v4754
  %4946 = vmatpush1.bf16.msra.mxu0 %v4753
  %4947 = vmatprep.subr.bf16.mxu0 %v4756
  %4948 = vmatpush1.bf16.msra.mxu0 %v4755
  %4949 = vmatprep.mubr.bf16.mxu0 %v4854
  %4950 = vmatmul.mubr.bf16.gmra.mrb[0].mxu0 %v4853
  %v4951 = vpop.f32.mrb[0].mxu0
  %v4952 = vadd.f32 0.0, %v4951
  %v4953 = vpop.f32.mrb[0].mxu0
  %v4954 = vadd.f32 0.0, %v4953
  %v4955 = vpop.f32.mrb[0].mxu0
  %v4956 = vadd.f32 0.0, %v4955
  %v4957 = vpop.f32.mrb[0].mxu0
  %v4958 = vadd.f32 0.0, %v4957
  %4959 = vmatprep.mubr.bf16.mxu0 %v4856
  %4960 = vmatmul.mubr.bf16.gmra.mrb[0].mxu0 %v4855
  %v4961 = vpop.f32.mrb[0].mxu0
  %v4962 = vadd.f32 0.0, %v4961
  %v4963 = vpop.f32.mrb[0].mxu0
  %v4964 = vadd.f32 0.0, %v4963
  %v4965 = vpop.f32.mrb[0].mxu0
  %v4966 = vadd.f32 0.0, %v4965
  %v4967 = vpop.f32.mrb[0].mxu0
  %v4968 = vadd.f32 0.0, %v4967
  %4969 = vmatprep.mubr.bf16.mxu0 %v4858
  %4970 = vmatmul.mubr.bf16.gmra.mrb[0].mxu0 %v4857
  %v4971 = vpop.f32.mrb[0].mxu0
  %v4972 = vadd.f32 0.0, %v4971
  %v4973 = vpop.f32.mrb[0].mxu0
  %v4974 = vadd.f32 0.0, %v4973
  %v4975 = vpop.f32.mrb[0].mxu0
  %v4976 = vadd.f32 0.0, %v4975
  %v4977 = vpop.f32.mrb[0].mxu0
  %v4978 = vadd.f32 0.0, %v4977
  %4979 = vmatprep.mubr.bf16.mxu0 %v4860
  %4980 = vmatmul.mubr.bf16.gmra.mrb[0].mxu0 %v4859
  %v4981 = vpop.f32.mrb[0].mxu0
  %v4982 = vadd.f32 0.0, %v4981
  %v4983 = vpop.f32.mrb[0].mxu0
  %v4984 = vadd.f32 0.0, %v4983
  %v4985 = vpop.f32.mrb[0].mxu0
  %v4986 = vadd.f32 0.0, %v4985
  %v4987 = vpop.f32.mrb[0].mxu0
  %v4988 = vadd.f32 0.0, %v4987
  %4989 = vmatprep.mubr.bf16.mxu0 %v4862
  %4990 = vmatmul.mubr.bf16.gmra.mrb[0].mxu0 %v4861
  %v4991 = vpop.f32.mrb[0].mxu0
  %v4992 = vadd.f32 0.0, %v4991
  %v4993 = vpop.f32.mrb[0].mxu0
  %v4994 = vadd.f32 0.0, %v4993
  %v4995 = vpop.f32.mrb[0].mxu0
  %v4996 = vadd.f32 0.0, %v4995
  %v4997 = vpop.f32.mrb[0].mxu0
  %v4998 = vadd.f32 0.0, %v4997
  %4999 = vmatprep.mubr.bf16.mxu0 %v4864
  %5000 = vmatmul.mubr.bf16.gmra.mrb[0].mxu0 %v4863
  %v5001 = vpop.f32.mrb[0].mxu0
  %v5002 = vadd.f32 0.0, %v5001
  %v5003 = vpop.f32.mrb[0].mxu0
  %v5004 = vadd.f32 0.0, %v5003
  %v5005 = vpop.f32.mrb[0].mxu0
  %v5006 = vadd.f32 0.0, %v5005
  %v5007 = vpop.f32.mrb[0].mxu0
  %v5008 = vadd.f32 0.0, %v5007
  %5009 = vmatprep.mubr.bf16.mxu0 %v4866
  %5010 = vmatmul.mubr.bf16.gmra.mrb[0].mxu0 %v4865
  %v5011 = vpop.f32.mrb[0].mxu0
  %v5012 = vadd.f32 0.0, %v5011
  %v5013 = vpop.f32.mrb[0].mxu0
  %v5014 = vadd.f32 0.0, %v5013
  %v5015 = vpop.f32.mrb[0].mxu0
  %v5016 = vadd.f32 0.0, %v5015
  %v5017 = vpop.f32.mrb[0].mxu0
  %v5018 = vadd.f32 0.0, %v5017
  %5019 = vmatprep.mubr.bf16.mxu0 %v4868
  %5020 = vmatmul.mubr.bf16.gmra.mrb[0].mxu0 %v4867
  %v5021 = vpop.f32.mrb[0].mxu0
  %v5022 = vadd.f32 0.0, %v5021
  %v5023 = vpop.f32.mrb[0].mxu0
  %v5024 = vadd.f32 0.0, %v5023
  %v5025 = vpop.f32.mrb[0].mxu0
  %v5026 = vadd.f32 0.0, %v5025
  %v5027 = vpop.f32.mrb[0].mxu0
  %v5028 = vadd.f32 0.0, %v5027
  %5029 = vmatprep.mubr.bf16.mxu0 %v4870
  %5030 = vmatmul.mubr.bf16.gmra.mrb[0].mxu0 %v4869
  %v5031 = vpop.f32.mrb[0].mxu0
  %v5032 = vadd.f32 0.0, %v5031
  %v5033 = vpop.f32.mrb[0].mxu0
  %v5034 = vadd.f32 0.0, %v5033
  %v5035 = vpop.f32.mrb[0].mxu0
  %v5036 = vadd.f32 0.0, %v5035
  %v5037 = vpop.f32.mrb[0].mxu0
  %v5038 = vadd.f32 0.0, %v5037
  %5039 = vmatprep.mubr.bf16.mxu0 %v4872
  %5040 = vmatmul.mubr.bf16.gmra.mrb[0].mxu0 %v4871
  %v5041 = vpop.f32.mrb[0].mxu0
  %v5042 = vadd.f32 0.0, %v5041
  %v5043 = vpop.f32.mrb[0].mxu0
  %v5044 = vadd.f32 0.0, %v5043
  %v5045 = vpop.f32.mrb[0].mxu0
  %v5046 = vadd.f32 0.0, %v5045
  %v5047 = vpop.f32.mrb[0].mxu0
  %v5048 = vadd.f32 0.0, %v5047
  %5049 = vmatprep.mubr.bf16.mxu0 %v4874
  %5050 = vmatmul.mubr.bf16.gmra.mrb[0].mxu0 %v4873
  %v5051 = vpop.f32.mrb[0].mxu0
  %v5052 = vadd.f32 0.0, %v5051
  %v5053 = vpop.f32.mrb[0].mxu0
  %v5054 = vadd.f32 0.0, %v5053
  %v5055 = vpop.f32.mrb[0].mxu0
  %v5056 = vadd.f32 0.0, %v5055
  %v5057 = vpop.f32.mrb[0].mxu0
  %v5058 = vadd.f32 0.0, %v5057
  %5059 = vmatprep.mubr.bf16.mxu0 %v4876
  %5060 = vmatmul.mubr.bf16.gmra.mrb[0].mxu0 %v4875
  %v5061 = vpop.f32.mrb[0].mxu0
  %v5062 = vadd.f32 0.0, %v5061
  %v5063 = vpop.f32.mrb[0].mxu0
  %v5064 = vadd.f32 0.0, %v5063
  %v5065 = vpop.f32.mrb[0].mxu0
  %v5066 = vadd.f32 0.0, %v5065
  %v5067 = vpop.f32.mrb[0].mxu0
  %v5068 = vadd.f32 0.0, %v5067
  %5069 = vmatprep.mubr.bf16.mxu0 %v4878
  %5070 = vmatmul.mubr.bf16.gmra.mrb[0].mxu0 %v4877
  %v5071 = vpop.f32.mrb[0].mxu0
  %v5072 = vadd.f32 0.0, %v5071
  %v5073 = vpop.f32.mrb[0].mxu0
  %v5074 = vadd.f32 0.0, %v5073
  %v5075 = vpop.f32.mrb[0].mxu0
  %v5076 = vadd.f32 0.0, %v5075
  %v5077 = vpop.f32.mrb[0].mxu0
  %v5078 = vadd.f32 0.0, %v5077
  %5079 = vmatprep.mubr.bf16.mxu0 %v4880
  %5080 = vmatmul.mubr.bf16.gmra.mrb[0].mxu0 %v4879
  %v5081 = vpop.f32.mrb[0].mxu0
  %v5082 = vadd.f32 0.0, %v5081
  %v5083 = vpop.f32.mrb[0].mxu0
  %v5084 = vadd.f32 0.0, %v5083
  %v5085 = vpop.f32.mrb[0].mxu0
  %v5086 = vadd.f32 0.0, %v5085
  %v5087 = vpop.f32.mrb[0].mxu0
  %v5088 = vadd.f32 0.0, %v5087
  %5089 = vmatprep.mubr.bf16.mxu0 %v4882
  %5090 = vmatmul.mubr.bf16.gmra.mrb[0].mxu0 %v4881
  %v5091 = vpop.f32.mrb[0].mxu0
  %v5092 = vadd.f32 0.0, %v5091
  %v5093 = vpop.f32.mrb[0].mxu0
  %v5094 = vadd.f32 0.0, %v5093
  %v5095 = vpop.f32.mrb[0].mxu0
  %v5096 = vadd.f32 0.0, %v5095
  %v5097 = vpop.f32.mrb[0].mxu0
  %v5098 = vadd.f32 0.0, %v5097
  %5099 = vmatprep.mubr.bf16.mxu0 %v4884
  %5100 = vmatmul.mubr.bf16.gmra.mrb[0].mxu0 %v4883
  %v5101 = vpop.f32.mrb[0].mxu0
  %v5102 = vadd.f32 0.0, %v5101
  %v5103 = vpop.f32.mrb[0].mxu0
  %v5104 = vadd.f32 0.0, %v5103
  %v5105 = vpop.f32.mrb[0].mxu0
  %v5106 = vadd.f32 0.0, %v5105
  %v5107 = vpop.f32.mrb[0].mxu0
  %v5108 = vadd.f32 0.0, %v5107
  %5109 = vdwg.mxu0
  %v5110 = vadd.f32 %v4435, %v4952
  %v5111 = vadd.f32 %v4436, %v4954
  %v5112 = vadd.f32 %v4437, %v4956
  %v5113 = vadd.f32 %v4438, %v4958
  %v5114 = vadd.f32 %v4439, %v4962
  %v5115 = vadd.f32 %v4440, %v4964
  %v5116 = vadd.f32 %v4441, %v4966
  %v5117 = vadd.f32 %v4442, %v4968
  %v5118 = vadd.f32 %v4443, %v4972
  %v5119 = vadd.f32 %v4444, %v4974
  %v5120 = vadd.f32 %v4445, %v4976
  %v5121 = vadd.f32 %v4446, %v4978
  %v5122 = vadd.f32 %v4447, %v4982
  %v5123 = vadd.f32 %v4448, %v4984
  %v5124 = vadd.f32 %v4449, %v4986
  %v5125 = vadd.f32 %v4450, %v4988
  %v5126 = vadd.f32 %v4451, %v4992
  %v5127 = vadd.f32 %v4452, %v4994
  %v5128 = vadd.f32 %v4453, %v4996
  %v5129 = vadd.f32 %v4454, %v4998
  %v5130 = vadd.f32 %v4455, %v5002
  %v5131 = vadd.f32 %v4456, %v5004
  %v5132 = vadd.f32 %v4457, %v5006
  %v5133 = vadd.f32 %v4458, %v5008
  %v5134 = vadd.f32 %v4459, %v5012
  %v5135 = vadd.f32 %v4460, %v5014
  %v5136 = vadd.f32 %v4461, %v5016
  %v5137 = vadd.f32 %v4462, %v5018
  %v5138 = vadd.f32 %v4463, %v5022
  %v5139 = vadd.f32 %v4464, %v5024
  %v5140 = vadd.f32 %v4465, %v5026
  %v5141 = vadd.f32 %v4466, %v5028
  %v5142 = vadd.f32 %v4467, %v5032
  %v5143 = vadd.f32 %v4468, %v5034
  %v5144 = vadd.f32 %v4469, %v5036
  %v5145 = vadd.f32 %v4470, %v5038
  %v5146 = vadd.f32 %v4471, %v5042
  %v5147 = vadd.f32 %v4472, %v5044
  %v5148 = vadd.f32 %v4473, %v5046
  %v5149 = vadd.f32 %v4474, %v5048
  %v5150 = vadd.f32 %v4475, %v5052
  %v5151 = vadd.f32 %v4476, %v5054
  %v5152 = vadd.f32 %v4477, %v5056
  %v5153 = vadd.f32 %v4478, %v5058
  %v5154 = vadd.f32 %v4479, %v5062
  %v5155 = vadd.f32 %v4480, %v5064
  %v5156 = vadd.f32 %v4481, %v5066
  %v5157 = vadd.f32 %v4482, %v5068
  %v5158 = vadd.f32 %v4483, %v5072
  %v5159 = vadd.f32 %v4484, %v5074
  %v5160 = vadd.f32 %v4485, %v5076
  %v5161 = vadd.f32 %v4486, %v5078
  %v5162 = vadd.f32 %v4487, %v5082
  %v5163 = vadd.f32 %v4488, %v5084
  %v5164 = vadd.f32 %v4489, %v5086
  %v5165 = vadd.f32 %v4490, %v5088
  %v5166 = vadd.f32 %v4491, %v5092
  %v5167 = vadd.f32 %v4492, %v5094
  %v5168 = vadd.f32 %v4493, %v5096
  %v5169 = vadd.f32 %v4494, %v5098
  %v5170 = vadd.f32 %v4495, %v5102
  %v5171 = vadd.f32 %v4496, %v5104
  %v5172 = vadd.f32 %v4497, %v5106
  %v5173 = vadd.f32 %v4498, %v5108
  %5174 = vrot.lane.b32.xlu0 %v29, 111
  %v5175 = vpop.permute.xlu0 %5174
  %5176 = vrot.lane.b32.xlu0 %v31, 111
  %v5177 = vpop.permute.xlu0 %5176
  %5178 = vrot.lane.b32.xlu0 %v33, 111
  %v5179 = vpop.permute.xlu0 %5178
  %5180 = vrot.lane.b32.xlu0 %v35, 111
  %v5181 = vpop.permute.xlu0 %5180
  %5182 = vrot.lane.b32.xlu0 %v37, 111
  %v5183 = vpop.permute.xlu0 %5182
  %5184 = vrot.lane.b32.xlu0 %v39, 111
  %v5185 = vpop.permute.xlu0 %5184
  %5186 = vrot.lane.b32.xlu0 %v41, 111
  %v5187 = vpop.permute.xlu0 %5186
  %5188 = vrot.lane.b32.xlu0 %v43, 111
  %v5189 = vpop.permute.xlu0 %5188
  %5190 = vrot.lane.b32.xlu0 %v45, 111
  %v5191 = vpop.permute.xlu0 %5190
  %5192 = vrot.lane.b32.xlu0 %v47, 111
  %v5193 = vpop.permute.xlu0 %5192
  %5194 = vrot.lane.b32.xlu0 %v49, 111
  %v5195 = vpop.permute.xlu0 %5194
  %5196 = vrot.lane.b32.xlu0 %v51, 111
  %v5197 = vpop.permute.xlu0 %5196
  %5198 = vrot.lane.b32.xlu0 %v53, 111
  %v5199 = vpop.permute.xlu0 %5198
  %5200 = vrot.lane.b32.xlu0 %v55, 111
  %v5201 = vpop.permute.xlu0 %5200
  %5202 = vrot.lane.b32.xlu0 %v57, 111
  %v5203 = vpop.permute.xlu0 %5202
  %5204 = vrot.lane.b32.xlu0 %v59, 111
  %v5205 = vpop.permute.xlu0 %5204
  %5206 = vrot.lane.b32.xlu0 %v61, 111
  %v5207 = vpop.permute.xlu0 %5206
  %5208 = vrot.lane.b32.xlu0 %v63, 111
  %v5209 = vpop.permute.xlu0 %5208
  %5210 = vrot.lane.b32.xlu0 %v65, 111
  %v5211 = vpop.permute.xlu0 %5210
  %5212 = vrot.lane.b32.xlu0 %v67, 111
  %v5213 = vpop.permute.xlu0 %5212
  %5214 = vrot.lane.b32.xlu0 %v69, 111
  %v5215 = vpop.permute.xlu0 %5214
  %5216 = vrot.lane.b32.xlu0 %v71, 111
  %v5217 = vpop.permute.xlu0 %5216
  %5218 = vrot.lane.b32.xlu0 %v73, 111
  %v5219 = vpop.permute.xlu0 %5218
  %5220 = vrot.lane.b32.xlu0 %v75, 111
  %v5221 = vpop.permute.xlu0 %5220
  %5222 = vrot.lane.b32.xlu0 %v77, 111
  %v5223 = vpop.permute.xlu0 %5222
  %5224 = vrot.lane.b32.xlu0 %v79, 111
  %v5225 = vpop.permute.xlu0 %5224
  %5226 = vrot.lane.b32.xlu0 %v81, 111
  %v5227 = vpop.permute.xlu0 %5226
  %5228 = vrot.lane.b32.xlu0 %v83, 111
  %v5229 = vpop.permute.xlu0 %5228
  %5230 = vrot.lane.b32.xlu0 %v85, 111
  %v5231 = vpop.permute.xlu0 %5230
  %5232 = vrot.lane.b32.xlu0 %v87, 111
  %v5233 = vpop.permute.xlu0 %5232
  %5234 = vrot.lane.b32.xlu0 %v89, 111
  %v5235 = vpop.permute.xlu0 %5234
  %5236 = vrot.lane.b32.xlu0 %v91, 111
  %v5237 = vpop.permute.xlu0 %5236
  %5238 = vrot.lane.b32.xlu0 %v30, 111
  %v5239 = vpop.permute.xlu0 %5238
  %5240 = vrot.lane.b32.xlu0 %v32, 111
  %v5241 = vpop.permute.xlu0 %5240
  %5242 = vrot.lane.b32.xlu0 %v34, 111
  %v5243 = vpop.permute.xlu0 %5242
  %5244 = vrot.lane.b32.xlu0 %v36, 111
  %v5245 = vpop.permute.xlu0 %5244
  %5246 = vrot.lane.b32.xlu0 %v38, 111
  %v5247 = vpop.permute.xlu0 %5246
  %5248 = vrot.lane.b32.xlu0 %v40, 111
  %v5249 = vpop.permute.xlu0 %5248
  %5250 = vrot.lane.b32.xlu0 %v42, 111
  %v5251 = vpop.permute.xlu0 %5250
  %5252 = vrot.lane.b32.xlu0 %v44, 111
  %v5253 = vpop.permute.xlu0 %5252
  %5254 = vrot.lane.b32.xlu0 %v46, 111
  %v5255 = vpop.permute.xlu0 %5254
  %5256 = vrot.lane.b32.xlu0 %v48, 111
  %v5257 = vpop.permute.xlu0 %5256
  %5258 = vrot.lane.b32.xlu0 %v50, 111
  %v5259 = vpop.permute.xlu0 %5258
  %5260 = vrot.lane.b32.xlu0 %v52, 111
  %v5261 = vpop.permute.xlu0 %5260
  %5262 = vrot.lane.b32.xlu0 %v54, 111
  %v5263 = vpop.permute.xlu0 %5262
  %5264 = vrot.lane.b32.xlu0 %v56, 111
  %v5265 = vpop.permute.xlu0 %5264
  %5266 = vrot.lane.b32.xlu0 %v58, 111
  %v5267 = vpop.permute.xlu0 %5266
  %5268 = vrot.lane.b32.xlu0 %v60, 111
  %v5269 = vpop.permute.xlu0 %5268
  %5270 = vrot.lane.b32.xlu0 %v62, 111
  %v5271 = vpop.permute.xlu0 %5270
  %5272 = vrot.lane.b32.xlu0 %v64, 111
  %v5273 = vpop.permute.xlu0 %5272
  %5274 = vrot.lane.b32.xlu0 %v66, 111
  %v5275 = vpop.permute.xlu0 %5274
  %5276 = vrot.lane.b32.xlu0 %v68, 111
  %v5277 = vpop.permute.xlu0 %5276
  %5278 = vrot.lane.b32.xlu0 %v70, 111
  %v5279 = vpop.permute.xlu0 %5278
  %5280 = vrot.lane.b32.xlu0 %v72, 111
  %v5281 = vpop.permute.xlu0 %5280
  %5282 = vrot.lane.b32.xlu0 %v74, 111
  %v5283 = vpop.permute.xlu0 %5282
  %5284 = vrot.lane.b32.xlu0 %v76, 111
  %v5285 = vpop.permute.xlu0 %5284
  %5286 = vrot.lane.b32.xlu0 %v78, 111
  %v5287 = vpop.permute.xlu0 %5286
  %5288 = vrot.lane.b32.xlu0 %v80, 111
  %v5289 = vpop.permute.xlu0 %5288
  %5290 = vrot.lane.b32.xlu0 %v82, 111
  %v5291 = vpop.permute.xlu0 %5290
  %5292 = vrot.lane.b32.xlu0 %v84, 111
  %v5293 = vpop.permute.xlu0 %5292
  %5294 = vrot.lane.b32.xlu0 %v86, 111
  %v5295 = vpop.permute.xlu0 %5294
  %5296 = vrot.lane.b32.xlu0 %v88, 111
  %v5297 = vpop.permute.xlu0 %5296
  %5298 = vrot.lane.b32.xlu0 %v90, 111
  %v5299 = vpop.permute.xlu0 %5298
  %5300 = vrot.lane.b32.xlu0 %v92, 111
  %v5301 = vpop.permute.xlu0 %5300
  %vm5302 = vcmp.lt.s32.totalorder %v223, 111
  %v5303 = vsel %vm5302, %v5175, %v5239
  %v5304 = vsel %vm5302, %v5177, %v5241
  %v5305 = vsel %vm5302, %v5179, %v5243
  %v5306 = vsel %vm5302, %v5181, %v5245
  %v5307 = vsel %vm5302, %v5183, %v5247
  %v5308 = vsel %vm5302, %v5185, %v5249
  %v5309 = vsel %vm5302, %v5187, %v5251
  %v5310 = vsel %vm5302, %v5189, %v5253
  %v5311 = vsel %vm5302, %v5191, %v5255
  %v5312 = vsel %vm5302, %v5193, %v5257
  %v5313 = vsel %vm5302, %v5195, %v5259
  %v5314 = vsel %vm5302, %v5197, %v5261
  %v5315 = vsel %vm5302, %v5199, %v5263
  %v5316 = vsel %vm5302, %v5201, %v5265
  %v5317 = vsel %vm5302, %v5203, %v5267
  %v5318 = vsel %vm5302, %v5205, %v5269
  %v5319 = vsel %vm5302, %v5207, %v5271
  %v5320 = vsel %vm5302, %v5209, %v5273
  %v5321 = vsel %vm5302, %v5211, %v5275
  %v5322 = vsel %vm5302, %v5213, %v5277
  %v5323 = vsel %vm5302, %v5215, %v5279
  %v5324 = vsel %vm5302, %v5217, %v5281
  %v5325 = vsel %vm5302, %v5219, %v5283
  %v5326 = vsel %vm5302, %v5221, %v5285
  %v5327 = vsel %vm5302, %v5223, %v5287
  %v5328 = vsel %vm5302, %v5225, %v5289
  %v5329 = vsel %vm5302, %v5227, %v5291
  %v5330 = vsel %vm5302, %v5229, %v5293
  %v5331 = vsel %vm5302, %v5231, %v5295
  %v5332 = vsel %vm5302, %v5233, %v5297
  %v5333 = vsel %vm5302, %v5235, %v5299
  %v5334 = vsel %vm5302, %v5237, %v5301
  %v5335 = vsel %vm5302, %v5239, %v5175
  %v5336 = vsel %vm5302, %v5241, %v5177
  %v5337 = vsel %vm5302, %v5243, %v5179
  %v5338 = vsel %vm5302, %v5245, %v5181
  %v5339 = vsel %vm5302, %v5247, %v5183
  %v5340 = vsel %vm5302, %v5249, %v5185
  %v5341 = vsel %vm5302, %v5251, %v5187
  %v5342 = vsel %vm5302, %v5253, %v5189
  %v5343 = vsel %vm5302, %v5255, %v5191
  %v5344 = vsel %vm5302, %v5257, %v5193
  %v5345 = vsel %vm5302, %v5259, %v5195
  %v5346 = vsel %vm5302, %v5261, %v5197
  %v5347 = vsel %vm5302, %v5263, %v5199
  %v5348 = vsel %vm5302, %v5265, %v5201
  %v5349 = vsel %vm5302, %v5267, %v5203
  %v5350 = vsel %vm5302, %v5269, %v5205
  %v5351 = vsel %vm5302, %v5271, %v5207
  %v5352 = vsel %vm5302, %v5273, %v5209
  %v5353 = vsel %vm5302, %v5275, %v5211
  %v5354 = vsel %vm5302, %v5277, %v5213
  %v5355 = vsel %vm5302, %v5279, %v5215
  %v5356 = vsel %vm5302, %v5281, %v5217
  %v5357 = vsel %vm5302, %v5283, %v5219
  %v5358 = vsel %vm5302, %v5285, %v5221
  %v5359 = vsel %vm5302, %v5287, %v5223
  %v5360 = vsel %vm5302, %v5289, %v5225
  %v5361 = vsel %vm5302, %v5291, %v5227
  %v5362 = vsel %vm5302, %v5293, %v5229
  %v5363 = vsel %vm5302, %v5295, %v5231
  %v5364 = vsel %vm5302, %v5297, %v5233
  %v5365 = vsel %vm5302, %v5299, %v5235
  %v5366 = vsel %vm5302, %v5301, %v5237
  %s5367 = scalar_lea.vmem %s2, 2048
  %v5368 = vld [vmem:[%s5367] sm:$0xff]
  %v5369 = vld [vmem:[%s5367 + $0x8] sm:$0xff]
  %v5370 = vld [vmem:[%s5367 + $0x10] sm:$0xff]
  %v5371 = vld [vmem:[%s5367 + $0x18] sm:$0xff]
  %v5372 = vld [vmem:[%s5367 + $0x20] sm:$0xff]
  %v5373 = vld [vmem:[%s5367 + $0x28] sm:$0xff]
  %v5374 = vld [vmem:[%s5367 + $0x30] sm:$0xff]
  %v5375 = vld [vmem:[%s5367 + $0x38] sm:$0xff]
  %v5376 = vld [vmem:[%s5367 + $0x40] sm:$0xff]
  %v5377 = vld [vmem:[%s5367 + $0x48] sm:$0xff]
  %v5378 = vld [vmem:[%s5367 + $0x50] sm:$0xff]
  %v5379 = vld [vmem:[%s5367 + $0x58] sm:$0xff]
  %v5380 = vld [vmem:[%s5367 + $0x60] sm:$0xff]
  %v5381 = vld [vmem:[%s5367 + $0x68] sm:$0xff]
  %v5382 = vld [vmem:[%s5367 + $0x70] sm:$0xff]
  %v5383 = vld [vmem:[%s5367 + $0x78] sm:$0xff]
  %v5384 = vld [vmem:[%s5367 + $0x80] sm:$0xff]
  %v5385 = vld [vmem:[%s5367 + $0x88] sm:$0xff]
  %v5386 = vld [vmem:[%s5367 + $0x90] sm:$0xff]
  %v5387 = vld [vmem:[%s5367 + $0x98] sm:$0xff]
  %v5388 = vld [vmem:[%s5367 + $0xa0] sm:$0xff]
  %v5389 = vld [vmem:[%s5367 + $0xa8] sm:$0xff]
  %v5390 = vld [vmem:[%s5367 + $0xb0] sm:$0xff]
  %v5391 = vld [vmem:[%s5367 + $0xb8] sm:$0xff]
  %v5392 = vld [vmem:[%s5367 + $0xc0] sm:$0xff]
  %v5393 = vld [vmem:[%s5367 + $0xc8] sm:$0xff]
  %v5394 = vld [vmem:[%s5367 + $0xd0] sm:$0xff]
  %v5395 = vld [vmem:[%s5367 + $0xd8] sm:$0xff]
  %v5396 = vld [vmem:[%s5367 + $0xe0] sm:$0xff]
  %v5397 = vld [vmem:[%s5367 + $0xe8] sm:$0xff]
  %v5398 = vld [vmem:[%s5367 + $0xf0] sm:$0xff]
  %v5399 = vld [vmem:[%s5367 + $0xf8] sm:$0xff]
  %v5400 = vpack.c.bf16 %v5304, %v5303
  %v5401 = vpack.c.bf16 %v5336, %v5335
  %v5402 = vpack.c.bf16 %v5306, %v5305
  %v5403 = vpack.c.bf16 %v5338, %v5337
  %v5404 = vpack.c.bf16 %v5308, %v5307
  %v5405 = vpack.c.bf16 %v5340, %v5339
  %v5406 = vpack.c.bf16 %v5310, %v5309
  %v5407 = vpack.c.bf16 %v5342, %v5341
  %v5408 = vpack.c.bf16 %v5312, %v5311
  %v5409 = vpack.c.bf16 %v5344, %v5343
  %v5410 = vpack.c.bf16 %v5314, %v5313
  %v5411 = vpack.c.bf16 %v5346, %v5345
  %v5412 = vpack.c.bf16 %v5316, %v5315
  %v5413 = vpack.c.bf16 %v5348, %v5347
  %v5414 = vpack.c.bf16 %v5318, %v5317
  %v5415 = vpack.c.bf16 %v5350, %v5349
  %v5416 = vpack.c.bf16 %v5320, %v5319
  %v5417 = vpack.c.bf16 %v5352, %v5351
  %v5418 = vpack.c.bf16 %v5322, %v5321
  %v5419 = vpack.c.bf16 %v5354, %v5353
  %v5420 = vpack.c.bf16 %v5324, %v5323
  %v5421 = vpack.c.bf16 %v5356, %v5355
  %v5422 = vpack.c.bf16 %v5326, %v5325
  %v5423 = vpack.c.bf16 %v5358, %v5357
  %v5424 = vpack.c.bf16 %v5328, %v5327
  %v5425 = vpack.c.bf16 %v5360, %v5359
  %v5426 = vpack.c.bf16 %v5330, %v5329
  %v5427 = vpack.c.bf16 %v5362, %v5361
  %v5428 = vpack.c.bf16 %v5332, %v5331
  %v5429 = vpack.c.bf16 %v5364, %v5363
  %v5430 = vpack.c.bf16 %v5334, %v5333
  %v5431 = vpack.c.bf16 %v5366, %v5365
  %v5464 = vunpack.c.l.b16 %v5368
  %v5465 = vunpack.c.h.b16 %v5368
  %v5466 = vunpack.c.l.b16 %v5369
  %v5467 = vunpack.c.h.b16 %v5369
  %v5468 = vunpack.c.l.b16 %v5370
  %v5469 = vunpack.c.h.b16 %v5370
  %v5470 = vunpack.c.l.b16 %v5371
  %v5471 = vunpack.c.h.b16 %v5371
  %v5472 = vunpack.c.l.b16 %v5372
  %v5473 = vunpack.c.h.b16 %v5372
  %v5474 = vunpack.c.l.b16 %v5373
  %v5475 = vunpack.c.h.b16 %v5373
  %v5476 = vunpack.c.l.b16 %v5374
  %v5477 = vunpack.c.h.b16 %v5374
  %v5478 = vunpack.c.l.b16 %v5375
  %v5479 = vunpack.c.h.b16 %v5375
  %v5480 = vunpack.c.l.b16 %v5376
  %v5481 = vunpack.c.h.b16 %v5376
  %v5482 = vunpack.c.l.b16 %v5377
  %v5483 = vunpack.c.h.b16 %v5377
  %v5484 = vunpack.c.l.b16 %v5378
  %v5485 = vunpack.c.h.b16 %v5378
  %v5486 = vunpack.c.l.b16 %v5379
  %v5487 = vunpack.c.h.b16 %v5379
  %v5488 = vunpack.c.l.b16 %v5380
  %v5489 = vunpack.c.h.b16 %v5380
  %v5490 = vunpack.c.l.b16 %v5381
  %v5491 = vunpack.c.h.b16 %v5381
  %v5492 = vunpack.c.l.b16 %v5382
  %v5493 = vunpack.c.h.b16 %v5382
  %v5494 = vunpack.c.l.b16 %v5383
  %v5495 = vunpack.c.h.b16 %v5383
  %v5496 = vunpack.c.l.b16 %v5384
  %v5497 = vunpack.c.h.b16 %v5384
  %v5498 = vunpack.c.l.b16 %v5385
  %v5499 = vunpack.c.h.b16 %v5385
  %v5500 = vunpack.c.l.b16 %v5386
  %v5501 = vunpack.c.h.b16 %v5386
  %v5502 = vunpack.c.l.b16 %v5387
  %v5503 = vunpack.c.h.b16 %v5387
  %v5504 = vunpack.c.l.b16 %v5388
  %v5505 = vunpack.c.h.b16 %v5388
  %v5506 = vunpack.c.l.b16 %v5389
  %v5507 = vunpack.c.h.b16 %v5389
  %v5508 = vunpack.c.l.b16 %v5390
  %v5509 = vunpack.c.h.b16 %v5390
  %v5510 = vunpack.c.l.b16 %v5391
  %v5511 = vunpack.c.h.b16 %v5391
  %v5512 = vunpack.c.l.b16 %v5392
  %v5513 = vunpack.c.h.b16 %v5392
  %v5514 = vunpack.c.l.b16 %v5393
  %v5515 = vunpack.c.h.b16 %v5393
  %v5516 = vunpack.c.l.b16 %v5394
  %v5517 = vunpack.c.h.b16 %v5394
  %v5518 = vunpack.c.l.b16 %v5395
  %v5519 = vunpack.c.h.b16 %v5395
  %v5520 = vunpack.c.l.b16 %v5396
  %v5521 = vunpack.c.h.b16 %v5396
  %v5522 = vunpack.c.l.b16 %v5397
  %v5523 = vunpack.c.h.b16 %v5397
  %v5524 = vunpack.c.l.b16 %v5398
  %v5525 = vunpack.c.h.b16 %v5398
  %v5526 = vunpack.c.l.b16 %v5399
  %v5527 = vunpack.c.h.b16 %v5399
  %v5528 = vpack.c.b16 %v5466, %v5464
  %v5529 = vpack.c.b16 %v5467, %v5465
  %v5530 = vpack.c.b16 %v5470, %v5468
  %v5531 = vpack.c.b16 %v5471, %v5469
  %v5532 = vpack.c.b16 %v5474, %v5472
  %v5533 = vpack.c.b16 %v5475, %v5473
  %v5534 = vpack.c.b16 %v5478, %v5476
  %v5535 = vpack.c.b16 %v5479, %v5477
  %v5536 = vpack.c.b16 %v5482, %v5480
  %v5537 = vpack.c.b16 %v5483, %v5481
  %v5538 = vpack.c.b16 %v5486, %v5484
  %v5539 = vpack.c.b16 %v5487, %v5485
  %v5540 = vpack.c.b16 %v5490, %v5488
  %v5541 = vpack.c.b16 %v5491, %v5489
  %v5542 = vpack.c.b16 %v5494, %v5492
  %v5543 = vpack.c.b16 %v5495, %v5493
  %v5544 = vpack.c.b16 %v5498, %v5496
  %v5545 = vpack.c.b16 %v5499, %v5497
  %v5546 = vpack.c.b16 %v5502, %v5500
  %v5547 = vpack.c.b16 %v5503, %v5501
  %v5548 = vpack.c.b16 %v5506, %v5504
  %v5549 = vpack.c.b16 %v5507, %v5505
  %v5550 = vpack.c.b16 %v5510, %v5508
  %v5551 = vpack.c.b16 %v5511, %v5509
  %v5552 = vpack.c.b16 %v5514, %v5512
  %v5553 = vpack.c.b16 %v5515, %v5513
  %v5554 = vpack.c.b16 %v5518, %v5516
  %v5555 = vpack.c.b16 %v5519, %v5517
  %v5556 = vpack.c.b16 %v5522, %v5520
  %v5557 = vpack.c.b16 %v5523, %v5521
  %v5558 = vpack.c.b16 %v5526, %v5524
  %v5559 = vpack.c.b16 %v5527, %v5525
  %5592 = vmatprep.subr.bf16.mxu0 %v5401
  %5593 = vmatpush1.bf16.msra.mxu0 %v5400
  %5594 = vmatprep.subr.bf16.mxu0 %v5403
  %5595 = vmatpush1.bf16.msra.mxu0 %v5402
  %5596 = vmatprep.subr.bf16.mxu0 %v5405
  %5597 = vmatpush1.bf16.msra.mxu0 %v5404
  %5598 = vmatprep.subr.bf16.mxu0 %v5407
  %5599 = vmatpush1.bf16.msra.mxu0 %v5406
  %5600 = vmatprep.subr.bf16.mxu0 %v5409
  %5601 = vmatpush1.bf16.msra.mxu0 %v5408
  %5602 = vmatprep.subr.bf16.mxu0 %v5411
  %5603 = vmatpush1.bf16.msra.mxu0 %v5410
  %5604 = vmatprep.subr.bf16.mxu0 %v5413
  %5605 = vmatpush1.bf16.msra.mxu0 %v5412
  %5606 = vmatprep.subr.bf16.mxu0 %v5415
  %5607 = vmatpush1.bf16.msra.mxu0 %v5414
  %5608 = vmatprep.subr.bf16.mxu0 %v5417
  %5609 = vmatpush1.bf16.msra.mxu0 %v5416
  %5610 = vmatprep.subr.bf16.mxu0 %v5419
  %5611 = vmatpush1.bf16.msra.mxu0 %v5418
  %5612 = vmatprep.subr.bf16.mxu0 %v5421
  %5613 = vmatpush1.bf16.msra.mxu0 %v5420
  %5614 = vmatprep.subr.bf16.mxu0 %v5423
  %5615 = vmatpush1.bf16.msra.mxu0 %v5422
  %5616 = vmatprep.subr.bf16.mxu0 %v5425
  %5617 = vmatpush1.bf16.msra.mxu0 %v5424
  %5618 = vmatprep.subr.bf16.mxu0 %v5427
  %5619 = vmatpush1.bf16.msra.mxu0 %v5426
  %5620 = vmatprep.subr.bf16.mxu0 %v5429
  %5621 = vmatpush1.bf16.msra.mxu0 %v5428
  %5622 = vmatprep.subr.bf16.mxu0 %v5431
  %5623 = vmatpush1.bf16.msra.mxu0 %v5430
  %5624 = vmatprep.mubr.bf16.mxu0 %v5529
  %5625 = vmatmul.mubr.bf16.gmra.mrb[0].mxu0 %v5528
  %v5626 = vpop.f32.mrb[0].mxu0
  %v5627 = vadd.f32 0.0, %v5626
  %v5628 = vpop.f32.mrb[0].mxu0
  %v5629 = vadd.f32 0.0, %v5628
  %v5630 = vpop.f32.mrb[0].mxu0
  %v5631 = vadd.f32 0.0, %v5630
  %v5632 = vpop.f32.mrb[0].mxu0
  %v5633 = vadd.f32 0.0, %v5632
  %5634 = vmatprep.mubr.bf16.mxu0 %v5531
  %5635 = vmatmul.mubr.bf16.gmra.mrb[0].mxu0 %v5530
  %v5636 = vpop.f32.mrb[0].mxu0
  %v5637 = vadd.f32 0.0, %v5636
  %v5638 = vpop.f32.mrb[0].mxu0
  %v5639 = vadd.f32 0.0, %v5638
  %v5640 = vpop.f32.mrb[0].mxu0
  %v5641 = vadd.f32 0.0, %v5640
  %v5642 = vpop.f32.mrb[0].mxu0
  %v5643 = vadd.f32 0.0, %v5642
  %5644 = vmatprep.mubr.bf16.mxu0 %v5533
  %5645 = vmatmul.mubr.bf16.gmra.mrb[0].mxu0 %v5532
  %v5646 = vpop.f32.mrb[0].mxu0
  %v5647 = vadd.f32 0.0, %v5646
  %v5648 = vpop.f32.mrb[0].mxu0
  %v5649 = vadd.f32 0.0, %v5648
  %v5650 = vpop.f32.mrb[0].mxu0
  %v5651 = vadd.f32 0.0, %v5650
  %v5652 = vpop.f32.mrb[0].mxu0
  %v5653 = vadd.f32 0.0, %v5652
  %5654 = vmatprep.mubr.bf16.mxu0 %v5535
  %5655 = vmatmul.mubr.bf16.gmra.mrb[0].mxu0 %v5534
  %v5656 = vpop.f32.mrb[0].mxu0
  %v5657 = vadd.f32 0.0, %v5656
  %v5658 = vpop.f32.mrb[0].mxu0
  %v5659 = vadd.f32 0.0, %v5658
  %v5660 = vpop.f32.mrb[0].mxu0
  %v5661 = vadd.f32 0.0, %v5660
  %v5662 = vpop.f32.mrb[0].mxu0
  %v5663 = vadd.f32 0.0, %v5662
  %5664 = vmatprep.mubr.bf16.mxu0 %v5537
  %5665 = vmatmul.mubr.bf16.gmra.mrb[0].mxu0 %v5536
  %v5666 = vpop.f32.mrb[0].mxu0
  %v5667 = vadd.f32 0.0, %v5666
  %v5668 = vpop.f32.mrb[0].mxu0
  %v5669 = vadd.f32 0.0, %v5668
  %v5670 = vpop.f32.mrb[0].mxu0
  %v5671 = vadd.f32 0.0, %v5670
  %v5672 = vpop.f32.mrb[0].mxu0
  %v5673 = vadd.f32 0.0, %v5672
  %5674 = vmatprep.mubr.bf16.mxu0 %v5539
  %5675 = vmatmul.mubr.bf16.gmra.mrb[0].mxu0 %v5538
  %v5676 = vpop.f32.mrb[0].mxu0
  %v5677 = vadd.f32 0.0, %v5676
  %v5678 = vpop.f32.mrb[0].mxu0
  %v5679 = vadd.f32 0.0, %v5678
  %v5680 = vpop.f32.mrb[0].mxu0
  %v5681 = vadd.f32 0.0, %v5680
  %v5682 = vpop.f32.mrb[0].mxu0
  %v5683 = vadd.f32 0.0, %v5682
  %5684 = vmatprep.mubr.bf16.mxu0 %v5541
  %5685 = vmatmul.mubr.bf16.gmra.mrb[0].mxu0 %v5540
  %v5686 = vpop.f32.mrb[0].mxu0
  %v5687 = vadd.f32 0.0, %v5686
  %v5688 = vpop.f32.mrb[0].mxu0
  %v5689 = vadd.f32 0.0, %v5688
  %v5690 = vpop.f32.mrb[0].mxu0
  %v5691 = vadd.f32 0.0, %v5690
  %v5692 = vpop.f32.mrb[0].mxu0
  %v5693 = vadd.f32 0.0, %v5692
  %5694 = vmatprep.mubr.bf16.mxu0 %v5543
  %5695 = vmatmul.mubr.bf16.gmra.mrb[0].mxu0 %v5542
  %v5696 = vpop.f32.mrb[0].mxu0
  %v5697 = vadd.f32 0.0, %v5696
  %v5698 = vpop.f32.mrb[0].mxu0
  %v5699 = vadd.f32 0.0, %v5698
  %v5700 = vpop.f32.mrb[0].mxu0
  %v5701 = vadd.f32 0.0, %v5700
  %v5702 = vpop.f32.mrb[0].mxu0
  %v5703 = vadd.f32 0.0, %v5702
  %5704 = vmatprep.mubr.bf16.mxu0 %v5545
  %5705 = vmatmul.mubr.bf16.gmra.mrb[0].mxu0 %v5544
  %v5706 = vpop.f32.mrb[0].mxu0
  %v5707 = vadd.f32 0.0, %v5706
  %v5708 = vpop.f32.mrb[0].mxu0
  %v5709 = vadd.f32 0.0, %v5708
  %v5710 = vpop.f32.mrb[0].mxu0
  %v5711 = vadd.f32 0.0, %v5710
  %v5712 = vpop.f32.mrb[0].mxu0
  %v5713 = vadd.f32 0.0, %v5712
  %5714 = vmatprep.mubr.bf16.mxu0 %v5547
  %5715 = vmatmul.mubr.bf16.gmra.mrb[0].mxu0 %v5546
  %v5716 = vpop.f32.mrb[0].mxu0
  %v5717 = vadd.f32 0.0, %v5716
  %v5718 = vpop.f32.mrb[0].mxu0
  %v5719 = vadd.f32 0.0, %v5718
  %v5720 = vpop.f32.mrb[0].mxu0
  %v5721 = vadd.f32 0.0, %v5720
  %v5722 = vpop.f32.mrb[0].mxu0
  %v5723 = vadd.f32 0.0, %v5722
  %5724 = vmatprep.mubr.bf16.mxu0 %v5549
  %5725 = vmatmul.mubr.bf16.gmra.mrb[0].mxu0 %v5548
  %v5726 = vpop.f32.mrb[0].mxu0
  %v5727 = vadd.f32 0.0, %v5726
  %v5728 = vpop.f32.mrb[0].mxu0
  %v5729 = vadd.f32 0.0, %v5728
  %v5730 = vpop.f32.mrb[0].mxu0
  %v5731 = vadd.f32 0.0, %v5730
  %v5732 = vpop.f32.mrb[0].mxu0
  %v5733 = vadd.f32 0.0, %v5732
  %5734 = vmatprep.mubr.bf16.mxu0 %v5551
  %5735 = vmatmul.mubr.bf16.gmra.mrb[0].mxu0 %v5550
  %v5736 = vpop.f32.mrb[0].mxu0
  %v5737 = vadd.f32 0.0, %v5736
  %v5738 = vpop.f32.mrb[0].mxu0
  %v5739 = vadd.f32 0.0, %v5738
  %v5740 = vpop.f32.mrb[0].mxu0
  %v5741 = vadd.f32 0.0, %v5740
  %v5742 = vpop.f32.mrb[0].mxu0
  %v5743 = vadd.f32 0.0, %v5742
  %5744 = vmatprep.mubr.bf16.mxu0 %v5553
  %5745 = vmatmul.mubr.bf16.gmra.mrb[0].mxu0 %v5552
  %v5746 = vpop.f32.mrb[0].mxu0
  %v5747 = vadd.f32 0.0, %v5746
  %v5748 = vpop.f32.mrb[0].mxu0
  %v5749 = vadd.f32 0.0, %v5748
  %v5750 = vpop.f32.mrb[0].mxu0
  %v5751 = vadd.f32 0.0, %v5750
  %v5752 = vpop.f32.mrb[0].mxu0
  %v5753 = vadd.f32 0.0, %v5752
  %5754 = vmatprep.mubr.bf16.mxu0 %v5555
  %5755 = vmatmul.mubr.bf16.gmra.mrb[0].mxu0 %v5554
  %v5756 = vpop.f32.mrb[0].mxu0
  %v5757 = vadd.f32 0.0, %v5756
  %v5758 = vpop.f32.mrb[0].mxu0
  %v5759 = vadd.f32 0.0, %v5758
  %v5760 = vpop.f32.mrb[0].mxu0
  %v5761 = vadd.f32 0.0, %v5760
  %v5762 = vpop.f32.mrb[0].mxu0
  %v5763 = vadd.f32 0.0, %v5762
  %5764 = vmatprep.mubr.bf16.mxu0 %v5557
  %5765 = vmatmul.mubr.bf16.gmra.mrb[0].mxu0 %v5556
  %v5766 = vpop.f32.mrb[0].mxu0
  %v5767 = vadd.f32 0.0, %v5766
  %v5768 = vpop.f32.mrb[0].mxu0
  %v5769 = vadd.f32 0.0, %v5768
  %v5770 = vpop.f32.mrb[0].mxu0
  %v5771 = vadd.f32 0.0, %v5770
  %v5772 = vpop.f32.mrb[0].mxu0
  %v5773 = vadd.f32 0.0, %v5772
  %5774 = vmatprep.mubr.bf16.mxu0 %v5559
  %5775 = vmatmul.mubr.bf16.gmra.mrb[0].mxu0 %v5558
  %v5776 = vpop.f32.mrb[0].mxu0
  %v5777 = vadd.f32 0.0, %v5776
  %v5778 = vpop.f32.mrb[0].mxu0
  %v5779 = vadd.f32 0.0, %v5778
  %v5780 = vpop.f32.mrb[0].mxu0
  %v5781 = vadd.f32 0.0, %v5780
  %v5782 = vpop.f32.mrb[0].mxu0
  %v5783 = vadd.f32 0.0, %v5782
  %5784 = vdwg.mxu0
  %v5785 = vadd.f32 %v5110, %v5627
  %v5786 = vadd.f32 %v5111, %v5629
  %v5787 = vadd.f32 %v5112, %v5631
  %v5788 = vadd.f32 %v5113, %v5633
  %v5789 = vadd.f32 %v5114, %v5637
  %v5790 = vadd.f32 %v5115, %v5639
  %v5791 = vadd.f32 %v5116, %v5641
  %v5792 = vadd.f32 %v5117, %v5643
  %v5793 = vadd.f32 %v5118, %v5647
  %v5794 = vadd.f32 %v5119, %v5649
  %v5795 = vadd.f32 %v5120, %v5651
  %v5796 = vadd.f32 %v5121, %v5653
  %v5797 = vadd.f32 %v5122, %v5657
  %v5798 = vadd.f32 %v5123, %v5659
  %v5799 = vadd.f32 %v5124, %v5661
  %v5800 = vadd.f32 %v5125, %v5663
  %v5801 = vadd.f32 %v5126, %v5667
  %v5802 = vadd.f32 %v5127, %v5669
  %v5803 = vadd.f32 %v5128, %v5671
  %v5804 = vadd.f32 %v5129, %v5673
  %v5805 = vadd.f32 %v5130, %v5677
  %v5806 = vadd.f32 %v5131, %v5679
  %v5807 = vadd.f32 %v5132, %v5681
  %v5808 = vadd.f32 %v5133, %v5683
  %v5809 = vadd.f32 %v5134, %v5687
  %v5810 = vadd.f32 %v5135, %v5689
  %v5811 = vadd.f32 %v5136, %v5691
  %v5812 = vadd.f32 %v5137, %v5693
  %v5813 = vadd.f32 %v5138, %v5697
  %v5814 = vadd.f32 %v5139, %v5699
  %v5815 = vadd.f32 %v5140, %v5701
  %v5816 = vadd.f32 %v5141, %v5703
  %v5817 = vadd.f32 %v5142, %v5707
  %v5818 = vadd.f32 %v5143, %v5709
  %v5819 = vadd.f32 %v5144, %v5711
  %v5820 = vadd.f32 %v5145, %v5713
  %v5821 = vadd.f32 %v5146, %v5717
  %v5822 = vadd.f32 %v5147, %v5719
  %v5823 = vadd.f32 %v5148, %v5721
  %v5824 = vadd.f32 %v5149, %v5723
  %v5825 = vadd.f32 %v5150, %v5727
  %v5826 = vadd.f32 %v5151, %v5729
  %v5827 = vadd.f32 %v5152, %v5731
  %v5828 = vadd.f32 %v5153, %v5733
  %v5829 = vadd.f32 %v5154, %v5737
  %v5830 = vadd.f32 %v5155, %v5739
  %v5831 = vadd.f32 %v5156, %v5741
  %v5832 = vadd.f32 %v5157, %v5743
  %v5833 = vadd.f32 %v5158, %v5747
  %v5834 = vadd.f32 %v5159, %v5749
  %v5835 = vadd.f32 %v5160, %v5751
  %v5836 = vadd.f32 %v5161, %v5753
  %v5837 = vadd.f32 %v5162, %v5757
  %v5838 = vadd.f32 %v5163, %v5759
  %v5839 = vadd.f32 %v5164, %v5761
  %v5840 = vadd.f32 %v5165, %v5763
  %v5841 = vadd.f32 %v5166, %v5767
  %v5842 = vadd.f32 %v5167, %v5769
  %v5843 = vadd.f32 %v5168, %v5771
  %v5844 = vadd.f32 %v5169, %v5773
  %v5845 = vadd.f32 %v5170, %v5777
  %v5846 = vadd.f32 %v5171, %v5779
  %v5847 = vadd.f32 %v5172, %v5781
  %v5848 = vadd.f32 %v5173, %v5783
  %v5850 = vlaneseq
  %v5851 = vshrl.u32 %v5850, 7
  %v5852 = vsub.s32 0, %v5851
  %v5853 = vrot.slane %v93, %v5852
  %v5854 = vlaneseq
  %v5855 = vshrl.u32 %v5854, 7
  %v5856 = vsub.s32 1, %v5855
  %v5857 = vrot.slane %v93, %v5856
  %v5860 = vmul.f32 %v5785, %v5853
  %v5861 = vmul.f32 %v5786, %v5857
  %v5862 = vmul.f32 %v5787, %v5853
  %v5863 = vmul.f32 %v5788, %v5857
  %v5864 = vmul.f32 %v5789, %v5853
  %v5865 = vmul.f32 %v5790, %v5857
  %v5866 = vmul.f32 %v5791, %v5853
  %v5867 = vmul.f32 %v5792, %v5857
  %v5868 = vmul.f32 %v5793, %v5853
  %v5869 = vmul.f32 %v5794, %v5857
  %v5870 = vmul.f32 %v5795, %v5853
  %v5871 = vmul.f32 %v5796, %v5857
  %v5872 = vmul.f32 %v5797, %v5853
  %v5873 = vmul.f32 %v5798, %v5857
  %v5874 = vmul.f32 %v5799, %v5853
  %v5875 = vmul.f32 %v5800, %v5857
  %v5876 = vmul.f32 %v5801, %v5853
  %v5877 = vmul.f32 %v5802, %v5857
  %v5878 = vmul.f32 %v5803, %v5853
  %v5879 = vmul.f32 %v5804, %v5857
  %v5880 = vmul.f32 %v5805, %v5853
  %v5881 = vmul.f32 %v5806, %v5857
  %v5882 = vmul.f32 %v5807, %v5853
  %v5883 = vmul.f32 %v5808, %v5857
  %v5884 = vmul.f32 %v5809, %v5853
  %v5885 = vmul.f32 %v5810, %v5857
  %v5886 = vmul.f32 %v5811, %v5853
  %v5887 = vmul.f32 %v5812, %v5857
  %v5888 = vmul.f32 %v5813, %v5853
  %v5889 = vmul.f32 %v5814, %v5857
  %v5890 = vmul.f32 %v5815, %v5853
  %v5891 = vmul.f32 %v5816, %v5857
  %v5892 = vmul.f32 %v5817, %v5853
  %v5893 = vmul.f32 %v5818, %v5857
  %v5894 = vmul.f32 %v5819, %v5853
  %v5895 = vmul.f32 %v5820, %v5857
  %v5896 = vmul.f32 %v5821, %v5853
  %v5897 = vmul.f32 %v5822, %v5857
  %v5898 = vmul.f32 %v5823, %v5853
  %v5899 = vmul.f32 %v5824, %v5857
  %v5900 = vmul.f32 %v5825, %v5853
  %v5901 = vmul.f32 %v5826, %v5857
  %v5902 = vmul.f32 %v5827, %v5853
  %v5903 = vmul.f32 %v5828, %v5857
  %v5904 = vmul.f32 %v5829, %v5853
  %v5905 = vmul.f32 %v5830, %v5857
  %v5906 = vmul.f32 %v5831, %v5853
  %v5907 = vmul.f32 %v5832, %v5857
  %v5908 = vmul.f32 %v5833, %v5853
  %v5909 = vmul.f32 %v5834, %v5857
  %v5910 = vmul.f32 %v5835, %v5853
  %v5911 = vmul.f32 %v5836, %v5857
  %v5912 = vmul.f32 %v5837, %v5853
  %v5913 = vmul.f32 %v5838, %v5857
  %v5914 = vmul.f32 %v5839, %v5853
  %v5915 = vmul.f32 %v5840, %v5857
  %v5916 = vmul.f32 %v5841, %v5853
  %v5917 = vmul.f32 %v5842, %v5857
  %v5918 = vmul.f32 %v5843, %v5853
  %v5919 = vmul.f32 %v5844, %v5857
  %v5920 = vmul.f32 %v5845, %v5853
  %v5921 = vmul.f32 %v5846, %v5857
  %v5922 = vmul.f32 %v5847, %v5853
  %v5923 = vmul.f32 %v5848, %v5857
  %v5924 = vadd.f32 %v5860, %v5861
  %5925 = vadd.xlane.f32.xlu0 %v5924
  %v5926 = vpop.xlane.xlu0 %5925
  %v5927 = vadd.f32 %v5862, %v5863
  %5928 = vadd.xlane.f32.xlu0 %v5927
  %v5929 = vpop.xlane.xlu0 %5928
  %v5930 = vadd.f32 %v5864, %v5865
  %5931 = vadd.xlane.f32.xlu0 %v5930
  %v5932 = vpop.xlane.xlu0 %5931
  %v5933 = vadd.f32 %v5866, %v5867
  %5934 = vadd.xlane.f32.xlu0 %v5933
  %v5935 = vpop.xlane.xlu0 %5934
  %v5936 = vadd.f32 %v5868, %v5869
  %5937 = vadd.xlane.f32.xlu0 %v5936
  %v5938 = vpop.xlane.xlu0 %5937
  %v5939 = vadd.f32 %v5870, %v5871
  %5940 = vadd.xlane.f32.xlu0 %v5939
  %v5941 = vpop.xlane.xlu0 %5940
  %v5942 = vadd.f32 %v5872, %v5873
  %5943 = vadd.xlane.f32.xlu0 %v5942
  %v5944 = vpop.xlane.xlu0 %5943
  %v5945 = vadd.f32 %v5874, %v5875
  %5946 = vadd.xlane.f32.xlu0 %v5945
  %v5947 = vpop.xlane.xlu0 %5946
  %v5948 = vadd.f32 %v5876, %v5877
  %5949 = vadd.xlane.f32.xlu0 %v5948
  %v5950 = vpop.xlane.xlu0 %5949
  %v5951 = vadd.f32 %v5878, %v5879
  %5952 = vadd.xlane.f32.xlu0 %v5951
  %v5953 = vpop.xlane.xlu0 %5952
  %v5954 = vadd.f32 %v5880, %v5881
  %5955 = vadd.xlane.f32.xlu0 %v5954
  %v5956 = vpop.xlane.xlu0 %5955
  %v5957 = vadd.f32 %v5882, %v5883
  %5958 = vadd.xlane.f32.xlu0 %v5957
  %v5959 = vpop.xlane.xlu0 %5958
  %v5960 = vadd.f32 %v5884, %v5885
  %5961 = vadd.xlane.f32.xlu0 %v5960
  %v5962 = vpop.xlane.xlu0 %5961
  %v5963 = vadd.f32 %v5886, %v5887
  %5964 = vadd.xlane.f32.xlu0 %v5963
  %v5965 = vpop.xlane.xlu0 %5964
  %v5966 = vadd.f32 %v5888, %v5889
  %5967 = vadd.xlane.f32.xlu0 %v5966
  %v5968 = vpop.xlane.xlu0 %5967
  %v5969 = vadd.f32 %v5890, %v5891
  %5970 = vadd.xlane.f32.xlu0 %v5969
  %v5971 = vpop.xlane.xlu0 %5970
  %v5972 = vadd.f32 %v5892, %v5893
  %5973 = vadd.xlane.f32.xlu0 %v5972
  %v5974 = vpop.xlane.xlu0 %5973
  %v5975 = vadd.f32 %v5894, %v5895
  %5976 = vadd.xlane.f32.xlu0 %v5975
  %v5977 = vpop.xlane.xlu0 %5976
  %v5978 = vadd.f32 %v5896, %v5897
  %5979 = vadd.xlane.f32.xlu0 %v5978
  %v5980 = vpop.xlane.xlu0 %5979
  %v5981 = vadd.f32 %v5898, %v5899
  %5982 = vadd.xlane.f32.xlu0 %v5981
  %v5983 = vpop.xlane.xlu0 %5982
  %v5984 = vadd.f32 %v5900, %v5901
  %5985 = vadd.xlane.f32.xlu0 %v5984
  %v5986 = vpop.xlane.xlu0 %5985
  %v5987 = vadd.f32 %v5902, %v5903
  %5988 = vadd.xlane.f32.xlu0 %v5987
  %v5989 = vpop.xlane.xlu0 %5988
  %v5990 = vadd.f32 %v5904, %v5905
  %5991 = vadd.xlane.f32.xlu0 %v5990
  %v5992 = vpop.xlane.xlu0 %5991
  %v5993 = vadd.f32 %v5906, %v5907
  %5994 = vadd.xlane.f32.xlu0 %v5993
  %v5995 = vpop.xlane.xlu0 %5994
  %v5996 = vadd.f32 %v5908, %v5909
  %5997 = vadd.xlane.f32.xlu0 %v5996
  %v5998 = vpop.xlane.xlu0 %5997
  %v5999 = vadd.f32 %v5910, %v5911
  %6000 = vadd.xlane.f32.xlu0 %v5999
  %v6001 = vpop.xlane.xlu0 %6000
  %v6002 = vadd.f32 %v5912, %v5913
  %6003 = vadd.xlane.f32.xlu0 %v6002
  %v6004 = vpop.xlane.xlu0 %6003
  %v6005 = vadd.f32 %v5914, %v5915
  %6006 = vadd.xlane.f32.xlu0 %v6005
  %v6007 = vpop.xlane.xlu0 %6006
  %v6008 = vadd.f32 %v5916, %v5917
  %6009 = vadd.xlane.f32.xlu0 %v6008
  %v6010 = vpop.xlane.xlu0 %6009
  %v6011 = vadd.f32 %v5918, %v5919
  %6012 = vadd.xlane.f32.xlu0 %v6011
  %v6013 = vpop.xlane.xlu0 %6012
  %v6014 = vadd.f32 %v5920, %v5921
  %6015 = vadd.xlane.f32.xlu0 %v6014
  %v6016 = vpop.xlane.xlu0 %6015
  %v6017 = vadd.f32 %v5922, %v5923
  %6018 = vadd.xlane.f32.xlu0 %v6017
  %v6019 = vpop.xlane.xlu0 %6018
  %v6020 = vmul.f32 %v5926, 0.0051020407
  %v6021 = vmul.f32 %v5929, 0.0051020407
  %v6022 = vmul.f32 %v5932, 0.0051020407
  %v6023 = vmul.f32 %v5935, 0.0051020407
  %v6024 = vmul.f32 %v5938, 0.0051020407
  %v6025 = vmul.f32 %v5941, 0.0051020407
  %v6026 = vmul.f32 %v5944, 0.0051020407
  %v6027 = vmul.f32 %v5947, 0.0051020407
  %v6028 = vmul.f32 %v5950, 0.0051020407
  %v6029 = vmul.f32 %v5953, 0.0051020407
  %v6030 = vmul.f32 %v5956, 0.0051020407
  %v6031 = vmul.f32 %v5959, 0.0051020407
  %v6032 = vmul.f32 %v5962, 0.0051020407
  %v6033 = vmul.f32 %v5965, 0.0051020407
  %v6034 = vmul.f32 %v5968, 0.0051020407
  %v6035 = vmul.f32 %v5971, 0.0051020407
  %v6036 = vmul.f32 %v5974, 0.0051020407
  %v6037 = vmul.f32 %v5977, 0.0051020407
  %v6038 = vmul.f32 %v5980, 0.0051020407
  %v6039 = vmul.f32 %v5983, 0.0051020407
  %v6040 = vmul.f32 %v5986, 0.0051020407
  %v6041 = vmul.f32 %v5989, 0.0051020407
  %v6042 = vmul.f32 %v5992, 0.0051020407
  %v6043 = vmul.f32 %v5995, 0.0051020407
  %v6044 = vmul.f32 %v5998, 0.0051020407
  %v6045 = vmul.f32 %v6001, 0.0051020407
  %v6046 = vmul.f32 %v6004, 0.0051020407
  %v6047 = vmul.f32 %v6007, 0.0051020407
  %v6048 = vmul.f32 %v6010, 0.0051020407
  %v6049 = vmul.f32 %v6013, 0.0051020407
  %v6050 = vmul.f32 %v6016, 0.0051020407
  %v6051 = vmul.f32 %v6019, 0.0051020407
  %v6052 = vmul.f32 %v5860, %v5785
  %v6053 = vmul.f32 %v5861, %v5786
  %v6054 = vmul.f32 %v5862, %v5787
  %v6055 = vmul.f32 %v5863, %v5788
  %v6056 = vmul.f32 %v5864, %v5789
  %v6057 = vmul.f32 %v5865, %v5790
  %v6058 = vmul.f32 %v5866, %v5791
  %v6059 = vmul.f32 %v5867, %v5792
  %v6060 = vmul.f32 %v5868, %v5793
  %v6061 = vmul.f32 %v5869, %v5794
  %v6062 = vmul.f32 %v5870, %v5795
  %v6063 = vmul.f32 %v5871, %v5796
  %v6064 = vmul.f32 %v5872, %v5797
  %v6065 = vmul.f32 %v5873, %v5798
  %v6066 = vmul.f32 %v5874, %v5799
  %v6067 = vmul.f32 %v5875, %v5800
  %v6068 = vmul.f32 %v5876, %v5801
  %v6069 = vmul.f32 %v5877, %v5802
  %v6070 = vmul.f32 %v5878, %v5803
  %v6071 = vmul.f32 %v5879, %v5804
  %v6072 = vmul.f32 %v5880, %v5805
  %v6073 = vmul.f32 %v5881, %v5806
  %v6074 = vmul.f32 %v5882, %v5807
  %v6075 = vmul.f32 %v5883, %v5808
  %v6076 = vmul.f32 %v5884, %v5809
  %v6077 = vmul.f32 %v5885, %v5810
  %v6078 = vmul.f32 %v5886, %v5811
  %v6079 = vmul.f32 %v5887, %v5812
  %v6080 = vmul.f32 %v5888, %v5813
  %v6081 = vmul.f32 %v5889, %v5814
  %v6082 = vmul.f32 %v5890, %v5815
  %v6083 = vmul.f32 %v5891, %v5816
  %v6084 = vmul.f32 %v5892, %v5817
  %v6085 = vmul.f32 %v5893, %v5818
  %v6086 = vmul.f32 %v5894, %v5819
  %v6087 = vmul.f32 %v5895, %v5820
  %v6088 = vmul.f32 %v5896, %v5821
  %v6089 = vmul.f32 %v5897, %v5822
  %v6090 = vmul.f32 %v5898, %v5823
  %v6091 = vmul.f32 %v5899, %v5824
  %v6092 = vmul.f32 %v5900, %v5825
  %v6093 = vmul.f32 %v5901, %v5826
  %v6094 = vmul.f32 %v5902, %v5827
  %v6095 = vmul.f32 %v5903, %v5828
  %v6096 = vmul.f32 %v5904, %v5829
  %v6097 = vmul.f32 %v5905, %v5830
  %v6098 = vmul.f32 %v5906, %v5831
  %v6099 = vmul.f32 %v5907, %v5832
  %v6100 = vmul.f32 %v5908, %v5833
  %v6101 = vmul.f32 %v5909, %v5834
  %v6102 = vmul.f32 %v5910, %v5835
  %v6103 = vmul.f32 %v5911, %v5836
  %v6104 = vmul.f32 %v5912, %v5837
  %v6105 = vmul.f32 %v5913, %v5838
  %v6106 = vmul.f32 %v5914, %v5839
  %v6107 = vmul.f32 %v5915, %v5840
  %v6108 = vmul.f32 %v5916, %v5841
  %v6109 = vmul.f32 %v5917, %v5842
  %v6110 = vmul.f32 %v5918, %v5843
  %v6111 = vmul.f32 %v5919, %v5844
  %v6112 = vmul.f32 %v5920, %v5845
  %v6113 = vmul.f32 %v5921, %v5846
  %v6114 = vmul.f32 %v5922, %v5847
  %v6115 = vmul.f32 %v5923, %v5848
  %v6116 = vadd.f32 %v6052, %v6053
  %6117 = vadd.xlane.f32.xlu0 %v6116
  %v6118 = vpop.xlane.xlu0 %6117
  %v6119 = vadd.f32 %v6054, %v6055
  %6120 = vadd.xlane.f32.xlu0 %v6119
  %v6121 = vpop.xlane.xlu0 %6120
  %v6122 = vadd.f32 %v6056, %v6057
  %6123 = vadd.xlane.f32.xlu0 %v6122
  %v6124 = vpop.xlane.xlu0 %6123
  %v6125 = vadd.f32 %v6058, %v6059
  %6126 = vadd.xlane.f32.xlu0 %v6125
  %v6127 = vpop.xlane.xlu0 %6126
  %v6128 = vadd.f32 %v6060, %v6061
  %6129 = vadd.xlane.f32.xlu0 %v6128
  %v6130 = vpop.xlane.xlu0 %6129
  %v6131 = vadd.f32 %v6062, %v6063
  %6132 = vadd.xlane.f32.xlu0 %v6131
  %v6133 = vpop.xlane.xlu0 %6132
  %v6134 = vadd.f32 %v6064, %v6065
  %6135 = vadd.xlane.f32.xlu0 %v6134
  %v6136 = vpop.xlane.xlu0 %6135
  %v6137 = vadd.f32 %v6066, %v6067
  %6138 = vadd.xlane.f32.xlu0 %v6137
  %v6139 = vpop.xlane.xlu0 %6138
  %v6140 = vadd.f32 %v6068, %v6069
  %6141 = vadd.xlane.f32.xlu0 %v6140
  %v6142 = vpop.xlane.xlu0 %6141
  %v6143 = vadd.f32 %v6070, %v6071
  %6144 = vadd.xlane.f32.xlu0 %v6143
  %v6145 = vpop.xlane.xlu0 %6144
  %v6146 = vadd.f32 %v6072, %v6073
  %6147 = vadd.xlane.f32.xlu0 %v6146
  %v6148 = vpop.xlane.xlu0 %6147
  %v6149 = vadd.f32 %v6074, %v6075
  %6150 = vadd.xlane.f32.xlu0 %v6149
  %v6151 = vpop.xlane.xlu0 %6150
  %v6152 = vadd.f32 %v6076, %v6077
  %6153 = vadd.xlane.f32.xlu0 %v6152
  %v6154 = vpop.xlane.xlu0 %6153
  %v6155 = vadd.f32 %v6078, %v6079
  %6156 = vadd.xlane.f32.xlu0 %v6155
  %v6157 = vpop.xlane.xlu0 %6156
  %v6158 = vadd.f32 %v6080, %v6081
  %6159 = vadd.xlane.f32.xlu0 %v6158
  %v6160 = vpop.xlane.xlu0 %6159
  %v6161 = vadd.f32 %v6082, %v6083
  %6162 = vadd.xlane.f32.xlu0 %v6161
  %v6163 = vpop.xlane.xlu0 %6162
  %v6164 = vadd.f32 %v6084, %v6085
  %6165 = vadd.xlane.f32.xlu0 %v6164
  %v6166 = vpop.xlane.xlu0 %6165
  %v6167 = vadd.f32 %v6086, %v6087
  %6168 = vadd.xlane.f32.xlu0 %v6167
  %v6169 = vpop.xlane.xlu0 %6168
  %v6170 = vadd.f32 %v6088, %v6089
  %6171 = vadd.xlane.f32.xlu0 %v6170
  %v6172 = vpop.xlane.xlu0 %6171
  %v6173 = vadd.f32 %v6090, %v6091
  %6174 = vadd.xlane.f32.xlu0 %v6173
  %v6175 = vpop.xlane.xlu0 %6174
  %v6176 = vadd.f32 %v6092, %v6093
  %6177 = vadd.xlane.f32.xlu0 %v6176
  %v6178 = vpop.xlane.xlu0 %6177
  %v6179 = vadd.f32 %v6094, %v6095
  %6180 = vadd.xlane.f32.xlu0 %v6179
  %v6181 = vpop.xlane.xlu0 %6180
  %v6182 = vadd.f32 %v6096, %v6097
  %6183 = vadd.xlane.f32.xlu0 %v6182
  %v6184 = vpop.xlane.xlu0 %6183
  %v6185 = vadd.f32 %v6098, %v6099
  %6186 = vadd.xlane.f32.xlu0 %v6185
  %v6187 = vpop.xlane.xlu0 %6186
  %v6188 = vadd.f32 %v6100, %v6101
  %6189 = vadd.xlane.f32.xlu0 %v6188
  %v6190 = vpop.xlane.xlu0 %6189
  %v6191 = vadd.f32 %v6102, %v6103
  %6192 = vadd.xlane.f32.xlu0 %v6191
  %v6193 = vpop.xlane.xlu0 %6192
  %v6194 = vadd.f32 %v6104, %v6105
  %6195 = vadd.xlane.f32.xlu0 %v6194
  %v6196 = vpop.xlane.xlu0 %6195
  %v6197 = vadd.f32 %v6106, %v6107
  %6198 = vadd.xlane.f32.xlu0 %v6197
  %v6199 = vpop.xlane.xlu0 %6198
  %v6200 = vadd.f32 %v6108, %v6109
  %6201 = vadd.xlane.f32.xlu0 %v6200
  %v6202 = vpop.xlane.xlu0 %6201
  %v6203 = vadd.f32 %v6110, %v6111
  %6204 = vadd.xlane.f32.xlu0 %v6203
  %v6205 = vpop.xlane.xlu0 %6204
  %v6206 = vadd.f32 %v6112, %v6113
  %6207 = vadd.xlane.f32.xlu0 %v6206
  %v6208 = vpop.xlane.xlu0 %6207
  %v6209 = vadd.f32 %v6114, %v6115
  %6210 = vadd.xlane.f32.xlu0 %v6209
  %v6211 = vpop.xlane.xlu0 %6210
  %v6212 = vmul.f32 %v6118, 0.0051020407
  %v6213 = vmul.f32 %v6121, 0.0051020407
  %v6214 = vmul.f32 %v6124, 0.0051020407
  %v6215 = vmul.f32 %v6127, 0.0051020407
  %v6216 = vmul.f32 %v6130, 0.0051020407
  %v6217 = vmul.f32 %v6133, 0.0051020407
  %v6218 = vmul.f32 %v6136, 0.0051020407
  %v6219 = vmul.f32 %v6139, 0.0051020407
  %v6220 = vmul.f32 %v6142, 0.0051020407
  %v6221 = vmul.f32 %v6145, 0.0051020407
  %v6222 = vmul.f32 %v6148, 0.0051020407
  %v6223 = vmul.f32 %v6151, 0.0051020407
  %v6224 = vmul.f32 %v6154, 0.0051020407
  %v6225 = vmul.f32 %v6157, 0.0051020407
  %v6226 = vmul.f32 %v6160, 0.0051020407
  %v6227 = vmul.f32 %v6163, 0.0051020407
  %v6228 = vmul.f32 %v6166, 0.0051020407
  %v6229 = vmul.f32 %v6169, 0.0051020407
  %v6230 = vmul.f32 %v6172, 0.0051020407
  %v6231 = vmul.f32 %v6175, 0.0051020407
  %v6232 = vmul.f32 %v6178, 0.0051020407
  %v6233 = vmul.f32 %v6181, 0.0051020407
  %v6234 = vmul.f32 %v6184, 0.0051020407
  %v6235 = vmul.f32 %v6187, 0.0051020407
  %v6236 = vmul.f32 %v6190, 0.0051020407
  %v6237 = vmul.f32 %v6193, 0.0051020407
  %v6238 = vmul.f32 %v6196, 0.0051020407
  %v6239 = vmul.f32 %v6199, 0.0051020407
  %v6240 = vmul.f32 %v6202, 0.0051020407
  %v6241 = vmul.f32 %v6205, 0.0051020407
  %v6242 = vmul.f32 %v6208, 0.0051020407
  %v6243 = vmul.f32 %v6211, 0.0051020407
  %v6244 = vmul.f32 %v6020, %v6020
  %v6245 = vmul.f32 %v6021, %v6021
  %v6246 = vmul.f32 %v6022, %v6022
  %v6247 = vmul.f32 %v6023, %v6023
  %v6248 = vmul.f32 %v6024, %v6024
  %v6249 = vmul.f32 %v6025, %v6025
  %v6250 = vmul.f32 %v6026, %v6026
  %v6251 = vmul.f32 %v6027, %v6027
  %v6252 = vmul.f32 %v6028, %v6028
  %v6253 = vmul.f32 %v6029, %v6029
  %v6254 = vmul.f32 %v6030, %v6030
  %v6255 = vmul.f32 %v6031, %v6031
  %v6256 = vmul.f32 %v6032, %v6032
  %v6257 = vmul.f32 %v6033, %v6033
  %v6258 = vmul.f32 %v6034, %v6034
  %v6259 = vmul.f32 %v6035, %v6035
  %v6260 = vmul.f32 %v6036, %v6036
  %v6261 = vmul.f32 %v6037, %v6037
  %v6262 = vmul.f32 %v6038, %v6038
  %v6263 = vmul.f32 %v6039, %v6039
  %v6264 = vmul.f32 %v6040, %v6040
  %v6265 = vmul.f32 %v6041, %v6041
  %v6266 = vmul.f32 %v6042, %v6042
  %v6267 = vmul.f32 %v6043, %v6043
  %v6268 = vmul.f32 %v6044, %v6044
  %v6269 = vmul.f32 %v6045, %v6045
  %v6270 = vmul.f32 %v6046, %v6046
  %v6271 = vmul.f32 %v6047, %v6047
  %v6272 = vmul.f32 %v6048, %v6048
  %v6273 = vmul.f32 %v6049, %v6049
  %v6274 = vmul.f32 %v6050, %v6050
  %v6275 = vmul.f32 %v6051, %v6051
  %v6276 = vsub.f32 %v6212, %v6244
  %v6277 = vsub.f32 %v6213, %v6245
  %v6278 = vsub.f32 %v6214, %v6246
  %v6279 = vsub.f32 %v6215, %v6247
  %v6280 = vsub.f32 %v6216, %v6248
  %v6281 = vsub.f32 %v6217, %v6249
  %v6282 = vsub.f32 %v6218, %v6250
  %v6283 = vsub.f32 %v6219, %v6251
  %v6284 = vsub.f32 %v6220, %v6252
  %v6285 = vsub.f32 %v6221, %v6253
  %v6286 = vsub.f32 %v6222, %v6254
  %v6287 = vsub.f32 %v6223, %v6255
  %v6288 = vsub.f32 %v6224, %v6256
  %v6289 = vsub.f32 %v6225, %v6257
  %v6290 = vsub.f32 %v6226, %v6258
  %v6291 = vsub.f32 %v6227, %v6259
  %v6292 = vsub.f32 %v6228, %v6260
  %v6293 = vsub.f32 %v6229, %v6261
  %v6294 = vsub.f32 %v6230, %v6262
  %v6295 = vsub.f32 %v6231, %v6263
  %v6296 = vsub.f32 %v6232, %v6264
  %v6297 = vsub.f32 %v6233, %v6265
  %v6298 = vsub.f32 %v6234, %v6266
  %v6299 = vsub.f32 %v6235, %v6267
  %v6300 = vsub.f32 %v6236, %v6268
  %v6301 = vsub.f32 %v6237, %v6269
  %v6302 = vsub.f32 %v6238, %v6270
  %v6303 = vsub.f32 %v6239, %v6271
  %v6304 = vsub.f32 %v6240, %v6272
  %v6305 = vsub.f32 %v6241, %v6273
  %v6306 = vsub.f32 %v6242, %v6274
  %v6307 = vsub.f32 %v6243, %v6275
  %v6308 = vmax.f32 %v6276, 0.0
  %v6309 = vmax.f32 %v6277, 0.0
  %v6310 = vmax.f32 %v6278, 0.0
  %v6311 = vmax.f32 %v6279, 0.0
  %v6312 = vmax.f32 %v6280, 0.0
  %v6313 = vmax.f32 %v6281, 0.0
  %v6314 = vmax.f32 %v6282, 0.0
  %v6315 = vmax.f32 %v6283, 0.0
  %v6316 = vmax.f32 %v6284, 0.0
  %v6317 = vmax.f32 %v6285, 0.0
  %v6318 = vmax.f32 %v6286, 0.0
  %v6319 = vmax.f32 %v6287, 0.0
  %v6320 = vmax.f32 %v6288, 0.0
  %v6321 = vmax.f32 %v6289, 0.0
  %v6322 = vmax.f32 %v6290, 0.0
  %v6323 = vmax.f32 %v6291, 0.0
  %v6324 = vmax.f32 %v6292, 0.0
  %v6325 = vmax.f32 %v6293, 0.0
  %v6326 = vmax.f32 %v6294, 0.0
  %v6327 = vmax.f32 %v6295, 0.0
  %v6328 = vmax.f32 %v6296, 0.0
  %v6329 = vmax.f32 %v6297, 0.0
  %v6330 = vmax.f32 %v6298, 0.0
  %v6331 = vmax.f32 %v6299, 0.0
  %v6332 = vmax.f32 %v6300, 0.0
  %v6333 = vmax.f32 %v6301, 0.0
  %v6334 = vmax.f32 %v6302, 0.0
  %v6335 = vmax.f32 %v6303, 0.0
  %v6336 = vmax.f32 %v6304, 0.0
  %v6337 = vmax.f32 %v6305, 0.0
  %v6338 = vmax.f32 %v6306, 0.0
  %v6339 = vmax.f32 %v6307, 0.0
  %v6340 = vld [vmem:[%s3] sm:$0xff]
  %v6341 = vld [vmem:[%s3 + $0x8] sm:$0xff]
  %v6342 = vld [vmem:[%s3 + $0x10] sm:$0xff]
  %v6343 = vld [vmem:[%s3 + $0x18] sm:$0xff]
  %v6344 = vld [vmem:[%s3 + $0x20] sm:$0xff]
  %v6345 = vld [vmem:[%s3 + $0x28] sm:$0xff]
  %v6346 = vld [vmem:[%s3 + $0x30] sm:$0xff]
  %v6347 = vld [vmem:[%s3 + $0x38] sm:$0xff]
  %v6348 = vld [vmem:[%s3 + $0x40] sm:$0xff]
  %v6349 = vld [vmem:[%s3 + $0x48] sm:$0xff]
  %v6350 = vld [vmem:[%s3 + $0x50] sm:$0xff]
  %v6351 = vld [vmem:[%s3 + $0x58] sm:$0xff]
  %v6352 = vld [vmem:[%s3 + $0x60] sm:$0xff]
  %v6353 = vld [vmem:[%s3 + $0x68] sm:$0xff]
  %v6354 = vld [vmem:[%s3 + $0x70] sm:$0xff]
  %v6355 = vld [vmem:[%s3 + $0x78] sm:$0xff]
  %v6356 = vld [vmem:[%s3 + $0x80] sm:$0xff]
  %v6357 = vld [vmem:[%s3 + $0x88] sm:$0xff]
  %v6358 = vld [vmem:[%s3 + $0x90] sm:$0xff]
  %v6359 = vld [vmem:[%s3 + $0x98] sm:$0xff]
  %v6360 = vld [vmem:[%s3 + $0xa0] sm:$0xff]
  %v6361 = vld [vmem:[%s3 + $0xa8] sm:$0xff]
  %v6362 = vld [vmem:[%s3 + $0xb0] sm:$0xff]
  %v6363 = vld [vmem:[%s3 + $0xb8] sm:$0xff]
  %v6364 = vld [vmem:[%s3 + $0xc0] sm:$0xff]
  %v6365 = vld [vmem:[%s3 + $0xc8] sm:$0xff]
  %v6366 = vld [vmem:[%s3 + $0xd0] sm:$0xff]
  %v6367 = vld [vmem:[%s3 + $0xd8] sm:$0xff]
  %v6368 = vld [vmem:[%s3 + $0xe0] sm:$0xff]
  %v6369 = vld [vmem:[%s3 + $0xe8] sm:$0xff]
  %v6370 = vld [vmem:[%s3 + $0xf0] sm:$0xff]
  %v6371 = vld [vmem:[%s3 + $0xf8] sm:$0xff]
  %v6372 = vadd.f32 %v6308, 1e-05
  %v6373 = vadd.f32 %v6309, 1e-05
  %v6374 = vadd.f32 %v6310, 1e-05
  %v6375 = vadd.f32 %v6311, 1e-05
  %v6376 = vadd.f32 %v6312, 1e-05
  %v6377 = vadd.f32 %v6313, 1e-05
  %v6378 = vadd.f32 %v6314, 1e-05
  %v6379 = vadd.f32 %v6315, 1e-05
  %v6380 = vadd.f32 %v6316, 1e-05
  %v6381 = vadd.f32 %v6317, 1e-05
  %v6382 = vadd.f32 %v6318, 1e-05
  %v6383 = vadd.f32 %v6319, 1e-05
  %v6384 = vadd.f32 %v6320, 1e-05
  %v6385 = vadd.f32 %v6321, 1e-05
  %v6386 = vadd.f32 %v6322, 1e-05
  %v6387 = vadd.f32 %v6323, 1e-05
  %v6388 = vadd.f32 %v6324, 1e-05
  %v6389 = vadd.f32 %v6325, 1e-05
  %v6390 = vadd.f32 %v6326, 1e-05
  %v6391 = vadd.f32 %v6327, 1e-05
  %v6392 = vadd.f32 %v6328, 1e-05
  %v6393 = vadd.f32 %v6329, 1e-05
  %v6394 = vadd.f32 %v6330, 1e-05
  %v6395 = vadd.f32 %v6331, 1e-05
  %v6396 = vadd.f32 %v6332, 1e-05
  %v6397 = vadd.f32 %v6333, 1e-05
  %v6398 = vadd.f32 %v6334, 1e-05
  %v6399 = vadd.f32 %v6335, 1e-05
  %v6400 = vadd.f32 %v6336, 1e-05
  %v6401 = vadd.f32 %v6337, 1e-05
  %v6402 = vadd.f32 %v6338, 1e-05
  %v6403 = vadd.f32 %v6339, 1e-05
  %v6404 = vrsqrt.pop %v6372
  %v6405 = vrsqrt.pop %v6373
  %v6406 = vrsqrt.pop %v6374
  %v6407 = vrsqrt.pop %v6375
  %v6408 = vrsqrt.pop %v6376
  %v6409 = vrsqrt.pop %v6377
  %v6410 = vrsqrt.pop %v6378
  %v6411 = vrsqrt.pop %v6379
  %v6412 = vrsqrt.pop %v6380
  %v6413 = vrsqrt.pop %v6381
  %v6414 = vrsqrt.pop %v6382
  %v6415 = vrsqrt.pop %v6383
  %v6416 = vrsqrt.pop %v6384
  %v6417 = vrsqrt.pop %v6385
  %v6418 = vrsqrt.pop %v6386
  %v6419 = vrsqrt.pop %v6387
  %v6420 = vrsqrt.pop %v6388
  %v6421 = vrsqrt.pop %v6389
  %v6422 = vrsqrt.pop %v6390
  %v6423 = vrsqrt.pop %v6391
  %v6424 = vrsqrt.pop %v6392
  %v6425 = vrsqrt.pop %v6393
  %v6426 = vrsqrt.pop %v6394
  %v6427 = vrsqrt.pop %v6395
  %v6428 = vrsqrt.pop %v6396
  %v6429 = vrsqrt.pop %v6397
  %v6430 = vrsqrt.pop %v6398
  %v6431 = vrsqrt.pop %v6399
  %v6432 = vrsqrt.pop %v6400
  %v6433 = vrsqrt.pop %v6401
  %v6434 = vrsqrt.pop %v6402
  %v6435 = vrsqrt.pop %v6403
  %v6436 = vmul.f32 %v6340, %v6404
  %v6437 = vmul.f32 %v6341, %v6405
  %v6438 = vmul.f32 %v6342, %v6406
  %v6439 = vmul.f32 %v6343, %v6407
  %v6440 = vmul.f32 %v6344, %v6408
  %v6441 = vmul.f32 %v6345, %v6409
  %v6442 = vmul.f32 %v6346, %v6410
  %v6443 = vmul.f32 %v6347, %v6411
  %v6444 = vmul.f32 %v6348, %v6412
  %v6445 = vmul.f32 %v6349, %v6413
  %v6446 = vmul.f32 %v6350, %v6414
  %v6447 = vmul.f32 %v6351, %v6415
  %v6448 = vmul.f32 %v6352, %v6416
  %v6449 = vmul.f32 %v6353, %v6417
  %v6450 = vmul.f32 %v6354, %v6418
  %v6451 = vmul.f32 %v6355, %v6419
  %v6452 = vmul.f32 %v6356, %v6420
  %v6453 = vmul.f32 %v6357, %v6421
  %v6454 = vmul.f32 %v6358, %v6422
  %v6455 = vmul.f32 %v6359, %v6423
  %v6456 = vmul.f32 %v6360, %v6424
  %v6457 = vmul.f32 %v6361, %v6425
  %v6458 = vmul.f32 %v6362, %v6426
  %v6459 = vmul.f32 %v6363, %v6427
  %v6460 = vmul.f32 %v6364, %v6428
  %v6461 = vmul.f32 %v6365, %v6429
  %v6462 = vmul.f32 %v6366, %v6430
  %v6463 = vmul.f32 %v6367, %v6431
  %v6464 = vmul.f32 %v6368, %v6432
  %v6465 = vmul.f32 %v6369, %v6433
  %v6466 = vmul.f32 %v6370, %v6434
  %v6467 = vmul.f32 %v6371, %v6435
  %v6468 = vld [vmem:[%s4] sm:$0xff]
  %v6469 = vld [vmem:[%s4 + $0x8] sm:$0xff]
  %v6470 = vld [vmem:[%s4 + $0x10] sm:$0xff]
  %v6471 = vld [vmem:[%s4 + $0x18] sm:$0xff]
  %v6472 = vld [vmem:[%s4 + $0x20] sm:$0xff]
  %v6473 = vld [vmem:[%s4 + $0x28] sm:$0xff]
  %v6474 = vld [vmem:[%s4 + $0x30] sm:$0xff]
  %v6475 = vld [vmem:[%s4 + $0x38] sm:$0xff]
  %v6476 = vld [vmem:[%s4 + $0x40] sm:$0xff]
  %v6477 = vld [vmem:[%s4 + $0x48] sm:$0xff]
  %v6478 = vld [vmem:[%s4 + $0x50] sm:$0xff]
  %v6479 = vld [vmem:[%s4 + $0x58] sm:$0xff]
  %v6480 = vld [vmem:[%s4 + $0x60] sm:$0xff]
  %v6481 = vld [vmem:[%s4 + $0x68] sm:$0xff]
  %v6482 = vld [vmem:[%s4 + $0x70] sm:$0xff]
  %v6483 = vld [vmem:[%s4 + $0x78] sm:$0xff]
  %v6484 = vld [vmem:[%s4 + $0x80] sm:$0xff]
  %v6485 = vld [vmem:[%s4 + $0x88] sm:$0xff]
  %v6486 = vld [vmem:[%s4 + $0x90] sm:$0xff]
  %v6487 = vld [vmem:[%s4 + $0x98] sm:$0xff]
  %v6488 = vld [vmem:[%s4 + $0xa0] sm:$0xff]
  %v6489 = vld [vmem:[%s4 + $0xa8] sm:$0xff]
  %v6490 = vld [vmem:[%s4 + $0xb0] sm:$0xff]
  %v6491 = vld [vmem:[%s4 + $0xb8] sm:$0xff]
  %v6492 = vld [vmem:[%s4 + $0xc0] sm:$0xff]
  %v6493 = vld [vmem:[%s4 + $0xc8] sm:$0xff]
  %v6494 = vld [vmem:[%s4 + $0xd0] sm:$0xff]
  %v6495 = vld [vmem:[%s4 + $0xd8] sm:$0xff]
  %v6496 = vld [vmem:[%s4 + $0xe0] sm:$0xff]
  %v6497 = vld [vmem:[%s4 + $0xe8] sm:$0xff]
  %v6498 = vld [vmem:[%s4 + $0xf0] sm:$0xff]
  %v6499 = vld [vmem:[%s4 + $0xf8] sm:$0xff]
  %v6500 = vmul.f32 %v6020, %v6436
  %v6501 = vmul.f32 %v6021, %v6437
  %v6502 = vmul.f32 %v6022, %v6438
  %v6503 = vmul.f32 %v6023, %v6439
  %v6504 = vmul.f32 %v6024, %v6440
  %v6505 = vmul.f32 %v6025, %v6441
  %v6506 = vmul.f32 %v6026, %v6442
  %v6507 = vmul.f32 %v6027, %v6443
  %v6508 = vmul.f32 %v6028, %v6444
  %v6509 = vmul.f32 %v6029, %v6445
  %v6510 = vmul.f32 %v6030, %v6446
  %v6511 = vmul.f32 %v6031, %v6447
  %v6512 = vmul.f32 %v6032, %v6448
  %v6513 = vmul.f32 %v6033, %v6449
  %v6514 = vmul.f32 %v6034, %v6450
  %v6515 = vmul.f32 %v6035, %v6451
  %v6516 = vmul.f32 %v6036, %v6452
  %v6517 = vmul.f32 %v6037, %v6453
  %v6518 = vmul.f32 %v6038, %v6454
  %v6519 = vmul.f32 %v6039, %v6455
  %v6520 = vmul.f32 %v6040, %v6456
  %v6521 = vmul.f32 %v6041, %v6457
  %v6522 = vmul.f32 %v6042, %v6458
  %v6523 = vmul.f32 %v6043, %v6459
  %v6524 = vmul.f32 %v6044, %v6460
  %v6525 = vmul.f32 %v6045, %v6461
  %v6526 = vmul.f32 %v6046, %v6462
  %v6527 = vmul.f32 %v6047, %v6463
  %v6528 = vmul.f32 %v6048, %v6464
  %v6529 = vmul.f32 %v6049, %v6465
  %v6530 = vmul.f32 %v6050, %v6466
  %v6531 = vmul.f32 %v6051, %v6467
  %v6532 = vsub.f32 %v6468, %v6500
  %v6533 = vsub.f32 %v6469, %v6501
  %v6534 = vsub.f32 %v6470, %v6502
  %v6535 = vsub.f32 %v6471, %v6503
  %v6536 = vsub.f32 %v6472, %v6504
  %v6537 = vsub.f32 %v6473, %v6505
  %v6538 = vsub.f32 %v6474, %v6506
  %v6539 = vsub.f32 %v6475, %v6507
  %v6540 = vsub.f32 %v6476, %v6508
  %v6541 = vsub.f32 %v6477, %v6509
  %v6542 = vsub.f32 %v6478, %v6510
  %v6543 = vsub.f32 %v6479, %v6511
  %v6544 = vsub.f32 %v6480, %v6512
  %v6545 = vsub.f32 %v6481, %v6513
  %v6546 = vsub.f32 %v6482, %v6514
  %v6547 = vsub.f32 %v6483, %v6515
  %v6548 = vsub.f32 %v6484, %v6516
  %v6549 = vsub.f32 %v6485, %v6517
  %v6550 = vsub.f32 %v6486, %v6518
  %v6551 = vsub.f32 %v6487, %v6519
  %v6552 = vsub.f32 %v6488, %v6520
  %v6553 = vsub.f32 %v6489, %v6521
  %v6554 = vsub.f32 %v6490, %v6522
  %v6555 = vsub.f32 %v6491, %v6523
  %v6556 = vsub.f32 %v6492, %v6524
  %v6557 = vsub.f32 %v6493, %v6525
  %v6558 = vsub.f32 %v6494, %v6526
  %v6559 = vsub.f32 %v6495, %v6527
  %v6560 = vsub.f32 %v6496, %v6528
  %v6561 = vsub.f32 %v6497, %v6529
  %v6562 = vsub.f32 %v6498, %v6530
  %v6563 = vsub.f32 %v6499, %v6531
  %6565 = vset.pattern.permute.xlu0 0
  %6566 = vperm.xlu0 %6565, %v6436
  %v6567 = vpop.permute.xlu0 %6566
  %6570 = vset.pattern.permute.xlu0 0
  %6571 = vperm.xlu0 %6570, %v6437
  %v6572 = vpop.permute.xlu0 %6571
  %6575 = vset.pattern.permute.xlu0 0
  %6576 = vperm.xlu0 %6575, %v6438
  %v6577 = vpop.permute.xlu0 %6576
  %6580 = vset.pattern.permute.xlu0 0
  %6581 = vperm.xlu0 %6580, %v6439
  %v6582 = vpop.permute.xlu0 %6581
  %6585 = vset.pattern.permute.xlu0 0
  %6586 = vperm.xlu0 %6585, %v6440
  %v6587 = vpop.permute.xlu0 %6586
  %6590 = vset.pattern.permute.xlu0 0
  %6591 = vperm.xlu0 %6590, %v6441
  %v6592 = vpop.permute.xlu0 %6591
  %6595 = vset.pattern.permute.xlu0 0
  %6596 = vperm.xlu0 %6595, %v6442
  %v6597 = vpop.permute.xlu0 %6596
  %6600 = vset.pattern.permute.xlu0 0
  %6601 = vperm.xlu0 %6600, %v6443
  %v6602 = vpop.permute.xlu0 %6601
  %6605 = vset.pattern.permute.xlu0 0
  %6606 = vperm.xlu0 %6605, %v6444
  %v6607 = vpop.permute.xlu0 %6606
  %6610 = vset.pattern.permute.xlu0 0
  %6611 = vperm.xlu0 %6610, %v6445
  %v6612 = vpop.permute.xlu0 %6611
  %6615 = vset.pattern.permute.xlu0 0
  %6616 = vperm.xlu0 %6615, %v6446
  %v6617 = vpop.permute.xlu0 %6616
  %6620 = vset.pattern.permute.xlu0 0
  %6621 = vperm.xlu0 %6620, %v6447
  %v6622 = vpop.permute.xlu0 %6621
  %6625 = vset.pattern.permute.xlu0 0
  %6626 = vperm.xlu0 %6625, %v6448
  %v6627 = vpop.permute.xlu0 %6626
  %6630 = vset.pattern.permute.xlu0 0
  %6631 = vperm.xlu0 %6630, %v6449
  %v6632 = vpop.permute.xlu0 %6631
  %6635 = vset.pattern.permute.xlu0 0
  %6636 = vperm.xlu0 %6635, %v6450
  %v6637 = vpop.permute.xlu0 %6636
  %6640 = vset.pattern.permute.xlu0 0
  %6641 = vperm.xlu0 %6640, %v6451
  %v6642 = vpop.permute.xlu0 %6641
  %6645 = vset.pattern.permute.xlu0 0
  %6646 = vperm.xlu0 %6645, %v6452
  %v6647 = vpop.permute.xlu0 %6646
  %6650 = vset.pattern.permute.xlu0 0
  %6651 = vperm.xlu0 %6650, %v6453
  %v6652 = vpop.permute.xlu0 %6651
  %6655 = vset.pattern.permute.xlu0 0
  %6656 = vperm.xlu0 %6655, %v6454
  %v6657 = vpop.permute.xlu0 %6656
  %6660 = vset.pattern.permute.xlu0 0
  %6661 = vperm.xlu0 %6660, %v6455
  %v6662 = vpop.permute.xlu0 %6661
  %6665 = vset.pattern.permute.xlu0 0
  %6666 = vperm.xlu0 %6665, %v6456
  %v6667 = vpop.permute.xlu0 %6666
  %6670 = vset.pattern.permute.xlu0 0
  %6671 = vperm.xlu0 %6670, %v6457
  %v6672 = vpop.permute.xlu0 %6671
  %6675 = vset.pattern.permute.xlu0 0
  %6676 = vperm.xlu0 %6675, %v6458
  %v6677 = vpop.permute.xlu0 %6676
  %6680 = vset.pattern.permute.xlu0 0
  %6681 = vperm.xlu0 %6680, %v6459
  %v6682 = vpop.permute.xlu0 %6681
  %6685 = vset.pattern.permute.xlu0 0
  %6686 = vperm.xlu0 %6685, %v6460
  %v6687 = vpop.permute.xlu0 %6686
  %6690 = vset.pattern.permute.xlu0 0
  %6691 = vperm.xlu0 %6690, %v6461
  %v6692 = vpop.permute.xlu0 %6691
  %6695 = vset.pattern.permute.xlu0 0
  %6696 = vperm.xlu0 %6695, %v6462
  %v6697 = vpop.permute.xlu0 %6696
  %6700 = vset.pattern.permute.xlu0 0
  %6701 = vperm.xlu0 %6700, %v6463
  %v6702 = vpop.permute.xlu0 %6701
  %6705 = vset.pattern.permute.xlu0 0
  %6706 = vperm.xlu0 %6705, %v6464
  %v6707 = vpop.permute.xlu0 %6706
  %6710 = vset.pattern.permute.xlu0 0
  %6711 = vperm.xlu0 %6710, %v6465
  %v6712 = vpop.permute.xlu0 %6711
  %6715 = vset.pattern.permute.xlu0 0
  %6716 = vperm.xlu0 %6715, %v6466
  %v6717 = vpop.permute.xlu0 %6716
  %6720 = vset.pattern.permute.xlu0 0
  %6721 = vperm.xlu0 %6720, %v6467
  %v6722 = vpop.permute.xlu0 %6721
  %v6724 = vmul.f32 %v5785, %v6567
  %v6725 = vmul.f32 %v5786, %v6567
  %v6726 = vmul.f32 %v5787, %v6572
  %v6727 = vmul.f32 %v5788, %v6572
  %v6728 = vmul.f32 %v5789, %v6577
  %v6729 = vmul.f32 %v5790, %v6577
  %v6730 = vmul.f32 %v5791, %v6582
  %v6731 = vmul.f32 %v5792, %v6582
  %v6732 = vmul.f32 %v5793, %v6587
  %v6733 = vmul.f32 %v5794, %v6587
  %v6734 = vmul.f32 %v5795, %v6592
  %v6735 = vmul.f32 %v5796, %v6592
  %v6736 = vmul.f32 %v5797, %v6597
  %v6737 = vmul.f32 %v5798, %v6597
  %v6738 = vmul.f32 %v5799, %v6602
  %v6739 = vmul.f32 %v5800, %v6602
  %v6740 = vmul.f32 %v5801, %v6607
  %v6741 = vmul.f32 %v5802, %v6607
  %v6742 = vmul.f32 %v5803, %v6612
  %v6743 = vmul.f32 %v5804, %v6612
  %v6744 = vmul.f32 %v5805, %v6617
  %v6745 = vmul.f32 %v5806, %v6617
  %v6746 = vmul.f32 %v5807, %v6622
  %v6747 = vmul.f32 %v5808, %v6622
  %v6748 = vmul.f32 %v5809, %v6627
  %v6749 = vmul.f32 %v5810, %v6627
  %v6750 = vmul.f32 %v5811, %v6632
  %v6751 = vmul.f32 %v5812, %v6632
  %v6752 = vmul.f32 %v5813, %v6637
  %v6753 = vmul.f32 %v5814, %v6637
  %v6754 = vmul.f32 %v5815, %v6642
  %v6755 = vmul.f32 %v5816, %v6642
  %v6756 = vmul.f32 %v5817, %v6647
  %v6757 = vmul.f32 %v5818, %v6647
  %v6758 = vmul.f32 %v5819, %v6652
  %v6759 = vmul.f32 %v5820, %v6652
  %v6760 = vmul.f32 %v5821, %v6657
  %v6761 = vmul.f32 %v5822, %v6657
  %v6762 = vmul.f32 %v5823, %v6662
  %v6763 = vmul.f32 %v5824, %v6662
  %v6764 = vmul.f32 %v5825, %v6667
  %v6765 = vmul.f32 %v5826, %v6667
  %v6766 = vmul.f32 %v5827, %v6672
  %v6767 = vmul.f32 %v5828, %v6672
  %v6768 = vmul.f32 %v5829, %v6677
  %v6769 = vmul.f32 %v5830, %v6677
  %v6770 = vmul.f32 %v5831, %v6682
  %v6771 = vmul.f32 %v5832, %v6682
  %v6772 = vmul.f32 %v5833, %v6687
  %v6773 = vmul.f32 %v5834, %v6687
  %v6774 = vmul.f32 %v5835, %v6692
  %v6775 = vmul.f32 %v5836, %v6692
  %v6776 = vmul.f32 %v5837, %v6697
  %v6777 = vmul.f32 %v5838, %v6697
  %v6778 = vmul.f32 %v5839, %v6702
  %v6779 = vmul.f32 %v5840, %v6702
  %v6780 = vmul.f32 %v5841, %v6707
  %v6781 = vmul.f32 %v5842, %v6707
  %v6782 = vmul.f32 %v5843, %v6712
  %v6783 = vmul.f32 %v5844, %v6712
  %v6784 = vmul.f32 %v5845, %v6717
  %v6785 = vmul.f32 %v5846, %v6717
  %v6786 = vmul.f32 %v5847, %v6722
  %v6787 = vmul.f32 %v5848, %v6722
  %6789 = vset.pattern.permute.xlu0 0
  %6790 = vperm.xlu0 %6789, %v6532
  %v6791 = vpop.permute.xlu0 %6790
  %6794 = vset.pattern.permute.xlu0 0
  %6795 = vperm.xlu0 %6794, %v6533
  %v6796 = vpop.permute.xlu0 %6795
  %6799 = vset.pattern.permute.xlu0 0
  %6800 = vperm.xlu0 %6799, %v6534
  %v6801 = vpop.permute.xlu0 %6800
  %6804 = vset.pattern.permute.xlu0 0
  %6805 = vperm.xlu0 %6804, %v6535
  %v6806 = vpop.permute.xlu0 %6805
  %6809 = vset.pattern.permute.xlu0 0
  %6810 = vperm.xlu0 %6809, %v6536
  %v6811 = vpop.permute.xlu0 %6810
  %6814 = vset.pattern.permute.xlu0 0
  %6815 = vperm.xlu0 %6814, %v6537
  %v6816 = vpop.permute.xlu0 %6815
  %6819 = vset.pattern.permute.xlu0 0
  %6820 = vperm.xlu0 %6819, %v6538
  %v6821 = vpop.permute.xlu0 %6820
  %6824 = vset.pattern.permute.xlu0 0
  %6825 = vperm.xlu0 %6824, %v6539
  %v6826 = vpop.permute.xlu0 %6825
  %6829 = vset.pattern.permute.xlu0 0
  %6830 = vperm.xlu0 %6829, %v6540
  %v6831 = vpop.permute.xlu0 %6830
  %6834 = vset.pattern.permute.xlu0 0
  %6835 = vperm.xlu0 %6834, %v6541
  %v6836 = vpop.permute.xlu0 %6835
  %6839 = vset.pattern.permute.xlu0 0
  %6840 = vperm.xlu0 %6839, %v6542
  %v6841 = vpop.permute.xlu0 %6840
  %6844 = vset.pattern.permute.xlu0 0
  %6845 = vperm.xlu0 %6844, %v6543
  %v6846 = vpop.permute.xlu0 %6845
  %6849 = vset.pattern.permute.xlu0 0
  %6850 = vperm.xlu0 %6849, %v6544
  %v6851 = vpop.permute.xlu0 %6850
  %6854 = vset.pattern.permute.xlu0 0
  %6855 = vperm.xlu0 %6854, %v6545
  %v6856 = vpop.permute.xlu0 %6855
  %6859 = vset.pattern.permute.xlu0 0
  %6860 = vperm.xlu0 %6859, %v6546
  %v6861 = vpop.permute.xlu0 %6860
  %6864 = vset.pattern.permute.xlu0 0
  %6865 = vperm.xlu0 %6864, %v6547
  %v6866 = vpop.permute.xlu0 %6865
  %6869 = vset.pattern.permute.xlu0 0
  %6870 = vperm.xlu0 %6869, %v6548
  %v6871 = vpop.permute.xlu0 %6870
  %6874 = vset.pattern.permute.xlu0 0
  %6875 = vperm.xlu0 %6874, %v6549
  %v6876 = vpop.permute.xlu0 %6875
  %6879 = vset.pattern.permute.xlu0 0
  %6880 = vperm.xlu0 %6879, %v6550
  %v6881 = vpop.permute.xlu0 %6880
  %6884 = vset.pattern.permute.xlu0 0
  %6885 = vperm.xlu0 %6884, %v6551
  %v6886 = vpop.permute.xlu0 %6885
  %6889 = vset.pattern.permute.xlu0 0
  %6890 = vperm.xlu0 %6889, %v6552
  %v6891 = vpop.permute.xlu0 %6890
  %6894 = vset.pattern.permute.xlu0 0
  %6895 = vperm.xlu0 %6894, %v6553
  %v6896 = vpop.permute.xlu0 %6895
  %6899 = vset.pattern.permute.xlu0 0
  %6900 = vperm.xlu0 %6899, %v6554
  %v6901 = vpop.permute.xlu0 %6900
  %6904 = vset.pattern.permute.xlu0 0
  %6905 = vperm.xlu0 %6904, %v6555
  %v6906 = vpop.permute.xlu0 %6905
  %6909 = vset.pattern.permute.xlu0 0
  %6910 = vperm.xlu0 %6909, %v6556
  %v6911 = vpop.permute.xlu0 %6910
  %6914 = vset.pattern.permute.xlu0 0
  %6915 = vperm.xlu0 %6914, %v6557
  %v6916 = vpop.permute.xlu0 %6915
  %6919 = vset.pattern.permute.xlu0 0
  %6920 = vperm.xlu0 %6919, %v6558
  %v6921 = vpop.permute.xlu0 %6920
  %6924 = vset.pattern.permute.xlu0 0
  %6925 = vperm.xlu0 %6924, %v6559
  %v6926 = vpop.permute.xlu0 %6925
  %6929 = vset.pattern.permute.xlu0 0
  %6930 = vperm.xlu0 %6929, %v6560
  %v6931 = vpop.permute.xlu0 %6930
  %6934 = vset.pattern.permute.xlu0 0
  %6935 = vperm.xlu0 %6934, %v6561
  %v6936 = vpop.permute.xlu0 %6935
  %6939 = vset.pattern.permute.xlu0 0
  %6940 = vperm.xlu0 %6939, %v6562
  %v6941 = vpop.permute.xlu0 %6940
  %6944 = vset.pattern.permute.xlu0 0
  %6945 = vperm.xlu0 %6944, %v6563
  %v6946 = vpop.permute.xlu0 %6945
  %v6948 = vadd.f32 %v6724, %v6791
  %v6949 = vadd.f32 %v6725, %v6791
  %v6950 = vadd.f32 %v6726, %v6796
  %v6951 = vadd.f32 %v6727, %v6796
  %v6952 = vadd.f32 %v6728, %v6801
  %v6953 = vadd.f32 %v6729, %v6801
  %v6954 = vadd.f32 %v6730, %v6806
  %v6955 = vadd.f32 %v6731, %v6806
  %v6956 = vadd.f32 %v6732, %v6811
  %v6957 = vadd.f32 %v6733, %v6811
  %v6958 = vadd.f32 %v6734, %v6816
  %v6959 = vadd.f32 %v6735, %v6816
  %v6960 = vadd.f32 %v6736, %v6821
  %v6961 = vadd.f32 %v6737, %v6821
  %v6962 = vadd.f32 %v6738, %v6826
  %v6963 = vadd.f32 %v6739, %v6826
  %v6964 = vadd.f32 %v6740, %v6831
  %v6965 = vadd.f32 %v6741, %v6831
  %v6966 = vadd.f32 %v6742, %v6836
  %v6967 = vadd.f32 %v6743, %v6836
  %v6968 = vadd.f32 %v6744, %v6841
  %v6969 = vadd.f32 %v6745, %v6841
  %v6970 = vadd.f32 %v6746, %v6846
  %v6971 = vadd.f32 %v6747, %v6846
  %v6972 = vadd.f32 %v6748, %v6851
  %v6973 = vadd.f32 %v6749, %v6851
  %v6974 = vadd.f32 %v6750, %v6856
  %v6975 = vadd.f32 %v6751, %v6856
  %v6976 = vadd.f32 %v6752, %v6861
  %v6977 = vadd.f32 %v6753, %v6861
  %v6978 = vadd.f32 %v6754, %v6866
  %v6979 = vadd.f32 %v6755, %v6866
  %v6980 = vadd.f32 %v6756, %v6871
  %v6981 = vadd.f32 %v6757, %v6871
  %v6982 = vadd.f32 %v6758, %v6876
  %v6983 = vadd.f32 %v6759, %v6876
  %v6984 = vadd.f32 %v6760, %v6881
  %v6985 = vadd.f32 %v6761, %v6881
  %v6986 = vadd.f32 %v6762, %v6886
  %v6987 = vadd.f32 %v6763, %v6886
  %v6988 = vadd.f32 %v6764, %v6891
  %v6989 = vadd.f32 %v6765, %v6891
  %v6990 = vadd.f32 %v6766, %v6896
  %v6991 = vadd.f32 %v6767, %v6896
  %v6992 = vadd.f32 %v6768, %v6901
  %v6993 = vadd.f32 %v6769, %v6901
  %v6994 = vadd.f32 %v6770, %v6906
  %v6995 = vadd.f32 %v6771, %v6906
  %v6996 = vadd.f32 %v6772, %v6911
  %v6997 = vadd.f32 %v6773, %v6911
  %v6998 = vadd.f32 %v6774, %v6916
  %v6999 = vadd.f32 %v6775, %v6916
  %v7000 = vadd.f32 %v6776, %v6921
  %v7001 = vadd.f32 %v6777, %v6921
  %v7002 = vadd.f32 %v6778, %v6926
  %v7003 = vadd.f32 %v6779, %v6926
  %v7004 = vadd.f32 %v6780, %v6931
  %v7005 = vadd.f32 %v6781, %v6931
  %v7006 = vadd.f32 %v6782, %v6936
  %v7007 = vadd.f32 %v6783, %v6936
  %v7008 = vadd.f32 %v6784, %v6941
  %v7009 = vadd.f32 %v6785, %v6941
  %v7010 = vadd.f32 %v6786, %v6946
  %v7011 = vadd.f32 %v6787, %v6946
  %v7012 = vmax.f32 %v6948, 0.0
  %v7013 = vmax.f32 %v6949, 0.0
  %v7014 = vmax.f32 %v6950, 0.0
  %v7015 = vmax.f32 %v6951, 0.0
  %v7016 = vmax.f32 %v6952, 0.0
  %v7017 = vmax.f32 %v6953, 0.0
  %v7018 = vmax.f32 %v6954, 0.0
  %v7019 = vmax.f32 %v6955, 0.0
  %v7020 = vmax.f32 %v6956, 0.0
  %v7021 = vmax.f32 %v6957, 0.0
  %v7022 = vmax.f32 %v6958, 0.0
  %v7023 = vmax.f32 %v6959, 0.0
  %v7024 = vmax.f32 %v6960, 0.0
  %v7025 = vmax.f32 %v6961, 0.0
  %v7026 = vmax.f32 %v6962, 0.0
  %v7027 = vmax.f32 %v6963, 0.0
  %v7028 = vmax.f32 %v6964, 0.0
  %v7029 = vmax.f32 %v6965, 0.0
  %v7030 = vmax.f32 %v6966, 0.0
  %v7031 = vmax.f32 %v6967, 0.0
  %v7032 = vmax.f32 %v6968, 0.0
  %v7033 = vmax.f32 %v6969, 0.0
  %v7034 = vmax.f32 %v6970, 0.0
  %v7035 = vmax.f32 %v6971, 0.0
  %v7036 = vmax.f32 %v6972, 0.0
  %v7037 = vmax.f32 %v6973, 0.0
  %v7038 = vmax.f32 %v6974, 0.0
  %v7039 = vmax.f32 %v6975, 0.0
  %v7040 = vmax.f32 %v6976, 0.0
  %v7041 = vmax.f32 %v6977, 0.0
  %v7042 = vmax.f32 %v6978, 0.0
  %v7043 = vmax.f32 %v6979, 0.0
  %v7044 = vmax.f32 %v6980, 0.0
  %v7045 = vmax.f32 %v6981, 0.0
  %v7046 = vmax.f32 %v6982, 0.0
  %v7047 = vmax.f32 %v6983, 0.0
  %v7048 = vmax.f32 %v6984, 0.0
  %v7049 = vmax.f32 %v6985, 0.0
  %v7050 = vmax.f32 %v6986, 0.0
  %v7051 = vmax.f32 %v6987, 0.0
  %v7052 = vmax.f32 %v6988, 0.0
  %v7053 = vmax.f32 %v6989, 0.0
  %v7054 = vmax.f32 %v6990, 0.0
  %v7055 = vmax.f32 %v6991, 0.0
  %v7056 = vmax.f32 %v6992, 0.0
  %v7057 = vmax.f32 %v6993, 0.0
  %v7058 = vmax.f32 %v6994, 0.0
  %v7059 = vmax.f32 %v6995, 0.0
  %v7060 = vmax.f32 %v6996, 0.0
  %v7061 = vmax.f32 %v6997, 0.0
  %v7062 = vmax.f32 %v6998, 0.0
  %v7063 = vmax.f32 %v6999, 0.0
  %v7064 = vmax.f32 %v7000, 0.0
  %v7065 = vmax.f32 %v7001, 0.0
  %v7066 = vmax.f32 %v7002, 0.0
  %v7067 = vmax.f32 %v7003, 0.0
  %v7068 = vmax.f32 %v7004, 0.0
  %v7069 = vmax.f32 %v7005, 0.0
  %v7070 = vmax.f32 %v7006, 0.0
  %v7071 = vmax.f32 %v7007, 0.0
  %v7072 = vmax.f32 %v7008, 0.0
  %v7073 = vmax.f32 %v7009, 0.0
  %v7074 = vmax.f32 %v7010, 0.0
  %v7075 = vmax.f32 %v7011, 0.0
  %v7076 = vld [vmem:[%s5] sm:$0xff]
  %v7077 = vld [vmem:[%s5 + $0x8] sm:$0xff]
  %v7078 = vld [vmem:[%s5 + $0x10] sm:$0xff]
  %v7079 = vld [vmem:[%s5 + $0x18] sm:$0xff]
  %v7080 = vld [vmem:[%s5 + $0x20] sm:$0xff]
  %v7081 = vld [vmem:[%s5 + $0x28] sm:$0xff]
  %v7082 = vld [vmem:[%s5 + $0x30] sm:$0xff]
  %v7083 = vld [vmem:[%s5 + $0x38] sm:$0xff]
  %v7084 = vld [vmem:[%s5 + $0x40] sm:$0xff]
  %v7085 = vld [vmem:[%s5 + $0x48] sm:$0xff]
  %v7086 = vld [vmem:[%s5 + $0x50] sm:$0xff]
  %v7087 = vld [vmem:[%s5 + $0x58] sm:$0xff]
  %v7088 = vld [vmem:[%s5 + $0x60] sm:$0xff]
  %v7089 = vld [vmem:[%s5 + $0x68] sm:$0xff]
  %v7090 = vld [vmem:[%s5 + $0x70] sm:$0xff]
  %v7091 = vld [vmem:[%s5 + $0x78] sm:$0xff]
  %v7092 = vld [vmem:[%s5 + $0x80] sm:$0xff]
  %v7093 = vld [vmem:[%s5 + $0x88] sm:$0xff]
  %v7094 = vld [vmem:[%s5 + $0x90] sm:$0xff]
  %v7095 = vld [vmem:[%s5 + $0x98] sm:$0xff]
  %v7096 = vld [vmem:[%s5 + $0xa0] sm:$0xff]
  %v7097 = vld [vmem:[%s5 + $0xa8] sm:$0xff]
  %v7098 = vld [vmem:[%s5 + $0xb0] sm:$0xff]
  %v7099 = vld [vmem:[%s5 + $0xb8] sm:$0xff]
  %v7100 = vld [vmem:[%s5 + $0xc0] sm:$0xff]
  %v7101 = vld [vmem:[%s5 + $0xc8] sm:$0xff]
  %v7102 = vld [vmem:[%s5 + $0xd0] sm:$0xff]
  %v7103 = vld [vmem:[%s5 + $0xd8] sm:$0xff]
  %v7104 = vld [vmem:[%s5 + $0xe0] sm:$0xff]
  %v7105 = vld [vmem:[%s5 + $0xe8] sm:$0xff]
  %v7106 = vld [vmem:[%s5 + $0xf0] sm:$0xff]
  %v7107 = vld [vmem:[%s5 + $0xf8] sm:$0xff]
  %v7108 = vld [vmem:[%s5 + $0x100] sm:$0xff]
  %v7109 = vld [vmem:[%s5 + $0x108] sm:$0xff]
  %v7110 = vld [vmem:[%s5 + $0x110] sm:$0xff]
  %v7111 = vld [vmem:[%s5 + $0x118] sm:$0xff]
  %v7112 = vld [vmem:[%s5 + $0x120] sm:$0xff]
  %v7113 = vld [vmem:[%s5 + $0x128] sm:$0xff]
  %v7114 = vld [vmem:[%s5 + $0x130] sm:$0xff]
  %v7115 = vld [vmem:[%s5 + $0x138] sm:$0xff]
  %v7116 = vld [vmem:[%s5 + $0x140] sm:$0xff]
  %v7117 = vld [vmem:[%s5 + $0x148] sm:$0xff]
  %v7118 = vld [vmem:[%s5 + $0x150] sm:$0xff]
  %v7119 = vld [vmem:[%s5 + $0x158] sm:$0xff]
  %v7120 = vld [vmem:[%s5 + $0x160] sm:$0xff]
  %v7121 = vld [vmem:[%s5 + $0x168] sm:$0xff]
  %v7122 = vld [vmem:[%s5 + $0x170] sm:$0xff]
  %v7123 = vld [vmem:[%s5 + $0x178] sm:$0xff]
  %v7124 = vld [vmem:[%s5 + $0x180] sm:$0xff]
  %v7125 = vld [vmem:[%s5 + $0x188] sm:$0xff]
  %v7126 = vld [vmem:[%s5 + $0x190] sm:$0xff]
  %v7127 = vld [vmem:[%s5 + $0x198] sm:$0xff]
  %v7128 = vld [vmem:[%s5 + $0x1a0] sm:$0xff]
  %v7129 = vld [vmem:[%s5 + $0x1a8] sm:$0xff]
  %v7130 = vld [vmem:[%s5 + $0x1b0] sm:$0xff]
  %v7131 = vld [vmem:[%s5 + $0x1b8] sm:$0xff]
  %v7132 = vld [vmem:[%s5 + $0x1c0] sm:$0xff]
  %v7133 = vld [vmem:[%s5 + $0x1c8] sm:$0xff]
  %v7134 = vld [vmem:[%s5 + $0x1d0] sm:$0xff]
  %v7135 = vld [vmem:[%s5 + $0x1d8] sm:$0xff]
  %v7136 = vld [vmem:[%s5 + $0x1e0] sm:$0xff]
  %v7137 = vld [vmem:[%s5 + $0x1e8] sm:$0xff]
  %v7138 = vld [vmem:[%s5 + $0x1f0] sm:$0xff]
  %v7139 = vld [vmem:[%s5 + $0x1f8] sm:$0xff]
  %v7140 = vld [vmem:[%s5 + $0x200] sm:$0xff]
  %v7141 = vld [vmem:[%s5 + $0x208] sm:$0xff]
  %v7142 = vld [vmem:[%s5 + $0x210] sm:$0xff]
  %v7143 = vld [vmem:[%s5 + $0x218] sm:$0xff]
  %v7144 = vld [vmem:[%s5 + $0x220] sm:$0xff]
  %v7145 = vld [vmem:[%s5 + $0x228] sm:$0xff]
  %v7146 = vld [vmem:[%s5 + $0x230] sm:$0xff]
  %v7147 = vld [vmem:[%s5 + $0x238] sm:$0xff]
  %v7148 = vld [vmem:[%s5 + $0x240] sm:$0xff]
  %v7149 = vld [vmem:[%s5 + $0x248] sm:$0xff]
  %v7150 = vld [vmem:[%s5 + $0x250] sm:$0xff]
  %v7151 = vld [vmem:[%s5 + $0x258] sm:$0xff]
  %v7152 = vld [vmem:[%s5 + $0x260] sm:$0xff]
  %v7153 = vld [vmem:[%s5 + $0x268] sm:$0xff]
  %v7154 = vld [vmem:[%s5 + $0x270] sm:$0xff]
  %v7155 = vld [vmem:[%s5 + $0x278] sm:$0xff]
  %v7156 = vld [vmem:[%s5 + $0x280] sm:$0xff]
  %v7157 = vld [vmem:[%s5 + $0x288] sm:$0xff]
  %v7158 = vld [vmem:[%s5 + $0x290] sm:$0xff]
  %v7159 = vld [vmem:[%s5 + $0x298] sm:$0xff]
  %v7160 = vld [vmem:[%s5 + $0x2a0] sm:$0xff]
  %v7161 = vld [vmem:[%s5 + $0x2a8] sm:$0xff]
  %v7162 = vld [vmem:[%s5 + $0x2b0] sm:$0xff]
  %v7163 = vld [vmem:[%s5 + $0x2b8] sm:$0xff]
  %v7164 = vld [vmem:[%s5 + $0x2c0] sm:$0xff]
  %v7165 = vld [vmem:[%s5 + $0x2c8] sm:$0xff]
  %v7166 = vld [vmem:[%s5 + $0x2d0] sm:$0xff]
  %v7167 = vld [vmem:[%s5 + $0x2d8] sm:$0xff]
  %v7168 = vld [vmem:[%s5 + $0x2e0] sm:$0xff]
  %v7169 = vld [vmem:[%s5 + $0x2e8] sm:$0xff]
  %v7170 = vld [vmem:[%s5 + $0x2f0] sm:$0xff]
  %v7171 = vld [vmem:[%s5 + $0x2f8] sm:$0xff]
  %v7172 = vld [vmem:[%s5 + $0x300] sm:$0xff]
  %v7173 = vld [vmem:[%s5 + $0x308] sm:$0xff]
  %v7174 = vld [vmem:[%s5 + $0x310] sm:$0xff]
  %v7175 = vld [vmem:[%s5 + $0x318] sm:$0xff]
  %v7176 = vld [vmem:[%s5 + $0x320] sm:$0xff]
  %v7177 = vld [vmem:[%s5 + $0x328] sm:$0xff]
  %v7178 = vld [vmem:[%s5 + $0x330] sm:$0xff]
  %v7179 = vld [vmem:[%s5 + $0x338] sm:$0xff]
  %v7180 = vld [vmem:[%s5 + $0x340] sm:$0xff]
  %v7181 = vld [vmem:[%s5 + $0x348] sm:$0xff]
  %v7182 = vld [vmem:[%s5 + $0x350] sm:$0xff]
  %v7183 = vld [vmem:[%s5 + $0x358] sm:$0xff]
  %v7184 = vld [vmem:[%s5 + $0x360] sm:$0xff]
  %v7185 = vld [vmem:[%s5 + $0x368] sm:$0xff]
  %v7186 = vld [vmem:[%s5 + $0x370] sm:$0xff]
  %v7187 = vld [vmem:[%s5 + $0x378] sm:$0xff]
  %v7188 = vld [vmem:[%s5 + $0x380] sm:$0xff]
  %v7189 = vld [vmem:[%s5 + $0x388] sm:$0xff]
  %v7190 = vld [vmem:[%s5 + $0x390] sm:$0xff]
  %v7191 = vld [vmem:[%s5 + $0x398] sm:$0xff]
  %v7192 = vld [vmem:[%s5 + $0x3a0] sm:$0xff]
  %v7193 = vld [vmem:[%s5 + $0x3a8] sm:$0xff]
  %v7194 = vld [vmem:[%s5 + $0x3b0] sm:$0xff]
  %v7195 = vld [vmem:[%s5 + $0x3b8] sm:$0xff]
  %v7196 = vld [vmem:[%s5 + $0x3c0] sm:$0xff]
  %v7197 = vld [vmem:[%s5 + $0x3c8] sm:$0xff]
  %v7198 = vld [vmem:[%s5 + $0x3d0] sm:$0xff]
  %v7199 = vld [vmem:[%s5 + $0x3d8] sm:$0xff]
  %v7200 = vld [vmem:[%s5 + $0x3e0] sm:$0xff]
  %v7201 = vld [vmem:[%s5 + $0x3e8] sm:$0xff]
  %v7202 = vld [vmem:[%s5 + $0x3f0] sm:$0xff]
  %v7203 = vld [vmem:[%s5 + $0x3f8] sm:$0xff]
  %v7204 = vpack.c.bf16 %v7014, %v7012
  %v7205 = vpack.c.bf16 %v7015, %v7013
  %v7206 = vpack.c.bf16 %v7018, %v7016
  %v7207 = vpack.c.bf16 %v7019, %v7017
  %v7208 = vpack.c.bf16 %v7022, %v7020
  %v7209 = vpack.c.bf16 %v7023, %v7021
  %v7210 = vpack.c.bf16 %v7026, %v7024
  %v7211 = vpack.c.bf16 %v7027, %v7025
  %v7212 = vpack.c.bf16 %v7030, %v7028
  %v7213 = vpack.c.bf16 %v7031, %v7029
  %v7214 = vpack.c.bf16 %v7034, %v7032
  %v7215 = vpack.c.bf16 %v7035, %v7033
  %v7216 = vpack.c.bf16 %v7038, %v7036
  %v7217 = vpack.c.bf16 %v7039, %v7037
  %v7218 = vpack.c.bf16 %v7042, %v7040
  %v7219 = vpack.c.bf16 %v7043, %v7041
  %v7220 = vpack.c.bf16 %v7046, %v7044
  %v7221 = vpack.c.bf16 %v7047, %v7045
  %v7222 = vpack.c.bf16 %v7050, %v7048
  %v7223 = vpack.c.bf16 %v7051, %v7049
  %v7224 = vpack.c.bf16 %v7054, %v7052
  %v7225 = vpack.c.bf16 %v7055, %v7053
  %v7226 = vpack.c.bf16 %v7058, %v7056
  %v7227 = vpack.c.bf16 %v7059, %v7057
  %v7228 = vpack.c.bf16 %v7062, %v7060
  %v7229 = vpack.c.bf16 %v7063, %v7061
  %v7230 = vpack.c.bf16 %v7066, %v7064
  %v7231 = vpack.c.bf16 %v7067, %v7065
  %v7232 = vpack.c.bf16 %v7070, %v7068
  %v7233 = vpack.c.bf16 %v7071, %v7069
  %v7234 = vpack.c.bf16 %v7074, %v7072
  %v7235 = vpack.c.bf16 %v7075, %v7073
  %v7364 = vunpack.c.l.b16 %v7076
  %v7365 = vunpack.c.h.b16 %v7076
  %v7366 = vunpack.c.l.b16 %v7077
  %v7367 = vunpack.c.h.b16 %v7077
  %v7368 = vunpack.c.l.b16 %v7078
  %v7369 = vunpack.c.h.b16 %v7078
  %v7370 = vunpack.c.l.b16 %v7079
  %v7371 = vunpack.c.h.b16 %v7079
  %v7372 = vunpack.c.l.b16 %v7080
  %v7373 = vunpack.c.h.b16 %v7080
  %v7374 = vunpack.c.l.b16 %v7081
  %v7375 = vunpack.c.h.b16 %v7081
  %v7376 = vunpack.c.l.b16 %v7082
  %v7377 = vunpack.c.h.b16 %v7082
  %v7378 = vunpack.c.l.b16 %v7083
  %v7379 = vunpack.c.h.b16 %v7083
  %v7380 = vunpack.c.l.b16 %v7084
  %v7381 = vunpack.c.h.b16 %v7084
  %v7382 = vunpack.c.l.b16 %v7085
  %v7383 = vunpack.c.h.b16 %v7085
  %v7384 = vunpack.c.l.b16 %v7086
  %v7385 = vunpack.c.h.b16 %v7086
  %v7386 = vunpack.c.l.b16 %v7087
  %v7387 = vunpack.c.h.b16 %v7087
  %v7388 = vunpack.c.l.b16 %v7088
  %v7389 = vunpack.c.h.b16 %v7088
  %v7390 = vunpack.c.l.b16 %v7089
  %v7391 = vunpack.c.h.b16 %v7089
  %v7392 = vunpack.c.l.b16 %v7090
  %v7393 = vunpack.c.h.b16 %v7090
  %v7394 = vunpack.c.l.b16 %v7091
  %v7395 = vunpack.c.h.b16 %v7091
  %v7396 = vunpack.c.l.b16 %v7092
  %v7397 = vunpack.c.h.b16 %v7092
  %v7398 = vunpack.c.l.b16 %v7093
  %v7399 = vunpack.c.h.b16 %v7093
  %v7400 = vunpack.c.l.b16 %v7094
  %v7401 = vunpack.c.h.b16 %v7094
  %v7402 = vunpack.c.l.b16 %v7095
  %v7403 = vunpack.c.h.b16 %v7095
  %v7404 = vunpack.c.l.b16 %v7096
  %v7405 = vunpack.c.h.b16 %v7096
  %v7406 = vunpack.c.l.b16 %v7097
  %v7407 = vunpack.c.h.b16 %v7097
  %v7408 = vunpack.c.l.b16 %v7098
  %v7409 = vunpack.c.h.b16 %v7098
  %v7410 = vunpack.c.l.b16 %v7099
  %v7411 = vunpack.c.h.b16 %v7099
  %v7412 = vunpack.c.l.b16 %v7100
  %v7413 = vunpack.c.h.b16 %v7100
  %v7414 = vunpack.c.l.b16 %v7101
  %v7415 = vunpack.c.h.b16 %v7101
  %v7416 = vunpack.c.l.b16 %v7102
  %v7417 = vunpack.c.h.b16 %v7102
  %v7418 = vunpack.c.l.b16 %v7103
  %v7419 = vunpack.c.h.b16 %v7103
  %v7420 = vunpack.c.l.b16 %v7104
  %v7421 = vunpack.c.h.b16 %v7104
  %v7422 = vunpack.c.l.b16 %v7105
  %v7423 = vunpack.c.h.b16 %v7105
  %v7424 = vunpack.c.l.b16 %v7106
  %v7425 = vunpack.c.h.b16 %v7106
  %v7426 = vunpack.c.l.b16 %v7107
  %v7427 = vunpack.c.h.b16 %v7107
  %v7428 = vunpack.c.l.b16 %v7108
  %v7429 = vunpack.c.h.b16 %v7108
  %v7430 = vunpack.c.l.b16 %v7109
  %v7431 = vunpack.c.h.b16 %v7109
  %v7432 = vunpack.c.l.b16 %v7110
  %v7433 = vunpack.c.h.b16 %v7110
  %v7434 = vunpack.c.l.b16 %v7111
  %v7435 = vunpack.c.h.b16 %v7111
  %v7436 = vunpack.c.l.b16 %v7112
  %v7437 = vunpack.c.h.b16 %v7112
  %v7438 = vunpack.c.l.b16 %v7113
  %v7439 = vunpack.c.h.b16 %v7113
  %v7440 = vunpack.c.l.b16 %v7114
  %v7441 = vunpack.c.h.b16 %v7114
  %v7442 = vunpack.c.l.b16 %v7115
  %v7443 = vunpack.c.h.b16 %v7115
  %v7444 = vunpack.c.l.b16 %v7116
  %v7445 = vunpack.c.h.b16 %v7116
  %v7446 = vunpack.c.l.b16 %v7117
  %v7447 = vunpack.c.h.b16 %v7117
  %v7448 = vunpack.c.l.b16 %v7118
  %v7449 = vunpack.c.h.b16 %v7118
  %v7450 = vunpack.c.l.b16 %v7119
  %v7451 = vunpack.c.h.b16 %v7119
  %v7452 = vunpack.c.l.b16 %v7120
  %v7453 = vunpack.c.h.b16 %v7120
  %v7454 = vunpack.c.l.b16 %v7121
  %v7455 = vunpack.c.h.b16 %v7121
  %v7456 = vunpack.c.l.b16 %v7122
  %v7457 = vunpack.c.h.b16 %v7122
  %v7458 = vunpack.c.l.b16 %v7123
  %v7459 = vunpack.c.h.b16 %v7123
  %v7460 = vunpack.c.l.b16 %v7124
  %v7461 = vunpack.c.h.b16 %v7124
  %v7462 = vunpack.c.l.b16 %v7125
  %v7463 = vunpack.c.h.b16 %v7125
  %v7464 = vunpack.c.l.b16 %v7126
  %v7465 = vunpack.c.h.b16 %v7126
  %v7466 = vunpack.c.l.b16 %v7127
  %v7467 = vunpack.c.h.b16 %v7127
  %v7468 = vunpack.c.l.b16 %v7128
  %v7469 = vunpack.c.h.b16 %v7128
  %v7470 = vunpack.c.l.b16 %v7129
  %v7471 = vunpack.c.h.b16 %v7129
  %v7472 = vunpack.c.l.b16 %v7130
  %v7473 = vunpack.c.h.b16 %v7130
  %v7474 = vunpack.c.l.b16 %v7131
  %v7475 = vunpack.c.h.b16 %v7131
  %v7476 = vunpack.c.l.b16 %v7132
  %v7477 = vunpack.c.h.b16 %v7132
  %v7478 = vunpack.c.l.b16 %v7133
  %v7479 = vunpack.c.h.b16 %v7133
  %v7480 = vunpack.c.l.b16 %v7134
  %v7481 = vunpack.c.h.b16 %v7134
  %v7482 = vunpack.c.l.b16 %v7135
  %v7483 = vunpack.c.h.b16 %v7135
  %v7484 = vunpack.c.l.b16 %v7136
  %v7485 = vunpack.c.h.b16 %v7136
  %v7486 = vunpack.c.l.b16 %v7137
  %v7487 = vunpack.c.h.b16 %v7137
  %v7488 = vunpack.c.l.b16 %v7138
  %v7489 = vunpack.c.h.b16 %v7138
  %v7490 = vunpack.c.l.b16 %v7139
  %v7491 = vunpack.c.h.b16 %v7139
  %v7492 = vunpack.c.l.b16 %v7140
  %v7493 = vunpack.c.h.b16 %v7140
  %v7494 = vunpack.c.l.b16 %v7141
  %v7495 = vunpack.c.h.b16 %v7141
  %v7496 = vunpack.c.l.b16 %v7142
  %v7497 = vunpack.c.h.b16 %v7142
  %v7498 = vunpack.c.l.b16 %v7143
  %v7499 = vunpack.c.h.b16 %v7143
  %v7500 = vunpack.c.l.b16 %v7144
  %v7501 = vunpack.c.h.b16 %v7144
  %v7502 = vunpack.c.l.b16 %v7145
  %v7503 = vunpack.c.h.b16 %v7145
  %v7504 = vunpack.c.l.b16 %v7146
  %v7505 = vunpack.c.h.b16 %v7146
  %v7506 = vunpack.c.l.b16 %v7147
  %v7507 = vunpack.c.h.b16 %v7147
  %v7508 = vunpack.c.l.b16 %v7148
  %v7509 = vunpack.c.h.b16 %v7148
  %v7510 = vunpack.c.l.b16 %v7149
  %v7511 = vunpack.c.h.b16 %v7149
  %v7512 = vunpack.c.l.b16 %v7150
  %v7513 = vunpack.c.h.b16 %v7150
  %v7514 = vunpack.c.l.b16 %v7151
  %v7515 = vunpack.c.h.b16 %v7151
  %v7516 = vunpack.c.l.b16 %v7152
  %v7517 = vunpack.c.h.b16 %v7152
  %v7518 = vunpack.c.l.b16 %v7153
  %v7519 = vunpack.c.h.b16 %v7153
  %v7520 = vunpack.c.l.b16 %v7154
  %v7521 = vunpack.c.h.b16 %v7154
  %v7522 = vunpack.c.l.b16 %v7155
  %v7523 = vunpack.c.h.b16 %v7155
  %v7524 = vunpack.c.l.b16 %v7156
  %v7525 = vunpack.c.h.b16 %v7156
  %v7526 = vunpack.c.l.b16 %v7157
  %v7527 = vunpack.c.h.b16 %v7157
  %v7528 = vunpack.c.l.b16 %v7158
  %v7529 = vunpack.c.h.b16 %v7158
  %v7530 = vunpack.c.l.b16 %v7159
  %v7531 = vunpack.c.h.b16 %v7159
  %v7532 = vunpack.c.l.b16 %v7160
  %v7533 = vunpack.c.h.b16 %v7160
  %v7534 = vunpack.c.l.b16 %v7161
  %v7535 = vunpack.c.h.b16 %v7161
  %v7536 = vunpack.c.l.b16 %v7162
  %v7537 = vunpack.c.h.b16 %v7162
  %v7538 = vunpack.c.l.b16 %v7163
  %v7539 = vunpack.c.h.b16 %v7163
  %v7540 = vunpack.c.l.b16 %v7164
  %v7541 = vunpack.c.h.b16 %v7164
  %v7542 = vunpack.c.l.b16 %v7165
  %v7543 = vunpack.c.h.b16 %v7165
  %v7544 = vunpack.c.l.b16 %v7166
  %v7545 = vunpack.c.h.b16 %v7166
  %v7546 = vunpack.c.l.b16 %v7167
  %v7547 = vunpack.c.h.b16 %v7167
  %v7548 = vunpack.c.l.b16 %v7168
  %v7549 = vunpack.c.h.b16 %v7168
  %v7550 = vunpack.c.l.b16 %v7169
  %v7551 = vunpack.c.h.b16 %v7169
  %v7552 = vunpack.c.l.b16 %v7170
  %v7553 = vunpack.c.h.b16 %v7170
  %v7554 = vunpack.c.l.b16 %v7171
  %v7555 = vunpack.c.h.b16 %v7171
  %v7556 = vunpack.c.l.b16 %v7172
  %v7557 = vunpack.c.h.b16 %v7172
  %v7558 = vunpack.c.l.b16 %v7173
  %v7559 = vunpack.c.h.b16 %v7173
  %v7560 = vunpack.c.l.b16 %v7174
  %v7561 = vunpack.c.h.b16 %v7174
  %v7562 = vunpack.c.l.b16 %v7175
  %v7563 = vunpack.c.h.b16 %v7175
  %v7564 = vunpack.c.l.b16 %v7176
  %v7565 = vunpack.c.h.b16 %v7176
  %v7566 = vunpack.c.l.b16 %v7177
  %v7567 = vunpack.c.h.b16 %v7177
  %v7568 = vunpack.c.l.b16 %v7178
  %v7569 = vunpack.c.h.b16 %v7178
  %v7570 = vunpack.c.l.b16 %v7179
  %v7571 = vunpack.c.h.b16 %v7179
  %v7572 = vunpack.c.l.b16 %v7180
  %v7573 = vunpack.c.h.b16 %v7180
  %v7574 = vunpack.c.l.b16 %v7181
  %v7575 = vunpack.c.h.b16 %v7181
  %v7576 = vunpack.c.l.b16 %v7182
  %v7577 = vunpack.c.h.b16 %v7182
  %v7578 = vunpack.c.l.b16 %v7183
  %v7579 = vunpack.c.h.b16 %v7183
  %v7580 = vunpack.c.l.b16 %v7184
  %v7581 = vunpack.c.h.b16 %v7184
  %v7582 = vunpack.c.l.b16 %v7185
  %v7583 = vunpack.c.h.b16 %v7185
  %v7584 = vunpack.c.l.b16 %v7186
  %v7585 = vunpack.c.h.b16 %v7186
  %v7586 = vunpack.c.l.b16 %v7187
  %v7587 = vunpack.c.h.b16 %v7187
  %v7588 = vunpack.c.l.b16 %v7188
  %v7589 = vunpack.c.h.b16 %v7188
  %v7590 = vunpack.c.l.b16 %v7189
  %v7591 = vunpack.c.h.b16 %v7189
  %v7592 = vunpack.c.l.b16 %v7190
  %v7593 = vunpack.c.h.b16 %v7190
  %v7594 = vunpack.c.l.b16 %v7191
  %v7595 = vunpack.c.h.b16 %v7191
  %v7596 = vunpack.c.l.b16 %v7192
  %v7597 = vunpack.c.h.b16 %v7192
  %v7598 = vunpack.c.l.b16 %v7193
  %v7599 = vunpack.c.h.b16 %v7193
  %v7600 = vunpack.c.l.b16 %v7194
  %v7601 = vunpack.c.h.b16 %v7194
  %v7602 = vunpack.c.l.b16 %v7195
  %v7603 = vunpack.c.h.b16 %v7195
  %v7604 = vunpack.c.l.b16 %v7196
  %v7605 = vunpack.c.h.b16 %v7196
  %v7606 = vunpack.c.l.b16 %v7197
  %v7607 = vunpack.c.h.b16 %v7197
  %v7608 = vunpack.c.l.b16 %v7198
  %v7609 = vunpack.c.h.b16 %v7198
  %v7610 = vunpack.c.l.b16 %v7199
  %v7611 = vunpack.c.h.b16 %v7199
  %v7612 = vunpack.c.l.b16 %v7200
  %v7613 = vunpack.c.h.b16 %v7200
  %v7614 = vunpack.c.l.b16 %v7201
  %v7615 = vunpack.c.h.b16 %v7201
  %v7616 = vunpack.c.l.b16 %v7202
  %v7617 = vunpack.c.h.b16 %v7202
  %v7618 = vunpack.c.l.b16 %v7203
  %v7619 = vunpack.c.h.b16 %v7203
  %v7620 = vpack.c.b16 %v7366, %v7364
  %v7621 = vpack.c.b16 %v7367, %v7365
  %v7622 = vpack.c.b16 %v7370, %v7368
  %v7623 = vpack.c.b16 %v7371, %v7369
  %v7624 = vpack.c.b16 %v7374, %v7372
  %v7625 = vpack.c.b16 %v7375, %v7373
  %v7626 = vpack.c.b16 %v7378, %v7376
  %v7627 = vpack.c.b16 %v7379, %v7377
  %v7628 = vpack.c.b16 %v7382, %v7380
  %v7629 = vpack.c.b16 %v7383, %v7381
  %v7630 = vpack.c.b16 %v7386, %v7384
  %v7631 = vpack.c.b16 %v7387, %v7385
  %v7632 = vpack.c.b16 %v7390, %v7388
  %v7633 = vpack.c.b16 %v7391, %v7389
  %v7634 = vpack.c.b16 %v7394, %v7392
  %v7635 = vpack.c.b16 %v7395, %v7393
  %v7636 = vpack.c.b16 %v7398, %v7396
  %v7637 = vpack.c.b16 %v7399, %v7397
  %v7638 = vpack.c.b16 %v7402, %v7400
  %v7639 = vpack.c.b16 %v7403, %v7401
  %v7640 = vpack.c.b16 %v7406, %v7404
  %v7641 = vpack.c.b16 %v7407, %v7405
  %v7642 = vpack.c.b16 %v7410, %v7408
  %v7643 = vpack.c.b16 %v7411, %v7409
  %v7644 = vpack.c.b16 %v7414, %v7412
  %v7645 = vpack.c.b16 %v7415, %v7413
  %v7646 = vpack.c.b16 %v7418, %v7416
  %v7647 = vpack.c.b16 %v7419, %v7417
  %v7648 = vpack.c.b16 %v7422, %v7420
  %v7649 = vpack.c.b16 %v7423, %v7421
  %v7650 = vpack.c.b16 %v7426, %v7424
  %v7651 = vpack.c.b16 %v7427, %v7425
  %v7652 = vpack.c.b16 %v7430, %v7428
  %v7653 = vpack.c.b16 %v7431, %v7429
  %v7654 = vpack.c.b16 %v7434, %v7432
  %v7655 = vpack.c.b16 %v7435, %v7433
  %v7656 = vpack.c.b16 %v7438, %v7436
  %v7657 = vpack.c.b16 %v7439, %v7437
  %v7658 = vpack.c.b16 %v7442, %v7440
  %v7659 = vpack.c.b16 %v7443, %v7441
  %v7660 = vpack.c.b16 %v7446, %v7444
  %v7661 = vpack.c.b16 %v7447, %v7445
  %v7662 = vpack.c.b16 %v7450, %v7448
  %v7663 = vpack.c.b16 %v7451, %v7449
  %v7664 = vpack.c.b16 %v7454, %v7452
  %v7665 = vpack.c.b16 %v7455, %v7453
  %v7666 = vpack.c.b16 %v7458, %v7456
  %v7667 = vpack.c.b16 %v7459, %v7457
  %v7668 = vpack.c.b16 %v7462, %v7460
  %v7669 = vpack.c.b16 %v7463, %v7461
  %v7670 = vpack.c.b16 %v7466, %v7464
  %v7671 = vpack.c.b16 %v7467, %v7465
  %v7672 = vpack.c.b16 %v7470, %v7468
  %v7673 = vpack.c.b16 %v7471, %v7469
  %v7674 = vpack.c.b16 %v7474, %v7472
  %v7675 = vpack.c.b16 %v7475, %v7473
  %v7676 = vpack.c.b16 %v7478, %v7476
  %v7677 = vpack.c.b16 %v7479, %v7477
  %v7678 = vpack.c.b16 %v7482, %v7480
  %v7679 = vpack.c.b16 %v7483, %v7481
  %v7680 = vpack.c.b16 %v7486, %v7484
  %v7681 = vpack.c.b16 %v7487, %v7485
  %v7682 = vpack.c.b16 %v7490, %v7488
  %v7683 = vpack.c.b16 %v7491, %v7489
  %v7684 = vpack.c.b16 %v7494, %v7492
  %v7685 = vpack.c.b16 %v7495, %v7493
  %v7686 = vpack.c.b16 %v7498, %v7496
  %v7687 = vpack.c.b16 %v7499, %v7497
  %v7688 = vpack.c.b16 %v7502, %v7500
  %v7689 = vpack.c.b16 %v7503, %v7501
  %v7690 = vpack.c.b16 %v7506, %v7504
  %v7691 = vpack.c.b16 %v7507, %v7505
  %v7692 = vpack.c.b16 %v7510, %v7508
  %v7693 = vpack.c.b16 %v7511, %v7509
  %v7694 = vpack.c.b16 %v7514, %v7512
  %v7695 = vpack.c.b16 %v7515, %v7513
  %v7696 = vpack.c.b16 %v7518, %v7516
  %v7697 = vpack.c.b16 %v7519, %v7517
  %v7698 = vpack.c.b16 %v7522, %v7520
  %v7699 = vpack.c.b16 %v7523, %v7521
  %v7700 = vpack.c.b16 %v7526, %v7524
  %v7701 = vpack.c.b16 %v7527, %v7525
  %v7702 = vpack.c.b16 %v7530, %v7528
  %v7703 = vpack.c.b16 %v7531, %v7529
  %v7704 = vpack.c.b16 %v7534, %v7532
  %v7705 = vpack.c.b16 %v7535, %v7533
  %v7706 = vpack.c.b16 %v7538, %v7536
  %v7707 = vpack.c.b16 %v7539, %v7537
  %v7708 = vpack.c.b16 %v7542, %v7540
  %v7709 = vpack.c.b16 %v7543, %v7541
  %v7710 = vpack.c.b16 %v7546, %v7544
  %v7711 = vpack.c.b16 %v7547, %v7545
  %v7712 = vpack.c.b16 %v7550, %v7548
  %v7713 = vpack.c.b16 %v7551, %v7549
  %v7714 = vpack.c.b16 %v7554, %v7552
  %v7715 = vpack.c.b16 %v7555, %v7553
  %v7716 = vpack.c.b16 %v7558, %v7556
  %v7717 = vpack.c.b16 %v7559, %v7557
  %v7718 = vpack.c.b16 %v7562, %v7560
  %v7719 = vpack.c.b16 %v7563, %v7561
  %v7720 = vpack.c.b16 %v7566, %v7564
  %v7721 = vpack.c.b16 %v7567, %v7565
  %v7722 = vpack.c.b16 %v7570, %v7568
  %v7723 = vpack.c.b16 %v7571, %v7569
  %v7724 = vpack.c.b16 %v7574, %v7572
  %v7725 = vpack.c.b16 %v7575, %v7573
  %v7726 = vpack.c.b16 %v7578, %v7576
  %v7727 = vpack.c.b16 %v7579, %v7577
  %v7728 = vpack.c.b16 %v7582, %v7580
  %v7729 = vpack.c.b16 %v7583, %v7581
  %v7730 = vpack.c.b16 %v7586, %v7584
  %v7731 = vpack.c.b16 %v7587, %v7585
  %v7732 = vpack.c.b16 %v7590, %v7588
  %v7733 = vpack.c.b16 %v7591, %v7589
  %v7734 = vpack.c.b16 %v7594, %v7592
  %v7735 = vpack.c.b16 %v7595, %v7593
  %v7736 = vpack.c.b16 %v7598, %v7596
  %v7737 = vpack.c.b16 %v7599, %v7597
  %v7738 = vpack.c.b16 %v7602, %v7600
  %v7739 = vpack.c.b16 %v7603, %v7601
  %v7740 = vpack.c.b16 %v7606, %v7604
  %v7741 = vpack.c.b16 %v7607, %v7605
  %v7742 = vpack.c.b16 %v7610, %v7608
  %v7743 = vpack.c.b16 %v7611, %v7609
  %v7744 = vpack.c.b16 %v7614, %v7612
  %v7745 = vpack.c.b16 %v7615, %v7613
  %v7746 = vpack.c.b16 %v7618, %v7616
  %v7747 = vpack.c.b16 %v7619, %v7617
  %7876 = vmatprep.subr.bf16.mxu0 %v7205
  %7877 = vmatpush1.bf16.msra.mxu0 %v7204
  %7878 = vmatprep.subr.bf16.mxu0 %v7207
  %7879 = vmatpush1.bf16.msra.mxu0 %v7206
  %7880 = vmatprep.subr.bf16.mxu0 %v7209
  %7881 = vmatpush1.bf16.msra.mxu0 %v7208
  %7882 = vmatprep.subr.bf16.mxu0 %v7211
  %7883 = vmatpush1.bf16.msra.mxu0 %v7210
  %7884 = vmatprep.subr.bf16.mxu0 %v7213
  %7885 = vmatpush1.bf16.msra.mxu0 %v7212
  %7886 = vmatprep.subr.bf16.mxu0 %v7215
  %7887 = vmatpush1.bf16.msra.mxu0 %v7214
  %7888 = vmatprep.subr.bf16.mxu0 %v7217
  %7889 = vmatpush1.bf16.msra.mxu0 %v7216
  %7890 = vmatprep.subr.bf16.mxu0 %v7219
  %7891 = vmatpush1.bf16.msra.mxu0 %v7218
  %7892 = vmatprep.subr.bf16.mxu0 %v7221
  %7893 = vmatpush1.bf16.msra.mxu0 %v7220
  %7894 = vmatprep.subr.bf16.mxu0 %v7223
  %7895 = vmatpush1.bf16.msra.mxu0 %v7222
  %7896 = vmatprep.subr.bf16.mxu0 %v7225
  %7897 = vmatpush1.bf16.msra.mxu0 %v7224
  %7898 = vmatprep.subr.bf16.mxu0 %v7227
  %7899 = vmatpush1.bf16.msra.mxu0 %v7226
  %7900 = vmatprep.subr.bf16.mxu0 %v7229
  %7901 = vmatpush1.bf16.msra.mxu0 %v7228
  %7902 = vmatprep.subr.bf16.mxu0 %v7231
  %7903 = vmatpush1.bf16.msra.mxu0 %v7230
  %7904 = vmatprep.subr.bf16.mxu0 %v7233
  %7905 = vmatpush1.bf16.msra.mxu0 %v7232
  %7906 = vmatprep.subr.bf16.mxu0 %v7235
  %7907 = vmatpush1.bf16.msra.mxu0 %v7234
  %7908 = vmatprep.mubr.bf16.mxu0 %v7621
  %7909 = vmatmul.mubr.bf16.gmra.mrb[0].mxu0 %v7620
  %v7910 = vpop.f32.mrb[0].mxu0
  %v7911 = vadd.f32 0.0, %v7910
  %v7912 = vpop.f32.mrb[0].mxu0
  %v7913 = vadd.f32 0.0, %v7912
  %v7914 = vpop.f32.mrb[0].mxu0
  %v7915 = vadd.f32 0.0, %v7914
  %v7916 = vpop.f32.mrb[0].mxu0
  %v7917 = vadd.f32 0.0, %v7916
  %7918 = vmatprep.mubr.bf16.mxu0 %v7623
  %7919 = vmatmul.mubr.bf16.gmra.mrb[0].mxu0 %v7622
  %v7920 = vpop.f32.mrb[0].mxu0
  %v7921 = vadd.f32 0.0, %v7920
  %v7922 = vpop.f32.mrb[0].mxu0
  %v7923 = vadd.f32 0.0, %v7922
  %v7924 = vpop.f32.mrb[0].mxu0
  %v7925 = vadd.f32 0.0, %v7924
  %v7926 = vpop.f32.mrb[0].mxu0
  %v7927 = vadd.f32 0.0, %v7926
  %7928 = vmatprep.mubr.bf16.mxu0 %v7625
  %7929 = vmatmul.mubr.bf16.gmra.mrb[0].mxu0 %v7624
  %v7930 = vpop.f32.mrb[0].mxu0
  %v7931 = vadd.f32 0.0, %v7930
  %v7932 = vpop.f32.mrb[0].mxu0
  %v7933 = vadd.f32 0.0, %v7932
  %v7934 = vpop.f32.mrb[0].mxu0
  %v7935 = vadd.f32 0.0, %v7934
  %v7936 = vpop.f32.mrb[0].mxu0
  %v7937 = vadd.f32 0.0, %v7936
  %7938 = vmatprep.mubr.bf16.mxu0 %v7627
  %7939 = vmatmul.mubr.bf16.gmra.mrb[0].mxu0 %v7626
  %v7940 = vpop.f32.mrb[0].mxu0
  %v7941 = vadd.f32 0.0, %v7940
  %v7942 = vpop.f32.mrb[0].mxu0
  %v7943 = vadd.f32 0.0, %v7942
  %v7944 = vpop.f32.mrb[0].mxu0
  %v7945 = vadd.f32 0.0, %v7944
  %v7946 = vpop.f32.mrb[0].mxu0
  %v7947 = vadd.f32 0.0, %v7946
  %7948 = vmatprep.mubr.bf16.mxu0 %v7629
  %7949 = vmatmul.mubr.bf16.gmra.mrb[0].mxu0 %v7628
  %v7950 = vpop.f32.mrb[0].mxu0
  %v7951 = vadd.f32 0.0, %v7950
  %v7952 = vpop.f32.mrb[0].mxu0
  %v7953 = vadd.f32 0.0, %v7952
  %v7954 = vpop.f32.mrb[0].mxu0
  %v7955 = vadd.f32 0.0, %v7954
  %v7956 = vpop.f32.mrb[0].mxu0
  %v7957 = vadd.f32 0.0, %v7956
  %7958 = vmatprep.mubr.bf16.mxu0 %v7631
  %7959 = vmatmul.mubr.bf16.gmra.mrb[0].mxu0 %v7630
  %v7960 = vpop.f32.mrb[0].mxu0
  %v7961 = vadd.f32 0.0, %v7960
  %v7962 = vpop.f32.mrb[0].mxu0
  %v7963 = vadd.f32 0.0, %v7962
  %v7964 = vpop.f32.mrb[0].mxu0
  %v7965 = vadd.f32 0.0, %v7964
  %v7966 = vpop.f32.mrb[0].mxu0
  %v7967 = vadd.f32 0.0, %v7966
  %7968 = vmatprep.mubr.bf16.mxu0 %v7633
  %7969 = vmatmul.mubr.bf16.gmra.mrb[0].mxu0 %v7632
  %v7970 = vpop.f32.mrb[0].mxu0
  %v7971 = vadd.f32 0.0, %v7970
  %v7972 = vpop.f32.mrb[0].mxu0
  %v7973 = vadd.f32 0.0, %v7972
  %v7974 = vpop.f32.mrb[0].mxu0
  %v7975 = vadd.f32 0.0, %v7974
  %v7976 = vpop.f32.mrb[0].mxu0
  %v7977 = vadd.f32 0.0, %v7976
  %7978 = vmatprep.mubr.bf16.mxu0 %v7635
  %7979 = vmatmul.mubr.bf16.gmra.mrb[0].mxu0 %v7634
  %v7980 = vpop.f32.mrb[0].mxu0
  %v7981 = vadd.f32 0.0, %v7980
  %v7982 = vpop.f32.mrb[0].mxu0
  %v7983 = vadd.f32 0.0, %v7982
  %v7984 = vpop.f32.mrb[0].mxu0
  %v7985 = vadd.f32 0.0, %v7984
  %v7986 = vpop.f32.mrb[0].mxu0
  %v7987 = vadd.f32 0.0, %v7986
  %7988 = vmatprep.mubr.bf16.mxu0 %v7637
  %7989 = vmatmul.mubr.bf16.gmra.mrb[0].mxu0 %v7636
  %v7990 = vpop.f32.mrb[0].mxu0
  %v7991 = vadd.f32 0.0, %v7990
  %v7992 = vpop.f32.mrb[0].mxu0
  %v7993 = vadd.f32 0.0, %v7992
  %v7994 = vpop.f32.mrb[0].mxu0
  %v7995 = vadd.f32 0.0, %v7994
  %v7996 = vpop.f32.mrb[0].mxu0
  %v7997 = vadd.f32 0.0, %v7996
  %7998 = vmatprep.mubr.bf16.mxu0 %v7639
  %7999 = vmatmul.mubr.bf16.gmra.mrb[0].mxu0 %v7638
  %v8000 = vpop.f32.mrb[0].mxu0
  %v8001 = vadd.f32 0.0, %v8000
  %v8002 = vpop.f32.mrb[0].mxu0
  %v8003 = vadd.f32 0.0, %v8002
  %v8004 = vpop.f32.mrb[0].mxu0
  %v8005 = vadd.f32 0.0, %v8004
  %v8006 = vpop.f32.mrb[0].mxu0
  %v8007 = vadd.f32 0.0, %v8006
  %8008 = vmatprep.mubr.bf16.mxu0 %v7641
  %8009 = vmatmul.mubr.bf16.gmra.mrb[0].mxu0 %v7640
  %v8010 = vpop.f32.mrb[0].mxu0
  %v8011 = vadd.f32 0.0, %v8010
  %v8012 = vpop.f32.mrb[0].mxu0
  %v8013 = vadd.f32 0.0, %v8012
  %v8014 = vpop.f32.mrb[0].mxu0
  %v8015 = vadd.f32 0.0, %v8014
  %v8016 = vpop.f32.mrb[0].mxu0
  %v8017 = vadd.f32 0.0, %v8016
  %8018 = vmatprep.mubr.bf16.mxu0 %v7643
  %8019 = vmatmul.mubr.bf16.gmra.mrb[0].mxu0 %v7642
  %v8020 = vpop.f32.mrb[0].mxu0
  %v8021 = vadd.f32 0.0, %v8020
  %v8022 = vpop.f32.mrb[0].mxu0
  %v8023 = vadd.f32 0.0, %v8022
  %v8024 = vpop.f32.mrb[0].mxu0
  %v8025 = vadd.f32 0.0, %v8024
  %v8026 = vpop.f32.mrb[0].mxu0
  %v8027 = vadd.f32 0.0, %v8026
  %8028 = vmatprep.mubr.bf16.mxu0 %v7645
  %8029 = vmatmul.mubr.bf16.gmra.mrb[0].mxu0 %v7644
  %v8030 = vpop.f32.mrb[0].mxu0
  %v8031 = vadd.f32 0.0, %v8030
  %v8032 = vpop.f32.mrb[0].mxu0
  %v8033 = vadd.f32 0.0, %v8032
  %v8034 = vpop.f32.mrb[0].mxu0
  %v8035 = vadd.f32 0.0, %v8034
  %v8036 = vpop.f32.mrb[0].mxu0
  %v8037 = vadd.f32 0.0, %v8036
  %8038 = vmatprep.mubr.bf16.mxu0 %v7647
  %8039 = vmatmul.mubr.bf16.gmra.mrb[0].mxu0 %v7646
  %v8040 = vpop.f32.mrb[0].mxu0
  %v8041 = vadd.f32 0.0, %v8040
  %v8042 = vpop.f32.mrb[0].mxu0
  %v8043 = vadd.f32 0.0, %v8042
  %v8044 = vpop.f32.mrb[0].mxu0
  %v8045 = vadd.f32 0.0, %v8044
  %v8046 = vpop.f32.mrb[0].mxu0
  %v8047 = vadd.f32 0.0, %v8046
  %8048 = vmatprep.mubr.bf16.mxu0 %v7649
  %8049 = vmatmul.mubr.bf16.gmra.mrb[0].mxu0 %v7648
  %v8050 = vpop.f32.mrb[0].mxu0
  %v8051 = vadd.f32 0.0, %v8050
  %v8052 = vpop.f32.mrb[0].mxu0
  %v8053 = vadd.f32 0.0, %v8052
  %v8054 = vpop.f32.mrb[0].mxu0
  %v8055 = vadd.f32 0.0, %v8054
  %v8056 = vpop.f32.mrb[0].mxu0
  %v8057 = vadd.f32 0.0, %v8056
  %8058 = vmatprep.mubr.bf16.mxu0 %v7651
  %8059 = vmatmul.mubr.bf16.gmra.mrb[0].mxu0 %v7650
  %v8060 = vpop.f32.mrb[0].mxu0
  %v8061 = vadd.f32 0.0, %v8060
  %v8062 = vpop.f32.mrb[0].mxu0
  %v8063 = vadd.f32 0.0, %v8062
  %v8064 = vpop.f32.mrb[0].mxu0
  %v8065 = vadd.f32 0.0, %v8064
  %v8066 = vpop.f32.mrb[0].mxu0
  %v8067 = vadd.f32 0.0, %v8066
  %8068 = vmatprep.mubr.bf16.mxu0 %v7653
  %8069 = vmatmul.mubr.bf16.gmra.mrb[0].mxu0 %v7652
  %v8070 = vpop.f32.mrb[0].mxu0
  %v8071 = vadd.f32 0.0, %v8070
  %v8072 = vpop.f32.mrb[0].mxu0
  %v8073 = vadd.f32 0.0, %v8072
  %v8074 = vpop.f32.mrb[0].mxu0
  %v8075 = vadd.f32 0.0, %v8074
  %v8076 = vpop.f32.mrb[0].mxu0
  %v8077 = vadd.f32 0.0, %v8076
  %8078 = vmatprep.mubr.bf16.mxu0 %v7655
  %8079 = vmatmul.mubr.bf16.gmra.mrb[0].mxu0 %v7654
  %v8080 = vpop.f32.mrb[0].mxu0
  %v8081 = vadd.f32 0.0, %v8080
  %v8082 = vpop.f32.mrb[0].mxu0
  %v8083 = vadd.f32 0.0, %v8082
  %v8084 = vpop.f32.mrb[0].mxu0
  %v8085 = vadd.f32 0.0, %v8084
  %v8086 = vpop.f32.mrb[0].mxu0
  %v8087 = vadd.f32 0.0, %v8086
  %8088 = vmatprep.mubr.bf16.mxu0 %v7657
  %8089 = vmatmul.mubr.bf16.gmra.mrb[0].mxu0 %v7656
  %v8090 = vpop.f32.mrb[0].mxu0
  %v8091 = vadd.f32 0.0, %v8090
  %v8092 = vpop.f32.mrb[0].mxu0
  %v8093 = vadd.f32 0.0, %v8092
  %v8094 = vpop.f32.mrb[0].mxu0
  %v8095 = vadd.f32 0.0, %v8094
  %v8096 = vpop.f32.mrb[0].mxu0
  %v8097 = vadd.f32 0.0, %v8096
  %8098 = vmatprep.mubr.bf16.mxu0 %v7659
  %8099 = vmatmul.mubr.bf16.gmra.mrb[0].mxu0 %v7658
  %v8100 = vpop.f32.mrb[0].mxu0
  %v8101 = vadd.f32 0.0, %v8100
  %v8102 = vpop.f32.mrb[0].mxu0
  %v8103 = vadd.f32 0.0, %v8102
  %v8104 = vpop.f32.mrb[0].mxu0
  %v8105 = vadd.f32 0.0, %v8104
  %v8106 = vpop.f32.mrb[0].mxu0
  %v8107 = vadd.f32 0.0, %v8106
  %8108 = vmatprep.mubr.bf16.mxu0 %v7661
  %8109 = vmatmul.mubr.bf16.gmra.mrb[0].mxu0 %v7660
  %v8110 = vpop.f32.mrb[0].mxu0
  %v8111 = vadd.f32 0.0, %v8110
  %v8112 = vpop.f32.mrb[0].mxu0
  %v8113 = vadd.f32 0.0, %v8112
  %v8114 = vpop.f32.mrb[0].mxu0
  %v8115 = vadd.f32 0.0, %v8114
  %v8116 = vpop.f32.mrb[0].mxu0
  %v8117 = vadd.f32 0.0, %v8116
  %8118 = vmatprep.mubr.bf16.mxu0 %v7663
  %8119 = vmatmul.mubr.bf16.gmra.mrb[0].mxu0 %v7662
  %v8120 = vpop.f32.mrb[0].mxu0
  %v8121 = vadd.f32 0.0, %v8120
  %v8122 = vpop.f32.mrb[0].mxu0
  %v8123 = vadd.f32 0.0, %v8122
  %v8124 = vpop.f32.mrb[0].mxu0
  %v8125 = vadd.f32 0.0, %v8124
  %v8126 = vpop.f32.mrb[0].mxu0
  %v8127 = vadd.f32 0.0, %v8126
  %8128 = vmatprep.mubr.bf16.mxu0 %v7665
  %8129 = vmatmul.mubr.bf16.gmra.mrb[0].mxu0 %v7664
  %v8130 = vpop.f32.mrb[0].mxu0
  %v8131 = vadd.f32 0.0, %v8130
  %v8132 = vpop.f32.mrb[0].mxu0
  %v8133 = vadd.f32 0.0, %v8132
  %v8134 = vpop.f32.mrb[0].mxu0
  %v8135 = vadd.f32 0.0, %v8134
  %v8136 = vpop.f32.mrb[0].mxu0
  %v8137 = vadd.f32 0.0, %v8136
  %8138 = vmatprep.mubr.bf16.mxu0 %v7667
  %8139 = vmatmul.mubr.bf16.gmra.mrb[0].mxu0 %v7666
  %v8140 = vpop.f32.mrb[0].mxu0
  %v8141 = vadd.f32 0.0, %v8140
  %v8142 = vpop.f32.mrb[0].mxu0
  %v8143 = vadd.f32 0.0, %v8142
  %v8144 = vpop.f32.mrb[0].mxu0
  %v8145 = vadd.f32 0.0, %v8144
  %v8146 = vpop.f32.mrb[0].mxu0
  %v8147 = vadd.f32 0.0, %v8146
  %8148 = vmatprep.mubr.bf16.mxu0 %v7669
  %8149 = vmatmul.mubr.bf16.gmra.mrb[0].mxu0 %v7668
  %v8150 = vpop.f32.mrb[0].mxu0
  %v8151 = vadd.f32 0.0, %v8150
  %v8152 = vpop.f32.mrb[0].mxu0
  %v8153 = vadd.f32 0.0, %v8152
  %v8154 = vpop.f32.mrb[0].mxu0
  %v8155 = vadd.f32 0.0, %v8154
  %v8156 = vpop.f32.mrb[0].mxu0
  %v8157 = vadd.f32 0.0, %v8156
  %8158 = vmatprep.mubr.bf16.mxu0 %v7671
  %8159 = vmatmul.mubr.bf16.gmra.mrb[0].mxu0 %v7670
  %v8160 = vpop.f32.mrb[0].mxu0
  %v8161 = vadd.f32 0.0, %v8160
  %v8162 = vpop.f32.mrb[0].mxu0
  %v8163 = vadd.f32 0.0, %v8162
  %v8164 = vpop.f32.mrb[0].mxu0
  %v8165 = vadd.f32 0.0, %v8164
  %v8166 = vpop.f32.mrb[0].mxu0
  %v8167 = vadd.f32 0.0, %v8166
  %8168 = vmatprep.mubr.bf16.mxu0 %v7673
  %8169 = vmatmul.mubr.bf16.gmra.mrb[0].mxu0 %v7672
  %v8170 = vpop.f32.mrb[0].mxu0
  %v8171 = vadd.f32 0.0, %v8170
  %v8172 = vpop.f32.mrb[0].mxu0
  %v8173 = vadd.f32 0.0, %v8172
  %v8174 = vpop.f32.mrb[0].mxu0
  %v8175 = vadd.f32 0.0, %v8174
  %v8176 = vpop.f32.mrb[0].mxu0
  %v8177 = vadd.f32 0.0, %v8176
  %8178 = vmatprep.mubr.bf16.mxu0 %v7675
  %8179 = vmatmul.mubr.bf16.gmra.mrb[0].mxu0 %v7674
  %v8180 = vpop.f32.mrb[0].mxu0
  %v8181 = vadd.f32 0.0, %v8180
  %v8182 = vpop.f32.mrb[0].mxu0
  %v8183 = vadd.f32 0.0, %v8182
  %v8184 = vpop.f32.mrb[0].mxu0
  %v8185 = vadd.f32 0.0, %v8184
  %v8186 = vpop.f32.mrb[0].mxu0
  %v8187 = vadd.f32 0.0, %v8186
  %8188 = vmatprep.mubr.bf16.mxu0 %v7677
  %8189 = vmatmul.mubr.bf16.gmra.mrb[0].mxu0 %v7676
  %v8190 = vpop.f32.mrb[0].mxu0
  %v8191 = vadd.f32 0.0, %v8190
  %v8192 = vpop.f32.mrb[0].mxu0
  %v8193 = vadd.f32 0.0, %v8192
  %v8194 = vpop.f32.mrb[0].mxu0
  %v8195 = vadd.f32 0.0, %v8194
  %v8196 = vpop.f32.mrb[0].mxu0
  %v8197 = vadd.f32 0.0, %v8196
  %8198 = vmatprep.mubr.bf16.mxu0 %v7679
  %8199 = vmatmul.mubr.bf16.gmra.mrb[0].mxu0 %v7678
  %v8200 = vpop.f32.mrb[0].mxu0
  %v8201 = vadd.f32 0.0, %v8200
  %v8202 = vpop.f32.mrb[0].mxu0
  %v8203 = vadd.f32 0.0, %v8202
  %v8204 = vpop.f32.mrb[0].mxu0
  %v8205 = vadd.f32 0.0, %v8204
  %v8206 = vpop.f32.mrb[0].mxu0
  %v8207 = vadd.f32 0.0, %v8206
  %8208 = vmatprep.mubr.bf16.mxu0 %v7681
  %8209 = vmatmul.mubr.bf16.gmra.mrb[0].mxu0 %v7680
  %v8210 = vpop.f32.mrb[0].mxu0
  %v8211 = vadd.f32 0.0, %v8210
  %v8212 = vpop.f32.mrb[0].mxu0
  %v8213 = vadd.f32 0.0, %v8212
  %v8214 = vpop.f32.mrb[0].mxu0
  %v8215 = vadd.f32 0.0, %v8214
  %v8216 = vpop.f32.mrb[0].mxu0
  %v8217 = vadd.f32 0.0, %v8216
  %8218 = vmatprep.mubr.bf16.mxu0 %v7683
  %8219 = vmatmul.mubr.bf16.gmra.mrb[0].mxu0 %v7682
  %v8220 = vpop.f32.mrb[0].mxu0
  %v8221 = vadd.f32 0.0, %v8220
  %v8222 = vpop.f32.mrb[0].mxu0
  %v8223 = vadd.f32 0.0, %v8222
  %v8224 = vpop.f32.mrb[0].mxu0
  %v8225 = vadd.f32 0.0, %v8224
  %v8226 = vpop.f32.mrb[0].mxu0
  %v8227 = vadd.f32 0.0, %v8226
  %8228 = vmatprep.mubr.bf16.mxu0 %v7685
  %8229 = vmatmul.mubr.bf16.gmra.mrb[0].mxu0 %v7684
  %v8230 = vpop.f32.mrb[0].mxu0
  %v8231 = vadd.f32 0.0, %v8230
  %v8232 = vpop.f32.mrb[0].mxu0
  %v8233 = vadd.f32 0.0, %v8232
  %v8234 = vpop.f32.mrb[0].mxu0
  %v8235 = vadd.f32 0.0, %v8234
  %v8236 = vpop.f32.mrb[0].mxu0
  %v8237 = vadd.f32 0.0, %v8236
  %8238 = vmatprep.mubr.bf16.mxu0 %v7687
  %8239 = vmatmul.mubr.bf16.gmra.mrb[0].mxu0 %v7686
  %v8240 = vpop.f32.mrb[0].mxu0
  %v8241 = vadd.f32 0.0, %v8240
  %v8242 = vpop.f32.mrb[0].mxu0
  %v8243 = vadd.f32 0.0, %v8242
  %v8244 = vpop.f32.mrb[0].mxu0
  %v8245 = vadd.f32 0.0, %v8244
  %v8246 = vpop.f32.mrb[0].mxu0
  %v8247 = vadd.f32 0.0, %v8246
  %8248 = vmatprep.mubr.bf16.mxu0 %v7689
  %8249 = vmatmul.mubr.bf16.gmra.mrb[0].mxu0 %v7688
  %v8250 = vpop.f32.mrb[0].mxu0
  %v8251 = vadd.f32 0.0, %v8250
  %v8252 = vpop.f32.mrb[0].mxu0
  %v8253 = vadd.f32 0.0, %v8252
  %v8254 = vpop.f32.mrb[0].mxu0
  %v8255 = vadd.f32 0.0, %v8254
  %v8256 = vpop.f32.mrb[0].mxu0
  %v8257 = vadd.f32 0.0, %v8256
  %8258 = vmatprep.mubr.bf16.mxu0 %v7691
  %8259 = vmatmul.mubr.bf16.gmra.mrb[0].mxu0 %v7690
  %v8260 = vpop.f32.mrb[0].mxu0
  %v8261 = vadd.f32 0.0, %v8260
  %v8262 = vpop.f32.mrb[0].mxu0
  %v8263 = vadd.f32 0.0, %v8262
  %v8264 = vpop.f32.mrb[0].mxu0
  %v8265 = vadd.f32 0.0, %v8264
  %v8266 = vpop.f32.mrb[0].mxu0
  %v8267 = vadd.f32 0.0, %v8266
  %8268 = vmatprep.mubr.bf16.mxu0 %v7693
  %8269 = vmatmul.mubr.bf16.gmra.mrb[0].mxu0 %v7692
  %v8270 = vpop.f32.mrb[0].mxu0
  %v8271 = vadd.f32 0.0, %v8270
  %v8272 = vpop.f32.mrb[0].mxu0
  %v8273 = vadd.f32 0.0, %v8272
  %v8274 = vpop.f32.mrb[0].mxu0
  %v8275 = vadd.f32 0.0, %v8274
  %v8276 = vpop.f32.mrb[0].mxu0
  %v8277 = vadd.f32 0.0, %v8276
  %8278 = vmatprep.mubr.bf16.mxu0 %v7695
  %8279 = vmatmul.mubr.bf16.gmra.mrb[0].mxu0 %v7694
  %v8280 = vpop.f32.mrb[0].mxu0
  %v8281 = vadd.f32 0.0, %v8280
  %v8282 = vpop.f32.mrb[0].mxu0
  %v8283 = vadd.f32 0.0, %v8282
  %v8284 = vpop.f32.mrb[0].mxu0
  %v8285 = vadd.f32 0.0, %v8284
  %v8286 = vpop.f32.mrb[0].mxu0
  %v8287 = vadd.f32 0.0, %v8286
  %8288 = vmatprep.mubr.bf16.mxu0 %v7697
  %8289 = vmatmul.mubr.bf16.gmra.mrb[0].mxu0 %v7696
  %v8290 = vpop.f32.mrb[0].mxu0
  %v8291 = vadd.f32 0.0, %v8290
  %v8292 = vpop.f32.mrb[0].mxu0
  %v8293 = vadd.f32 0.0, %v8292
  %v8294 = vpop.f32.mrb[0].mxu0
  %v8295 = vadd.f32 0.0, %v8294
  %v8296 = vpop.f32.mrb[0].mxu0
  %v8297 = vadd.f32 0.0, %v8296
  %8298 = vmatprep.mubr.bf16.mxu0 %v7699
  %8299 = vmatmul.mubr.bf16.gmra.mrb[0].mxu0 %v7698
  %v8300 = vpop.f32.mrb[0].mxu0
  %v8301 = vadd.f32 0.0, %v8300
  %v8302 = vpop.f32.mrb[0].mxu0
  %v8303 = vadd.f32 0.0, %v8302
  %v8304 = vpop.f32.mrb[0].mxu0
  %v8305 = vadd.f32 0.0, %v8304
  %v8306 = vpop.f32.mrb[0].mxu0
  %v8307 = vadd.f32 0.0, %v8306
  %8308 = vmatprep.mubr.bf16.mxu0 %v7701
  %8309 = vmatmul.mubr.bf16.gmra.mrb[0].mxu0 %v7700
  %v8310 = vpop.f32.mrb[0].mxu0
  %v8311 = vadd.f32 0.0, %v8310
  %v8312 = vpop.f32.mrb[0].mxu0
  %v8313 = vadd.f32 0.0, %v8312
  %v8314 = vpop.f32.mrb[0].mxu0
  %v8315 = vadd.f32 0.0, %v8314
  %v8316 = vpop.f32.mrb[0].mxu0
  %v8317 = vadd.f32 0.0, %v8316
  %8318 = vmatprep.mubr.bf16.mxu0 %v7703
  %8319 = vmatmul.mubr.bf16.gmra.mrb[0].mxu0 %v7702
  %v8320 = vpop.f32.mrb[0].mxu0
  %v8321 = vadd.f32 0.0, %v8320
  %v8322 = vpop.f32.mrb[0].mxu0
  %v8323 = vadd.f32 0.0, %v8322
  %v8324 = vpop.f32.mrb[0].mxu0
  %v8325 = vadd.f32 0.0, %v8324
  %v8326 = vpop.f32.mrb[0].mxu0
  %v8327 = vadd.f32 0.0, %v8326
  %8328 = vmatprep.mubr.bf16.mxu0 %v7705
  %8329 = vmatmul.mubr.bf16.gmra.mrb[0].mxu0 %v7704
  %v8330 = vpop.f32.mrb[0].mxu0
  %v8331 = vadd.f32 0.0, %v8330
  %v8332 = vpop.f32.mrb[0].mxu0
  %v8333 = vadd.f32 0.0, %v8332
  %v8334 = vpop.f32.mrb[0].mxu0
  %v8335 = vadd.f32 0.0, %v8334
  %v8336 = vpop.f32.mrb[0].mxu0
  %v8337 = vadd.f32 0.0, %v8336
  %8338 = vmatprep.mubr.bf16.mxu0 %v7707
  %8339 = vmatmul.mubr.bf16.gmra.mrb[0].mxu0 %v7706
  %v8340 = vpop.f32.mrb[0].mxu0
  %v8341 = vadd.f32 0.0, %v8340
  %v8342 = vpop.f32.mrb[0].mxu0
  %v8343 = vadd.f32 0.0, %v8342
  %v8344 = vpop.f32.mrb[0].mxu0
  %v8345 = vadd.f32 0.0, %v8344
  %v8346 = vpop.f32.mrb[0].mxu0
  %v8347 = vadd.f32 0.0, %v8346
  %8348 = vmatprep.mubr.bf16.mxu0 %v7709
  %8349 = vmatmul.mubr.bf16.gmra.mrb[0].mxu0 %v7708
  %v8350 = vpop.f32.mrb[0].mxu0
  %v8351 = vadd.f32 0.0, %v8350
  %v8352 = vpop.f32.mrb[0].mxu0
  %v8353 = vadd.f32 0.0, %v8352
  %v8354 = vpop.f32.mrb[0].mxu0
  %v8355 = vadd.f32 0.0, %v8354
  %v8356 = vpop.f32.mrb[0].mxu0
  %v8357 = vadd.f32 0.0, %v8356
  %8358 = vmatprep.mubr.bf16.mxu0 %v7711
  %8359 = vmatmul.mubr.bf16.gmra.mrb[0].mxu0 %v7710
  %v8360 = vpop.f32.mrb[0].mxu0
  %v8361 = vadd.f32 0.0, %v8360
  %v8362 = vpop.f32.mrb[0].mxu0
  %v8363 = vadd.f32 0.0, %v8362
  %v8364 = vpop.f32.mrb[0].mxu0
  %v8365 = vadd.f32 0.0, %v8364
  %v8366 = vpop.f32.mrb[0].mxu0
  %v8367 = vadd.f32 0.0, %v8366
  %8368 = vmatprep.mubr.bf16.mxu0 %v7713
  %8369 = vmatmul.mubr.bf16.gmra.mrb[0].mxu0 %v7712
  %v8370 = vpop.f32.mrb[0].mxu0
  %v8371 = vadd.f32 0.0, %v8370
  %v8372 = vpop.f32.mrb[0].mxu0
  %v8373 = vadd.f32 0.0, %v8372
  %v8374 = vpop.f32.mrb[0].mxu0
  %v8375 = vadd.f32 0.0, %v8374
  %v8376 = vpop.f32.mrb[0].mxu0
  %v8377 = vadd.f32 0.0, %v8376
  %8378 = vmatprep.mubr.bf16.mxu0 %v7715
  %8379 = vmatmul.mubr.bf16.gmra.mrb[0].mxu0 %v7714
  %v8380 = vpop.f32.mrb[0].mxu0
  %v8381 = vadd.f32 0.0, %v8380
  %v8382 = vpop.f32.mrb[0].mxu0
  %v8383 = vadd.f32 0.0, %v8382
  %v8384 = vpop.f32.mrb[0].mxu0
  %v8385 = vadd.f32 0.0, %v8384
  %v8386 = vpop.f32.mrb[0].mxu0
  %v8387 = vadd.f32 0.0, %v8386
  %8388 = vmatprep.mubr.bf16.mxu0 %v7717
  %8389 = vmatmul.mubr.bf16.gmra.mrb[0].mxu0 %v7716
  %v8390 = vpop.f32.mrb[0].mxu0
  %v8391 = vadd.f32 0.0, %v8390
  %v8392 = vpop.f32.mrb[0].mxu0
  %v8393 = vadd.f32 0.0, %v8392
  %v8394 = vpop.f32.mrb[0].mxu0
  %v8395 = vadd.f32 0.0, %v8394
  %v8396 = vpop.f32.mrb[0].mxu0
  %v8397 = vadd.f32 0.0, %v8396
  %8398 = vmatprep.mubr.bf16.mxu0 %v7719
  %8399 = vmatmul.mubr.bf16.gmra.mrb[0].mxu0 %v7718
  %v8400 = vpop.f32.mrb[0].mxu0
  %v8401 = vadd.f32 0.0, %v8400
  %v8402 = vpop.f32.mrb[0].mxu0
  %v8403 = vadd.f32 0.0, %v8402
  %v8404 = vpop.f32.mrb[0].mxu0
  %v8405 = vadd.f32 0.0, %v8404
  %v8406 = vpop.f32.mrb[0].mxu0
  %v8407 = vadd.f32 0.0, %v8406
  %8408 = vmatprep.mubr.bf16.mxu0 %v7721
  %8409 = vmatmul.mubr.bf16.gmra.mrb[0].mxu0 %v7720
  %v8410 = vpop.f32.mrb[0].mxu0
  %v8411 = vadd.f32 0.0, %v8410
  %v8412 = vpop.f32.mrb[0].mxu0
  %v8413 = vadd.f32 0.0, %v8412
  %v8414 = vpop.f32.mrb[0].mxu0
  %v8415 = vadd.f32 0.0, %v8414
  %v8416 = vpop.f32.mrb[0].mxu0
  %v8417 = vadd.f32 0.0, %v8416
  %8418 = vmatprep.mubr.bf16.mxu0 %v7723
  %8419 = vmatmul.mubr.bf16.gmra.mrb[0].mxu0 %v7722
  %v8420 = vpop.f32.mrb[0].mxu0
  %v8421 = vadd.f32 0.0, %v8420
  %v8422 = vpop.f32.mrb[0].mxu0
  %v8423 = vadd.f32 0.0, %v8422
  %v8424 = vpop.f32.mrb[0].mxu0
  %v8425 = vadd.f32 0.0, %v8424
  %v8426 = vpop.f32.mrb[0].mxu0
  %v8427 = vadd.f32 0.0, %v8426
  %8428 = vmatprep.mubr.bf16.mxu0 %v7725
  %8429 = vmatmul.mubr.bf16.gmra.mrb[0].mxu0 %v7724
  %v8430 = vpop.f32.mrb[0].mxu0
  %v8431 = vadd.f32 0.0, %v8430
  %v8432 = vpop.f32.mrb[0].mxu0
  %v8433 = vadd.f32 0.0, %v8432
  %v8434 = vpop.f32.mrb[0].mxu0
  %v8435 = vadd.f32 0.0, %v8434
  %v8436 = vpop.f32.mrb[0].mxu0
  %v8437 = vadd.f32 0.0, %v8436
  %8438 = vmatprep.mubr.bf16.mxu0 %v7727
  %8439 = vmatmul.mubr.bf16.gmra.mrb[0].mxu0 %v7726
  %v8440 = vpop.f32.mrb[0].mxu0
  %v8441 = vadd.f32 0.0, %v8440
  %v8442 = vpop.f32.mrb[0].mxu0
  %v8443 = vadd.f32 0.0, %v8442
  %v8444 = vpop.f32.mrb[0].mxu0
  %v8445 = vadd.f32 0.0, %v8444
  %v8446 = vpop.f32.mrb[0].mxu0
  %v8447 = vadd.f32 0.0, %v8446
  %8448 = vmatprep.mubr.bf16.mxu0 %v7729
  %8449 = vmatmul.mubr.bf16.gmra.mrb[0].mxu0 %v7728
  %v8450 = vpop.f32.mrb[0].mxu0
  %v8451 = vadd.f32 0.0, %v8450
  %v8452 = vpop.f32.mrb[0].mxu0
  %v8453 = vadd.f32 0.0, %v8452
  %v8454 = vpop.f32.mrb[0].mxu0
  %v8455 = vadd.f32 0.0, %v8454
  %v8456 = vpop.f32.mrb[0].mxu0
  %v8457 = vadd.f32 0.0, %v8456
  %8458 = vmatprep.mubr.bf16.mxu0 %v7731
  %8459 = vmatmul.mubr.bf16.gmra.mrb[0].mxu0 %v7730
  %v8460 = vpop.f32.mrb[0].mxu0
  %v8461 = vadd.f32 0.0, %v8460
  %v8462 = vpop.f32.mrb[0].mxu0
  %v8463 = vadd.f32 0.0, %v8462
  %v8464 = vpop.f32.mrb[0].mxu0
  %v8465 = vadd.f32 0.0, %v8464
  %v8466 = vpop.f32.mrb[0].mxu0
  %v8467 = vadd.f32 0.0, %v8466
  %8468 = vmatprep.mubr.bf16.mxu0 %v7733
  %8469 = vmatmul.mubr.bf16.gmra.mrb[0].mxu0 %v7732
  %v8470 = vpop.f32.mrb[0].mxu0
  %v8471 = vadd.f32 0.0, %v8470
  %v8472 = vpop.f32.mrb[0].mxu0
  %v8473 = vadd.f32 0.0, %v8472
  %v8474 = vpop.f32.mrb[0].mxu0
  %v8475 = vadd.f32 0.0, %v8474
  %v8476 = vpop.f32.mrb[0].mxu0
  %v8477 = vadd.f32 0.0, %v8476
  %8478 = vmatprep.mubr.bf16.mxu0 %v7735
  %8479 = vmatmul.mubr.bf16.gmra.mrb[0].mxu0 %v7734
  %v8480 = vpop.f32.mrb[0].mxu0
  %v8481 = vadd.f32 0.0, %v8480
  %v8482 = vpop.f32.mrb[0].mxu0
  %v8483 = vadd.f32 0.0, %v8482
  %v8484 = vpop.f32.mrb[0].mxu0
  %v8485 = vadd.f32 0.0, %v8484
  %v8486 = vpop.f32.mrb[0].mxu0
  %v8487 = vadd.f32 0.0, %v8486
  %8488 = vmatprep.mubr.bf16.mxu0 %v7737
  %8489 = vmatmul.mubr.bf16.gmra.mrb[0].mxu0 %v7736
  %v8490 = vpop.f32.mrb[0].mxu0
  %v8491 = vadd.f32 0.0, %v8490
  %v8492 = vpop.f32.mrb[0].mxu0
  %v8493 = vadd.f32 0.0, %v8492
  %v8494 = vpop.f32.mrb[0].mxu0
  %v8495 = vadd.f32 0.0, %v8494
  %v8496 = vpop.f32.mrb[0].mxu0
  %v8497 = vadd.f32 0.0, %v8496
  %8498 = vmatprep.mubr.bf16.mxu0 %v7739
  %8499 = vmatmul.mubr.bf16.gmra.mrb[0].mxu0 %v7738
  %v8500 = vpop.f32.mrb[0].mxu0
  %v8501 = vadd.f32 0.0, %v8500
  %v8502 = vpop.f32.mrb[0].mxu0
  %v8503 = vadd.f32 0.0, %v8502
  %v8504 = vpop.f32.mrb[0].mxu0
  %v8505 = vadd.f32 0.0, %v8504
  %v8506 = vpop.f32.mrb[0].mxu0
  %v8507 = vadd.f32 0.0, %v8506
  %8508 = vmatprep.mubr.bf16.mxu0 %v7741
  %8509 = vmatmul.mubr.bf16.gmra.mrb[0].mxu0 %v7740
  %v8510 = vpop.f32.mrb[0].mxu0
  %v8511 = vadd.f32 0.0, %v8510
  %v8512 = vpop.f32.mrb[0].mxu0
  %v8513 = vadd.f32 0.0, %v8512
  %v8514 = vpop.f32.mrb[0].mxu0
  %v8515 = vadd.f32 0.0, %v8514
  %v8516 = vpop.f32.mrb[0].mxu0
  %v8517 = vadd.f32 0.0, %v8516
  %8518 = vmatprep.mubr.bf16.mxu0 %v7743
  %8519 = vmatmul.mubr.bf16.gmra.mrb[0].mxu0 %v7742
  %v8520 = vpop.f32.mrb[0].mxu0
  %v8521 = vadd.f32 0.0, %v8520
  %v8522 = vpop.f32.mrb[0].mxu0
  %v8523 = vadd.f32 0.0, %v8522
  %v8524 = vpop.f32.mrb[0].mxu0
  %v8525 = vadd.f32 0.0, %v8524
  %v8526 = vpop.f32.mrb[0].mxu0
  %v8527 = vadd.f32 0.0, %v8526
  %8528 = vmatprep.mubr.bf16.mxu0 %v7745
  %8529 = vmatmul.mubr.bf16.gmra.mrb[0].mxu0 %v7744
  %v8530 = vpop.f32.mrb[0].mxu0
  %v8531 = vadd.f32 0.0, %v8530
  %v8532 = vpop.f32.mrb[0].mxu0
  %v8533 = vadd.f32 0.0, %v8532
  %v8534 = vpop.f32.mrb[0].mxu0
  %v8535 = vadd.f32 0.0, %v8534
  %v8536 = vpop.f32.mrb[0].mxu0
  %v8537 = vadd.f32 0.0, %v8536
  %8538 = vmatprep.mubr.bf16.mxu0 %v7747
  %8539 = vmatmul.mubr.bf16.gmra.mrb[0].mxu0 %v7746
  %v8540 = vpop.f32.mrb[0].mxu0
  %v8541 = vadd.f32 0.0, %v8540
  %v8542 = vpop.f32.mrb[0].mxu0
  %v8543 = vadd.f32 0.0, %v8542
  %v8544 = vpop.f32.mrb[0].mxu0
  %v8545 = vadd.f32 0.0, %v8544
  %v8546 = vpop.f32.mrb[0].mxu0
  %v8547 = vadd.f32 0.0, %v8546
  %8548 = vdwg.mxu0
  %v8549 = vmul.f32 %v7911, %v5853
  %v8550 = vmul.f32 %v7913, %v5857
  %v8551 = vmul.f32 %v7915, %v5853
  %v8552 = vmul.f32 %v7917, %v5857
  %v8553 = vmul.f32 %v7921, %v5853
  %v8554 = vmul.f32 %v7923, %v5857
  %v8555 = vmul.f32 %v7925, %v5853
  %v8556 = vmul.f32 %v7927, %v5857
  %v8557 = vmul.f32 %v7931, %v5853
  %v8558 = vmul.f32 %v7933, %v5857
  %v8559 = vmul.f32 %v7935, %v5853
  %v8560 = vmul.f32 %v7937, %v5857
  %v8561 = vmul.f32 %v7941, %v5853
  %v8562 = vmul.f32 %v7943, %v5857
  %v8563 = vmul.f32 %v7945, %v5853
  %v8564 = vmul.f32 %v7947, %v5857
  %v8565 = vmul.f32 %v7951, %v5853
  %v8566 = vmul.f32 %v7953, %v5857
  %v8567 = vmul.f32 %v7955, %v5853
  %v8568 = vmul.f32 %v7957, %v5857
  %v8569 = vmul.f32 %v7961, %v5853
  %v8570 = vmul.f32 %v7963, %v5857
  %v8571 = vmul.f32 %v7965, %v5853
  %v8572 = vmul.f32 %v7967, %v5857
  %v8573 = vmul.f32 %v7971, %v5853
  %v8574 = vmul.f32 %v7973, %v5857
  %v8575 = vmul.f32 %v7975, %v5853
  %v8576 = vmul.f32 %v7977, %v5857
  %v8577 = vmul.f32 %v7981, %v5853
  %v8578 = vmul.f32 %v7983, %v5857
  %v8579 = vmul.f32 %v7985, %v5853
  %v8580 = vmul.f32 %v7987, %v5857
  %v8581 = vmul.f32 %v7991, %v5853
  %v8582 = vmul.f32 %v7993, %v5857
  %v8583 = vmul.f32 %v7995, %v5853
  %v8584 = vmul.f32 %v7997, %v5857
  %v8585 = vmul.f32 %v8001, %v5853
  %v8586 = vmul.f32 %v8003, %v5857
  %v8587 = vmul.f32 %v8005, %v5853
  %v8588 = vmul.f32 %v8007, %v5857
  %v8589 = vmul.f32 %v8011, %v5853
  %v8590 = vmul.f32 %v8013, %v5857
  %v8591 = vmul.f32 %v8015, %v5853
  %v8592 = vmul.f32 %v8017, %v5857
  %v8593 = vmul.f32 %v8021, %v5853
  %v8594 = vmul.f32 %v8023, %v5857
  %v8595 = vmul.f32 %v8025, %v5853
  %v8596 = vmul.f32 %v8027, %v5857
  %v8597 = vmul.f32 %v8031, %v5853
  %v8598 = vmul.f32 %v8033, %v5857
  %v8599 = vmul.f32 %v8035, %v5853
  %v8600 = vmul.f32 %v8037, %v5857
  %v8601 = vmul.f32 %v8041, %v5853
  %v8602 = vmul.f32 %v8043, %v5857
  %v8603 = vmul.f32 %v8045, %v5853
  %v8604 = vmul.f32 %v8047, %v5857
  %v8605 = vmul.f32 %v8051, %v5853
  %v8606 = vmul.f32 %v8053, %v5857
  %v8607 = vmul.f32 %v8055, %v5853
  %v8608 = vmul.f32 %v8057, %v5857
  %v8609 = vmul.f32 %v8061, %v5853
  %v8610 = vmul.f32 %v8063, %v5857
  %v8611 = vmul.f32 %v8065, %v5853
  %v8612 = vmul.f32 %v8067, %v5857
  %v8613 = vmul.f32 %v8071, %v5853
  %v8614 = vmul.f32 %v8073, %v5857
  %v8615 = vmul.f32 %v8075, %v5853
  %v8616 = vmul.f32 %v8077, %v5857
  %v8617 = vmul.f32 %v8081, %v5853
  %v8618 = vmul.f32 %v8083, %v5857
  %v8619 = vmul.f32 %v8085, %v5853
  %v8620 = vmul.f32 %v8087, %v5857
  %v8621 = vmul.f32 %v8091, %v5853
  %v8622 = vmul.f32 %v8093, %v5857
  %v8623 = vmul.f32 %v8095, %v5853
  %v8624 = vmul.f32 %v8097, %v5857
  %v8625 = vmul.f32 %v8101, %v5853
  %v8626 = vmul.f32 %v8103, %v5857
  %v8627 = vmul.f32 %v8105, %v5853
  %v8628 = vmul.f32 %v8107, %v5857
  %v8629 = vmul.f32 %v8111, %v5853
  %v8630 = vmul.f32 %v8113, %v5857
  %v8631 = vmul.f32 %v8115, %v5853
  %v8632 = vmul.f32 %v8117, %v5857
  %v8633 = vmul.f32 %v8121, %v5853
  %v8634 = vmul.f32 %v8123, %v5857
  %v8635 = vmul.f32 %v8125, %v5853
  %v8636 = vmul.f32 %v8127, %v5857
  %v8637 = vmul.f32 %v8131, %v5853
  %v8638 = vmul.f32 %v8133, %v5857
  %v8639 = vmul.f32 %v8135, %v5853
  %v8640 = vmul.f32 %v8137, %v5857
  %v8641 = vmul.f32 %v8141, %v5853
  %v8642 = vmul.f32 %v8143, %v5857
  %v8643 = vmul.f32 %v8145, %v5853
  %v8644 = vmul.f32 %v8147, %v5857
  %v8645 = vmul.f32 %v8151, %v5853
  %v8646 = vmul.f32 %v8153, %v5857
  %v8647 = vmul.f32 %v8155, %v5853
  %v8648 = vmul.f32 %v8157, %v5857
  %v8649 = vmul.f32 %v8161, %v5853
  %v8650 = vmul.f32 %v8163, %v5857
  %v8651 = vmul.f32 %v8165, %v5853
  %v8652 = vmul.f32 %v8167, %v5857
  %v8653 = vmul.f32 %v8171, %v5853
  %v8654 = vmul.f32 %v8173, %v5857
  %v8655 = vmul.f32 %v8175, %v5853
  %v8656 = vmul.f32 %v8177, %v5857
  %v8657 = vmul.f32 %v8181, %v5853
  %v8658 = vmul.f32 %v8183, %v5857
  %v8659 = vmul.f32 %v8185, %v5853
  %v8660 = vmul.f32 %v8187, %v5857
  %v8661 = vmul.f32 %v8191, %v5853
  %v8662 = vmul.f32 %v8193, %v5857
  %v8663 = vmul.f32 %v8195, %v5853
  %v8664 = vmul.f32 %v8197, %v5857
  %v8665 = vmul.f32 %v8201, %v5853
  %v8666 = vmul.f32 %v8203, %v5857
  %v8667 = vmul.f32 %v8205, %v5853
  %v8668 = vmul.f32 %v8207, %v5857
  %v8669 = vmul.f32 %v8211, %v5853
  %v8670 = vmul.f32 %v8213, %v5857
  %v8671 = vmul.f32 %v8215, %v5853
  %v8672 = vmul.f32 %v8217, %v5857
  %v8673 = vmul.f32 %v8221, %v5853
  %v8674 = vmul.f32 %v8223, %v5857
  %v8675 = vmul.f32 %v8225, %v5853
  %v8676 = vmul.f32 %v8227, %v5857
  %v8677 = vmul.f32 %v8231, %v5853
  %v8678 = vmul.f32 %v8233, %v5857
  %v8679 = vmul.f32 %v8235, %v5853
  %v8680 = vmul.f32 %v8237, %v5857
  %v8681 = vmul.f32 %v8241, %v5853
  %v8682 = vmul.f32 %v8243, %v5857
  %v8683 = vmul.f32 %v8245, %v5853
  %v8684 = vmul.f32 %v8247, %v5857
  %v8685 = vmul.f32 %v8251, %v5853
  %v8686 = vmul.f32 %v8253, %v5857
  %v8687 = vmul.f32 %v8255, %v5853
  %v8688 = vmul.f32 %v8257, %v5857
  %v8689 = vmul.f32 %v8261, %v5853
  %v8690 = vmul.f32 %v8263, %v5857
  %v8691 = vmul.f32 %v8265, %v5853
  %v8692 = vmul.f32 %v8267, %v5857
  %v8693 = vmul.f32 %v8271, %v5853
  %v8694 = vmul.f32 %v8273, %v5857
  %v8695 = vmul.f32 %v8275, %v5853
  %v8696 = vmul.f32 %v8277, %v5857
  %v8697 = vmul.f32 %v8281, %v5853
  %v8698 = vmul.f32 %v8283, %v5857
  %v8699 = vmul.f32 %v8285, %v5853
  %v8700 = vmul.f32 %v8287, %v5857
  %v8701 = vmul.f32 %v8291, %v5853
  %v8702 = vmul.f32 %v8293, %v5857
  %v8703 = vmul.f32 %v8295, %v5853
  %v8704 = vmul.f32 %v8297, %v5857
  %v8705 = vmul.f32 %v8301, %v5853
  %v8706 = vmul.f32 %v8303, %v5857
  %v8707 = vmul.f32 %v8305, %v5853
  %v8708 = vmul.f32 %v8307, %v5857
  %v8709 = vmul.f32 %v8311, %v5853
  %v8710 = vmul.f32 %v8313, %v5857
  %v8711 = vmul.f32 %v8315, %v5853
  %v8712 = vmul.f32 %v8317, %v5857
  %v8713 = vmul.f32 %v8321, %v5853
  %v8714 = vmul.f32 %v8323, %v5857
  %v8715 = vmul.f32 %v8325, %v5853
  %v8716 = vmul.f32 %v8327, %v5857
  %v8717 = vmul.f32 %v8331, %v5853
  %v8718 = vmul.f32 %v8333, %v5857
  %v8719 = vmul.f32 %v8335, %v5853
  %v8720 = vmul.f32 %v8337, %v5857
  %v8721 = vmul.f32 %v8341, %v5853
  %v8722 = vmul.f32 %v8343, %v5857
  %v8723 = vmul.f32 %v8345, %v5853
  %v8724 = vmul.f32 %v8347, %v5857
  %v8725 = vmul.f32 %v8351, %v5853
  %v8726 = vmul.f32 %v8353, %v5857
  %v8727 = vmul.f32 %v8355, %v5853
  %v8728 = vmul.f32 %v8357, %v5857
  %v8729 = vmul.f32 %v8361, %v5853
  %v8730 = vmul.f32 %v8363, %v5857
  %v8731 = vmul.f32 %v8365, %v5853
  %v8732 = vmul.f32 %v8367, %v5857
  %v8733 = vmul.f32 %v8371, %v5853
  %v8734 = vmul.f32 %v8373, %v5857
  %v8735 = vmul.f32 %v8375, %v5853
  %v8736 = vmul.f32 %v8377, %v5857
  %v8737 = vmul.f32 %v8381, %v5853
  %v8738 = vmul.f32 %v8383, %v5857
  %v8739 = vmul.f32 %v8385, %v5853
  %v8740 = vmul.f32 %v8387, %v5857
  %v8741 = vmul.f32 %v8391, %v5853
  %v8742 = vmul.f32 %v8393, %v5857
  %v8743 = vmul.f32 %v8395, %v5853
  %v8744 = vmul.f32 %v8397, %v5857
  %v8745 = vmul.f32 %v8401, %v5853
  %v8746 = vmul.f32 %v8403, %v5857
  %v8747 = vmul.f32 %v8405, %v5853
  %v8748 = vmul.f32 %v8407, %v5857
  %v8749 = vmul.f32 %v8411, %v5853
  %v8750 = vmul.f32 %v8413, %v5857
  %v8751 = vmul.f32 %v8415, %v5853
  %v8752 = vmul.f32 %v8417, %v5857
  %v8753 = vmul.f32 %v8421, %v5853
  %v8754 = vmul.f32 %v8423, %v5857
  %v8755 = vmul.f32 %v8425, %v5853
  %v8756 = vmul.f32 %v8427, %v5857
  %v8757 = vmul.f32 %v8431, %v5853
  %v8758 = vmul.f32 %v8433, %v5857
  %v8759 = vmul.f32 %v8435, %v5853
  %v8760 = vmul.f32 %v8437, %v5857
  %v8761 = vmul.f32 %v8441, %v5853
  %v8762 = vmul.f32 %v8443, %v5857
  %v8763 = vmul.f32 %v8445, %v5853
  %v8764 = vmul.f32 %v8447, %v5857
  %v8765 = vmul.f32 %v8451, %v5853
  %v8766 = vmul.f32 %v8453, %v5857
  %v8767 = vmul.f32 %v8455, %v5853
  %v8768 = vmul.f32 %v8457, %v5857
  %v8769 = vmul.f32 %v8461, %v5853
  %v8770 = vmul.f32 %v8463, %v5857
  %v8771 = vmul.f32 %v8465, %v5853
  %v8772 = vmul.f32 %v8467, %v5857
  %v8773 = vmul.f32 %v8471, %v5853
  %v8774 = vmul.f32 %v8473, %v5857
  %v8775 = vmul.f32 %v8475, %v5853
  %v8776 = vmul.f32 %v8477, %v5857
  %v8777 = vmul.f32 %v8481, %v5853
  %v8778 = vmul.f32 %v8483, %v5857
  %v8779 = vmul.f32 %v8485, %v5853
  %v8780 = vmul.f32 %v8487, %v5857
  %v8781 = vmul.f32 %v8491, %v5853
  %v8782 = vmul.f32 %v8493, %v5857
  %v8783 = vmul.f32 %v8495, %v5853
  %v8784 = vmul.f32 %v8497, %v5857
  %v8785 = vmul.f32 %v8501, %v5853
  %v8786 = vmul.f32 %v8503, %v5857
  %v8787 = vmul.f32 %v8505, %v5853
  %v8788 = vmul.f32 %v8507, %v5857
  %v8789 = vmul.f32 %v8511, %v5853
  %v8790 = vmul.f32 %v8513, %v5857
  %v8791 = vmul.f32 %v8515, %v5853
  %v8792 = vmul.f32 %v8517, %v5857
  %v8793 = vmul.f32 %v8521, %v5853
  %v8794 = vmul.f32 %v8523, %v5857
  %v8795 = vmul.f32 %v8525, %v5853
  %v8796 = vmul.f32 %v8527, %v5857
  %v8797 = vmul.f32 %v8531, %v5853
  %v8798 = vmul.f32 %v8533, %v5857
  %v8799 = vmul.f32 %v8535, %v5853
  %v8800 = vmul.f32 %v8537, %v5857
  %v8801 = vmul.f32 %v8541, %v5853
  %v8802 = vmul.f32 %v8543, %v5857
  %v8803 = vmul.f32 %v8545, %v5853
  %v8804 = vmul.f32 %v8547, %v5857
  %v8805 = vadd.f32 %v8549, %v8550
  %8806 = vadd.xlane.f32.xlu0 %v8805
  %v8807 = vpop.xlane.xlu0 %8806
  %v8808 = vadd.f32 %v8551, %v8552
  %8809 = vadd.xlane.f32.xlu0 %v8808
  %v8810 = vpop.xlane.xlu0 %8809
  %v8811 = vadd.f32 %v8553, %v8554
  %8812 = vadd.xlane.f32.xlu0 %v8811
  %v8813 = vpop.xlane.xlu0 %8812
  %v8814 = vadd.f32 %v8555, %v8556
  %8815 = vadd.xlane.f32.xlu0 %v8814
  %v8816 = vpop.xlane.xlu0 %8815
  %v8817 = vadd.f32 %v8557, %v8558
  %8818 = vadd.xlane.f32.xlu0 %v8817
  %v8819 = vpop.xlane.xlu0 %8818
  %v8820 = vadd.f32 %v8559, %v8560
  %8821 = vadd.xlane.f32.xlu0 %v8820
  %v8822 = vpop.xlane.xlu0 %8821
  %v8823 = vadd.f32 %v8561, %v8562
  %8824 = vadd.xlane.f32.xlu0 %v8823
  %v8825 = vpop.xlane.xlu0 %8824
  %v8826 = vadd.f32 %v8563, %v8564
  %8827 = vadd.xlane.f32.xlu0 %v8826
  %v8828 = vpop.xlane.xlu0 %8827
  %v8829 = vadd.f32 %v8565, %v8566
  %8830 = vadd.xlane.f32.xlu0 %v8829
  %v8831 = vpop.xlane.xlu0 %8830
  %v8832 = vadd.f32 %v8567, %v8568
  %8833 = vadd.xlane.f32.xlu0 %v8832
  %v8834 = vpop.xlane.xlu0 %8833
  %v8835 = vadd.f32 %v8569, %v8570
  %8836 = vadd.xlane.f32.xlu0 %v8835
  %v8837 = vpop.xlane.xlu0 %8836
  %v8838 = vadd.f32 %v8571, %v8572
  %8839 = vadd.xlane.f32.xlu0 %v8838
  %v8840 = vpop.xlane.xlu0 %8839
  %v8841 = vadd.f32 %v8573, %v8574
  %8842 = vadd.xlane.f32.xlu0 %v8841
  %v8843 = vpop.xlane.xlu0 %8842
  %v8844 = vadd.f32 %v8575, %v8576
  %8845 = vadd.xlane.f32.xlu0 %v8844
  %v8846 = vpop.xlane.xlu0 %8845
  %v8847 = vadd.f32 %v8577, %v8578
  %8848 = vadd.xlane.f32.xlu0 %v8847
  %v8849 = vpop.xlane.xlu0 %8848
  %v8850 = vadd.f32 %v8579, %v8580
  %8851 = vadd.xlane.f32.xlu0 %v8850
  %v8852 = vpop.xlane.xlu0 %8851
  %v8853 = vadd.f32 %v8581, %v8582
  %8854 = vadd.xlane.f32.xlu0 %v8853
  %v8855 = vpop.xlane.xlu0 %8854
  %v8856 = vadd.f32 %v8583, %v8584
  %8857 = vadd.xlane.f32.xlu0 %v8856
  %v8858 = vpop.xlane.xlu0 %8857
  %v8859 = vadd.f32 %v8585, %v8586
  %8860 = vadd.xlane.f32.xlu0 %v8859
  %v8861 = vpop.xlane.xlu0 %8860
  %v8862 = vadd.f32 %v8587, %v8588
  %8863 = vadd.xlane.f32.xlu0 %v8862
  %v8864 = vpop.xlane.xlu0 %8863
  %v8865 = vadd.f32 %v8589, %v8590
  %8866 = vadd.xlane.f32.xlu0 %v8865
  %v8867 = vpop.xlane.xlu0 %8866
  %v8868 = vadd.f32 %v8591, %v8592
  %8869 = vadd.xlane.f32.xlu0 %v8868
  %v8870 = vpop.xlane.xlu0 %8869
  %v8871 = vadd.f32 %v8593, %v8594
  %8872 = vadd.xlane.f32.xlu0 %v8871
  %v8873 = vpop.xlane.xlu0 %8872
  %v8874 = vadd.f32 %v8595, %v8596
  %8875 = vadd.xlane.f32.xlu0 %v8874
  %v8876 = vpop.xlane.xlu0 %8875
  %v8877 = vadd.f32 %v8597, %v8598
  %8878 = vadd.xlane.f32.xlu0 %v8877
  %v8879 = vpop.xlane.xlu0 %8878
  %v8880 = vadd.f32 %v8599, %v8600
  %8881 = vadd.xlane.f32.xlu0 %v8880
  %v8882 = vpop.xlane.xlu0 %8881
  %v8883 = vadd.f32 %v8601, %v8602
  %8884 = vadd.xlane.f32.xlu0 %v8883
  %v8885 = vpop.xlane.xlu0 %8884
  %v8886 = vadd.f32 %v8603, %v8604
  %8887 = vadd.xlane.f32.xlu0 %v8886
  %v8888 = vpop.xlane.xlu0 %8887
  %v8889 = vadd.f32 %v8605, %v8606
  %8890 = vadd.xlane.f32.xlu0 %v8889
  %v8891 = vpop.xlane.xlu0 %8890
  %v8892 = vadd.f32 %v8607, %v8608
  %8893 = vadd.xlane.f32.xlu0 %v8892
  %v8894 = vpop.xlane.xlu0 %8893
  %v8895 = vadd.f32 %v8609, %v8610
  %8896 = vadd.xlane.f32.xlu0 %v8895
  %v8897 = vpop.xlane.xlu0 %8896
  %v8898 = vadd.f32 %v8611, %v8612
  %8899 = vadd.xlane.f32.xlu0 %v8898
  %v8900 = vpop.xlane.xlu0 %8899
  %v8901 = vadd.f32 %v8613, %v8614
  %8902 = vadd.xlane.f32.xlu0 %v8901
  %v8903 = vpop.xlane.xlu0 %8902
  %v8904 = vadd.f32 %v8615, %v8616
  %8905 = vadd.xlane.f32.xlu0 %v8904
  %v8906 = vpop.xlane.xlu0 %8905
  %v8907 = vadd.f32 %v8617, %v8618
  %8908 = vadd.xlane.f32.xlu0 %v8907
  %v8909 = vpop.xlane.xlu0 %8908
  %v8910 = vadd.f32 %v8619, %v8620
  %8911 = vadd.xlane.f32.xlu0 %v8910
  %v8912 = vpop.xlane.xlu0 %8911
  %v8913 = vadd.f32 %v8621, %v8622
  %8914 = vadd.xlane.f32.xlu0 %v8913
  %v8915 = vpop.xlane.xlu0 %8914
  %v8916 = vadd.f32 %v8623, %v8624
  %8917 = vadd.xlane.f32.xlu0 %v8916
  %v8918 = vpop.xlane.xlu0 %8917
  %v8919 = vadd.f32 %v8625, %v8626
  %8920 = vadd.xlane.f32.xlu0 %v8919
  %v8921 = vpop.xlane.xlu0 %8920
  %v8922 = vadd.f32 %v8627, %v8628
  %8923 = vadd.xlane.f32.xlu0 %v8922
  %v8924 = vpop.xlane.xlu0 %8923
  %v8925 = vadd.f32 %v8629, %v8630
  %8926 = vadd.xlane.f32.xlu0 %v8925
  %v8927 = vpop.xlane.xlu0 %8926
  %v8928 = vadd.f32 %v8631, %v8632
  %8929 = vadd.xlane.f32.xlu0 %v8928
  %v8930 = vpop.xlane.xlu0 %8929
  %v8931 = vadd.f32 %v8633, %v8634
  %8932 = vadd.xlane.f32.xlu0 %v8931
  %v8933 = vpop.xlane.xlu0 %8932
  %v8934 = vadd.f32 %v8635, %v8636
  %8935 = vadd.xlane.f32.xlu0 %v8934
  %v8936 = vpop.xlane.xlu0 %8935
  %v8937 = vadd.f32 %v8637, %v8638
  %8938 = vadd.xlane.f32.xlu0 %v8937
  %v8939 = vpop.xlane.xlu0 %8938
  %v8940 = vadd.f32 %v8639, %v8640
  %8941 = vadd.xlane.f32.xlu0 %v8940
  %v8942 = vpop.xlane.xlu0 %8941
  %v8943 = vadd.f32 %v8641, %v8642
  %8944 = vadd.xlane.f32.xlu0 %v8943
  %v8945 = vpop.xlane.xlu0 %8944
  %v8946 = vadd.f32 %v8643, %v8644
  %8947 = vadd.xlane.f32.xlu0 %v8946
  %v8948 = vpop.xlane.xlu0 %8947
  %v8949 = vadd.f32 %v8645, %v8646
  %8950 = vadd.xlane.f32.xlu0 %v8949
  %v8951 = vpop.xlane.xlu0 %8950
  %v8952 = vadd.f32 %v8647, %v8648
  %8953 = vadd.xlane.f32.xlu0 %v8952
  %v8954 = vpop.xlane.xlu0 %8953
  %v8955 = vadd.f32 %v8649, %v8650
  %8956 = vadd.xlane.f32.xlu0 %v8955
  %v8957 = vpop.xlane.xlu0 %8956
  %v8958 = vadd.f32 %v8651, %v8652
  %8959 = vadd.xlane.f32.xlu0 %v8958
  %v8960 = vpop.xlane.xlu0 %8959
  %v8961 = vadd.f32 %v8653, %v8654
  %8962 = vadd.xlane.f32.xlu0 %v8961
  %v8963 = vpop.xlane.xlu0 %8962
  %v8964 = vadd.f32 %v8655, %v8656
  %8965 = vadd.xlane.f32.xlu0 %v8964
  %v8966 = vpop.xlane.xlu0 %8965
  %v8967 = vadd.f32 %v8657, %v8658
  %8968 = vadd.xlane.f32.xlu0 %v8967
  %v8969 = vpop.xlane.xlu0 %8968
  %v8970 = vadd.f32 %v8659, %v8660
  %8971 = vadd.xlane.f32.xlu0 %v8970
  %v8972 = vpop.xlane.xlu0 %8971
  %v8973 = vadd.f32 %v8661, %v8662
  %8974 = vadd.xlane.f32.xlu0 %v8973
  %v8975 = vpop.xlane.xlu0 %8974
  %v8976 = vadd.f32 %v8663, %v8664
  %8977 = vadd.xlane.f32.xlu0 %v8976
  %v8978 = vpop.xlane.xlu0 %8977
  %v8979 = vadd.f32 %v8665, %v8666
  %8980 = vadd.xlane.f32.xlu0 %v8979
  %v8981 = vpop.xlane.xlu0 %8980
  %v8982 = vadd.f32 %v8667, %v8668
  %8983 = vadd.xlane.f32.xlu0 %v8982
  %v8984 = vpop.xlane.xlu0 %8983
  %v8985 = vadd.f32 %v8669, %v8670
  %8986 = vadd.xlane.f32.xlu0 %v8985
  %v8987 = vpop.xlane.xlu0 %8986
  %v8988 = vadd.f32 %v8671, %v8672
  %8989 = vadd.xlane.f32.xlu0 %v8988
  %v8990 = vpop.xlane.xlu0 %8989
  %v8991 = vadd.f32 %v8673, %v8674
  %8992 = vadd.xlane.f32.xlu0 %v8991
  %v8993 = vpop.xlane.xlu0 %8992
  %v8994 = vadd.f32 %v8675, %v8676
  %8995 = vadd.xlane.f32.xlu0 %v8994
  %v8996 = vpop.xlane.xlu0 %8995
  %v8997 = vadd.f32 %v8677, %v8678
  %8998 = vadd.xlane.f32.xlu0 %v8997
  %v8999 = vpop.xlane.xlu0 %8998
  %v9000 = vadd.f32 %v8679, %v8680
  %9001 = vadd.xlane.f32.xlu0 %v9000
  %v9002 = vpop.xlane.xlu0 %9001
  %v9003 = vadd.f32 %v8681, %v8682
  %9004 = vadd.xlane.f32.xlu0 %v9003
  %v9005 = vpop.xlane.xlu0 %9004
  %v9006 = vadd.f32 %v8683, %v8684
  %9007 = vadd.xlane.f32.xlu0 %v9006
  %v9008 = vpop.xlane.xlu0 %9007
  %v9009 = vadd.f32 %v8685, %v8686
  %9010 = vadd.xlane.f32.xlu0 %v9009
  %v9011 = vpop.xlane.xlu0 %9010
  %v9012 = vadd.f32 %v8687, %v8688
  %9013 = vadd.xlane.f32.xlu0 %v9012
  %v9014 = vpop.xlane.xlu0 %9013
  %v9015 = vadd.f32 %v8689, %v8690
  %9016 = vadd.xlane.f32.xlu0 %v9015
  %v9017 = vpop.xlane.xlu0 %9016
  %v9018 = vadd.f32 %v8691, %v8692
  %9019 = vadd.xlane.f32.xlu0 %v9018
  %v9020 = vpop.xlane.xlu0 %9019
  %v9021 = vadd.f32 %v8693, %v8694
  %9022 = vadd.xlane.f32.xlu0 %v9021
  %v9023 = vpop.xlane.xlu0 %9022
  %v9024 = vadd.f32 %v8695, %v8696
  %9025 = vadd.xlane.f32.xlu0 %v9024
  %v9026 = vpop.xlane.xlu0 %9025
  %v9027 = vadd.f32 %v8697, %v8698
  %9028 = vadd.xlane.f32.xlu0 %v9027
  %v9029 = vpop.xlane.xlu0 %9028
  %v9030 = vadd.f32 %v8699, %v8700
  %9031 = vadd.xlane.f32.xlu0 %v9030
  %v9032 = vpop.xlane.xlu0 %9031
  %v9033 = vadd.f32 %v8701, %v8702
  %9034 = vadd.xlane.f32.xlu0 %v9033
  %v9035 = vpop.xlane.xlu0 %9034
  %v9036 = vadd.f32 %v8703, %v8704
  %9037 = vadd.xlane.f32.xlu0 %v9036
  %v9038 = vpop.xlane.xlu0 %9037
  %v9039 = vadd.f32 %v8705, %v8706
  %9040 = vadd.xlane.f32.xlu0 %v9039
  %v9041 = vpop.xlane.xlu0 %9040
  %v9042 = vadd.f32 %v8707, %v8708
  %9043 = vadd.xlane.f32.xlu0 %v9042
  %v9044 = vpop.xlane.xlu0 %9043
  %v9045 = vadd.f32 %v8709, %v8710
  %9046 = vadd.xlane.f32.xlu0 %v9045
  %v9047 = vpop.xlane.xlu0 %9046
  %v9048 = vadd.f32 %v8711, %v8712
  %9049 = vadd.xlane.f32.xlu0 %v9048
  %v9050 = vpop.xlane.xlu0 %9049
  %v9051 = vadd.f32 %v8713, %v8714
  %9052 = vadd.xlane.f32.xlu0 %v9051
  %v9053 = vpop.xlane.xlu0 %9052
  %v9054 = vadd.f32 %v8715, %v8716
  %9055 = vadd.xlane.f32.xlu0 %v9054
  %v9056 = vpop.xlane.xlu0 %9055
  %v9057 = vadd.f32 %v8717, %v8718
  %9058 = vadd.xlane.f32.xlu0 %v9057
  %v9059 = vpop.xlane.xlu0 %9058
  %v9060 = vadd.f32 %v8719, %v8720
  %9061 = vadd.xlane.f32.xlu0 %v9060
  %v9062 = vpop.xlane.xlu0 %9061
  %v9063 = vadd.f32 %v8721, %v8722
  %9064 = vadd.xlane.f32.xlu0 %v9063
  %v9065 = vpop.xlane.xlu0 %9064
  %v9066 = vadd.f32 %v8723, %v8724
  %9067 = vadd.xlane.f32.xlu0 %v9066
  %v9068 = vpop.xlane.xlu0 %9067
  %v9069 = vadd.f32 %v8725, %v8726
  %9070 = vadd.xlane.f32.xlu0 %v9069
  %v9071 = vpop.xlane.xlu0 %9070
  %v9072 = vadd.f32 %v8727, %v8728
  %9073 = vadd.xlane.f32.xlu0 %v9072
  %v9074 = vpop.xlane.xlu0 %9073
  %v9075 = vadd.f32 %v8729, %v8730
  %9076 = vadd.xlane.f32.xlu0 %v9075
  %v9077 = vpop.xlane.xlu0 %9076
  %v9078 = vadd.f32 %v8731, %v8732
  %9079 = vadd.xlane.f32.xlu0 %v9078
  %v9080 = vpop.xlane.xlu0 %9079
  %v9081 = vadd.f32 %v8733, %v8734
  %9082 = vadd.xlane.f32.xlu0 %v9081
  %v9083 = vpop.xlane.xlu0 %9082
  %v9084 = vadd.f32 %v8735, %v8736
  %9085 = vadd.xlane.f32.xlu0 %v9084
  %v9086 = vpop.xlane.xlu0 %9085
  %v9087 = vadd.f32 %v8737, %v8738
  %9088 = vadd.xlane.f32.xlu0 %v9087
  %v9089 = vpop.xlane.xlu0 %9088
  %v9090 = vadd.f32 %v8739, %v8740
  %9091 = vadd.xlane.f32.xlu0 %v9090
  %v9092 = vpop.xlane.xlu0 %9091
  %v9093 = vadd.f32 %v8741, %v8742
  %9094 = vadd.xlane.f32.xlu0 %v9093
  %v9095 = vpop.xlane.xlu0 %9094
  %v9096 = vadd.f32 %v8743, %v8744
  %9097 = vadd.xlane.f32.xlu0 %v9096
  %v9098 = vpop.xlane.xlu0 %9097
  %v9099 = vadd.f32 %v8745, %v8746
  %9100 = vadd.xlane.f32.xlu0 %v9099
  %v9101 = vpop.xlane.xlu0 %9100
  %v9102 = vadd.f32 %v8747, %v8748
  %9103 = vadd.xlane.f32.xlu0 %v9102
  %v9104 = vpop.xlane.xlu0 %9103
  %v9105 = vadd.f32 %v8749, %v8750
  %9106 = vadd.xlane.f32.xlu0 %v9105
  %v9107 = vpop.xlane.xlu0 %9106
  %v9108 = vadd.f32 %v8751, %v8752
  %9109 = vadd.xlane.f32.xlu0 %v9108
  %v9110 = vpop.xlane.xlu0 %9109
  %v9111 = vadd.f32 %v8753, %v8754
  %9112 = vadd.xlane.f32.xlu0 %v9111
  %v9113 = vpop.xlane.xlu0 %9112
  %v9114 = vadd.f32 %v8755, %v8756
  %9115 = vadd.xlane.f32.xlu0 %v9114
  %v9116 = vpop.xlane.xlu0 %9115
  %v9117 = vadd.f32 %v8757, %v8758
  %9118 = vadd.xlane.f32.xlu0 %v9117
  %v9119 = vpop.xlane.xlu0 %9118
  %v9120 = vadd.f32 %v8759, %v8760
  %9121 = vadd.xlane.f32.xlu0 %v9120
  %v9122 = vpop.xlane.xlu0 %9121
  %v9123 = vadd.f32 %v8761, %v8762
  %9124 = vadd.xlane.f32.xlu0 %v9123
  %v9125 = vpop.xlane.xlu0 %9124
  %v9126 = vadd.f32 %v8763, %v8764
  %9127 = vadd.xlane.f32.xlu0 %v9126
  %v9128 = vpop.xlane.xlu0 %9127
  %v9129 = vadd.f32 %v8765, %v8766
  %9130 = vadd.xlane.f32.xlu0 %v9129
  %v9131 = vpop.xlane.xlu0 %9130
  %v9132 = vadd.f32 %v8767, %v8768
  %9133 = vadd.xlane.f32.xlu0 %v9132
  %v9134 = vpop.xlane.xlu0 %9133
  %v9135 = vadd.f32 %v8769, %v8770
  %9136 = vadd.xlane.f32.xlu0 %v9135
  %v9137 = vpop.xlane.xlu0 %9136
  %v9138 = vadd.f32 %v8771, %v8772
  %9139 = vadd.xlane.f32.xlu0 %v9138
  %v9140 = vpop.xlane.xlu0 %9139
  %v9141 = vadd.f32 %v8773, %v8774
  %9142 = vadd.xlane.f32.xlu0 %v9141
  %v9143 = vpop.xlane.xlu0 %9142
  %v9144 = vadd.f32 %v8775, %v8776
  %9145 = vadd.xlane.f32.xlu0 %v9144
  %v9146 = vpop.xlane.xlu0 %9145
  %v9147 = vadd.f32 %v8777, %v8778
  %9148 = vadd.xlane.f32.xlu0 %v9147
  %v9149 = vpop.xlane.xlu0 %9148
  %v9150 = vadd.f32 %v8779, %v8780
  %9151 = vadd.xlane.f32.xlu0 %v9150
  %v9152 = vpop.xlane.xlu0 %9151
  %v9153 = vadd.f32 %v8781, %v8782
  %9154 = vadd.xlane.f32.xlu0 %v9153
  %v9155 = vpop.xlane.xlu0 %9154
  %v9156 = vadd.f32 %v8783, %v8784
  %9157 = vadd.xlane.f32.xlu0 %v9156
  %v9158 = vpop.xlane.xlu0 %9157
  %v9159 = vadd.f32 %v8785, %v8786
  %9160 = vadd.xlane.f32.xlu0 %v9159
  %v9161 = vpop.xlane.xlu0 %9160
  %v9162 = vadd.f32 %v8787, %v8788
  %9163 = vadd.xlane.f32.xlu0 %v9162
  %v9164 = vpop.xlane.xlu0 %9163
  %v9165 = vadd.f32 %v8789, %v8790
  %9166 = vadd.xlane.f32.xlu0 %v9165
  %v9167 = vpop.xlane.xlu0 %9166
  %v9168 = vadd.f32 %v8791, %v8792
  %9169 = vadd.xlane.f32.xlu0 %v9168
  %v9170 = vpop.xlane.xlu0 %9169
  %v9171 = vadd.f32 %v8793, %v8794
  %9172 = vadd.xlane.f32.xlu0 %v9171
  %v9173 = vpop.xlane.xlu0 %9172
  %v9174 = vadd.f32 %v8795, %v8796
  %9175 = vadd.xlane.f32.xlu0 %v9174
  %v9176 = vpop.xlane.xlu0 %9175
  %v9177 = vadd.f32 %v8797, %v8798
  %9178 = vadd.xlane.f32.xlu0 %v9177
  %v9179 = vpop.xlane.xlu0 %9178
  %v9180 = vadd.f32 %v8799, %v8800
  %9181 = vadd.xlane.f32.xlu0 %v9180
  %v9182 = vpop.xlane.xlu0 %9181
  %v9183 = vadd.f32 %v8801, %v8802
  %9184 = vadd.xlane.f32.xlu0 %v9183
  %v9185 = vpop.xlane.xlu0 %9184
  %v9186 = vadd.f32 %v8803, %v8804
  %9187 = vadd.xlane.f32.xlu0 %v9186
  %v9188 = vpop.xlane.xlu0 %9187
  %v9189 = vmul.f32 %v8807, 0.0051020407
  %v9190 = vmul.f32 %v8810, 0.0051020407
  %v9191 = vmul.f32 %v8813, 0.0051020407
  %v9192 = vmul.f32 %v8816, 0.0051020407
  %v9193 = vmul.f32 %v8819, 0.0051020407
  %v9194 = vmul.f32 %v8822, 0.0051020407
  %v9195 = vmul.f32 %v8825, 0.0051020407
  %v9196 = vmul.f32 %v8828, 0.0051020407
  %v9197 = vmul.f32 %v8831, 0.0051020407
  %v9198 = vmul.f32 %v8834, 0.0051020407
  %v9199 = vmul.f32 %v8837, 0.0051020407
  %v9200 = vmul.f32 %v8840, 0.0051020407
  %v9201 = vmul.f32 %v8843, 0.0051020407
  %v9202 = vmul.f32 %v8846, 0.0051020407
  %v9203 = vmul.f32 %v8849, 0.0051020407
  %v9204 = vmul.f32 %v8852, 0.0051020407
  %v9205 = vmul.f32 %v8855, 0.0051020407
  %v9206 = vmul.f32 %v8858, 0.0051020407
  %v9207 = vmul.f32 %v8861, 0.0051020407
  %v9208 = vmul.f32 %v8864, 0.0051020407
  %v9209 = vmul.f32 %v8867, 0.0051020407
  %v9210 = vmul.f32 %v8870, 0.0051020407
  %v9211 = vmul.f32 %v8873, 0.0051020407
  %v9212 = vmul.f32 %v8876, 0.0051020407
  %v9213 = vmul.f32 %v8879, 0.0051020407
  %v9214 = vmul.f32 %v8882, 0.0051020407
  %v9215 = vmul.f32 %v8885, 0.0051020407
  %v9216 = vmul.f32 %v8888, 0.0051020407
  %v9217 = vmul.f32 %v8891, 0.0051020407
  %v9218 = vmul.f32 %v8894, 0.0051020407
  %v9219 = vmul.f32 %v8897, 0.0051020407
  %v9220 = vmul.f32 %v8900, 0.0051020407
  %v9221 = vmul.f32 %v8903, 0.0051020407
  %v9222 = vmul.f32 %v8906, 0.0051020407
  %v9223 = vmul.f32 %v8909, 0.0051020407
  %v9224 = vmul.f32 %v8912, 0.0051020407
  %v9225 = vmul.f32 %v8915, 0.0051020407
  %v9226 = vmul.f32 %v8918, 0.0051020407
  %v9227 = vmul.f32 %v8921, 0.0051020407
  %v9228 = vmul.f32 %v8924, 0.0051020407
  %v9229 = vmul.f32 %v8927, 0.0051020407
  %v9230 = vmul.f32 %v8930, 0.0051020407
  %v9231 = vmul.f32 %v8933, 0.0051020407
  %v9232 = vmul.f32 %v8936, 0.0051020407
  %v9233 = vmul.f32 %v8939, 0.0051020407
  %v9234 = vmul.f32 %v8942, 0.0051020407
  %v9235 = vmul.f32 %v8945, 0.0051020407
  %v9236 = vmul.f32 %v8948, 0.0051020407
  %v9237 = vmul.f32 %v8951, 0.0051020407
  %v9238 = vmul.f32 %v8954, 0.0051020407
  %v9239 = vmul.f32 %v8957, 0.0051020407
  %v9240 = vmul.f32 %v8960, 0.0051020407
  %v9241 = vmul.f32 %v8963, 0.0051020407
  %v9242 = vmul.f32 %v8966, 0.0051020407
  %v9243 = vmul.f32 %v8969, 0.0051020407
  %v9244 = vmul.f32 %v8972, 0.0051020407
  %v9245 = vmul.f32 %v8975, 0.0051020407
  %v9246 = vmul.f32 %v8978, 0.0051020407
  %v9247 = vmul.f32 %v8981, 0.0051020407
  %v9248 = vmul.f32 %v8984, 0.0051020407
  %v9249 = vmul.f32 %v8987, 0.0051020407
  %v9250 = vmul.f32 %v8990, 0.0051020407
  %v9251 = vmul.f32 %v8993, 0.0051020407
  %v9252 = vmul.f32 %v8996, 0.0051020407
  %v9253 = vmul.f32 %v8999, 0.0051020407
  %v9254 = vmul.f32 %v9002, 0.0051020407
  %v9255 = vmul.f32 %v9005, 0.0051020407
  %v9256 = vmul.f32 %v9008, 0.0051020407
  %v9257 = vmul.f32 %v9011, 0.0051020407
  %v9258 = vmul.f32 %v9014, 0.0051020407
  %v9259 = vmul.f32 %v9017, 0.0051020407
  %v9260 = vmul.f32 %v9020, 0.0051020407
  %v9261 = vmul.f32 %v9023, 0.0051020407
  %v9262 = vmul.f32 %v9026, 0.0051020407
  %v9263 = vmul.f32 %v9029, 0.0051020407
  %v9264 = vmul.f32 %v9032, 0.0051020407
  %v9265 = vmul.f32 %v9035, 0.0051020407
  %v9266 = vmul.f32 %v9038, 0.0051020407
  %v9267 = vmul.f32 %v9041, 0.0051020407
  %v9268 = vmul.f32 %v9044, 0.0051020407
  %v9269 = vmul.f32 %v9047, 0.0051020407
  %v9270 = vmul.f32 %v9050, 0.0051020407
  %v9271 = vmul.f32 %v9053, 0.0051020407
  %v9272 = vmul.f32 %v9056, 0.0051020407
  %v9273 = vmul.f32 %v9059, 0.0051020407
  %v9274 = vmul.f32 %v9062, 0.0051020407
  %v9275 = vmul.f32 %v9065, 0.0051020407
  %v9276 = vmul.f32 %v9068, 0.0051020407
  %v9277 = vmul.f32 %v9071, 0.0051020407
  %v9278 = vmul.f32 %v9074, 0.0051020407
  %v9279 = vmul.f32 %v9077, 0.0051020407
  %v9280 = vmul.f32 %v9080, 0.0051020407
  %v9281 = vmul.f32 %v9083, 0.0051020407
  %v9282 = vmul.f32 %v9086, 0.0051020407
  %v9283 = vmul.f32 %v9089, 0.0051020407
  %v9284 = vmul.f32 %v9092, 0.0051020407
  %v9285 = vmul.f32 %v9095, 0.0051020407
  %v9286 = vmul.f32 %v9098, 0.0051020407
  %v9287 = vmul.f32 %v9101, 0.0051020407
  %v9288 = vmul.f32 %v9104, 0.0051020407
  %v9289 = vmul.f32 %v9107, 0.0051020407
  %v9290 = vmul.f32 %v9110, 0.0051020407
  %v9291 = vmul.f32 %v9113, 0.0051020407
  %v9292 = vmul.f32 %v9116, 0.0051020407
  %v9293 = vmul.f32 %v9119, 0.0051020407
  %v9294 = vmul.f32 %v9122, 0.0051020407
  %v9295 = vmul.f32 %v9125, 0.0051020407
  %v9296 = vmul.f32 %v9128, 0.0051020407
  %v9297 = vmul.f32 %v9131, 0.0051020407
  %v9298 = vmul.f32 %v9134, 0.0051020407
  %v9299 = vmul.f32 %v9137, 0.0051020407
  %v9300 = vmul.f32 %v9140, 0.0051020407
  %v9301 = vmul.f32 %v9143, 0.0051020407
  %v9302 = vmul.f32 %v9146, 0.0051020407
  %v9303 = vmul.f32 %v9149, 0.0051020407
  %v9304 = vmul.f32 %v9152, 0.0051020407
  %v9305 = vmul.f32 %v9155, 0.0051020407
  %v9306 = vmul.f32 %v9158, 0.0051020407
  %v9307 = vmul.f32 %v9161, 0.0051020407
  %v9308 = vmul.f32 %v9164, 0.0051020407
  %v9309 = vmul.f32 %v9167, 0.0051020407
  %v9310 = vmul.f32 %v9170, 0.0051020407
  %v9311 = vmul.f32 %v9173, 0.0051020407
  %v9312 = vmul.f32 %v9176, 0.0051020407
  %v9313 = vmul.f32 %v9179, 0.0051020407
  %v9314 = vmul.f32 %v9182, 0.0051020407
  %v9315 = vmul.f32 %v9185, 0.0051020407
  %v9316 = vmul.f32 %v9188, 0.0051020407
  %v9317 = vmul.f32 %v8549, %v7911
  %v9318 = vmul.f32 %v8550, %v7913
  %v9319 = vmul.f32 %v8551, %v7915
  %v9320 = vmul.f32 %v8552, %v7917
  %v9321 = vmul.f32 %v8553, %v7921
  %v9322 = vmul.f32 %v8554, %v7923
  %v9323 = vmul.f32 %v8555, %v7925
  %v9324 = vmul.f32 %v8556, %v7927
  %v9325 = vmul.f32 %v8557, %v7931
  %v9326 = vmul.f32 %v8558, %v7933
  %v9327 = vmul.f32 %v8559, %v7935
  %v9328 = vmul.f32 %v8560, %v7937
  %v9329 = vmul.f32 %v8561, %v7941
  %v9330 = vmul.f32 %v8562, %v7943
  %v9331 = vmul.f32 %v8563, %v7945
  %v9332 = vmul.f32 %v8564, %v7947
  %v9333 = vmul.f32 %v8565, %v7951
  %v9334 = vmul.f32 %v8566, %v7953
  %v9335 = vmul.f32 %v8567, %v7955
  %v9336 = vmul.f32 %v8568, %v7957
  %v9337 = vmul.f32 %v8569, %v7961
  %v9338 = vmul.f32 %v8570, %v7963
  %v9339 = vmul.f32 %v8571, %v7965
  %v9340 = vmul.f32 %v8572, %v7967
  %v9341 = vmul.f32 %v8573, %v7971
  %v9342 = vmul.f32 %v8574, %v7973
  %v9343 = vmul.f32 %v8575, %v7975
  %v9344 = vmul.f32 %v8576, %v7977
  %v9345 = vmul.f32 %v8577, %v7981
  %v9346 = vmul.f32 %v8578, %v7983
  %v9347 = vmul.f32 %v8579, %v7985
  %v9348 = vmul.f32 %v8580, %v7987
  %v9349 = vmul.f32 %v8581, %v7991
  %v9350 = vmul.f32 %v8582, %v7993
  %v9351 = vmul.f32 %v8583, %v7995
  %v9352 = vmul.f32 %v8584, %v7997
  %v9353 = vmul.f32 %v8585, %v8001
  %v9354 = vmul.f32 %v8586, %v8003
  %v9355 = vmul.f32 %v8587, %v8005
  %v9356 = vmul.f32 %v8588, %v8007
  %v9357 = vmul.f32 %v8589, %v8011
  %v9358 = vmul.f32 %v8590, %v8013
  %v9359 = vmul.f32 %v8591, %v8015
  %v9360 = vmul.f32 %v8592, %v8017
  %v9361 = vmul.f32 %v8593, %v8021
  %v9362 = vmul.f32 %v8594, %v8023
  %v9363 = vmul.f32 %v8595, %v8025
  %v9364 = vmul.f32 %v8596, %v8027
  %v9365 = vmul.f32 %v8597, %v8031
  %v9366 = vmul.f32 %v8598, %v8033
  %v9367 = vmul.f32 %v8599, %v8035
  %v9368 = vmul.f32 %v8600, %v8037
  %v9369 = vmul.f32 %v8601, %v8041
  %v9370 = vmul.f32 %v8602, %v8043
  %v9371 = vmul.f32 %v8603, %v8045
  %v9372 = vmul.f32 %v8604, %v8047
  %v9373 = vmul.f32 %v8605, %v8051
  %v9374 = vmul.f32 %v8606, %v8053
  %v9375 = vmul.f32 %v8607, %v8055
  %v9376 = vmul.f32 %v8608, %v8057
  %v9377 = vmul.f32 %v8609, %v8061
  %v9378 = vmul.f32 %v8610, %v8063
  %v9379 = vmul.f32 %v8611, %v8065
  %v9380 = vmul.f32 %v8612, %v8067
  %v9381 = vmul.f32 %v8613, %v8071
  %v9382 = vmul.f32 %v8614, %v8073
  %v9383 = vmul.f32 %v8615, %v8075
  %v9384 = vmul.f32 %v8616, %v8077
  %v9385 = vmul.f32 %v8617, %v8081
  %v9386 = vmul.f32 %v8618, %v8083
  %v9387 = vmul.f32 %v8619, %v8085
  %v9388 = vmul.f32 %v8620, %v8087
  %v9389 = vmul.f32 %v8621, %v8091
  %v9390 = vmul.f32 %v8622, %v8093
  %v9391 = vmul.f32 %v8623, %v8095
  %v9392 = vmul.f32 %v8624, %v8097
  %v9393 = vmul.f32 %v8625, %v8101
  %v9394 = vmul.f32 %v8626, %v8103
  %v9395 = vmul.f32 %v8627, %v8105
  %v9396 = vmul.f32 %v8628, %v8107
  %v9397 = vmul.f32 %v8629, %v8111
  %v9398 = vmul.f32 %v8630, %v8113
  %v9399 = vmul.f32 %v8631, %v8115
  %v9400 = vmul.f32 %v8632, %v8117
  %v9401 = vmul.f32 %v8633, %v8121
  %v9402 = vmul.f32 %v8634, %v8123
  %v9403 = vmul.f32 %v8635, %v8125
  %v9404 = vmul.f32 %v8636, %v8127
  %v9405 = vmul.f32 %v8637, %v8131
  %v9406 = vmul.f32 %v8638, %v8133
  %v9407 = vmul.f32 %v8639, %v8135
  %v9408 = vmul.f32 %v8640, %v8137
  %v9409 = vmul.f32 %v8641, %v8141
  %v9410 = vmul.f32 %v8642, %v8143
  %v9411 = vmul.f32 %v8643, %v8145
  %v9412 = vmul.f32 %v8644, %v8147
  %v9413 = vmul.f32 %v8645, %v8151
  %v9414 = vmul.f32 %v8646, %v8153
  %v9415 = vmul.f32 %v8647, %v8155
  %v9416 = vmul.f32 %v8648, %v8157
  %v9417 = vmul.f32 %v8649, %v8161
  %v9418 = vmul.f32 %v8650, %v8163
  %v9419 = vmul.f32 %v8651, %v8165
  %v9420 = vmul.f32 %v8652, %v8167
  %v9421 = vmul.f32 %v8653, %v8171
  %v9422 = vmul.f32 %v8654, %v8173
  %v9423 = vmul.f32 %v8655, %v8175
  %v9424 = vmul.f32 %v8656, %v8177
  %v9425 = vmul.f32 %v8657, %v8181
  %v9426 = vmul.f32 %v8658, %v8183
  %v9427 = vmul.f32 %v8659, %v8185
  %v9428 = vmul.f32 %v8660, %v8187
  %v9429 = vmul.f32 %v8661, %v8191
  %v9430 = vmul.f32 %v8662, %v8193
  %v9431 = vmul.f32 %v8663, %v8195
  %v9432 = vmul.f32 %v8664, %v8197
  %v9433 = vmul.f32 %v8665, %v8201
  %v9434 = vmul.f32 %v8666, %v8203
  %v9435 = vmul.f32 %v8667, %v8205
  %v9436 = vmul.f32 %v8668, %v8207
  %v9437 = vmul.f32 %v8669, %v8211
  %v9438 = vmul.f32 %v8670, %v8213
  %v9439 = vmul.f32 %v8671, %v8215
  %v9440 = vmul.f32 %v8672, %v8217
  %v9441 = vmul.f32 %v8673, %v8221
  %v9442 = vmul.f32 %v8674, %v8223
  %v9443 = vmul.f32 %v8675, %v8225
  %v9444 = vmul.f32 %v8676, %v8227
  %v9445 = vmul.f32 %v8677, %v8231
  %v9446 = vmul.f32 %v8678, %v8233
  %v9447 = vmul.f32 %v8679, %v8235
  %v9448 = vmul.f32 %v8680, %v8237
  %v9449 = vmul.f32 %v8681, %v8241
  %v9450 = vmul.f32 %v8682, %v8243
  %v9451 = vmul.f32 %v8683, %v8245
  %v9452 = vmul.f32 %v8684, %v8247
  %v9453 = vmul.f32 %v8685, %v8251
  %v9454 = vmul.f32 %v8686, %v8253
  %v9455 = vmul.f32 %v8687, %v8255
  %v9456 = vmul.f32 %v8688, %v8257
  %v9457 = vmul.f32 %v8689, %v8261
  %v9458 = vmul.f32 %v8690, %v8263
  %v9459 = vmul.f32 %v8691, %v8265
  %v9460 = vmul.f32 %v8692, %v8267
  %v9461 = vmul.f32 %v8693, %v8271
  %v9462 = vmul.f32 %v8694, %v8273
  %v9463 = vmul.f32 %v8695, %v8275
  %v9464 = vmul.f32 %v8696, %v8277
  %v9465 = vmul.f32 %v8697, %v8281
  %v9466 = vmul.f32 %v8698, %v8283
  %v9467 = vmul.f32 %v8699, %v8285
  %v9468 = vmul.f32 %v8700, %v8287
  %v9469 = vmul.f32 %v8701, %v8291
  %v9470 = vmul.f32 %v8702, %v8293
  %v9471 = vmul.f32 %v8703, %v8295
  %v9472 = vmul.f32 %v8704, %v8297
  %v9473 = vmul.f32 %v8705, %v8301
  %v9474 = vmul.f32 %v8706, %v8303
  %v9475 = vmul.f32 %v8707, %v8305
  %v9476 = vmul.f32 %v8708, %v8307
  %v9477 = vmul.f32 %v8709, %v8311
  %v9478 = vmul.f32 %v8710, %v8313
  %v9479 = vmul.f32 %v8711, %v8315
  %v9480 = vmul.f32 %v8712, %v8317
  %v9481 = vmul.f32 %v8713, %v8321
  %v9482 = vmul.f32 %v8714, %v8323
  %v9483 = vmul.f32 %v8715, %v8325
  %v9484 = vmul.f32 %v8716, %v8327
  %v9485 = vmul.f32 %v8717, %v8331
  %v9486 = vmul.f32 %v8718, %v8333
  %v9487 = vmul.f32 %v8719, %v8335
  %v9488 = vmul.f32 %v8720, %v8337
  %v9489 = vmul.f32 %v8721, %v8341
  %v9490 = vmul.f32 %v8722, %v8343
  %v9491 = vmul.f32 %v8723, %v8345
  %v9492 = vmul.f32 %v8724, %v8347
  %v9493 = vmul.f32 %v8725, %v8351
  %v9494 = vmul.f32 %v8726, %v8353
  %v9495 = vmul.f32 %v8727, %v8355
  %v9496 = vmul.f32 %v8728, %v8357
  %v9497 = vmul.f32 %v8729, %v8361
  %v9498 = vmul.f32 %v8730, %v8363
  %v9499 = vmul.f32 %v8731, %v8365
  %v9500 = vmul.f32 %v8732, %v8367
  %v9501 = vmul.f32 %v8733, %v8371
  %v9502 = vmul.f32 %v8734, %v8373
  %v9503 = vmul.f32 %v8735, %v8375
  %v9504 = vmul.f32 %v8736, %v8377
  %v9505 = vmul.f32 %v8737, %v8381
  %v9506 = vmul.f32 %v8738, %v8383
  %v9507 = vmul.f32 %v8739, %v8385
  %v9508 = vmul.f32 %v8740, %v8387
  %v9509 = vmul.f32 %v8741, %v8391
  %v9510 = vmul.f32 %v8742, %v8393
  %v9511 = vmul.f32 %v8743, %v8395
  %v9512 = vmul.f32 %v8744, %v8397
  %v9513 = vmul.f32 %v8745, %v8401
  %v9514 = vmul.f32 %v8746, %v8403
  %v9515 = vmul.f32 %v8747, %v8405
  %v9516 = vmul.f32 %v8748, %v8407
  %v9517 = vmul.f32 %v8749, %v8411
  %v9518 = vmul.f32 %v8750, %v8413
  %v9519 = vmul.f32 %v8751, %v8415
  %v9520 = vmul.f32 %v8752, %v8417
  %v9521 = vmul.f32 %v8753, %v8421
  %v9522 = vmul.f32 %v8754, %v8423
  %v9523 = vmul.f32 %v8755, %v8425
  %v9524 = vmul.f32 %v8756, %v8427
  %v9525 = vmul.f32 %v8757, %v8431
  %v9526 = vmul.f32 %v8758, %v8433
  %v9527 = vmul.f32 %v8759, %v8435
  %v9528 = vmul.f32 %v8760, %v8437
  %v9529 = vmul.f32 %v8761, %v8441
  %v9530 = vmul.f32 %v8762, %v8443
  %v9531 = vmul.f32 %v8763, %v8445
  %v9532 = vmul.f32 %v8764, %v8447
  %v9533 = vmul.f32 %v8765, %v8451
  %v9534 = vmul.f32 %v8766, %v8453
  %v9535 = vmul.f32 %v8767, %v8455
  %v9536 = vmul.f32 %v8768, %v8457
  %v9537 = vmul.f32 %v8769, %v8461
  %v9538 = vmul.f32 %v8770, %v8463
  %v9539 = vmul.f32 %v8771, %v8465
  %v9540 = vmul.f32 %v8772, %v8467
  %v9541 = vmul.f32 %v8773, %v8471
  %v9542 = vmul.f32 %v8774, %v8473
  %v9543 = vmul.f32 %v8775, %v8475
  %v9544 = vmul.f32 %v8776, %v8477
  %v9545 = vmul.f32 %v8777, %v8481
  %v9546 = vmul.f32 %v8778, %v8483
  %v9547 = vmul.f32 %v8779, %v8485
  %v9548 = vmul.f32 %v8780, %v8487
  %v9549 = vmul.f32 %v8781, %v8491
  %v9550 = vmul.f32 %v8782, %v8493
  %v9551 = vmul.f32 %v8783, %v8495
  %v9552 = vmul.f32 %v8784, %v8497
  %v9553 = vmul.f32 %v8785, %v8501
  %v9554 = vmul.f32 %v8786, %v8503
  %v9555 = vmul.f32 %v8787, %v8505
  %v9556 = vmul.f32 %v8788, %v8507
  %v9557 = vmul.f32 %v8789, %v8511
  %v9558 = vmul.f32 %v8790, %v8513
  %v9559 = vmul.f32 %v8791, %v8515
  %v9560 = vmul.f32 %v8792, %v8517
  %v9561 = vmul.f32 %v8793, %v8521
  %v9562 = vmul.f32 %v8794, %v8523
  %v9563 = vmul.f32 %v8795, %v8525
  %v9564 = vmul.f32 %v8796, %v8527
  %v9565 = vmul.f32 %v8797, %v8531
  %v9566 = vmul.f32 %v8798, %v8533
  %v9567 = vmul.f32 %v8799, %v8535
  %v9568 = vmul.f32 %v8800, %v8537
  %v9569 = vmul.f32 %v8801, %v8541
  %v9570 = vmul.f32 %v8802, %v8543
  %v9571 = vmul.f32 %v8803, %v8545
  %v9572 = vmul.f32 %v8804, %v8547
  %v9573 = vadd.f32 %v9317, %v9318
  %9574 = vadd.xlane.f32.xlu0 %v9573
  %v9575 = vpop.xlane.xlu0 %9574
  %v9576 = vadd.f32 %v9319, %v9320
  %9577 = vadd.xlane.f32.xlu0 %v9576
  %v9578 = vpop.xlane.xlu0 %9577
  %v9579 = vadd.f32 %v9321, %v9322
  %9580 = vadd.xlane.f32.xlu0 %v9579
  %v9581 = vpop.xlane.xlu0 %9580
  %v9582 = vadd.f32 %v9323, %v9324
  %9583 = vadd.xlane.f32.xlu0 %v9582
  %v9584 = vpop.xlane.xlu0 %9583
  %v9585 = vadd.f32 %v9325, %v9326
  %9586 = vadd.xlane.f32.xlu0 %v9585
  %v9587 = vpop.xlane.xlu0 %9586
  %v9588 = vadd.f32 %v9327, %v9328
  %9589 = vadd.xlane.f32.xlu0 %v9588
  %v9590 = vpop.xlane.xlu0 %9589
  %v9591 = vadd.f32 %v9329, %v9330
  %9592 = vadd.xlane.f32.xlu0 %v9591
  %v9593 = vpop.xlane.xlu0 %9592
  %v9594 = vadd.f32 %v9331, %v9332
  %9595 = vadd.xlane.f32.xlu0 %v9594
  %v9596 = vpop.xlane.xlu0 %9595
  %v9597 = vadd.f32 %v9333, %v9334
  %9598 = vadd.xlane.f32.xlu0 %v9597
  %v9599 = vpop.xlane.xlu0 %9598
  %v9600 = vadd.f32 %v9335, %v9336
  %9601 = vadd.xlane.f32.xlu0 %v9600
  %v9602 = vpop.xlane.xlu0 %9601
  %v9603 = vadd.f32 %v9337, %v9338
  %9604 = vadd.xlane.f32.xlu0 %v9603
  %v9605 = vpop.xlane.xlu0 %9604
  %v9606 = vadd.f32 %v9339, %v9340
  %9607 = vadd.xlane.f32.xlu0 %v9606
  %v9608 = vpop.xlane.xlu0 %9607
  %v9609 = vadd.f32 %v9341, %v9342
  %9610 = vadd.xlane.f32.xlu0 %v9609
  %v9611 = vpop.xlane.xlu0 %9610
  %v9612 = vadd.f32 %v9343, %v9344
  %9613 = vadd.xlane.f32.xlu0 %v9612
  %v9614 = vpop.xlane.xlu0 %9613
  %v9615 = vadd.f32 %v9345, %v9346
  %9616 = vadd.xlane.f32.xlu0 %v9615
  %v9617 = vpop.xlane.xlu0 %9616
  %v9618 = vadd.f32 %v9347, %v9348
  %9619 = vadd.xlane.f32.xlu0 %v9618
  %v9620 = vpop.xlane.xlu0 %9619
  %v9621 = vadd.f32 %v9349, %v9350
  %9622 = vadd.xlane.f32.xlu0 %v9621
  %v9623 = vpop.xlane.xlu0 %9622
  %v9624 = vadd.f32 %v9351, %v9352
  %9625 = vadd.xlane.f32.xlu0 %v9624
  %v9626 = vpop.xlane.xlu0 %9625
  %v9627 = vadd.f32 %v9353, %v9354
  %9628 = vadd.xlane.f32.xlu0 %v9627
  %v9629 = vpop.xlane.xlu0 %9628
  %v9630 = vadd.f32 %v9355, %v9356
  %9631 = vadd.xlane.f32.xlu0 %v9630
  %v9632 = vpop.xlane.xlu0 %9631
  %v9633 = vadd.f32 %v9357, %v9358
  %9634 = vadd.xlane.f32.xlu0 %v9633
  %v9635 = vpop.xlane.xlu0 %9634
  %v9636 = vadd.f32 %v9359, %v9360
  %9637 = vadd.xlane.f32.xlu0 %v9636
  %v9638 = vpop.xlane.xlu0 %9637
  %v9639 = vadd.f32 %v9361, %v9362
  %9640 = vadd.xlane.f32.xlu0 %v9639
  %v9641 = vpop.xlane.xlu0 %9640
  %v9642 = vadd.f32 %v9363, %v9364
  %9643 = vadd.xlane.f32.xlu0 %v9642
  %v9644 = vpop.xlane.xlu0 %9643
  %v9645 = vadd.f32 %v9365, %v9366
  %9646 = vadd.xlane.f32.xlu0 %v9645
  %v9647 = vpop.xlane.xlu0 %9646
  %v9648 = vadd.f32 %v9367, %v9368
  %9649 = vadd.xlane.f32.xlu0 %v9648
  %v9650 = vpop.xlane.xlu0 %9649
  %v9651 = vadd.f32 %v9369, %v9370
  %9652 = vadd.xlane.f32.xlu0 %v9651
  %v9653 = vpop.xlane.xlu0 %9652
  %v9654 = vadd.f32 %v9371, %v9372
  %9655 = vadd.xlane.f32.xlu0 %v9654
  %v9656 = vpop.xlane.xlu0 %9655
  %v9657 = vadd.f32 %v9373, %v9374
  %9658 = vadd.xlane.f32.xlu0 %v9657
  %v9659 = vpop.xlane.xlu0 %9658
  %v9660 = vadd.f32 %v9375, %v9376
  %9661 = vadd.xlane.f32.xlu0 %v9660
  %v9662 = vpop.xlane.xlu0 %9661
  %v9663 = vadd.f32 %v9377, %v9378
  %9664 = vadd.xlane.f32.xlu0 %v9663
  %v9665 = vpop.xlane.xlu0 %9664
  %v9666 = vadd.f32 %v9379, %v9380
  %9667 = vadd.xlane.f32.xlu0 %v9666
  %v9668 = vpop.xlane.xlu0 %9667
  %v9669 = vadd.f32 %v9381, %v9382
  %9670 = vadd.xlane.f32.xlu0 %v9669
  %v9671 = vpop.xlane.xlu0 %9670
  %v9672 = vadd.f32 %v9383, %v9384
  %9673 = vadd.xlane.f32.xlu0 %v9672
  %v9674 = vpop.xlane.xlu0 %9673
  %v9675 = vadd.f32 %v9385, %v9386
  %9676 = vadd.xlane.f32.xlu0 %v9675
  %v9677 = vpop.xlane.xlu0 %9676
  %v9678 = vadd.f32 %v9387, %v9388
  %9679 = vadd.xlane.f32.xlu0 %v9678
  %v9680 = vpop.xlane.xlu0 %9679
  %v9681 = vadd.f32 %v9389, %v9390
  %9682 = vadd.xlane.f32.xlu0 %v9681
  %v9683 = vpop.xlane.xlu0 %9682
  %v9684 = vadd.f32 %v9391, %v9392
  %9685 = vadd.xlane.f32.xlu0 %v9684
  %v9686 = vpop.xlane.xlu0 %9685
  %v9687 = vadd.f32 %v9393, %v9394
  %9688 = vadd.xlane.f32.xlu0 %v9687
  %v9689 = vpop.xlane.xlu0 %9688
  %v9690 = vadd.f32 %v9395, %v9396
  %9691 = vadd.xlane.f32.xlu0 %v9690
  %v9692 = vpop.xlane.xlu0 %9691
  %v9693 = vadd.f32 %v9397, %v9398
  %9694 = vadd.xlane.f32.xlu0 %v9693
  %v9695 = vpop.xlane.xlu0 %9694
  %v9696 = vadd.f32 %v9399, %v9400
  %9697 = vadd.xlane.f32.xlu0 %v9696
  %v9698 = vpop.xlane.xlu0 %9697
  %v9699 = vadd.f32 %v9401, %v9402
  %9700 = vadd.xlane.f32.xlu0 %v9699
  %v9701 = vpop.xlane.xlu0 %9700
  %v9702 = vadd.f32 %v9403, %v9404
  %9703 = vadd.xlane.f32.xlu0 %v9702
  %v9704 = vpop.xlane.xlu0 %9703
  %v9705 = vadd.f32 %v9405, %v9406
  %9706 = vadd.xlane.f32.xlu0 %v9705
  %v9707 = vpop.xlane.xlu0 %9706
  %v9708 = vadd.f32 %v9407, %v9408
  %9709 = vadd.xlane.f32.xlu0 %v9708
  %v9710 = vpop.xlane.xlu0 %9709
  %v9711 = vadd.f32 %v9409, %v9410
  %9712 = vadd.xlane.f32.xlu0 %v9711
  %v9713 = vpop.xlane.xlu0 %9712
  %v9714 = vadd.f32 %v9411, %v9412
  %9715 = vadd.xlane.f32.xlu0 %v9714
  %v9716 = vpop.xlane.xlu0 %9715
  %v9717 = vadd.f32 %v9413, %v9414
  %9718 = vadd.xlane.f32.xlu0 %v9717
  %v9719 = vpop.xlane.xlu0 %9718
  %v9720 = vadd.f32 %v9415, %v9416
  %9721 = vadd.xlane.f32.xlu0 %v9720
  %v9722 = vpop.xlane.xlu0 %9721
  %v9723 = vadd.f32 %v9417, %v9418
  %9724 = vadd.xlane.f32.xlu0 %v9723
  %v9725 = vpop.xlane.xlu0 %9724
  %v9726 = vadd.f32 %v9419, %v9420
  %9727 = vadd.xlane.f32.xlu0 %v9726
  %v9728 = vpop.xlane.xlu0 %9727
  %v9729 = vadd.f32 %v9421, %v9422
  %9730 = vadd.xlane.f32.xlu0 %v9729
  %v9731 = vpop.xlane.xlu0 %9730
  %v9732 = vadd.f32 %v9423, %v9424
  %9733 = vadd.xlane.f32.xlu0 %v9732
  %v9734 = vpop.xlane.xlu0 %9733
  %v9735 = vadd.f32 %v9425, %v9426
  %9736 = vadd.xlane.f32.xlu0 %v9735
  %v9737 = vpop.xlane.xlu0 %9736
  %v9738 = vadd.f32 %v9427, %v9428
  %9739 = vadd.xlane.f32.xlu0 %v9738
  %v9740 = vpop.xlane.xlu0 %9739
  %v9741 = vadd.f32 %v9429, %v9430
  %9742 = vadd.xlane.f32.xlu0 %v9741
  %v9743 = vpop.xlane.xlu0 %9742
  %v9744 = vadd.f32 %v9431, %v9432
  %9745 = vadd.xlane.f32.xlu0 %v9744
  %v9746 = vpop.xlane.xlu0 %9745
  %v9747 = vadd.f32 %v9433, %v9434
  %9748 = vadd.xlane.f32.xlu0 %v9747
  %v9749 = vpop.xlane.xlu0 %9748
  %v9750 = vadd.f32 %v9435, %v9436
  %9751 = vadd.xlane.f32.xlu0 %v9750
  %v9752 = vpop.xlane.xlu0 %9751
  %v9753 = vadd.f32 %v9437, %v9438
  %9754 = vadd.xlane.f32.xlu0 %v9753
  %v9755 = vpop.xlane.xlu0 %9754
  %v9756 = vadd.f32 %v9439, %v9440
  %9757 = vadd.xlane.f32.xlu0 %v9756
  %v9758 = vpop.xlane.xlu0 %9757
  %v9759 = vadd.f32 %v9441, %v9442
  %9760 = vadd.xlane.f32.xlu0 %v9759
  %v9761 = vpop.xlane.xlu0 %9760
  %v9762 = vadd.f32 %v9443, %v9444
  %9763 = vadd.xlane.f32.xlu0 %v9762
  %v9764 = vpop.xlane.xlu0 %9763
  %v9765 = vadd.f32 %v9445, %v9446
  %9766 = vadd.xlane.f32.xlu0 %v9765
  %v9767 = vpop.xlane.xlu0 %9766
  %v9768 = vadd.f32 %v9447, %v9448
  %9769 = vadd.xlane.f32.xlu0 %v9768
  %v9770 = vpop.xlane.xlu0 %9769
  %v9771 = vadd.f32 %v9449, %v9450
  %9772 = vadd.xlane.f32.xlu0 %v9771
  %v9773 = vpop.xlane.xlu0 %9772
  %v9774 = vadd.f32 %v9451, %v9452
  %9775 = vadd.xlane.f32.xlu0 %v9774
  %v9776 = vpop.xlane.xlu0 %9775
  %v9777 = vadd.f32 %v9453, %v9454
  %9778 = vadd.xlane.f32.xlu0 %v9777
  %v9779 = vpop.xlane.xlu0 %9778
  %v9780 = vadd.f32 %v9455, %v9456
  %9781 = vadd.xlane.f32.xlu0 %v9780
  %v9782 = vpop.xlane.xlu0 %9781
  %v9783 = vadd.f32 %v9457, %v9458
  %9784 = vadd.xlane.f32.xlu0 %v9783
  %v9785 = vpop.xlane.xlu0 %9784
  %v9786 = vadd.f32 %v9459, %v9460
  %9787 = vadd.xlane.f32.xlu0 %v9786
  %v9788 = vpop.xlane.xlu0 %9787
  %v9789 = vadd.f32 %v9461, %v9462
  %9790 = vadd.xlane.f32.xlu0 %v9789
  %v9791 = vpop.xlane.xlu0 %9790
  %v9792 = vadd.f32 %v9463, %v9464
  %9793 = vadd.xlane.f32.xlu0 %v9792
  %v9794 = vpop.xlane.xlu0 %9793
  %v9795 = vadd.f32 %v9465, %v9466
  %9796 = vadd.xlane.f32.xlu0 %v9795
  %v9797 = vpop.xlane.xlu0 %9796
  %v9798 = vadd.f32 %v9467, %v9468
  %9799 = vadd.xlane.f32.xlu0 %v9798
  %v9800 = vpop.xlane.xlu0 %9799
  %v9801 = vadd.f32 %v9469, %v9470
  %9802 = vadd.xlane.f32.xlu0 %v9801
  %v9803 = vpop.xlane.xlu0 %9802
  %v9804 = vadd.f32 %v9471, %v9472
  %9805 = vadd.xlane.f32.xlu0 %v9804
  %v9806 = vpop.xlane.xlu0 %9805
  %v9807 = vadd.f32 %v9473, %v9474
  %9808 = vadd.xlane.f32.xlu0 %v9807
  %v9809 = vpop.xlane.xlu0 %9808
  %v9810 = vadd.f32 %v9475, %v9476
  %9811 = vadd.xlane.f32.xlu0 %v9810
  %v9812 = vpop.xlane.xlu0 %9811
  %v9813 = vadd.f32 %v9477, %v9478
  %9814 = vadd.xlane.f32.xlu0 %v9813
  %v9815 = vpop.xlane.xlu0 %9814
  %v9816 = vadd.f32 %v9479, %v9480
  %9817 = vadd.xlane.f32.xlu0 %v9816
  %v9818 = vpop.xlane.xlu0 %9817
  %v9819 = vadd.f32 %v9481, %v9482
  %9820 = vadd.xlane.f32.xlu0 %v9819
  %v9821 = vpop.xlane.xlu0 %9820
  %v9822 = vadd.f32 %v9483, %v9484
  %9823 = vadd.xlane.f32.xlu0 %v9822
  %v9824 = vpop.xlane.xlu0 %9823
  %v9825 = vadd.f32 %v9485, %v9486
  %9826 = vadd.xlane.f32.xlu0 %v9825
  %v9827 = vpop.xlane.xlu0 %9826
  %v9828 = vadd.f32 %v9487, %v9488
  %9829 = vadd.xlane.f32.xlu0 %v9828
  %v9830 = vpop.xlane.xlu0 %9829
  %v9831 = vadd.f32 %v9489, %v9490
  %9832 = vadd.xlane.f32.xlu0 %v9831
  %v9833 = vpop.xlane.xlu0 %9832
  %v9834 = vadd.f32 %v9491, %v9492
  %9835 = vadd.xlane.f32.xlu0 %v9834
  %v9836 = vpop.xlane.xlu0 %9835
  %v9837 = vadd.f32 %v9493, %v9494
  %9838 = vadd.xlane.f32.xlu0 %v9837
  %v9839 = vpop.xlane.xlu0 %9838
  %v9840 = vadd.f32 %v9495, %v9496
  %9841 = vadd.xlane.f32.xlu0 %v9840
  %v9842 = vpop.xlane.xlu0 %9841
  %v9843 = vadd.f32 %v9497, %v9498
  %9844 = vadd.xlane.f32.xlu0 %v9843
  %v9845 = vpop.xlane.xlu0 %9844
  %v9846 = vadd.f32 %v9499, %v9500
  %9847 = vadd.xlane.f32.xlu0 %v9846
  %v9848 = vpop.xlane.xlu0 %9847
  %v9849 = vadd.f32 %v9501, %v9502
  %9850 = vadd.xlane.f32.xlu0 %v9849
  %v9851 = vpop.xlane.xlu0 %9850
  %v9852 = vadd.f32 %v9503, %v9504
  %9853 = vadd.xlane.f32.xlu0 %v9852
  %v9854 = vpop.xlane.xlu0 %9853
  %v9855 = vadd.f32 %v9505, %v9506
  %9856 = vadd.xlane.f32.xlu0 %v9855
  %v9857 = vpop.xlane.xlu0 %9856
  %v9858 = vadd.f32 %v9507, %v9508
  %9859 = vadd.xlane.f32.xlu0 %v9858
  %v9860 = vpop.xlane.xlu0 %9859
  %v9861 = vadd.f32 %v9509, %v9510
  %9862 = vadd.xlane.f32.xlu0 %v9861
  %v9863 = vpop.xlane.xlu0 %9862
  %v9864 = vadd.f32 %v9511, %v9512
  %9865 = vadd.xlane.f32.xlu0 %v9864
  %v9866 = vpop.xlane.xlu0 %9865
  %v9867 = vadd.f32 %v9513, %v9514
  %9868 = vadd.xlane.f32.xlu0 %v9867
  %v9869 = vpop.xlane.xlu0 %9868
  %v9870 = vadd.f32 %v9515, %v9516
  %9871 = vadd.xlane.f32.xlu0 %v9870
  %v9872 = vpop.xlane.xlu0 %9871
  %v9873 = vadd.f32 %v9517, %v9518
  %9874 = vadd.xlane.f32.xlu0 %v9873
  %v9875 = vpop.xlane.xlu0 %9874
  %v9876 = vadd.f32 %v9519, %v9520
  %9877 = vadd.xlane.f32.xlu0 %v9876
  %v9878 = vpop.xlane.xlu0 %9877
  %v9879 = vadd.f32 %v9521, %v9522
  %9880 = vadd.xlane.f32.xlu0 %v9879
  %v9881 = vpop.xlane.xlu0 %9880
  %v9882 = vadd.f32 %v9523, %v9524
  %9883 = vadd.xlane.f32.xlu0 %v9882
  %v9884 = vpop.xlane.xlu0 %9883
  %v9885 = vadd.f32 %v9525, %v9526
  %9886 = vadd.xlane.f32.xlu0 %v9885
  %v9887 = vpop.xlane.xlu0 %9886
  %v9888 = vadd.f32 %v9527, %v9528
  %9889 = vadd.xlane.f32.xlu0 %v9888
  %v9890 = vpop.xlane.xlu0 %9889
  %v9891 = vadd.f32 %v9529, %v9530
  %9892 = vadd.xlane.f32.xlu0 %v9891
  %v9893 = vpop.xlane.xlu0 %9892
  %v9894 = vadd.f32 %v9531, %v9532
  %9895 = vadd.xlane.f32.xlu0 %v9894
  %v9896 = vpop.xlane.xlu0 %9895
  %v9897 = vadd.f32 %v9533, %v9534
  %9898 = vadd.xlane.f32.xlu0 %v9897
  %v9899 = vpop.xlane.xlu0 %9898
  %v9900 = vadd.f32 %v9535, %v9536
  %9901 = vadd.xlane.f32.xlu0 %v9900
  %v9902 = vpop.xlane.xlu0 %9901
  %v9903 = vadd.f32 %v9537, %v9538
  %9904 = vadd.xlane.f32.xlu0 %v9903
  %v9905 = vpop.xlane.xlu0 %9904
  %v9906 = vadd.f32 %v9539, %v9540
  %9907 = vadd.xlane.f32.xlu0 %v9906
  %v9908 = vpop.xlane.xlu0 %9907
  %v9909 = vadd.f32 %v9541, %v9542
  %9910 = vadd.xlane.f32.xlu0 %v9909
  %v9911 = vpop.xlane.xlu0 %9910
  %v9912 = vadd.f32 %v9543, %v9544
  %9913 = vadd.xlane.f32.xlu0 %v9912
  %v9914 = vpop.xlane.xlu0 %9913
  %v9915 = vadd.f32 %v9545, %v9546
  %9916 = vadd.xlane.f32.xlu0 %v9915
  %v9917 = vpop.xlane.xlu0 %9916
  %v9918 = vadd.f32 %v9547, %v9548
  %9919 = vadd.xlane.f32.xlu0 %v9918
  %v9920 = vpop.xlane.xlu0 %9919
  %v9921 = vadd.f32 %v9549, %v9550
  %9922 = vadd.xlane.f32.xlu0 %v9921
  %v9923 = vpop.xlane.xlu0 %9922
  %v9924 = vadd.f32 %v9551, %v9552
  %9925 = vadd.xlane.f32.xlu0 %v9924
  %v9926 = vpop.xlane.xlu0 %9925
  %v9927 = vadd.f32 %v9553, %v9554
  %9928 = vadd.xlane.f32.xlu0 %v9927
  %v9929 = vpop.xlane.xlu0 %9928
  %v9930 = vadd.f32 %v9555, %v9556
  %9931 = vadd.xlane.f32.xlu0 %v9930
  %v9932 = vpop.xlane.xlu0 %9931
  %v9933 = vadd.f32 %v9557, %v9558
  %9934 = vadd.xlane.f32.xlu0 %v9933
  %v9935 = vpop.xlane.xlu0 %9934
  %v9936 = vadd.f32 %v9559, %v9560
  %9937 = vadd.xlane.f32.xlu0 %v9936
  %v9938 = vpop.xlane.xlu0 %9937
  %v9939 = vadd.f32 %v9561, %v9562
  %9940 = vadd.xlane.f32.xlu0 %v9939
  %v9941 = vpop.xlane.xlu0 %9940
  %v9942 = vadd.f32 %v9563, %v9564
  %9943 = vadd.xlane.f32.xlu0 %v9942
  %v9944 = vpop.xlane.xlu0 %9943
  %v9945 = vadd.f32 %v9565, %v9566
  %9946 = vadd.xlane.f32.xlu0 %v9945
  %v9947 = vpop.xlane.xlu0 %9946
  %v9948 = vadd.f32 %v9567, %v9568
  %9949 = vadd.xlane.f32.xlu0 %v9948
  %v9950 = vpop.xlane.xlu0 %9949
  %v9951 = vadd.f32 %v9569, %v9570
  %9952 = vadd.xlane.f32.xlu0 %v9951
  %v9953 = vpop.xlane.xlu0 %9952
  %v9954 = vadd.f32 %v9571, %v9572
  %9955 = vadd.xlane.f32.xlu0 %v9954
  %v9956 = vpop.xlane.xlu0 %9955
  %v9957 = vmul.f32 %v9575, 0.0051020407
  %v9958 = vmul.f32 %v9578, 0.0051020407
  %v9959 = vmul.f32 %v9581, 0.0051020407
  %v9960 = vmul.f32 %v9584, 0.0051020407
  %v9961 = vmul.f32 %v9587, 0.0051020407
  %v9962 = vmul.f32 %v9590, 0.0051020407
  %v9963 = vmul.f32 %v9593, 0.0051020407
  %v9964 = vmul.f32 %v9596, 0.0051020407
  %v9965 = vmul.f32 %v9599, 0.0051020407
  %v9966 = vmul.f32 %v9602, 0.0051020407
  %v9967 = vmul.f32 %v9605, 0.0051020407
  %v9968 = vmul.f32 %v9608, 0.0051020407
  %v9969 = vmul.f32 %v9611, 0.0051020407
  %v9970 = vmul.f32 %v9614, 0.0051020407
  %v9971 = vmul.f32 %v9617, 0.0051020407
  %v9972 = vmul.f32 %v9620, 0.0051020407
  %v9973 = vmul.f32 %v9623, 0.0051020407
  %v9974 = vmul.f32 %v9626, 0.0051020407
  %v9975 = vmul.f32 %v9629, 0.0051020407
  %v9976 = vmul.f32 %v9632, 0.0051020407
  %v9977 = vmul.f32 %v9635, 0.0051020407
  %v9978 = vmul.f32 %v9638, 0.0051020407
  %v9979 = vmul.f32 %v9641, 0.0051020407
  %v9980 = vmul.f32 %v9644, 0.0051020407
  %v9981 = vmul.f32 %v9647, 0.0051020407
  %v9982 = vmul.f32 %v9650, 0.0051020407
  %v9983 = vmul.f32 %v9653, 0.0051020407
  %v9984 = vmul.f32 %v9656, 0.0051020407
  %v9985 = vmul.f32 %v9659, 0.0051020407
  %v9986 = vmul.f32 %v9662, 0.0051020407
  %v9987 = vmul.f32 %v9665, 0.0051020407
  %v9988 = vmul.f32 %v9668, 0.0051020407
  %v9989 = vmul.f32 %v9671, 0.0051020407
  %v9990 = vmul.f32 %v9674, 0.0051020407
  %v9991 = vmul.f32 %v9677, 0.0051020407
  %v9992 = vmul.f32 %v9680, 0.0051020407
  %v9993 = vmul.f32 %v9683, 0.0051020407
  %v9994 = vmul.f32 %v9686, 0.0051020407
  %v9995 = vmul.f32 %v9689, 0.0051020407
  %v9996 = vmul.f32 %v9692, 0.0051020407
  %v9997 = vmul.f32 %v9695, 0.0051020407
  %v9998 = vmul.f32 %v9698, 0.0051020407
  %v9999 = vmul.f32 %v9701, 0.0051020407
  %v10000 = vmul.f32 %v9704, 0.0051020407
  %v10001 = vmul.f32 %v9707, 0.0051020407
  %v10002 = vmul.f32 %v9710, 0.0051020407
  %v10003 = vmul.f32 %v9713, 0.0051020407
  %v10004 = vmul.f32 %v9716, 0.0051020407
  %v10005 = vmul.f32 %v9719, 0.0051020407
  %v10006 = vmul.f32 %v9722, 0.0051020407
  %v10007 = vmul.f32 %v9725, 0.0051020407
  %v10008 = vmul.f32 %v9728, 0.0051020407
  %v10009 = vmul.f32 %v9731, 0.0051020407
  %v10010 = vmul.f32 %v9734, 0.0051020407
  %v10011 = vmul.f32 %v9737, 0.0051020407
  %v10012 = vmul.f32 %v9740, 0.0051020407
  %v10013 = vmul.f32 %v9743, 0.0051020407
  %v10014 = vmul.f32 %v9746, 0.0051020407
  %v10015 = vmul.f32 %v9749, 0.0051020407
  %v10016 = vmul.f32 %v9752, 0.0051020407
  %v10017 = vmul.f32 %v9755, 0.0051020407
  %v10018 = vmul.f32 %v9758, 0.0051020407
  %v10019 = vmul.f32 %v9761, 0.0051020407
  %v10020 = vmul.f32 %v9764, 0.0051020407
  %v10021 = vmul.f32 %v9767, 0.0051020407
  %v10022 = vmul.f32 %v9770, 0.0051020407
  %v10023 = vmul.f32 %v9773, 0.0051020407
  %v10024 = vmul.f32 %v9776, 0.0051020407
  %v10025 = vmul.f32 %v9779, 0.0051020407
  %v10026 = vmul.f32 %v9782, 0.0051020407
  %v10027 = vmul.f32 %v9785, 0.0051020407
  %v10028 = vmul.f32 %v9788, 0.0051020407
  %v10029 = vmul.f32 %v9791, 0.0051020407
  %v10030 = vmul.f32 %v9794, 0.0051020407
  %v10031 = vmul.f32 %v9797, 0.0051020407
  %v10032 = vmul.f32 %v9800, 0.0051020407
  %v10033 = vmul.f32 %v9803, 0.0051020407
  %v10034 = vmul.f32 %v9806, 0.0051020407
  %v10035 = vmul.f32 %v9809, 0.0051020407
  %v10036 = vmul.f32 %v9812, 0.0051020407
  %v10037 = vmul.f32 %v9815, 0.0051020407
  %v10038 = vmul.f32 %v9818, 0.0051020407
  %v10039 = vmul.f32 %v9821, 0.0051020407
  %v10040 = vmul.f32 %v9824, 0.0051020407
  %v10041 = vmul.f32 %v9827, 0.0051020407
  %v10042 = vmul.f32 %v9830, 0.0051020407
  %v10043 = vmul.f32 %v9833, 0.0051020407
  %v10044 = vmul.f32 %v9836, 0.0051020407
  %v10045 = vmul.f32 %v9839, 0.0051020407
  %v10046 = vmul.f32 %v9842, 0.0051020407
  %v10047 = vmul.f32 %v9845, 0.0051020407
  %v10048 = vmul.f32 %v9848, 0.0051020407
  %v10049 = vmul.f32 %v9851, 0.0051020407
  %v10050 = vmul.f32 %v9854, 0.0051020407
  %v10051 = vmul.f32 %v9857, 0.0051020407
  %v10052 = vmul.f32 %v9860, 0.0051020407
  %v10053 = vmul.f32 %v9863, 0.0051020407
  %v10054 = vmul.f32 %v9866, 0.0051020407
  %v10055 = vmul.f32 %v9869, 0.0051020407
  %v10056 = vmul.f32 %v9872, 0.0051020407
  %v10057 = vmul.f32 %v9875, 0.0051020407
  %v10058 = vmul.f32 %v9878, 0.0051020407
  %v10059 = vmul.f32 %v9881, 0.0051020407
  %v10060 = vmul.f32 %v9884, 0.0051020407
  %v10061 = vmul.f32 %v9887, 0.0051020407
  %v10062 = vmul.f32 %v9890, 0.0051020407
  %v10063 = vmul.f32 %v9893, 0.0051020407
  %v10064 = vmul.f32 %v9896, 0.0051020407
  %v10065 = vmul.f32 %v9899, 0.0051020407
  %v10066 = vmul.f32 %v9902, 0.0051020407
  %v10067 = vmul.f32 %v9905, 0.0051020407
  %v10068 = vmul.f32 %v9908, 0.0051020407
  %v10069 = vmul.f32 %v9911, 0.0051020407
  %v10070 = vmul.f32 %v9914, 0.0051020407
  %v10071 = vmul.f32 %v9917, 0.0051020407
  %v10072 = vmul.f32 %v9920, 0.0051020407
  %v10073 = vmul.f32 %v9923, 0.0051020407
  %v10074 = vmul.f32 %v9926, 0.0051020407
  %v10075 = vmul.f32 %v9929, 0.0051020407
  %v10076 = vmul.f32 %v9932, 0.0051020407
  %v10077 = vmul.f32 %v9935, 0.0051020407
  %v10078 = vmul.f32 %v9938, 0.0051020407
  %v10079 = vmul.f32 %v9941, 0.0051020407
  %v10080 = vmul.f32 %v9944, 0.0051020407
  %v10081 = vmul.f32 %v9947, 0.0051020407
  %v10082 = vmul.f32 %v9950, 0.0051020407
  %v10083 = vmul.f32 %v9953, 0.0051020407
  %v10084 = vmul.f32 %v9956, 0.0051020407
  %v10085 = vmul.f32 %v9189, %v9189
  %v10086 = vmul.f32 %v9190, %v9190
  %v10087 = vmul.f32 %v9191, %v9191
  %v10088 = vmul.f32 %v9192, %v9192
  %v10089 = vmul.f32 %v9193, %v9193
  %v10090 = vmul.f32 %v9194, %v9194
  %v10091 = vmul.f32 %v9195, %v9195
  %v10092 = vmul.f32 %v9196, %v9196
  %v10093 = vmul.f32 %v9197, %v9197
  %v10094 = vmul.f32 %v9198, %v9198
  %v10095 = vmul.f32 %v9199, %v9199
  %v10096 = vmul.f32 %v9200, %v9200
  %v10097 = vmul.f32 %v9201, %v9201
  %v10098 = vmul.f32 %v9202, %v9202
  %v10099 = vmul.f32 %v9203, %v9203
  %v10100 = vmul.f32 %v9204, %v9204
  %v10101 = vmul.f32 %v9205, %v9205
  %v10102 = vmul.f32 %v9206, %v9206
  %v10103 = vmul.f32 %v9207, %v9207
  %v10104 = vmul.f32 %v9208, %v9208
  %v10105 = vmul.f32 %v9209, %v9209
  %v10106 = vmul.f32 %v9210, %v9210
  %v10107 = vmul.f32 %v9211, %v9211
  %v10108 = vmul.f32 %v9212, %v9212
  %v10109 = vmul.f32 %v9213, %v9213
  %v10110 = vmul.f32 %v9214, %v9214
  %v10111 = vmul.f32 %v9215, %v9215
  %v10112 = vmul.f32 %v9216, %v9216
  %v10113 = vmul.f32 %v9217, %v9217
  %v10114 = vmul.f32 %v9218, %v9218
  %v10115 = vmul.f32 %v9219, %v9219
  %v10116 = vmul.f32 %v9220, %v9220
  %v10117 = vmul.f32 %v9221, %v9221
  %v10118 = vmul.f32 %v9222, %v9222
  %v10119 = vmul.f32 %v9223, %v9223
  %v10120 = vmul.f32 %v9224, %v9224
  %v10121 = vmul.f32 %v9225, %v9225
  %v10122 = vmul.f32 %v9226, %v9226
  %v10123 = vmul.f32 %v9227, %v9227
  %v10124 = vmul.f32 %v9228, %v9228
  %v10125 = vmul.f32 %v9229, %v9229
  %v10126 = vmul.f32 %v9230, %v9230
  %v10127 = vmul.f32 %v9231, %v9231
  %v10128 = vmul.f32 %v9232, %v9232
  %v10129 = vmul.f32 %v9233, %v9233
  %v10130 = vmul.f32 %v9234, %v9234
  %v10131 = vmul.f32 %v9235, %v9235
  %v10132 = vmul.f32 %v9236, %v9236
  %v10133 = vmul.f32 %v9237, %v9237
  %v10134 = vmul.f32 %v9238, %v9238
  %v10135 = vmul.f32 %v9239, %v9239
  %v10136 = vmul.f32 %v9240, %v9240
  %v10137 = vmul.f32 %v9241, %v9241
  %v10138 = vmul.f32 %v9242, %v9242
  %v10139 = vmul.f32 %v9243, %v9243
  %v10140 = vmul.f32 %v9244, %v9244
  %v10141 = vmul.f32 %v9245, %v9245
  %v10142 = vmul.f32 %v9246, %v9246
  %v10143 = vmul.f32 %v9247, %v9247
  %v10144 = vmul.f32 %v9248, %v9248
  %v10145 = vmul.f32 %v9249, %v9249
  %v10146 = vmul.f32 %v9250, %v9250
  %v10147 = vmul.f32 %v9251, %v9251
  %v10148 = vmul.f32 %v9252, %v9252
  %v10149 = vmul.f32 %v9253, %v9253
  %v10150 = vmul.f32 %v9254, %v9254
  %v10151 = vmul.f32 %v9255, %v9255
  %v10152 = vmul.f32 %v9256, %v9256
  %v10153 = vmul.f32 %v9257, %v9257
  %v10154 = vmul.f32 %v9258, %v9258
  %v10155 = vmul.f32 %v9259, %v9259
  %v10156 = vmul.f32 %v9260, %v9260
  %v10157 = vmul.f32 %v9261, %v9261
  %v10158 = vmul.f32 %v9262, %v9262
  %v10159 = vmul.f32 %v9263, %v9263
  %v10160 = vmul.f32 %v9264, %v9264
  %v10161 = vmul.f32 %v9265, %v9265
  %v10162 = vmul.f32 %v9266, %v9266
  %v10163 = vmul.f32 %v9267, %v9267
  %v10164 = vmul.f32 %v9268, %v9268
  %v10165 = vmul.f32 %v9269, %v9269
  %v10166 = vmul.f32 %v9270, %v9270
  %v10167 = vmul.f32 %v9271, %v9271
  %v10168 = vmul.f32 %v9272, %v9272
  %v10169 = vmul.f32 %v9273, %v9273
  %v10170 = vmul.f32 %v9274, %v9274
  %v10171 = vmul.f32 %v9275, %v9275
  %v10172 = vmul.f32 %v9276, %v9276
  %v10173 = vmul.f32 %v9277, %v9277
  %v10174 = vmul.f32 %v9278, %v9278
  %v10175 = vmul.f32 %v9279, %v9279
  %v10176 = vmul.f32 %v9280, %v9280
  %v10177 = vmul.f32 %v9281, %v9281
  %v10178 = vmul.f32 %v9282, %v9282
  %v10179 = vmul.f32 %v9283, %v9283
  %v10180 = vmul.f32 %v9284, %v9284
  %v10181 = vmul.f32 %v9285, %v9285
  %v10182 = vmul.f32 %v9286, %v9286
  %v10183 = vmul.f32 %v9287, %v9287
  %v10184 = vmul.f32 %v9288, %v9288
  %v10185 = vmul.f32 %v9289, %v9289
  %v10186 = vmul.f32 %v9290, %v9290
  %v10187 = vmul.f32 %v9291, %v9291
  %v10188 = vmul.f32 %v9292, %v9292
  %v10189 = vmul.f32 %v9293, %v9293
  %v10190 = vmul.f32 %v9294, %v9294
  %v10191 = vmul.f32 %v9295, %v9295
  %v10192 = vmul.f32 %v9296, %v9296
  %v10193 = vmul.f32 %v9297, %v9297
  %v10194 = vmul.f32 %v9298, %v9298
  %v10195 = vmul.f32 %v9299, %v9299
  %v10196 = vmul.f32 %v9300, %v9300
  %v10197 = vmul.f32 %v9301, %v9301
  %v10198 = vmul.f32 %v9302, %v9302
  %v10199 = vmul.f32 %v9303, %v9303
  %v10200 = vmul.f32 %v9304, %v9304
  %v10201 = vmul.f32 %v9305, %v9305
  %v10202 = vmul.f32 %v9306, %v9306
  %v10203 = vmul.f32 %v9307, %v9307
  %v10204 = vmul.f32 %v9308, %v9308
  %v10205 = vmul.f32 %v9309, %v9309
  %v10206 = vmul.f32 %v9310, %v9310
  %v10207 = vmul.f32 %v9311, %v9311
  %v10208 = vmul.f32 %v9312, %v9312
  %v10209 = vmul.f32 %v9313, %v9313
  %v10210 = vmul.f32 %v9314, %v9314
  %v10211 = vmul.f32 %v9315, %v9315
  %v10212 = vmul.f32 %v9316, %v9316
  %v10213 = vsub.f32 %v9957, %v10085
  %v10214 = vsub.f32 %v9958, %v10086
  %v10215 = vsub.f32 %v9959, %v10087
  %v10216 = vsub.f32 %v9960, %v10088
  %v10217 = vsub.f32 %v9961, %v10089
  %v10218 = vsub.f32 %v9962, %v10090
  %v10219 = vsub.f32 %v9963, %v10091
  %v10220 = vsub.f32 %v9964, %v10092
  %v10221 = vsub.f32 %v9965, %v10093
  %v10222 = vsub.f32 %v9966, %v10094
  %v10223 = vsub.f32 %v9967, %v10095
  %v10224 = vsub.f32 %v9968, %v10096
  %v10225 = vsub.f32 %v9969, %v10097
  %v10226 = vsub.f32 %v9970, %v10098
  %v10227 = vsub.f32 %v9971, %v10099
  %v10228 = vsub.f32 %v9972, %v10100
  %v10229 = vsub.f32 %v9973, %v10101
  %v10230 = vsub.f32 %v9974, %v10102
  %v10231 = vsub.f32 %v9975, %v10103
  %v10232 = vsub.f32 %v9976, %v10104
  %v10233 = vsub.f32 %v9977, %v10105
  %v10234 = vsub.f32 %v9978, %v10106
  %v10235 = vsub.f32 %v9979, %v10107
  %v10236 = vsub.f32 %v9980, %v10108
  %v10237 = vsub.f32 %v9981, %v10109
  %v10238 = vsub.f32 %v9982, %v10110
  %v10239 = vsub.f32 %v9983, %v10111
  %v10240 = vsub.f32 %v9984, %v10112
  %v10241 = vsub.f32 %v9985, %v10113
  %v10242 = vsub.f32 %v9986, %v10114
  %v10243 = vsub.f32 %v9987, %v10115
  %v10244 = vsub.f32 %v9988, %v10116
  %v10245 = vsub.f32 %v9989, %v10117
  %v10246 = vsub.f32 %v9990, %v10118
  %v10247 = vsub.f32 %v9991, %v10119
  %v10248 = vsub.f32 %v9992, %v10120
  %v10249 = vsub.f32 %v9993, %v10121
  %v10250 = vsub.f32 %v9994, %v10122
  %v10251 = vsub.f32 %v9995, %v10123
  %v10252 = vsub.f32 %v9996, %v10124
  %v10253 = vsub.f32 %v9997, %v10125
  %v10254 = vsub.f32 %v9998, %v10126
  %v10255 = vsub.f32 %v9999, %v10127
  %v10256 = vsub.f32 %v10000, %v10128
  %v10257 = vsub.f32 %v10001, %v10129
  %v10258 = vsub.f32 %v10002, %v10130
  %v10259 = vsub.f32 %v10003, %v10131
  %v10260 = vsub.f32 %v10004, %v10132
  %v10261 = vsub.f32 %v10005, %v10133
  %v10262 = vsub.f32 %v10006, %v10134
  %v10263 = vsub.f32 %v10007, %v10135
  %v10264 = vsub.f32 %v10008, %v10136
  %v10265 = vsub.f32 %v10009, %v10137
  %v10266 = vsub.f32 %v10010, %v10138
  %v10267 = vsub.f32 %v10011, %v10139
  %v10268 = vsub.f32 %v10012, %v10140
  %v10269 = vsub.f32 %v10013, %v10141
  %v10270 = vsub.f32 %v10014, %v10142
  %v10271 = vsub.f32 %v10015, %v10143
  %v10272 = vsub.f32 %v10016, %v10144
  %v10273 = vsub.f32 %v10017, %v10145
  %v10274 = vsub.f32 %v10018, %v10146
  %v10275 = vsub.f32 %v10019, %v10147
  %v10276 = vsub.f32 %v10020, %v10148
  %v10277 = vsub.f32 %v10021, %v10149
  %v10278 = vsub.f32 %v10022, %v10150
  %v10279 = vsub.f32 %v10023, %v10151
  %v10280 = vsub.f32 %v10024, %v10152
  %v10281 = vsub.f32 %v10025, %v10153
  %v10282 = vsub.f32 %v10026, %v10154
  %v10283 = vsub.f32 %v10027, %v10155
  %v10284 = vsub.f32 %v10028, %v10156
  %v10285 = vsub.f32 %v10029, %v10157
  %v10286 = vsub.f32 %v10030, %v10158
  %v10287 = vsub.f32 %v10031, %v10159
  %v10288 = vsub.f32 %v10032, %v10160
  %v10289 = vsub.f32 %v10033, %v10161
  %v10290 = vsub.f32 %v10034, %v10162
  %v10291 = vsub.f32 %v10035, %v10163
  %v10292 = vsub.f32 %v10036, %v10164
  %v10293 = vsub.f32 %v10037, %v10165
  %v10294 = vsub.f32 %v10038, %v10166
  %v10295 = vsub.f32 %v10039, %v10167
  %v10296 = vsub.f32 %v10040, %v10168
  %v10297 = vsub.f32 %v10041, %v10169
  %v10298 = vsub.f32 %v10042, %v10170
  %v10299 = vsub.f32 %v10043, %v10171
  %v10300 = vsub.f32 %v10044, %v10172
  %v10301 = vsub.f32 %v10045, %v10173
  %v10302 = vsub.f32 %v10046, %v10174
  %v10303 = vsub.f32 %v10047, %v10175
  %v10304 = vsub.f32 %v10048, %v10176
  %v10305 = vsub.f32 %v10049, %v10177
  %v10306 = vsub.f32 %v10050, %v10178
  %v10307 = vsub.f32 %v10051, %v10179
  %v10308 = vsub.f32 %v10052, %v10180
  %v10309 = vsub.f32 %v10053, %v10181
  %v10310 = vsub.f32 %v10054, %v10182
  %v10311 = vsub.f32 %v10055, %v10183
  %v10312 = vsub.f32 %v10056, %v10184
  %v10313 = vsub.f32 %v10057, %v10185
  %v10314 = vsub.f32 %v10058, %v10186
  %v10315 = vsub.f32 %v10059, %v10187
  %v10316 = vsub.f32 %v10060, %v10188
  %v10317 = vsub.f32 %v10061, %v10189
  %v10318 = vsub.f32 %v10062, %v10190
  %v10319 = vsub.f32 %v10063, %v10191
  %v10320 = vsub.f32 %v10064, %v10192
  %v10321 = vsub.f32 %v10065, %v10193
  %v10322 = vsub.f32 %v10066, %v10194
  %v10323 = vsub.f32 %v10067, %v10195
  %v10324 = vsub.f32 %v10068, %v10196
  %v10325 = vsub.f32 %v10069, %v10197
  %v10326 = vsub.f32 %v10070, %v10198
  %v10327 = vsub.f32 %v10071, %v10199
  %v10328 = vsub.f32 %v10072, %v10200
  %v10329 = vsub.f32 %v10073, %v10201
  %v10330 = vsub.f32 %v10074, %v10202
  %v10331 = vsub.f32 %v10075, %v10203
  %v10332 = vsub.f32 %v10076, %v10204
  %v10333 = vsub.f32 %v10077, %v10205
  %v10334 = vsub.f32 %v10078, %v10206
  %v10335 = vsub.f32 %v10079, %v10207
  %v10336 = vsub.f32 %v10080, %v10208
  %v10337 = vsub.f32 %v10081, %v10209
  %v10338 = vsub.f32 %v10082, %v10210
  %v10339 = vsub.f32 %v10083, %v10211
  %v10340 = vsub.f32 %v10084, %v10212
  %v10341 = vmax.f32 %v10213, 0.0
  %v10342 = vmax.f32 %v10214, 0.0
  %v10343 = vmax.f32 %v10215, 0.0
  %v10344 = vmax.f32 %v10216, 0.0
  %v10345 = vmax.f32 %v10217, 0.0
  %v10346 = vmax.f32 %v10218, 0.0
  %v10347 = vmax.f32 %v10219, 0.0
  %v10348 = vmax.f32 %v10220, 0.0
  %v10349 = vmax.f32 %v10221, 0.0
  %v10350 = vmax.f32 %v10222, 0.0
  %v10351 = vmax.f32 %v10223, 0.0
  %v10352 = vmax.f32 %v10224, 0.0
  %v10353 = vmax.f32 %v10225, 0.0
  %v10354 = vmax.f32 %v10226, 0.0
  %v10355 = vmax.f32 %v10227, 0.0
  %v10356 = vmax.f32 %v10228, 0.0
  %v10357 = vmax.f32 %v10229, 0.0
  %v10358 = vmax.f32 %v10230, 0.0
  %v10359 = vmax.f32 %v10231, 0.0
  %v10360 = vmax.f32 %v10232, 0.0
  %v10361 = vmax.f32 %v10233, 0.0
  %v10362 = vmax.f32 %v10234, 0.0
  %v10363 = vmax.f32 %v10235, 0.0
  %v10364 = vmax.f32 %v10236, 0.0
  %v10365 = vmax.f32 %v10237, 0.0
  %v10366 = vmax.f32 %v10238, 0.0
  %v10367 = vmax.f32 %v10239, 0.0
  %v10368 = vmax.f32 %v10240, 0.0
  %v10369 = vmax.f32 %v10241, 0.0
  %v10370 = vmax.f32 %v10242, 0.0
  %v10371 = vmax.f32 %v10243, 0.0
  %v10372 = vmax.f32 %v10244, 0.0
  %v10373 = vmax.f32 %v10245, 0.0
  %v10374 = vmax.f32 %v10246, 0.0
  %v10375 = vmax.f32 %v10247, 0.0
  %v10376 = vmax.f32 %v10248, 0.0
  %v10377 = vmax.f32 %v10249, 0.0
  %v10378 = vmax.f32 %v10250, 0.0
  %v10379 = vmax.f32 %v10251, 0.0
  %v10380 = vmax.f32 %v10252, 0.0
  %v10381 = vmax.f32 %v10253, 0.0
  %v10382 = vmax.f32 %v10254, 0.0
  %v10383 = vmax.f32 %v10255, 0.0
  %v10384 = vmax.f32 %v10256, 0.0
  %v10385 = vmax.f32 %v10257, 0.0
  %v10386 = vmax.f32 %v10258, 0.0
  %v10387 = vmax.f32 %v10259, 0.0
  %v10388 = vmax.f32 %v10260, 0.0
  %v10389 = vmax.f32 %v10261, 0.0
  %v10390 = vmax.f32 %v10262, 0.0
  %v10391 = vmax.f32 %v10263, 0.0
  %v10392 = vmax.f32 %v10264, 0.0
  %v10393 = vmax.f32 %v10265, 0.0
  %v10394 = vmax.f32 %v10266, 0.0
  %v10395 = vmax.f32 %v10267, 0.0
  %v10396 = vmax.f32 %v10268, 0.0
  %v10397 = vmax.f32 %v10269, 0.0
  %v10398 = vmax.f32 %v10270, 0.0
  %v10399 = vmax.f32 %v10271, 0.0
  %v10400 = vmax.f32 %v10272, 0.0
  %v10401 = vmax.f32 %v10273, 0.0
  %v10402 = vmax.f32 %v10274, 0.0
  %v10403 = vmax.f32 %v10275, 0.0
  %v10404 = vmax.f32 %v10276, 0.0
  %v10405 = vmax.f32 %v10277, 0.0
  %v10406 = vmax.f32 %v10278, 0.0
  %v10407 = vmax.f32 %v10279, 0.0
  %v10408 = vmax.f32 %v10280, 0.0
  %v10409 = vmax.f32 %v10281, 0.0
  %v10410 = vmax.f32 %v10282, 0.0
  %v10411 = vmax.f32 %v10283, 0.0
  %v10412 = vmax.f32 %v10284, 0.0
  %v10413 = vmax.f32 %v10285, 0.0
  %v10414 = vmax.f32 %v10286, 0.0
  %v10415 = vmax.f32 %v10287, 0.0
  %v10416 = vmax.f32 %v10288, 0.0
  %v10417 = vmax.f32 %v10289, 0.0
  %v10418 = vmax.f32 %v10290, 0.0
  %v10419 = vmax.f32 %v10291, 0.0
  %v10420 = vmax.f32 %v10292, 0.0
  %v10421 = vmax.f32 %v10293, 0.0
  %v10422 = vmax.f32 %v10294, 0.0
  %v10423 = vmax.f32 %v10295, 0.0
  %v10424 = vmax.f32 %v10296, 0.0
  %v10425 = vmax.f32 %v10297, 0.0
  %v10426 = vmax.f32 %v10298, 0.0
  %v10427 = vmax.f32 %v10299, 0.0
  %v10428 = vmax.f32 %v10300, 0.0
  %v10429 = vmax.f32 %v10301, 0.0
  %v10430 = vmax.f32 %v10302, 0.0
  %v10431 = vmax.f32 %v10303, 0.0
  %v10432 = vmax.f32 %v10304, 0.0
  %v10433 = vmax.f32 %v10305, 0.0
  %v10434 = vmax.f32 %v10306, 0.0
  %v10435 = vmax.f32 %v10307, 0.0
  %v10436 = vmax.f32 %v10308, 0.0
  %v10437 = vmax.f32 %v10309, 0.0
  %v10438 = vmax.f32 %v10310, 0.0
  %v10439 = vmax.f32 %v10311, 0.0
  %v10440 = vmax.f32 %v10312, 0.0
  %v10441 = vmax.f32 %v10313, 0.0
  %v10442 = vmax.f32 %v10314, 0.0
  %v10443 = vmax.f32 %v10315, 0.0
  %v10444 = vmax.f32 %v10316, 0.0
  %v10445 = vmax.f32 %v10317, 0.0
  %v10446 = vmax.f32 %v10318, 0.0
  %v10447 = vmax.f32 %v10319, 0.0
  %v10448 = vmax.f32 %v10320, 0.0
  %v10449 = vmax.f32 %v10321, 0.0
  %v10450 = vmax.f32 %v10322, 0.0
  %v10451 = vmax.f32 %v10323, 0.0
  %v10452 = vmax.f32 %v10324, 0.0
  %v10453 = vmax.f32 %v10325, 0.0
  %v10454 = vmax.f32 %v10326, 0.0
  %v10455 = vmax.f32 %v10327, 0.0
  %v10456 = vmax.f32 %v10328, 0.0
  %v10457 = vmax.f32 %v10329, 0.0
  %v10458 = vmax.f32 %v10330, 0.0
  %v10459 = vmax.f32 %v10331, 0.0
  %v10460 = vmax.f32 %v10332, 0.0
  %v10461 = vmax.f32 %v10333, 0.0
  %v10462 = vmax.f32 %v10334, 0.0
  %v10463 = vmax.f32 %v10335, 0.0
  %v10464 = vmax.f32 %v10336, 0.0
  %v10465 = vmax.f32 %v10337, 0.0
  %v10466 = vmax.f32 %v10338, 0.0
  %v10467 = vmax.f32 %v10339, 0.0
  %v10468 = vmax.f32 %v10340, 0.0
  %v10469 = vld [vmem:[%s6] sm:$0xff]
  %v10470 = vld [vmem:[%s6 + $0x8] sm:$0xff]
  %v10471 = vld [vmem:[%s6 + $0x10] sm:$0xff]
  %v10472 = vld [vmem:[%s6 + $0x18] sm:$0xff]
  %v10473 = vld [vmem:[%s6 + $0x20] sm:$0xff]
  %v10474 = vld [vmem:[%s6 + $0x28] sm:$0xff]
  %v10475 = vld [vmem:[%s6 + $0x30] sm:$0xff]
  %v10476 = vld [vmem:[%s6 + $0x38] sm:$0xff]
  %v10477 = vld [vmem:[%s6 + $0x40] sm:$0xff]
  %v10478 = vld [vmem:[%s6 + $0x48] sm:$0xff]
  %v10479 = vld [vmem:[%s6 + $0x50] sm:$0xff]
  %v10480 = vld [vmem:[%s6 + $0x58] sm:$0xff]
  %v10481 = vld [vmem:[%s6 + $0x60] sm:$0xff]
  %v10482 = vld [vmem:[%s6 + $0x68] sm:$0xff]
  %v10483 = vld [vmem:[%s6 + $0x70] sm:$0xff]
  %v10484 = vld [vmem:[%s6 + $0x78] sm:$0xff]
  %v10485 = vld [vmem:[%s6 + $0x80] sm:$0xff]
  %v10486 = vld [vmem:[%s6 + $0x88] sm:$0xff]
  %v10487 = vld [vmem:[%s6 + $0x90] sm:$0xff]
  %v10488 = vld [vmem:[%s6 + $0x98] sm:$0xff]
  %v10489 = vld [vmem:[%s6 + $0xa0] sm:$0xff]
  %v10490 = vld [vmem:[%s6 + $0xa8] sm:$0xff]
  %v10491 = vld [vmem:[%s6 + $0xb0] sm:$0xff]
  %v10492 = vld [vmem:[%s6 + $0xb8] sm:$0xff]
  %v10493 = vld [vmem:[%s6 + $0xc0] sm:$0xff]
  %v10494 = vld [vmem:[%s6 + $0xc8] sm:$0xff]
  %v10495 = vld [vmem:[%s6 + $0xd0] sm:$0xff]
  %v10496 = vld [vmem:[%s6 + $0xd8] sm:$0xff]
  %v10497 = vld [vmem:[%s6 + $0xe0] sm:$0xff]
  %v10498 = vld [vmem:[%s6 + $0xe8] sm:$0xff]
  %v10499 = vld [vmem:[%s6 + $0xf0] sm:$0xff]
  %v10500 = vld [vmem:[%s6 + $0xf8] sm:$0xff]
  %v10501 = vld [vmem:[%s6 + $0x100] sm:$0xff]
  %v10502 = vld [vmem:[%s6 + $0x108] sm:$0xff]
  %v10503 = vld [vmem:[%s6 + $0x110] sm:$0xff]
  %v10504 = vld [vmem:[%s6 + $0x118] sm:$0xff]
  %v10505 = vld [vmem:[%s6 + $0x120] sm:$0xff]
  %v10506 = vld [vmem:[%s6 + $0x128] sm:$0xff]
  %v10507 = vld [vmem:[%s6 + $0x130] sm:$0xff]
  %v10508 = vld [vmem:[%s6 + $0x138] sm:$0xff]
  %v10509 = vld [vmem:[%s6 + $0x140] sm:$0xff]
  %v10510 = vld [vmem:[%s6 + $0x148] sm:$0xff]
  %v10511 = vld [vmem:[%s6 + $0x150] sm:$0xff]
  %v10512 = vld [vmem:[%s6 + $0x158] sm:$0xff]
  %v10513 = vld [vmem:[%s6 + $0x160] sm:$0xff]
  %v10514 = vld [vmem:[%s6 + $0x168] sm:$0xff]
  %v10515 = vld [vmem:[%s6 + $0x170] sm:$0xff]
  %v10516 = vld [vmem:[%s6 + $0x178] sm:$0xff]
  %v10517 = vld [vmem:[%s6 + $0x180] sm:$0xff]
  %v10518 = vld [vmem:[%s6 + $0x188] sm:$0xff]
  %v10519 = vld [vmem:[%s6 + $0x190] sm:$0xff]
  %v10520 = vld [vmem:[%s6 + $0x198] sm:$0xff]
  %v10521 = vld [vmem:[%s6 + $0x1a0] sm:$0xff]
  %v10522 = vld [vmem:[%s6 + $0x1a8] sm:$0xff]
  %v10523 = vld [vmem:[%s6 + $0x1b0] sm:$0xff]
  %v10524 = vld [vmem:[%s6 + $0x1b8] sm:$0xff]
  %v10525 = vld [vmem:[%s6 + $0x1c0] sm:$0xff]
  %v10526 = vld [vmem:[%s6 + $0x1c8] sm:$0xff]
  %v10527 = vld [vmem:[%s6 + $0x1d0] sm:$0xff]
  %v10528 = vld [vmem:[%s6 + $0x1d8] sm:$0xff]
  %v10529 = vld [vmem:[%s6 + $0x1e0] sm:$0xff]
  %v10530 = vld [vmem:[%s6 + $0x1e8] sm:$0xff]
  %v10531 = vld [vmem:[%s6 + $0x1f0] sm:$0xff]
  %v10532 = vld [vmem:[%s6 + $0x1f8] sm:$0xff]
  %v10533 = vld [vmem:[%s6 + $0x200] sm:$0xff]
  %v10534 = vld [vmem:[%s6 + $0x208] sm:$0xff]
  %v10535 = vld [vmem:[%s6 + $0x210] sm:$0xff]
  %v10536 = vld [vmem:[%s6 + $0x218] sm:$0xff]
  %v10537 = vld [vmem:[%s6 + $0x220] sm:$0xff]
  %v10538 = vld [vmem:[%s6 + $0x228] sm:$0xff]
  %v10539 = vld [vmem:[%s6 + $0x230] sm:$0xff]
  %v10540 = vld [vmem:[%s6 + $0x238] sm:$0xff]
  %v10541 = vld [vmem:[%s6 + $0x240] sm:$0xff]
  %v10542 = vld [vmem:[%s6 + $0x248] sm:$0xff]
  %v10543 = vld [vmem:[%s6 + $0x250] sm:$0xff]
  %v10544 = vld [vmem:[%s6 + $0x258] sm:$0xff]
  %v10545 = vld [vmem:[%s6 + $0x260] sm:$0xff]
  %v10546 = vld [vmem:[%s6 + $0x268] sm:$0xff]
  %v10547 = vld [vmem:[%s6 + $0x270] sm:$0xff]
  %v10548 = vld [vmem:[%s6 + $0x278] sm:$0xff]
  %v10549 = vld [vmem:[%s6 + $0x280] sm:$0xff]
  %v10550 = vld [vmem:[%s6 + $0x288] sm:$0xff]
  %v10551 = vld [vmem:[%s6 + $0x290] sm:$0xff]
  %v10552 = vld [vmem:[%s6 + $0x298] sm:$0xff]
  %v10553 = vld [vmem:[%s6 + $0x2a0] sm:$0xff]
  %v10554 = vld [vmem:[%s6 + $0x2a8] sm:$0xff]
  %v10555 = vld [vmem:[%s6 + $0x2b0] sm:$0xff]
  %v10556 = vld [vmem:[%s6 + $0x2b8] sm:$0xff]
  %v10557 = vld [vmem:[%s6 + $0x2c0] sm:$0xff]
  %v10558 = vld [vmem:[%s6 + $0x2c8] sm:$0xff]
  %v10559 = vld [vmem:[%s6 + $0x2d0] sm:$0xff]
  %v10560 = vld [vmem:[%s6 + $0x2d8] sm:$0xff]
  %v10561 = vld [vmem:[%s6 + $0x2e0] sm:$0xff]
  %v10562 = vld [vmem:[%s6 + $0x2e8] sm:$0xff]
  %v10563 = vld [vmem:[%s6 + $0x2f0] sm:$0xff]
  %v10564 = vld [vmem:[%s6 + $0x2f8] sm:$0xff]
  %v10565 = vld [vmem:[%s6 + $0x300] sm:$0xff]
  %v10566 = vld [vmem:[%s6 + $0x308] sm:$0xff]
  %v10567 = vld [vmem:[%s6 + $0x310] sm:$0xff]
  %v10568 = vld [vmem:[%s6 + $0x318] sm:$0xff]
  %v10569 = vld [vmem:[%s6 + $0x320] sm:$0xff]
  %v10570 = vld [vmem:[%s6 + $0x328] sm:$0xff]
  %v10571 = vld [vmem:[%s6 + $0x330] sm:$0xff]
  %v10572 = vld [vmem:[%s6 + $0x338] sm:$0xff]
  %v10573 = vld [vmem:[%s6 + $0x340] sm:$0xff]
  %v10574 = vld [vmem:[%s6 + $0x348] sm:$0xff]
  %v10575 = vld [vmem:[%s6 + $0x350] sm:$0xff]
  %v10576 = vld [vmem:[%s6 + $0x358] sm:$0xff]
  %v10577 = vld [vmem:[%s6 + $0x360] sm:$0xff]
  %v10578 = vld [vmem:[%s6 + $0x368] sm:$0xff]
  %v10579 = vld [vmem:[%s6 + $0x370] sm:$0xff]
  %v10580 = vld [vmem:[%s6 + $0x378] sm:$0xff]
  %v10581 = vld [vmem:[%s6 + $0x380] sm:$0xff]
  %v10582 = vld [vmem:[%s6 + $0x388] sm:$0xff]
  %v10583 = vld [vmem:[%s6 + $0x390] sm:$0xff]
  %v10584 = vld [vmem:[%s6 + $0x398] sm:$0xff]
  %v10585 = vld [vmem:[%s6 + $0x3a0] sm:$0xff]
  %v10586 = vld [vmem:[%s6 + $0x3a8] sm:$0xff]
  %v10587 = vld [vmem:[%s6 + $0x3b0] sm:$0xff]
  %v10588 = vld [vmem:[%s6 + $0x3b8] sm:$0xff]
  %v10589 = vld [vmem:[%s6 + $0x3c0] sm:$0xff]
  %v10590 = vld [vmem:[%s6 + $0x3c8] sm:$0xff]
  %v10591 = vld [vmem:[%s6 + $0x3d0] sm:$0xff]
  %v10592 = vld [vmem:[%s6 + $0x3d8] sm:$0xff]
  %v10593 = vld [vmem:[%s6 + $0x3e0] sm:$0xff]
  %v10594 = vld [vmem:[%s6 + $0x3e8] sm:$0xff]
  %v10595 = vld [vmem:[%s6 + $0x3f0] sm:$0xff]
  %v10596 = vld [vmem:[%s6 + $0x3f8] sm:$0xff]
  %v10597 = vadd.f32 %v10341, 1e-05
  %v10598 = vadd.f32 %v10342, 1e-05
  %v10599 = vadd.f32 %v10343, 1e-05
  %v10600 = vadd.f32 %v10344, 1e-05
  %v10601 = vadd.f32 %v10345, 1e-05
  %v10602 = vadd.f32 %v10346, 1e-05
  %v10603 = vadd.f32 %v10347, 1e-05
  %v10604 = vadd.f32 %v10348, 1e-05
  %v10605 = vadd.f32 %v10349, 1e-05
  %v10606 = vadd.f32 %v10350, 1e-05
  %v10607 = vadd.f32 %v10351, 1e-05
  %v10608 = vadd.f32 %v10352, 1e-05
  %v10609 = vadd.f32 %v10353, 1e-05
  %v10610 = vadd.f32 %v10354, 1e-05
  %v10611 = vadd.f32 %v10355, 1e-05
  %v10612 = vadd.f32 %v10356, 1e-05
  %v10613 = vadd.f32 %v10357, 1e-05
  %v10614 = vadd.f32 %v10358, 1e-05
  %v10615 = vadd.f32 %v10359, 1e-05
  %v10616 = vadd.f32 %v10360, 1e-05
  %v10617 = vadd.f32 %v10361, 1e-05
  %v10618 = vadd.f32 %v10362, 1e-05
  %v10619 = vadd.f32 %v10363, 1e-05
  %v10620 = vadd.f32 %v10364, 1e-05
  %v10621 = vadd.f32 %v10365, 1e-05
  %v10622 = vadd.f32 %v10366, 1e-05
  %v10623 = vadd.f32 %v10367, 1e-05
  %v10624 = vadd.f32 %v10368, 1e-05
  %v10625 = vadd.f32 %v10369, 1e-05
  %v10626 = vadd.f32 %v10370, 1e-05
  %v10627 = vadd.f32 %v10371, 1e-05
  %v10628 = vadd.f32 %v10372, 1e-05
  %v10629 = vadd.f32 %v10373, 1e-05
  %v10630 = vadd.f32 %v10374, 1e-05
  %v10631 = vadd.f32 %v10375, 1e-05
  %v10632 = vadd.f32 %v10376, 1e-05
  %v10633 = vadd.f32 %v10377, 1e-05
  %v10634 = vadd.f32 %v10378, 1e-05
  %v10635 = vadd.f32 %v10379, 1e-05
  %v10636 = vadd.f32 %v10380, 1e-05
  %v10637 = vadd.f32 %v10381, 1e-05
  %v10638 = vadd.f32 %v10382, 1e-05
  %v10639 = vadd.f32 %v10383, 1e-05
  %v10640 = vadd.f32 %v10384, 1e-05
  %v10641 = vadd.f32 %v10385, 1e-05
  %v10642 = vadd.f32 %v10386, 1e-05
  %v10643 = vadd.f32 %v10387, 1e-05
  %v10644 = vadd.f32 %v10388, 1e-05
  %v10645 = vadd.f32 %v10389, 1e-05
  %v10646 = vadd.f32 %v10390, 1e-05
  %v10647 = vadd.f32 %v10391, 1e-05
  %v10648 = vadd.f32 %v10392, 1e-05
  %v10649 = vadd.f32 %v10393, 1e-05
  %v10650 = vadd.f32 %v10394, 1e-05
  %v10651 = vadd.f32 %v10395, 1e-05
  %v10652 = vadd.f32 %v10396, 1e-05
  %v10653 = vadd.f32 %v10397, 1e-05
  %v10654 = vadd.f32 %v10398, 1e-05
  %v10655 = vadd.f32 %v10399, 1e-05
  %v10656 = vadd.f32 %v10400, 1e-05
  %v10657 = vadd.f32 %v10401, 1e-05
  %v10658 = vadd.f32 %v10402, 1e-05
  %v10659 = vadd.f32 %v10403, 1e-05
  %v10660 = vadd.f32 %v10404, 1e-05
  %v10661 = vadd.f32 %v10405, 1e-05
  %v10662 = vadd.f32 %v10406, 1e-05
  %v10663 = vadd.f32 %v10407, 1e-05
  %v10664 = vadd.f32 %v10408, 1e-05
  %v10665 = vadd.f32 %v10409, 1e-05
  %v10666 = vadd.f32 %v10410, 1e-05
  %v10667 = vadd.f32 %v10411, 1e-05
  %v10668 = vadd.f32 %v10412, 1e-05
  %v10669 = vadd.f32 %v10413, 1e-05
  %v10670 = vadd.f32 %v10414, 1e-05
  %v10671 = vadd.f32 %v10415, 1e-05
  %v10672 = vadd.f32 %v10416, 1e-05
  %v10673 = vadd.f32 %v10417, 1e-05
  %v10674 = vadd.f32 %v10418, 1e-05
  %v10675 = vadd.f32 %v10419, 1e-05
  %v10676 = vadd.f32 %v10420, 1e-05
  %v10677 = vadd.f32 %v10421, 1e-05
  %v10678 = vadd.f32 %v10422, 1e-05
  %v10679 = vadd.f32 %v10423, 1e-05
  %v10680 = vadd.f32 %v10424, 1e-05
  %v10681 = vadd.f32 %v10425, 1e-05
  %v10682 = vadd.f32 %v10426, 1e-05
  %v10683 = vadd.f32 %v10427, 1e-05
  %v10684 = vadd.f32 %v10428, 1e-05
  %v10685 = vadd.f32 %v10429, 1e-05
  %v10686 = vadd.f32 %v10430, 1e-05
  %v10687 = vadd.f32 %v10431, 1e-05
  %v10688 = vadd.f32 %v10432, 1e-05
  %v10689 = vadd.f32 %v10433, 1e-05
  %v10690 = vadd.f32 %v10434, 1e-05
  %v10691 = vadd.f32 %v10435, 1e-05
  %v10692 = vadd.f32 %v10436, 1e-05
  %v10693 = vadd.f32 %v10437, 1e-05
  %v10694 = vadd.f32 %v10438, 1e-05
  %v10695 = vadd.f32 %v10439, 1e-05
  %v10696 = vadd.f32 %v10440, 1e-05
  %v10697 = vadd.f32 %v10441, 1e-05
  %v10698 = vadd.f32 %v10442, 1e-05
  %v10699 = vadd.f32 %v10443, 1e-05
  %v10700 = vadd.f32 %v10444, 1e-05
  %v10701 = vadd.f32 %v10445, 1e-05
  %v10702 = vadd.f32 %v10446, 1e-05
  %v10703 = vadd.f32 %v10447, 1e-05
  %v10704 = vadd.f32 %v10448, 1e-05
  %v10705 = vadd.f32 %v10449, 1e-05
  %v10706 = vadd.f32 %v10450, 1e-05
  %v10707 = vadd.f32 %v10451, 1e-05
  %v10708 = vadd.f32 %v10452, 1e-05
  %v10709 = vadd.f32 %v10453, 1e-05
  %v10710 = vadd.f32 %v10454, 1e-05
  %v10711 = vadd.f32 %v10455, 1e-05
  %v10712 = vadd.f32 %v10456, 1e-05
  %v10713 = vadd.f32 %v10457, 1e-05
  %v10714 = vadd.f32 %v10458, 1e-05
  %v10715 = vadd.f32 %v10459, 1e-05
  %v10716 = vadd.f32 %v10460, 1e-05
  %v10717 = vadd.f32 %v10461, 1e-05
  %v10718 = vadd.f32 %v10462, 1e-05
  %v10719 = vadd.f32 %v10463, 1e-05
  %v10720 = vadd.f32 %v10464, 1e-05
  %v10721 = vadd.f32 %v10465, 1e-05
  %v10722 = vadd.f32 %v10466, 1e-05
  %v10723 = vadd.f32 %v10467, 1e-05
  %v10724 = vadd.f32 %v10468, 1e-05
  %v10725 = vrsqrt.pop %v10597
  %v10726 = vrsqrt.pop %v10598
  %v10727 = vrsqrt.pop %v10599
  %v10728 = vrsqrt.pop %v10600
  %v10729 = vrsqrt.pop %v10601
  %v10730 = vrsqrt.pop %v10602
  %v10731 = vrsqrt.pop %v10603
  %v10732 = vrsqrt.pop %v10604
  %v10733 = vrsqrt.pop %v10605
  %v10734 = vrsqrt.pop %v10606
  %v10735 = vrsqrt.pop %v10607
  %v10736 = vrsqrt.pop %v10608
  %v10737 = vrsqrt.pop %v10609
  %v10738 = vrsqrt.pop %v10610
  %v10739 = vrsqrt.pop %v10611
  %v10740 = vrsqrt.pop %v10612
  %v10741 = vrsqrt.pop %v10613
  %v10742 = vrsqrt.pop %v10614
  %v10743 = vrsqrt.pop %v10615
  %v10744 = vrsqrt.pop %v10616
  %v10745 = vrsqrt.pop %v10617
  %v10746 = vrsqrt.pop %v10618
  %v10747 = vrsqrt.pop %v10619
  %v10748 = vrsqrt.pop %v10620
  %v10749 = vrsqrt.pop %v10621
  %v10750 = vrsqrt.pop %v10622
  %v10751 = vrsqrt.pop %v10623
  %v10752 = vrsqrt.pop %v10624
  %v10753 = vrsqrt.pop %v10625
  %v10754 = vrsqrt.pop %v10626
  %v10755 = vrsqrt.pop %v10627
  %v10756 = vrsqrt.pop %v10628
  %v10757 = vrsqrt.pop %v10629
  %v10758 = vrsqrt.pop %v10630
  %v10759 = vrsqrt.pop %v10631
  %v10760 = vrsqrt.pop %v10632
  %v10761 = vrsqrt.pop %v10633
  %v10762 = vrsqrt.pop %v10634
  %v10763 = vrsqrt.pop %v10635
  %v10764 = vrsqrt.pop %v10636
  %v10765 = vrsqrt.pop %v10637
  %v10766 = vrsqrt.pop %v10638
  %v10767 = vrsqrt.pop %v10639
  %v10768 = vrsqrt.pop %v10640
  %v10769 = vrsqrt.pop %v10641
  %v10770 = vrsqrt.pop %v10642
  %v10771 = vrsqrt.pop %v10643
  %v10772 = vrsqrt.pop %v10644
  %v10773 = vrsqrt.pop %v10645
  %v10774 = vrsqrt.pop %v10646
  %v10775 = vrsqrt.pop %v10647
  %v10776 = vrsqrt.pop %v10648
  %v10777 = vrsqrt.pop %v10649
  %v10778 = vrsqrt.pop %v10650
  %v10779 = vrsqrt.pop %v10651
  %v10780 = vrsqrt.pop %v10652
  %v10781 = vrsqrt.pop %v10653
  %v10782 = vrsqrt.pop %v10654
  %v10783 = vrsqrt.pop %v10655
  %v10784 = vrsqrt.pop %v10656
  %v10785 = vrsqrt.pop %v10657
  %v10786 = vrsqrt.pop %v10658
  %v10787 = vrsqrt.pop %v10659
  %v10788 = vrsqrt.pop %v10660
  %v10789 = vrsqrt.pop %v10661
  %v10790 = vrsqrt.pop %v10662
  %v10791 = vrsqrt.pop %v10663
  %v10792 = vrsqrt.pop %v10664
  %v10793 = vrsqrt.pop %v10665
  %v10794 = vrsqrt.pop %v10666
  %v10795 = vrsqrt.pop %v10667
  %v10796 = vrsqrt.pop %v10668
  %v10797 = vrsqrt.pop %v10669
  %v10798 = vrsqrt.pop %v10670
  %v10799 = vrsqrt.pop %v10671
  %v10800 = vrsqrt.pop %v10672
  %v10801 = vrsqrt.pop %v10673
  %v10802 = vrsqrt.pop %v10674
  %v10803 = vrsqrt.pop %v10675
  %v10804 = vrsqrt.pop %v10676
  %v10805 = vrsqrt.pop %v10677
  %v10806 = vrsqrt.pop %v10678
  %v10807 = vrsqrt.pop %v10679
  %v10808 = vrsqrt.pop %v10680
  %v10809 = vrsqrt.pop %v10681
  %v10810 = vrsqrt.pop %v10682
  %v10811 = vrsqrt.pop %v10683
  %v10812 = vrsqrt.pop %v10684
  %v10813 = vrsqrt.pop %v10685
  %v10814 = vrsqrt.pop %v10686
  %v10815 = vrsqrt.pop %v10687
  %v10816 = vrsqrt.pop %v10688
  %v10817 = vrsqrt.pop %v10689
  %v10818 = vrsqrt.pop %v10690
  %v10819 = vrsqrt.pop %v10691
  %v10820 = vrsqrt.pop %v10692
  %v10821 = vrsqrt.pop %v10693
  %v10822 = vrsqrt.pop %v10694
  %v10823 = vrsqrt.pop %v10695
  %v10824 = vrsqrt.pop %v10696
  %v10825 = vrsqrt.pop %v10697
  %v10826 = vrsqrt.pop %v10698
  %v10827 = vrsqrt.pop %v10699
  %v10828 = vrsqrt.pop %v10700
  %v10829 = vrsqrt.pop %v10701
  %v10830 = vrsqrt.pop %v10702
  %v10831 = vrsqrt.pop %v10703
  %v10832 = vrsqrt.pop %v10704
  %v10833 = vrsqrt.pop %v10705
  %v10834 = vrsqrt.pop %v10706
  %v10835 = vrsqrt.pop %v10707
  %v10836 = vrsqrt.pop %v10708
  %v10837 = vrsqrt.pop %v10709
  %v10838 = vrsqrt.pop %v10710
  %v10839 = vrsqrt.pop %v10711
  %v10840 = vrsqrt.pop %v10712
  %v10841 = vrsqrt.pop %v10713
  %v10842 = vrsqrt.pop %v10714
  %v10843 = vrsqrt.pop %v10715
  %v10844 = vrsqrt.pop %v10716
  %v10845 = vrsqrt.pop %v10717
  %v10846 = vrsqrt.pop %v10718
  %v10847 = vrsqrt.pop %v10719
  %v10848 = vrsqrt.pop %v10720
  %v10849 = vrsqrt.pop %v10721
  %v10850 = vrsqrt.pop %v10722
  %v10851 = vrsqrt.pop %v10723
  %v10852 = vrsqrt.pop %v10724
  %v10853 = vmul.f32 %v10469, %v10725
  %v10854 = vmul.f32 %v10470, %v10726
  %v10855 = vmul.f32 %v10471, %v10727
  %v10856 = vmul.f32 %v10472, %v10728
  %v10857 = vmul.f32 %v10473, %v10729
  %v10858 = vmul.f32 %v10474, %v10730
  %v10859 = vmul.f32 %v10475, %v10731
  %v10860 = vmul.f32 %v10476, %v10732
  %v10861 = vmul.f32 %v10477, %v10733
  %v10862 = vmul.f32 %v10478, %v10734
  %v10863 = vmul.f32 %v10479, %v10735
  %v10864 = vmul.f32 %v10480, %v10736
  %v10865 = vmul.f32 %v10481, %v10737
  %v10866 = vmul.f32 %v10482, %v10738
  %v10867 = vmul.f32 %v10483, %v10739
  %v10868 = vmul.f32 %v10484, %v10740
  %v10869 = vmul.f32 %v10485, %v10741
  %v10870 = vmul.f32 %v10486, %v10742
  %v10871 = vmul.f32 %v10487, %v10743
  %v10872 = vmul.f32 %v10488, %v10744
  %v10873 = vmul.f32 %v10489, %v10745
  %v10874 = vmul.f32 %v10490, %v10746
  %v10875 = vmul.f32 %v10491, %v10747
  %v10876 = vmul.f32 %v10492, %v10748
  %v10877 = vmul.f32 %v10493, %v10749
  %v10878 = vmul.f32 %v10494, %v10750
  %v10879 = vmul.f32 %v10495, %v10751
  %v10880 = vmul.f32 %v10496, %v10752
  %v10881 = vmul.f32 %v10497, %v10753
  %v10882 = vmul.f32 %v10498, %v10754
  %v10883 = vmul.f32 %v10499, %v10755
  %v10884 = vmul.f32 %v10500, %v10756
  %v10885 = vmul.f32 %v10501, %v10757
  %v10886 = vmul.f32 %v10502, %v10758
  %v10887 = vmul.f32 %v10503, %v10759
  %v10888 = vmul.f32 %v10504, %v10760
  %v10889 = vmul.f32 %v10505, %v10761
  %v10890 = vmul.f32 %v10506, %v10762
  %v10891 = vmul.f32 %v10507, %v10763
  %v10892 = vmul.f32 %v10508, %v10764
  %v10893 = vmul.f32 %v10509, %v10765
  %v10894 = vmul.f32 %v10510, %v10766
  %v10895 = vmul.f32 %v10511, %v10767
  %v10896 = vmul.f32 %v10512, %v10768
  %v10897 = vmul.f32 %v10513, %v10769
  %v10898 = vmul.f32 %v10514, %v10770
  %v10899 = vmul.f32 %v10515, %v10771
  %v10900 = vmul.f32 %v10516, %v10772
  %v10901 = vmul.f32 %v10517, %v10773
  %v10902 = vmul.f32 %v10518, %v10774
  %v10903 = vmul.f32 %v10519, %v10775
  %v10904 = vmul.f32 %v10520, %v10776
  %v10905 = vmul.f32 %v10521, %v10777
  %v10906 = vmul.f32 %v10522, %v10778
  %v10907 = vmul.f32 %v10523, %v10779
  %v10908 = vmul.f32 %v10524, %v10780
  %v10909 = vmul.f32 %v10525, %v10781
  %v10910 = vmul.f32 %v10526, %v10782
  %v10911 = vmul.f32 %v10527, %v10783
  %v10912 = vmul.f32 %v10528, %v10784
  %v10913 = vmul.f32 %v10529, %v10785
  %v10914 = vmul.f32 %v10530, %v10786
  %v10915 = vmul.f32 %v10531, %v10787
  %v10916 = vmul.f32 %v10532, %v10788
  %v10917 = vmul.f32 %v10533, %v10789
  %v10918 = vmul.f32 %v10534, %v10790
  %v10919 = vmul.f32 %v10535, %v10791
  %v10920 = vmul.f32 %v10536, %v10792
  %v10921 = vmul.f32 %v10537, %v10793
  %v10922 = vmul.f32 %v10538, %v10794
  %v10923 = vmul.f32 %v10539, %v10795
  %v10924 = vmul.f32 %v10540, %v10796
  %v10925 = vmul.f32 %v10541, %v10797
  %v10926 = vmul.f32 %v10542, %v10798
  %v10927 = vmul.f32 %v10543, %v10799
  %v10928 = vmul.f32 %v10544, %v10800
  %v10929 = vmul.f32 %v10545, %v10801
  %v10930 = vmul.f32 %v10546, %v10802
  %v10931 = vmul.f32 %v10547, %v10803
  %v10932 = vmul.f32 %v10548, %v10804
  %v10933 = vmul.f32 %v10549, %v10805
  %v10934 = vmul.f32 %v10550, %v10806
  %v10935 = vmul.f32 %v10551, %v10807
  %v10936 = vmul.f32 %v10552, %v10808
  %v10937 = vmul.f32 %v10553, %v10809
  %v10938 = vmul.f32 %v10554, %v10810
  %v10939 = vmul.f32 %v10555, %v10811
  %v10940 = vmul.f32 %v10556, %v10812
  %v10941 = vmul.f32 %v10557, %v10813
  %v10942 = vmul.f32 %v10558, %v10814
  %v10943 = vmul.f32 %v10559, %v10815
  %v10944 = vmul.f32 %v10560, %v10816
  %v10945 = vmul.f32 %v10561, %v10817
  %v10946 = vmul.f32 %v10562, %v10818
  %v10947 = vmul.f32 %v10563, %v10819
  %v10948 = vmul.f32 %v10564, %v10820
  %v10949 = vmul.f32 %v10565, %v10821
  %v10950 = vmul.f32 %v10566, %v10822
  %v10951 = vmul.f32 %v10567, %v10823
  %v10952 = vmul.f32 %v10568, %v10824
  %v10953 = vmul.f32 %v10569, %v10825
  %v10954 = vmul.f32 %v10570, %v10826
  %v10955 = vmul.f32 %v10571, %v10827
  %v10956 = vmul.f32 %v10572, %v10828
  %v10957 = vmul.f32 %v10573, %v10829
  %v10958 = vmul.f32 %v10574, %v10830
  %v10959 = vmul.f32 %v10575, %v10831
  %v10960 = vmul.f32 %v10576, %v10832
  %v10961 = vmul.f32 %v10577, %v10833
  %v10962 = vmul.f32 %v10578, %v10834
  %v10963 = vmul.f32 %v10579, %v10835
  %v10964 = vmul.f32 %v10580, %v10836
  %v10965 = vmul.f32 %v10581, %v10837
  %v10966 = vmul.f32 %v10582, %v10838
  %v10967 = vmul.f32 %v10583, %v10839
  %v10968 = vmul.f32 %v10584, %v10840
  %v10969 = vmul.f32 %v10585, %v10841
  %v10970 = vmul.f32 %v10586, %v10842
  %v10971 = vmul.f32 %v10587, %v10843
  %v10972 = vmul.f32 %v10588, %v10844
  %v10973 = vmul.f32 %v10589, %v10845
  %v10974 = vmul.f32 %v10590, %v10846
  %v10975 = vmul.f32 %v10591, %v10847
  %v10976 = vmul.f32 %v10592, %v10848
  %v10977 = vmul.f32 %v10593, %v10849
  %v10978 = vmul.f32 %v10594, %v10850
  %v10979 = vmul.f32 %v10595, %v10851
  %v10980 = vmul.f32 %v10596, %v10852
  %v10981 = vld [vmem:[%s7] sm:$0xff]
  %v10982 = vld [vmem:[%s7 + $0x8] sm:$0xff]
  %v10983 = vld [vmem:[%s7 + $0x10] sm:$0xff]
  %v10984 = vld [vmem:[%s7 + $0x18] sm:$0xff]
  %v10985 = vld [vmem:[%s7 + $0x20] sm:$0xff]
  %v10986 = vld [vmem:[%s7 + $0x28] sm:$0xff]
  %v10987 = vld [vmem:[%s7 + $0x30] sm:$0xff]
  %v10988 = vld [vmem:[%s7 + $0x38] sm:$0xff]
  %v10989 = vld [vmem:[%s7 + $0x40] sm:$0xff]
  %v10990 = vld [vmem:[%s7 + $0x48] sm:$0xff]
  %v10991 = vld [vmem:[%s7 + $0x50] sm:$0xff]
  %v10992 = vld [vmem:[%s7 + $0x58] sm:$0xff]
  %v10993 = vld [vmem:[%s7 + $0x60] sm:$0xff]
  %v10994 = vld [vmem:[%s7 + $0x68] sm:$0xff]
  %v10995 = vld [vmem:[%s7 + $0x70] sm:$0xff]
  %v10996 = vld [vmem:[%s7 + $0x78] sm:$0xff]
  %v10997 = vld [vmem:[%s7 + $0x80] sm:$0xff]
  %v10998 = vld [vmem:[%s7 + $0x88] sm:$0xff]
  %v10999 = vld [vmem:[%s7 + $0x90] sm:$0xff]
  %v11000 = vld [vmem:[%s7 + $0x98] sm:$0xff]
  %v11001 = vld [vmem:[%s7 + $0xa0] sm:$0xff]
  %v11002 = vld [vmem:[%s7 + $0xa8] sm:$0xff]
  %v11003 = vld [vmem:[%s7 + $0xb0] sm:$0xff]
  %v11004 = vld [vmem:[%s7 + $0xb8] sm:$0xff]
  %v11005 = vld [vmem:[%s7 + $0xc0] sm:$0xff]
  %v11006 = vld [vmem:[%s7 + $0xc8] sm:$0xff]
  %v11007 = vld [vmem:[%s7 + $0xd0] sm:$0xff]
  %v11008 = vld [vmem:[%s7 + $0xd8] sm:$0xff]
  %v11009 = vld [vmem:[%s7 + $0xe0] sm:$0xff]
  %v11010 = vld [vmem:[%s7 + $0xe8] sm:$0xff]
  %v11011 = vld [vmem:[%s7 + $0xf0] sm:$0xff]
  %v11012 = vld [vmem:[%s7 + $0xf8] sm:$0xff]
  %v11013 = vld [vmem:[%s7 + $0x100] sm:$0xff]
  %v11014 = vld [vmem:[%s7 + $0x108] sm:$0xff]
  %v11015 = vld [vmem:[%s7 + $0x110] sm:$0xff]
  %v11016 = vld [vmem:[%s7 + $0x118] sm:$0xff]
  %v11017 = vld [vmem:[%s7 + $0x120] sm:$0xff]
  %v11018 = vld [vmem:[%s7 + $0x128] sm:$0xff]
  %v11019 = vld [vmem:[%s7 + $0x130] sm:$0xff]
  %v11020 = vld [vmem:[%s7 + $0x138] sm:$0xff]
  %v11021 = vld [vmem:[%s7 + $0x140] sm:$0xff]
  %v11022 = vld [vmem:[%s7 + $0x148] sm:$0xff]
  %v11023 = vld [vmem:[%s7 + $0x150] sm:$0xff]
  %v11024 = vld [vmem:[%s7 + $0x158] sm:$0xff]
  %v11025 = vld [vmem:[%s7 + $0x160] sm:$0xff]
  %v11026 = vld [vmem:[%s7 + $0x168] sm:$0xff]
  %v11027 = vld [vmem:[%s7 + $0x170] sm:$0xff]
  %v11028 = vld [vmem:[%s7 + $0x178] sm:$0xff]
  %v11029 = vld [vmem:[%s7 + $0x180] sm:$0xff]
  %v11030 = vld [vmem:[%s7 + $0x188] sm:$0xff]
  %v11031 = vld [vmem:[%s7 + $0x190] sm:$0xff]
  %v11032 = vld [vmem:[%s7 + $0x198] sm:$0xff]
  %v11033 = vld [vmem:[%s7 + $0x1a0] sm:$0xff]
  %v11034 = vld [vmem:[%s7 + $0x1a8] sm:$0xff]
  %v11035 = vld [vmem:[%s7 + $0x1b0] sm:$0xff]
  %v11036 = vld [vmem:[%s7 + $0x1b8] sm:$0xff]
  %v11037 = vld [vmem:[%s7 + $0x1c0] sm:$0xff]
  %v11038 = vld [vmem:[%s7 + $0x1c8] sm:$0xff]
  %v11039 = vld [vmem:[%s7 + $0x1d0] sm:$0xff]
  %v11040 = vld [vmem:[%s7 + $0x1d8] sm:$0xff]
  %v11041 = vld [vmem:[%s7 + $0x1e0] sm:$0xff]
  %v11042 = vld [vmem:[%s7 + $0x1e8] sm:$0xff]
  %v11043 = vld [vmem:[%s7 + $0x1f0] sm:$0xff]
  %v11044 = vld [vmem:[%s7 + $0x1f8] sm:$0xff]
  %v11045 = vld [vmem:[%s7 + $0x200] sm:$0xff]
  %v11046 = vld [vmem:[%s7 + $0x208] sm:$0xff]
  %v11047 = vld [vmem:[%s7 + $0x210] sm:$0xff]
  %v11048 = vld [vmem:[%s7 + $0x218] sm:$0xff]
  %v11049 = vld [vmem:[%s7 + $0x220] sm:$0xff]
  %v11050 = vld [vmem:[%s7 + $0x228] sm:$0xff]
  %v11051 = vld [vmem:[%s7 + $0x230] sm:$0xff]
  %v11052 = vld [vmem:[%s7 + $0x238] sm:$0xff]
  %v11053 = vld [vmem:[%s7 + $0x240] sm:$0xff]
  %v11054 = vld [vmem:[%s7 + $0x248] sm:$0xff]
  %v11055 = vld [vmem:[%s7 + $0x250] sm:$0xff]
  %v11056 = vld [vmem:[%s7 + $0x258] sm:$0xff]
  %v11057 = vld [vmem:[%s7 + $0x260] sm:$0xff]
  %v11058 = vld [vmem:[%s7 + $0x268] sm:$0xff]
  %v11059 = vld [vmem:[%s7 + $0x270] sm:$0xff]
  %v11060 = vld [vmem:[%s7 + $0x278] sm:$0xff]
  %v11061 = vld [vmem:[%s7 + $0x280] sm:$0xff]
  %v11062 = vld [vmem:[%s7 + $0x288] sm:$0xff]
  %v11063 = vld [vmem:[%s7 + $0x290] sm:$0xff]
  %v11064 = vld [vmem:[%s7 + $0x298] sm:$0xff]
  %v11065 = vld [vmem:[%s7 + $0x2a0] sm:$0xff]
  %v11066 = vld [vmem:[%s7 + $0x2a8] sm:$0xff]
  %v11067 = vld [vmem:[%s7 + $0x2b0] sm:$0xff]
  %v11068 = vld [vmem:[%s7 + $0x2b8] sm:$0xff]
  %v11069 = vld [vmem:[%s7 + $0x2c0] sm:$0xff]
  %v11070 = vld [vmem:[%s7 + $0x2c8] sm:$0xff]
  %v11071 = vld [vmem:[%s7 + $0x2d0] sm:$0xff]
  %v11072 = vld [vmem:[%s7 + $0x2d8] sm:$0xff]
  %v11073 = vld [vmem:[%s7 + $0x2e0] sm:$0xff]
  %v11074 = vld [vmem:[%s7 + $0x2e8] sm:$0xff]
  %v11075 = vld [vmem:[%s7 + $0x2f0] sm:$0xff]
  %v11076 = vld [vmem:[%s7 + $0x2f8] sm:$0xff]
  %v11077 = vld [vmem:[%s7 + $0x300] sm:$0xff]
  %v11078 = vld [vmem:[%s7 + $0x308] sm:$0xff]
  %v11079 = vld [vmem:[%s7 + $0x310] sm:$0xff]
  %v11080 = vld [vmem:[%s7 + $0x318] sm:$0xff]
  %v11081 = vld [vmem:[%s7 + $0x320] sm:$0xff]
  %v11082 = vld [vmem:[%s7 + $0x328] sm:$0xff]
  %v11083 = vld [vmem:[%s7 + $0x330] sm:$0xff]
  %v11084 = vld [vmem:[%s7 + $0x338] sm:$0xff]
  %v11085 = vld [vmem:[%s7 + $0x340] sm:$0xff]
  %v11086 = vld [vmem:[%s7 + $0x348] sm:$0xff]
  %v11087 = vld [vmem:[%s7 + $0x350] sm:$0xff]
  %v11088 = vld [vmem:[%s7 + $0x358] sm:$0xff]
  %v11089 = vld [vmem:[%s7 + $0x360] sm:$0xff]
  %v11090 = vld [vmem:[%s7 + $0x368] sm:$0xff]
  %v11091 = vld [vmem:[%s7 + $0x370] sm:$0xff]
  %v11092 = vld [vmem:[%s7 + $0x378] sm:$0xff]
  %v11093 = vld [vmem:[%s7 + $0x380] sm:$0xff]
  %v11094 = vld [vmem:[%s7 + $0x388] sm:$0xff]
  %v11095 = vld [vmem:[%s7 + $0x390] sm:$0xff]
  %v11096 = vld [vmem:[%s7 + $0x398] sm:$0xff]
  %v11097 = vld [vmem:[%s7 + $0x3a0] sm:$0xff]
  %v11098 = vld [vmem:[%s7 + $0x3a8] sm:$0xff]
  %v11099 = vld [vmem:[%s7 + $0x3b0] sm:$0xff]
  %v11100 = vld [vmem:[%s7 + $0x3b8] sm:$0xff]
  %v11101 = vld [vmem:[%s7 + $0x3c0] sm:$0xff]
  %v11102 = vld [vmem:[%s7 + $0x3c8] sm:$0xff]
  %v11103 = vld [vmem:[%s7 + $0x3d0] sm:$0xff]
  %v11104 = vld [vmem:[%s7 + $0x3d8] sm:$0xff]
  %v11105 = vld [vmem:[%s7 + $0x3e0] sm:$0xff]
  %v11106 = vld [vmem:[%s7 + $0x3e8] sm:$0xff]
  %v11107 = vld [vmem:[%s7 + $0x3f0] sm:$0xff]
  %v11108 = vld [vmem:[%s7 + $0x3f8] sm:$0xff]
  %v11109 = vmul.f32 %v9189, %v10853
  %v11110 = vmul.f32 %v9190, %v10854
  %v11111 = vmul.f32 %v9191, %v10855
  %v11112 = vmul.f32 %v9192, %v10856
  %v11113 = vmul.f32 %v9193, %v10857
  %v11114 = vmul.f32 %v9194, %v10858
  %v11115 = vmul.f32 %v9195, %v10859
  %v11116 = vmul.f32 %v9196, %v10860
  %v11117 = vmul.f32 %v9197, %v10861
  %v11118 = vmul.f32 %v9198, %v10862
  %v11119 = vmul.f32 %v9199, %v10863
  %v11120 = vmul.f32 %v9200, %v10864
  %v11121 = vmul.f32 %v9201, %v10865
  %v11122 = vmul.f32 %v9202, %v10866
  %v11123 = vmul.f32 %v9203, %v10867
  %v11124 = vmul.f32 %v9204, %v10868
  %v11125 = vmul.f32 %v9205, %v10869
  %v11126 = vmul.f32 %v9206, %v10870
  %v11127 = vmul.f32 %v9207, %v10871
  %v11128 = vmul.f32 %v9208, %v10872
  %v11129 = vmul.f32 %v9209, %v10873
  %v11130 = vmul.f32 %v9210, %v10874
  %v11131 = vmul.f32 %v9211, %v10875
  %v11132 = vmul.f32 %v9212, %v10876
  %v11133 = vmul.f32 %v9213, %v10877
  %v11134 = vmul.f32 %v9214, %v10878
  %v11135 = vmul.f32 %v9215, %v10879
  %v11136 = vmul.f32 %v9216, %v10880
  %v11137 = vmul.f32 %v9217, %v10881
  %v11138 = vmul.f32 %v9218, %v10882
  %v11139 = vmul.f32 %v9219, %v10883
  %v11140 = vmul.f32 %v9220, %v10884
  %v11141 = vmul.f32 %v9221, %v10885
  %v11142 = vmul.f32 %v9222, %v10886
  %v11143 = vmul.f32 %v9223, %v10887
  %v11144 = vmul.f32 %v9224, %v10888
  %v11145 = vmul.f32 %v9225, %v10889
  %v11146 = vmul.f32 %v9226, %v10890
  %v11147 = vmul.f32 %v9227, %v10891
  %v11148 = vmul.f32 %v9228, %v10892
  %v11149 = vmul.f32 %v9229, %v10893
  %v11150 = vmul.f32 %v9230, %v10894
  %v11151 = vmul.f32 %v9231, %v10895
  %v11152 = vmul.f32 %v9232, %v10896
  %v11153 = vmul.f32 %v9233, %v10897
  %v11154 = vmul.f32 %v9234, %v10898
  %v11155 = vmul.f32 %v9235, %v10899
  %v11156 = vmul.f32 %v9236, %v10900
  %v11157 = vmul.f32 %v9237, %v10901
  %v11158 = vmul.f32 %v9238, %v10902
  %v11159 = vmul.f32 %v9239, %v10903
  %v11160 = vmul.f32 %v9240, %v10904
  %v11161 = vmul.f32 %v9241, %v10905
  %v11162 = vmul.f32 %v9242, %v10906
  %v11163 = vmul.f32 %v9243, %v10907
  %v11164 = vmul.f32 %v9244, %v10908
  %v11165 = vmul.f32 %v9245, %v10909
  %v11166 = vmul.f32 %v9246, %v10910
  %v11167 = vmul.f32 %v9247, %v10911
  %v11168 = vmul.f32 %v9248, %v10912
  %v11169 = vmul.f32 %v9249, %v10913
  %v11170 = vmul.f32 %v9250, %v10914
  %v11171 = vmul.f32 %v9251, %v10915
  %v11172 = vmul.f32 %v9252, %v10916
  %v11173 = vmul.f32 %v9253, %v10917
  %v11174 = vmul.f32 %v9254, %v10918
  %v11175 = vmul.f32 %v9255, %v10919
  %v11176 = vmul.f32 %v9256, %v10920
  %v11177 = vmul.f32 %v9257, %v10921
  %v11178 = vmul.f32 %v9258, %v10922
  %v11179 = vmul.f32 %v9259, %v10923
  %v11180 = vmul.f32 %v9260, %v10924
  %v11181 = vmul.f32 %v9261, %v10925
  %v11182 = vmul.f32 %v9262, %v10926
  %v11183 = vmul.f32 %v9263, %v10927
  %v11184 = vmul.f32 %v9264, %v10928
  %v11185 = vmul.f32 %v9265, %v10929
  %v11186 = vmul.f32 %v9266, %v10930
  %v11187 = vmul.f32 %v9267, %v10931
  %v11188 = vmul.f32 %v9268, %v10932
  %v11189 = vmul.f32 %v9269, %v10933
  %v11190 = vmul.f32 %v9270, %v10934
  %v11191 = vmul.f32 %v9271, %v10935
  %v11192 = vmul.f32 %v9272, %v10936
  %v11193 = vmul.f32 %v9273, %v10937
  %v11194 = vmul.f32 %v9274, %v10938
  %v11195 = vmul.f32 %v9275, %v10939
  %v11196 = vmul.f32 %v9276, %v10940
  %v11197 = vmul.f32 %v9277, %v10941
  %v11198 = vmul.f32 %v9278, %v10942
  %v11199 = vmul.f32 %v9279, %v10943
  %v11200 = vmul.f32 %v9280, %v10944
  %v11201 = vmul.f32 %v9281, %v10945
  %v11202 = vmul.f32 %v9282, %v10946
  %v11203 = vmul.f32 %v9283, %v10947
  %v11204 = vmul.f32 %v9284, %v10948
  %v11205 = vmul.f32 %v9285, %v10949
  %v11206 = vmul.f32 %v9286, %v10950
  %v11207 = vmul.f32 %v9287, %v10951
  %v11208 = vmul.f32 %v9288, %v10952
  %v11209 = vmul.f32 %v9289, %v10953
  %v11210 = vmul.f32 %v9290, %v10954
  %v11211 = vmul.f32 %v9291, %v10955
  %v11212 = vmul.f32 %v9292, %v10956
  %v11213 = vmul.f32 %v9293, %v10957
  %v11214 = vmul.f32 %v9294, %v10958
  %v11215 = vmul.f32 %v9295, %v10959
  %v11216 = vmul.f32 %v9296, %v10960
  %v11217 = vmul.f32 %v9297, %v10961
  %v11218 = vmul.f32 %v9298, %v10962
  %v11219 = vmul.f32 %v9299, %v10963
  %v11220 = vmul.f32 %v9300, %v10964
  %v11221 = vmul.f32 %v9301, %v10965
  %v11222 = vmul.f32 %v9302, %v10966
  %v11223 = vmul.f32 %v9303, %v10967
  %v11224 = vmul.f32 %v9304, %v10968
  %v11225 = vmul.f32 %v9305, %v10969
  %v11226 = vmul.f32 %v9306, %v10970
  %v11227 = vmul.f32 %v9307, %v10971
  %v11228 = vmul.f32 %v9308, %v10972
  %v11229 = vmul.f32 %v9309, %v10973
  %v11230 = vmul.f32 %v9310, %v10974
  %v11231 = vmul.f32 %v9311, %v10975
  %v11232 = vmul.f32 %v9312, %v10976
  %v11233 = vmul.f32 %v9313, %v10977
  %v11234 = vmul.f32 %v9314, %v10978
  %v11235 = vmul.f32 %v9315, %v10979
  %v11236 = vmul.f32 %v9316, %v10980
  %v11237 = vsub.f32 %v10981, %v11109
  %v11238 = vsub.f32 %v10982, %v11110
  %v11239 = vsub.f32 %v10983, %v11111
  %v11240 = vsub.f32 %v10984, %v11112
  %v11241 = vsub.f32 %v10985, %v11113
  %v11242 = vsub.f32 %v10986, %v11114
  %v11243 = vsub.f32 %v10987, %v11115
  %v11244 = vsub.f32 %v10988, %v11116
  %v11245 = vsub.f32 %v10989, %v11117
  %v11246 = vsub.f32 %v10990, %v11118
  %v11247 = vsub.f32 %v10991, %v11119
  %v11248 = vsub.f32 %v10992, %v11120
  %v11249 = vsub.f32 %v10993, %v11121
  %v11250 = vsub.f32 %v10994, %v11122
  %v11251 = vsub.f32 %v10995, %v11123
  %v11252 = vsub.f32 %v10996, %v11124
  %v11253 = vsub.f32 %v10997, %v11125
  %v11254 = vsub.f32 %v10998, %v11126
  %v11255 = vsub.f32 %v10999, %v11127
  %v11256 = vsub.f32 %v11000, %v11128
  %v11257 = vsub.f32 %v11001, %v11129
  %v11258 = vsub.f32 %v11002, %v11130
  %v11259 = vsub.f32 %v11003, %v11131
  %v11260 = vsub.f32 %v11004, %v11132
  %v11261 = vsub.f32 %v11005, %v11133
  %v11262 = vsub.f32 %v11006, %v11134
  %v11263 = vsub.f32 %v11007, %v11135
  %v11264 = vsub.f32 %v11008, %v11136
  %v11265 = vsub.f32 %v11009, %v11137
  %v11266 = vsub.f32 %v11010, %v11138
  %v11267 = vsub.f32 %v11011, %v11139
  %v11268 = vsub.f32 %v11012, %v11140
  %v11269 = vsub.f32 %v11013, %v11141
  %v11270 = vsub.f32 %v11014, %v11142
  %v11271 = vsub.f32 %v11015, %v11143
  %v11272 = vsub.f32 %v11016, %v11144
  %v11273 = vsub.f32 %v11017, %v11145
  %v11274 = vsub.f32 %v11018, %v11146
  %v11275 = vsub.f32 %v11019, %v11147
  %v11276 = vsub.f32 %v11020, %v11148
  %v11277 = vsub.f32 %v11021, %v11149
  %v11278 = vsub.f32 %v11022, %v11150
  %v11279 = vsub.f32 %v11023, %v11151
  %v11280 = vsub.f32 %v11024, %v11152
  %v11281 = vsub.f32 %v11025, %v11153
  %v11282 = vsub.f32 %v11026, %v11154
  %v11283 = vsub.f32 %v11027, %v11155
  %v11284 = vsub.f32 %v11028, %v11156
  %v11285 = vsub.f32 %v11029, %v11157
  %v11286 = vsub.f32 %v11030, %v11158
  %v11287 = vsub.f32 %v11031, %v11159
  %v11288 = vsub.f32 %v11032, %v11160
  %v11289 = vsub.f32 %v11033, %v11161
  %v11290 = vsub.f32 %v11034, %v11162
  %v11291 = vsub.f32 %v11035, %v11163
  %v11292 = vsub.f32 %v11036, %v11164
  %v11293 = vsub.f32 %v11037, %v11165
  %v11294 = vsub.f32 %v11038, %v11166
  %v11295 = vsub.f32 %v11039, %v11167
  %v11296 = vsub.f32 %v11040, %v11168
  %v11297 = vsub.f32 %v11041, %v11169
  %v11298 = vsub.f32 %v11042, %v11170
  %v11299 = vsub.f32 %v11043, %v11171
  %v11300 = vsub.f32 %v11044, %v11172
  %v11301 = vsub.f32 %v11045, %v11173
  %v11302 = vsub.f32 %v11046, %v11174
  %v11303 = vsub.f32 %v11047, %v11175
  %v11304 = vsub.f32 %v11048, %v11176
  %v11305 = vsub.f32 %v11049, %v11177
  %v11306 = vsub.f32 %v11050, %v11178
  %v11307 = vsub.f32 %v11051, %v11179
  %v11308 = vsub.f32 %v11052, %v11180
  %v11309 = vsub.f32 %v11053, %v11181
  %v11310 = vsub.f32 %v11054, %v11182
  %v11311 = vsub.f32 %v11055, %v11183
  %v11312 = vsub.f32 %v11056, %v11184
  %v11313 = vsub.f32 %v11057, %v11185
  %v11314 = vsub.f32 %v11058, %v11186
  %v11315 = vsub.f32 %v11059, %v11187
  %v11316 = vsub.f32 %v11060, %v11188
  %v11317 = vsub.f32 %v11061, %v11189
  %v11318 = vsub.f32 %v11062, %v11190
  %v11319 = vsub.f32 %v11063, %v11191
  %v11320 = vsub.f32 %v11064, %v11192
  %v11321 = vsub.f32 %v11065, %v11193
  %v11322 = vsub.f32 %v11066, %v11194
  %v11323 = vsub.f32 %v11067, %v11195
  %v11324 = vsub.f32 %v11068, %v11196
  %v11325 = vsub.f32 %v11069, %v11197
  %v11326 = vsub.f32 %v11070, %v11198
  %v11327 = vsub.f32 %v11071, %v11199
  %v11328 = vsub.f32 %v11072, %v11200
  %v11329 = vsub.f32 %v11073, %v11201
  %v11330 = vsub.f32 %v11074, %v11202
  %v11331 = vsub.f32 %v11075, %v11203
  %v11332 = vsub.f32 %v11076, %v11204
  %v11333 = vsub.f32 %v11077, %v11205
  %v11334 = vsub.f32 %v11078, %v11206
  %v11335 = vsub.f32 %v11079, %v11207
  %v11336 = vsub.f32 %v11080, %v11208
  %v11337 = vsub.f32 %v11081, %v11209
  %v11338 = vsub.f32 %v11082, %v11210
  %v11339 = vsub.f32 %v11083, %v11211
  %v11340 = vsub.f32 %v11084, %v11212
  %v11341 = vsub.f32 %v11085, %v11213
  %v11342 = vsub.f32 %v11086, %v11214
  %v11343 = vsub.f32 %v11087, %v11215
  %v11344 = vsub.f32 %v11088, %v11216
  %v11345 = vsub.f32 %v11089, %v11217
  %v11346 = vsub.f32 %v11090, %v11218
  %v11347 = vsub.f32 %v11091, %v11219
  %v11348 = vsub.f32 %v11092, %v11220
  %v11349 = vsub.f32 %v11093, %v11221
  %v11350 = vsub.f32 %v11094, %v11222
  %v11351 = vsub.f32 %v11095, %v11223
  %v11352 = vsub.f32 %v11096, %v11224
  %v11353 = vsub.f32 %v11097, %v11225
  %v11354 = vsub.f32 %v11098, %v11226
  %v11355 = vsub.f32 %v11099, %v11227
  %v11356 = vsub.f32 %v11100, %v11228
  %v11357 = vsub.f32 %v11101, %v11229
  %v11358 = vsub.f32 %v11102, %v11230
  %v11359 = vsub.f32 %v11103, %v11231
  %v11360 = vsub.f32 %v11104, %v11232
  %v11361 = vsub.f32 %v11105, %v11233
  %v11362 = vsub.f32 %v11106, %v11234
  %v11363 = vsub.f32 %v11107, %v11235
  %v11364 = vsub.f32 %v11108, %v11236
  %11366 = vset.pattern.permute.xlu0 0
  %11367 = vperm.xlu0 %11366, %v10853
  %v11368 = vpop.permute.xlu0 %11367
  %11371 = vset.pattern.permute.xlu0 0
  %11372 = vperm.xlu0 %11371, %v10854
  %v11373 = vpop.permute.xlu0 %11372
  %11376 = vset.pattern.permute.xlu0 0
  %11377 = vperm.xlu0 %11376, %v10855
  %v11378 = vpop.permute.xlu0 %11377
  %11381 = vset.pattern.permute.xlu0 0
  %11382 = vperm.xlu0 %11381, %v10856
  %v11383 = vpop.permute.xlu0 %11382
  %11386 = vset.pattern.permute.xlu0 0
  %11387 = vperm.xlu0 %11386, %v10857
  %v11388 = vpop.permute.xlu0 %11387
  %11391 = vset.pattern.permute.xlu0 0
  %11392 = vperm.xlu0 %11391, %v10858
  %v11393 = vpop.permute.xlu0 %11392
  %11396 = vset.pattern.permute.xlu0 0
  %11397 = vperm.xlu0 %11396, %v10859
  %v11398 = vpop.permute.xlu0 %11397
  %11401 = vset.pattern.permute.xlu0 0
  %11402 = vperm.xlu0 %11401, %v10860
  %v11403 = vpop.permute.xlu0 %11402
  %11406 = vset.pattern.permute.xlu0 0
  %11407 = vperm.xlu0 %11406, %v10861
  %v11408 = vpop.permute.xlu0 %11407
  %11411 = vset.pattern.permute.xlu0 0
  %11412 = vperm.xlu0 %11411, %v10862
  %v11413 = vpop.permute.xlu0 %11412
  %11416 = vset.pattern.permute.xlu0 0
  %11417 = vperm.xlu0 %11416, %v10863
  %v11418 = vpop.permute.xlu0 %11417
  %11421 = vset.pattern.permute.xlu0 0
  %11422 = vperm.xlu0 %11421, %v10864
  %v11423 = vpop.permute.xlu0 %11422
  %11426 = vset.pattern.permute.xlu0 0
  %11427 = vperm.xlu0 %11426, %v10865
  %v11428 = vpop.permute.xlu0 %11427
  %11431 = vset.pattern.permute.xlu0 0
  %11432 = vperm.xlu0 %11431, %v10866
  %v11433 = vpop.permute.xlu0 %11432
  %11436 = vset.pattern.permute.xlu0 0
  %11437 = vperm.xlu0 %11436, %v10867
  %v11438 = vpop.permute.xlu0 %11437
  %11441 = vset.pattern.permute.xlu0 0
  %11442 = vperm.xlu0 %11441, %v10868
  %v11443 = vpop.permute.xlu0 %11442
  %11446 = vset.pattern.permute.xlu0 0
  %11447 = vperm.xlu0 %11446, %v10869
  %v11448 = vpop.permute.xlu0 %11447
  %11451 = vset.pattern.permute.xlu0 0
  %11452 = vperm.xlu0 %11451, %v10870
  %v11453 = vpop.permute.xlu0 %11452
  %11456 = vset.pattern.permute.xlu0 0
  %11457 = vperm.xlu0 %11456, %v10871
  %v11458 = vpop.permute.xlu0 %11457
  %11461 = vset.pattern.permute.xlu0 0
  %11462 = vperm.xlu0 %11461, %v10872
  %v11463 = vpop.permute.xlu0 %11462
  %11466 = vset.pattern.permute.xlu0 0
  %11467 = vperm.xlu0 %11466, %v10873
  %v11468 = vpop.permute.xlu0 %11467
  %11471 = vset.pattern.permute.xlu0 0
  %11472 = vperm.xlu0 %11471, %v10874
  %v11473 = vpop.permute.xlu0 %11472
  %11476 = vset.pattern.permute.xlu0 0
  %11477 = vperm.xlu0 %11476, %v10875
  %v11478 = vpop.permute.xlu0 %11477
  %11481 = vset.pattern.permute.xlu0 0
  %11482 = vperm.xlu0 %11481, %v10876
  %v11483 = vpop.permute.xlu0 %11482
  %11486 = vset.pattern.permute.xlu0 0
  %11487 = vperm.xlu0 %11486, %v10877
  %v11488 = vpop.permute.xlu0 %11487
  %11491 = vset.pattern.permute.xlu0 0
  %11492 = vperm.xlu0 %11491, %v10878
  %v11493 = vpop.permute.xlu0 %11492
  %11496 = vset.pattern.permute.xlu0 0
  %11497 = vperm.xlu0 %11496, %v10879
  %v11498 = vpop.permute.xlu0 %11497
  %11501 = vset.pattern.permute.xlu0 0
  %11502 = vperm.xlu0 %11501, %v10880
  %v11503 = vpop.permute.xlu0 %11502
  %11506 = vset.pattern.permute.xlu0 0
  %11507 = vperm.xlu0 %11506, %v10881
  %v11508 = vpop.permute.xlu0 %11507
  %11511 = vset.pattern.permute.xlu0 0
  %11512 = vperm.xlu0 %11511, %v10882
  %v11513 = vpop.permute.xlu0 %11512
  %11516 = vset.pattern.permute.xlu0 0
  %11517 = vperm.xlu0 %11516, %v10883
  %v11518 = vpop.permute.xlu0 %11517
  %11521 = vset.pattern.permute.xlu0 0
  %11522 = vperm.xlu0 %11521, %v10884
  %v11523 = vpop.permute.xlu0 %11522
  %11526 = vset.pattern.permute.xlu0 0
  %11527 = vperm.xlu0 %11526, %v10885
  %v11528 = vpop.permute.xlu0 %11527
  %11531 = vset.pattern.permute.xlu0 0
  %11532 = vperm.xlu0 %11531, %v10886
  %v11533 = vpop.permute.xlu0 %11532
  %11536 = vset.pattern.permute.xlu0 0
  %11537 = vperm.xlu0 %11536, %v10887
  %v11538 = vpop.permute.xlu0 %11537
  %11541 = vset.pattern.permute.xlu0 0
  %11542 = vperm.xlu0 %11541, %v10888
  %v11543 = vpop.permute.xlu0 %11542
  %11546 = vset.pattern.permute.xlu0 0
  %11547 = vperm.xlu0 %11546, %v10889
  %v11548 = vpop.permute.xlu0 %11547
  %11551 = vset.pattern.permute.xlu0 0
  %11552 = vperm.xlu0 %11551, %v10890
  %v11553 = vpop.permute.xlu0 %11552
  %11556 = vset.pattern.permute.xlu0 0
  %11557 = vperm.xlu0 %11556, %v10891
  %v11558 = vpop.permute.xlu0 %11557
  %11561 = vset.pattern.permute.xlu0 0
  %11562 = vperm.xlu0 %11561, %v10892
  %v11563 = vpop.permute.xlu0 %11562
  %11566 = vset.pattern.permute.xlu0 0
  %11567 = vperm.xlu0 %11566, %v10893
  %v11568 = vpop.permute.xlu0 %11567
  %11571 = vset.pattern.permute.xlu0 0
  %11572 = vperm.xlu0 %11571, %v10894
  %v11573 = vpop.permute.xlu0 %11572
  %11576 = vset.pattern.permute.xlu0 0
  %11577 = vperm.xlu0 %11576, %v10895
  %v11578 = vpop.permute.xlu0 %11577
  %11581 = vset.pattern.permute.xlu0 0
  %11582 = vperm.xlu0 %11581, %v10896
  %v11583 = vpop.permute.xlu0 %11582
  %11586 = vset.pattern.permute.xlu0 0
  %11587 = vperm.xlu0 %11586, %v10897
  %v11588 = vpop.permute.xlu0 %11587
  %11591 = vset.pattern.permute.xlu0 0
  %11592 = vperm.xlu0 %11591, %v10898
  %v11593 = vpop.permute.xlu0 %11592
  %11596 = vset.pattern.permute.xlu0 0
  %11597 = vperm.xlu0 %11596, %v10899
  %v11598 = vpop.permute.xlu0 %11597
  %11601 = vset.pattern.permute.xlu0 0
  %11602 = vperm.xlu0 %11601, %v10900
  %v11603 = vpop.permute.xlu0 %11602
  %11606 = vset.pattern.permute.xlu0 0
  %11607 = vperm.xlu0 %11606, %v10901
  %v11608 = vpop.permute.xlu0 %11607
  %11611 = vset.pattern.permute.xlu0 0
  %11612 = vperm.xlu0 %11611, %v10902
  %v11613 = vpop.permute.xlu0 %11612
  %11616 = vset.pattern.permute.xlu0 0
  %11617 = vperm.xlu0 %11616, %v10903
  %v11618 = vpop.permute.xlu0 %11617
  %11621 = vset.pattern.permute.xlu0 0
  %11622 = vperm.xlu0 %11621, %v10904
  %v11623 = vpop.permute.xlu0 %11622
  %11626 = vset.pattern.permute.xlu0 0
  %11627 = vperm.xlu0 %11626, %v10905
  %v11628 = vpop.permute.xlu0 %11627
  %11631 = vset.pattern.permute.xlu0 0
  %11632 = vperm.xlu0 %11631, %v10906
  %v11633 = vpop.permute.xlu0 %11632
  %11636 = vset.pattern.permute.xlu0 0
  %11637 = vperm.xlu0 %11636, %v10907
  %v11638 = vpop.permute.xlu0 %11637
  %11641 = vset.pattern.permute.xlu0 0
  %11642 = vperm.xlu0 %11641, %v10908
  %v11643 = vpop.permute.xlu0 %11642
  %11646 = vset.pattern.permute.xlu0 0
  %11647 = vperm.xlu0 %11646, %v10909
  %v11648 = vpop.permute.xlu0 %11647
  %11651 = vset.pattern.permute.xlu0 0
  %11652 = vperm.xlu0 %11651, %v10910
  %v11653 = vpop.permute.xlu0 %11652
  %11656 = vset.pattern.permute.xlu0 0
  %11657 = vperm.xlu0 %11656, %v10911
  %v11658 = vpop.permute.xlu0 %11657
  %11661 = vset.pattern.permute.xlu0 0
  %11662 = vperm.xlu0 %11661, %v10912
  %v11663 = vpop.permute.xlu0 %11662
  %11666 = vset.pattern.permute.xlu0 0
  %11667 = vperm.xlu0 %11666, %v10913
  %v11668 = vpop.permute.xlu0 %11667
  %11671 = vset.pattern.permute.xlu0 0
  %11672 = vperm.xlu0 %11671, %v10914
  %v11673 = vpop.permute.xlu0 %11672
  %11676 = vset.pattern.permute.xlu0 0
  %11677 = vperm.xlu0 %11676, %v10915
  %v11678 = vpop.permute.xlu0 %11677
  %11681 = vset.pattern.permute.xlu0 0
  %11682 = vperm.xlu0 %11681, %v10916
  %v11683 = vpop.permute.xlu0 %11682
  %11686 = vset.pattern.permute.xlu0 0
  %11687 = vperm.xlu0 %11686, %v10917
  %v11688 = vpop.permute.xlu0 %11687
  %11691 = vset.pattern.permute.xlu0 0
  %11692 = vperm.xlu0 %11691, %v10918
  %v11693 = vpop.permute.xlu0 %11692
  %11696 = vset.pattern.permute.xlu0 0
  %11697 = vperm.xlu0 %11696, %v10919
  %v11698 = vpop.permute.xlu0 %11697
  %11701 = vset.pattern.permute.xlu0 0
  %11702 = vperm.xlu0 %11701, %v10920
  %v11703 = vpop.permute.xlu0 %11702
  %11706 = vset.pattern.permute.xlu0 0
  %11707 = vperm.xlu0 %11706, %v10921
  %v11708 = vpop.permute.xlu0 %11707
  %11711 = vset.pattern.permute.xlu0 0
  %11712 = vperm.xlu0 %11711, %v10922
  %v11713 = vpop.permute.xlu0 %11712
  %11716 = vset.pattern.permute.xlu0 0
  %11717 = vperm.xlu0 %11716, %v10923
  %v11718 = vpop.permute.xlu0 %11717
  %11721 = vset.pattern.permute.xlu0 0
  %11722 = vperm.xlu0 %11721, %v10924
  %v11723 = vpop.permute.xlu0 %11722
  %11726 = vset.pattern.permute.xlu0 0
  %11727 = vperm.xlu0 %11726, %v10925
  %v11728 = vpop.permute.xlu0 %11727
  %11731 = vset.pattern.permute.xlu0 0
  %11732 = vperm.xlu0 %11731, %v10926
  %v11733 = vpop.permute.xlu0 %11732
  %11736 = vset.pattern.permute.xlu0 0
  %11737 = vperm.xlu0 %11736, %v10927
  %v11738 = vpop.permute.xlu0 %11737
  %11741 = vset.pattern.permute.xlu0 0
  %11742 = vperm.xlu0 %11741, %v10928
  %v11743 = vpop.permute.xlu0 %11742
  %11746 = vset.pattern.permute.xlu0 0
  %11747 = vperm.xlu0 %11746, %v10929
  %v11748 = vpop.permute.xlu0 %11747
  %11751 = vset.pattern.permute.xlu0 0
  %11752 = vperm.xlu0 %11751, %v10930
  %v11753 = vpop.permute.xlu0 %11752
  %11756 = vset.pattern.permute.xlu0 0
  %11757 = vperm.xlu0 %11756, %v10931
  %v11758 = vpop.permute.xlu0 %11757
  %11761 = vset.pattern.permute.xlu0 0
  %11762 = vperm.xlu0 %11761, %v10932
  %v11763 = vpop.permute.xlu0 %11762
  %11766 = vset.pattern.permute.xlu0 0
  %11767 = vperm.xlu0 %11766, %v10933
  %v11768 = vpop.permute.xlu0 %11767
  %11771 = vset.pattern.permute.xlu0 0
  %11772 = vperm.xlu0 %11771, %v10934
  %v11773 = vpop.permute.xlu0 %11772
  %11776 = vset.pattern.permute.xlu0 0
  %11777 = vperm.xlu0 %11776, %v10935
  %v11778 = vpop.permute.xlu0 %11777
  %11781 = vset.pattern.permute.xlu0 0
  %11782 = vperm.xlu0 %11781, %v10936
  %v11783 = vpop.permute.xlu0 %11782
  %11786 = vset.pattern.permute.xlu0 0
  %11787 = vperm.xlu0 %11786, %v10937
  %v11788 = vpop.permute.xlu0 %11787
  %11791 = vset.pattern.permute.xlu0 0
  %11792 = vperm.xlu0 %11791, %v10938
  %v11793 = vpop.permute.xlu0 %11792
  %11796 = vset.pattern.permute.xlu0 0
  %11797 = vperm.xlu0 %11796, %v10939
  %v11798 = vpop.permute.xlu0 %11797
  %11801 = vset.pattern.permute.xlu0 0
  %11802 = vperm.xlu0 %11801, %v10940
  %v11803 = vpop.permute.xlu0 %11802
  %11806 = vset.pattern.permute.xlu0 0
  %11807 = vperm.xlu0 %11806, %v10941
  %v11808 = vpop.permute.xlu0 %11807
  %11811 = vset.pattern.permute.xlu0 0
  %11812 = vperm.xlu0 %11811, %v10942
  %v11813 = vpop.permute.xlu0 %11812
  %11816 = vset.pattern.permute.xlu0 0
  %11817 = vperm.xlu0 %11816, %v10943
  %v11818 = vpop.permute.xlu0 %11817
  %11821 = vset.pattern.permute.xlu0 0
  %11822 = vperm.xlu0 %11821, %v10944
  %v11823 = vpop.permute.xlu0 %11822
  %11826 = vset.pattern.permute.xlu0 0
  %11827 = vperm.xlu0 %11826, %v10945
  %v11828 = vpop.permute.xlu0 %11827
  %11831 = vset.pattern.permute.xlu0 0
  %11832 = vperm.xlu0 %11831, %v10946
  %v11833 = vpop.permute.xlu0 %11832
  %11836 = vset.pattern.permute.xlu0 0
  %11837 = vperm.xlu0 %11836, %v10947
  %v11838 = vpop.permute.xlu0 %11837
  %11841 = vset.pattern.permute.xlu0 0
  %11842 = vperm.xlu0 %11841, %v10948
  %v11843 = vpop.permute.xlu0 %11842
  %11846 = vset.pattern.permute.xlu0 0
  %11847 = vperm.xlu0 %11846, %v10949
  %v11848 = vpop.permute.xlu0 %11847
  %11851 = vset.pattern.permute.xlu0 0
  %11852 = vperm.xlu0 %11851, %v10950
  %v11853 = vpop.permute.xlu0 %11852
  %11856 = vset.pattern.permute.xlu0 0
  %11857 = vperm.xlu0 %11856, %v10951
  %v11858 = vpop.permute.xlu0 %11857
  %11861 = vset.pattern.permute.xlu0 0
  %11862 = vperm.xlu0 %11861, %v10952
  %v11863 = vpop.permute.xlu0 %11862
  %11866 = vset.pattern.permute.xlu0 0
  %11867 = vperm.xlu0 %11866, %v10953
  %v11868 = vpop.permute.xlu0 %11867
  %11871 = vset.pattern.permute.xlu0 0
  %11872 = vperm.xlu0 %11871, %v10954
  %v11873 = vpop.permute.xlu0 %11872
  %11876 = vset.pattern.permute.xlu0 0
  %11877 = vperm.xlu0 %11876, %v10955
  %v11878 = vpop.permute.xlu0 %11877
  %11881 = vset.pattern.permute.xlu0 0
  %11882 = vperm.xlu0 %11881, %v10956
  %v11883 = vpop.permute.xlu0 %11882
  %11886 = vset.pattern.permute.xlu0 0
  %11887 = vperm.xlu0 %11886, %v10957
  %v11888 = vpop.permute.xlu0 %11887
  %11891 = vset.pattern.permute.xlu0 0
  %11892 = vperm.xlu0 %11891, %v10958
  %v11893 = vpop.permute.xlu0 %11892
  %11896 = vset.pattern.permute.xlu0 0
  %11897 = vperm.xlu0 %11896, %v10959
  %v11898 = vpop.permute.xlu0 %11897
  %11901 = vset.pattern.permute.xlu0 0
  %11902 = vperm.xlu0 %11901, %v10960
  %v11903 = vpop.permute.xlu0 %11902
  %11906 = vset.pattern.permute.xlu0 0
  %11907 = vperm.xlu0 %11906, %v10961
  %v11908 = vpop.permute.xlu0 %11907
  %11911 = vset.pattern.permute.xlu0 0
  %11912 = vperm.xlu0 %11911, %v10962
  %v11913 = vpop.permute.xlu0 %11912
  %11916 = vset.pattern.permute.xlu0 0
  %11917 = vperm.xlu0 %11916, %v10963
  %v11918 = vpop.permute.xlu0 %11917
  %11921 = vset.pattern.permute.xlu0 0
  %11922 = vperm.xlu0 %11921, %v10964
  %v11923 = vpop.permute.xlu0 %11922
  %11926 = vset.pattern.permute.xlu0 0
  %11927 = vperm.xlu0 %11926, %v10965
  %v11928 = vpop.permute.xlu0 %11927
  %11931 = vset.pattern.permute.xlu0 0
  %11932 = vperm.xlu0 %11931, %v10966
  %v11933 = vpop.permute.xlu0 %11932
  %11936 = vset.pattern.permute.xlu0 0
  %11937 = vperm.xlu0 %11936, %v10967
  %v11938 = vpop.permute.xlu0 %11937
  %11941 = vset.pattern.permute.xlu0 0
  %11942 = vperm.xlu0 %11941, %v10968
  %v11943 = vpop.permute.xlu0 %11942
  %11946 = vset.pattern.permute.xlu0 0
  %11947 = vperm.xlu0 %11946, %v10969
  %v11948 = vpop.permute.xlu0 %11947
  %11951 = vset.pattern.permute.xlu0 0
  %11952 = vperm.xlu0 %11951, %v10970
  %v11953 = vpop.permute.xlu0 %11952
  %11956 = vset.pattern.permute.xlu0 0
  %11957 = vperm.xlu0 %11956, %v10971
  %v11958 = vpop.permute.xlu0 %11957
  %11961 = vset.pattern.permute.xlu0 0
  %11962 = vperm.xlu0 %11961, %v10972
  %v11963 = vpop.permute.xlu0 %11962
  %11966 = vset.pattern.permute.xlu0 0
  %11967 = vperm.xlu0 %11966, %v10973
  %v11968 = vpop.permute.xlu0 %11967
  %11971 = vset.pattern.permute.xlu0 0
  %11972 = vperm.xlu0 %11971, %v10974
  %v11973 = vpop.permute.xlu0 %11972
  %11976 = vset.pattern.permute.xlu0 0
  %11977 = vperm.xlu0 %11976, %v10975
  %v11978 = vpop.permute.xlu0 %11977
  %11981 = vset.pattern.permute.xlu0 0
  %11982 = vperm.xlu0 %11981, %v10976
  %v11983 = vpop.permute.xlu0 %11982
  %11986 = vset.pattern.permute.xlu0 0
  %11987 = vperm.xlu0 %11986, %v10977
  %v11988 = vpop.permute.xlu0 %11987
  %11991 = vset.pattern.permute.xlu0 0
  %11992 = vperm.xlu0 %11991, %v10978
  %v11993 = vpop.permute.xlu0 %11992
  %11996 = vset.pattern.permute.xlu0 0
  %11997 = vperm.xlu0 %11996, %v10979
  %v11998 = vpop.permute.xlu0 %11997
  %12001 = vset.pattern.permute.xlu0 0
  %12002 = vperm.xlu0 %12001, %v10980
  %v12003 = vpop.permute.xlu0 %12002
  %v12005 = vmul.f32 %v7911, %v11368
  %v12006 = vmul.f32 %v7913, %v11368
  %v12007 = vmul.f32 %v7915, %v11373
  %v12008 = vmul.f32 %v7917, %v11373
  %v12009 = vmul.f32 %v7921, %v11378
  %v12010 = vmul.f32 %v7923, %v11378
  %v12011 = vmul.f32 %v7925, %v11383
  %v12012 = vmul.f32 %v7927, %v11383
  %v12013 = vmul.f32 %v7931, %v11388
  %v12014 = vmul.f32 %v7933, %v11388
  %v12015 = vmul.f32 %v7935, %v11393
  %v12016 = vmul.f32 %v7937, %v11393
  %v12017 = vmul.f32 %v7941, %v11398
  %v12018 = vmul.f32 %v7943, %v11398
  %v12019 = vmul.f32 %v7945, %v11403
  %v12020 = vmul.f32 %v7947, %v11403
  %v12021 = vmul.f32 %v7951, %v11408
  %v12022 = vmul.f32 %v7953, %v11408
  %v12023 = vmul.f32 %v7955, %v11413
  %v12024 = vmul.f32 %v7957, %v11413
  %v12025 = vmul.f32 %v7961, %v11418
  %v12026 = vmul.f32 %v7963, %v11418
  %v12027 = vmul.f32 %v7965, %v11423
  %v12028 = vmul.f32 %v7967, %v11423
  %v12029 = vmul.f32 %v7971, %v11428
  %v12030 = vmul.f32 %v7973, %v11428
  %v12031 = vmul.f32 %v7975, %v11433
  %v12032 = vmul.f32 %v7977, %v11433
  %v12033 = vmul.f32 %v7981, %v11438
  %v12034 = vmul.f32 %v7983, %v11438
  %v12035 = vmul.f32 %v7985, %v11443
  %v12036 = vmul.f32 %v7987, %v11443
  %v12037 = vmul.f32 %v7991, %v11448
  %v12038 = vmul.f32 %v7993, %v11448
  %v12039 = vmul.f32 %v7995, %v11453
  %v12040 = vmul.f32 %v7997, %v11453
  %v12041 = vmul.f32 %v8001, %v11458
  %v12042 = vmul.f32 %v8003, %v11458
  %v12043 = vmul.f32 %v8005, %v11463
  %v12044 = vmul.f32 %v8007, %v11463
  %v12045 = vmul.f32 %v8011, %v11468
  %v12046 = vmul.f32 %v8013, %v11468
  %v12047 = vmul.f32 %v8015, %v11473
  %v12048 = vmul.f32 %v8017, %v11473
  %v12049 = vmul.f32 %v8021, %v11478
  %v12050 = vmul.f32 %v8023, %v11478
  %v12051 = vmul.f32 %v8025, %v11483
  %v12052 = vmul.f32 %v8027, %v11483
  %v12053 = vmul.f32 %v8031, %v11488
  %v12054 = vmul.f32 %v8033, %v11488
  %v12055 = vmul.f32 %v8035, %v11493
  %v12056 = vmul.f32 %v8037, %v11493
  %v12057 = vmul.f32 %v8041, %v11498
  %v12058 = vmul.f32 %v8043, %v11498
  %v12059 = vmul.f32 %v8045, %v11503
  %v12060 = vmul.f32 %v8047, %v11503
  %v12061 = vmul.f32 %v8051, %v11508
  %v12062 = vmul.f32 %v8053, %v11508
  %v12063 = vmul.f32 %v8055, %v11513
  %v12064 = vmul.f32 %v8057, %v11513
  %v12065 = vmul.f32 %v8061, %v11518
  %v12066 = vmul.f32 %v8063, %v11518
  %v12067 = vmul.f32 %v8065, %v11523
  %v12068 = vmul.f32 %v8067, %v11523
  %v12069 = vmul.f32 %v8071, %v11528
  %v12070 = vmul.f32 %v8073, %v11528
  %v12071 = vmul.f32 %v8075, %v11533
  %v12072 = vmul.f32 %v8077, %v11533
  %v12073 = vmul.f32 %v8081, %v11538
  %v12074 = vmul.f32 %v8083, %v11538
  %v12075 = vmul.f32 %v8085, %v11543
  %v12076 = vmul.f32 %v8087, %v11543
  %v12077 = vmul.f32 %v8091, %v11548
  %v12078 = vmul.f32 %v8093, %v11548
  %v12079 = vmul.f32 %v8095, %v11553
  %v12080 = vmul.f32 %v8097, %v11553
  %v12081 = vmul.f32 %v8101, %v11558
  %v12082 = vmul.f32 %v8103, %v11558
  %v12083 = vmul.f32 %v8105, %v11563
  %v12084 = vmul.f32 %v8107, %v11563
  %v12085 = vmul.f32 %v8111, %v11568
  %v12086 = vmul.f32 %v8113, %v11568
  %v12087 = vmul.f32 %v8115, %v11573
  %v12088 = vmul.f32 %v8117, %v11573
  %v12089 = vmul.f32 %v8121, %v11578
  %v12090 = vmul.f32 %v8123, %v11578
  %v12091 = vmul.f32 %v8125, %v11583
  %v12092 = vmul.f32 %v8127, %v11583
  %v12093 = vmul.f32 %v8131, %v11588
  %v12094 = vmul.f32 %v8133, %v11588
  %v12095 = vmul.f32 %v8135, %v11593
  %v12096 = vmul.f32 %v8137, %v11593
  %v12097 = vmul.f32 %v8141, %v11598
  %v12098 = vmul.f32 %v8143, %v11598
  %v12099 = vmul.f32 %v8145, %v11603
  %v12100 = vmul.f32 %v8147, %v11603
  %v12101 = vmul.f32 %v8151, %v11608
  %v12102 = vmul.f32 %v8153, %v11608
  %v12103 = vmul.f32 %v8155, %v11613
  %v12104 = vmul.f32 %v8157, %v11613
  %v12105 = vmul.f32 %v8161, %v11618
  %v12106 = vmul.f32 %v8163, %v11618
  %v12107 = vmul.f32 %v8165, %v11623
  %v12108 = vmul.f32 %v8167, %v11623
  %v12109 = vmul.f32 %v8171, %v11628
  %v12110 = vmul.f32 %v8173, %v11628
  %v12111 = vmul.f32 %v8175, %v11633
  %v12112 = vmul.f32 %v8177, %v11633
  %v12113 = vmul.f32 %v8181, %v11638
  %v12114 = vmul.f32 %v8183, %v11638
  %v12115 = vmul.f32 %v8185, %v11643
  %v12116 = vmul.f32 %v8187, %v11643
  %v12117 = vmul.f32 %v8191, %v11648
  %v12118 = vmul.f32 %v8193, %v11648
  %v12119 = vmul.f32 %v8195, %v11653
  %v12120 = vmul.f32 %v8197, %v11653
  %v12121 = vmul.f32 %v8201, %v11658
  %v12122 = vmul.f32 %v8203, %v11658
  %v12123 = vmul.f32 %v8205, %v11663
  %v12124 = vmul.f32 %v8207, %v11663
  %v12125 = vmul.f32 %v8211, %v11668
  %v12126 = vmul.f32 %v8213, %v11668
  %v12127 = vmul.f32 %v8215, %v11673
  %v12128 = vmul.f32 %v8217, %v11673
  %v12129 = vmul.f32 %v8221, %v11678
  %v12130 = vmul.f32 %v8223, %v11678
  %v12131 = vmul.f32 %v8225, %v11683
  %v12132 = vmul.f32 %v8227, %v11683
  %v12133 = vmul.f32 %v8231, %v11688
  %v12134 = vmul.f32 %v8233, %v11688
  %v12135 = vmul.f32 %v8235, %v11693
  %v12136 = vmul.f32 %v8237, %v11693
  %v12137 = vmul.f32 %v8241, %v11698
  %v12138 = vmul.f32 %v8243, %v11698
  %v12139 = vmul.f32 %v8245, %v11703
  %v12140 = vmul.f32 %v8247, %v11703
  %v12141 = vmul.f32 %v8251, %v11708
  %v12142 = vmul.f32 %v8253, %v11708
  %v12143 = vmul.f32 %v8255, %v11713
  %v12144 = vmul.f32 %v8257, %v11713
  %v12145 = vmul.f32 %v8261, %v11718
  %v12146 = vmul.f32 %v8263, %v11718
  %v12147 = vmul.f32 %v8265, %v11723
  %v12148 = vmul.f32 %v8267, %v11723
  %v12149 = vmul.f32 %v8271, %v11728
  %v12150 = vmul.f32 %v8273, %v11728
  %v12151 = vmul.f32 %v8275, %v11733
  %v12152 = vmul.f32 %v8277, %v11733
  %v12153 = vmul.f32 %v8281, %v11738
  %v12154 = vmul.f32 %v8283, %v11738
  %v12155 = vmul.f32 %v8285, %v11743
  %v12156 = vmul.f32 %v8287, %v11743
  %v12157 = vmul.f32 %v8291, %v11748
  %v12158 = vmul.f32 %v8293, %v11748
  %v12159 = vmul.f32 %v8295, %v11753
  %v12160 = vmul.f32 %v8297, %v11753
  %v12161 = vmul.f32 %v8301, %v11758
  %v12162 = vmul.f32 %v8303, %v11758
  %v12163 = vmul.f32 %v8305, %v11763
  %v12164 = vmul.f32 %v8307, %v11763
  %v12165 = vmul.f32 %v8311, %v11768
  %v12166 = vmul.f32 %v8313, %v11768
  %v12167 = vmul.f32 %v8315, %v11773
  %v12168 = vmul.f32 %v8317, %v11773
  %v12169 = vmul.f32 %v8321, %v11778
  %v12170 = vmul.f32 %v8323, %v11778
  %v12171 = vmul.f32 %v8325, %v11783
  %v12172 = vmul.f32 %v8327, %v11783
  %v12173 = vmul.f32 %v8331, %v11788
  %v12174 = vmul.f32 %v8333, %v11788
  %v12175 = vmul.f32 %v8335, %v11793
  %v12176 = vmul.f32 %v8337, %v11793
  %v12177 = vmul.f32 %v8341, %v11798
  %v12178 = vmul.f32 %v8343, %v11798
  %v12179 = vmul.f32 %v8345, %v11803
  %v12180 = vmul.f32 %v8347, %v11803
  %v12181 = vmul.f32 %v8351, %v11808
  %v12182 = vmul.f32 %v8353, %v11808
  %v12183 = vmul.f32 %v8355, %v11813
  %v12184 = vmul.f32 %v8357, %v11813
  %v12185 = vmul.f32 %v8361, %v11818
  %v12186 = vmul.f32 %v8363, %v11818
  %v12187 = vmul.f32 %v8365, %v11823
  %v12188 = vmul.f32 %v8367, %v11823
  %v12189 = vmul.f32 %v8371, %v11828
  %v12190 = vmul.f32 %v8373, %v11828
  %v12191 = vmul.f32 %v8375, %v11833
  %v12192 = vmul.f32 %v8377, %v11833
  %v12193 = vmul.f32 %v8381, %v11838
  %v12194 = vmul.f32 %v8383, %v11838
  %v12195 = vmul.f32 %v8385, %v11843
  %v12196 = vmul.f32 %v8387, %v11843
  %v12197 = vmul.f32 %v8391, %v11848
  %v12198 = vmul.f32 %v8393, %v11848
  %v12199 = vmul.f32 %v8395, %v11853
  %v12200 = vmul.f32 %v8397, %v11853
  %v12201 = vmul.f32 %v8401, %v11858
  %v12202 = vmul.f32 %v8403, %v11858
  %v12203 = vmul.f32 %v8405, %v11863
  %v12204 = vmul.f32 %v8407, %v11863
  %v12205 = vmul.f32 %v8411, %v11868
  %v12206 = vmul.f32 %v8413, %v11868
  %v12207 = vmul.f32 %v8415, %v11873
  %v12208 = vmul.f32 %v8417, %v11873
  %v12209 = vmul.f32 %v8421, %v11878
  %v12210 = vmul.f32 %v8423, %v11878
  %v12211 = vmul.f32 %v8425, %v11883
  %v12212 = vmul.f32 %v8427, %v11883
  %v12213 = vmul.f32 %v8431, %v11888
  %v12214 = vmul.f32 %v8433, %v11888
  %v12215 = vmul.f32 %v8435, %v11893
  %v12216 = vmul.f32 %v8437, %v11893
  %v12217 = vmul.f32 %v8441, %v11898
  %v12218 = vmul.f32 %v8443, %v11898
  %v12219 = vmul.f32 %v8445, %v11903
  %v12220 = vmul.f32 %v8447, %v11903
  %v12221 = vmul.f32 %v8451, %v11908
  %v12222 = vmul.f32 %v8453, %v11908
  %v12223 = vmul.f32 %v8455, %v11913
  %v12224 = vmul.f32 %v8457, %v11913
  %v12225 = vmul.f32 %v8461, %v11918
  %v12226 = vmul.f32 %v8463, %v11918
  %v12227 = vmul.f32 %v8465, %v11923
  %v12228 = vmul.f32 %v8467, %v11923
  %v12229 = vmul.f32 %v8471, %v11928
  %v12230 = vmul.f32 %v8473, %v11928
  %v12231 = vmul.f32 %v8475, %v11933
  %v12232 = vmul.f32 %v8477, %v11933
  %v12233 = vmul.f32 %v8481, %v11938
  %v12234 = vmul.f32 %v8483, %v11938
  %v12235 = vmul.f32 %v8485, %v11943
  %v12236 = vmul.f32 %v8487, %v11943
  %v12237 = vmul.f32 %v8491, %v11948
  %v12238 = vmul.f32 %v8493, %v11948
  %v12239 = vmul.f32 %v8495, %v11953
  %v12240 = vmul.f32 %v8497, %v11953
  %v12241 = vmul.f32 %v8501, %v11958
  %v12242 = vmul.f32 %v8503, %v11958
  %v12243 = vmul.f32 %v8505, %v11963
  %v12244 = vmul.f32 %v8507, %v11963
  %v12245 = vmul.f32 %v8511, %v11968
  %v12246 = vmul.f32 %v8513, %v11968
  %v12247 = vmul.f32 %v8515, %v11973
  %v12248 = vmul.f32 %v8517, %v11973
  %v12249 = vmul.f32 %v8521, %v11978
  %v12250 = vmul.f32 %v8523, %v11978
  %v12251 = vmul.f32 %v8525, %v11983
  %v12252 = vmul.f32 %v8527, %v11983
  %v12253 = vmul.f32 %v8531, %v11988
  %v12254 = vmul.f32 %v8533, %v11988
  %v12255 = vmul.f32 %v8535, %v11993
  %v12256 = vmul.f32 %v8537, %v11993
  %v12257 = vmul.f32 %v8541, %v11998
  %v12258 = vmul.f32 %v8543, %v11998
  %v12259 = vmul.f32 %v8545, %v12003
  %v12260 = vmul.f32 %v8547, %v12003
  %12262 = vset.pattern.permute.xlu0 0
  %12263 = vperm.xlu0 %12262, %v11237
  %v12264 = vpop.permute.xlu0 %12263
  %12267 = vset.pattern.permute.xlu0 0
  %12268 = vperm.xlu0 %12267, %v11238
  %v12269 = vpop.permute.xlu0 %12268
  %12272 = vset.pattern.permute.xlu0 0
  %12273 = vperm.xlu0 %12272, %v11239
  %v12274 = vpop.permute.xlu0 %12273
  %12277 = vset.pattern.permute.xlu0 0
  %12278 = vperm.xlu0 %12277, %v11240
  %v12279 = vpop.permute.xlu0 %12278
  %12282 = vset.pattern.permute.xlu0 0
  %12283 = vperm.xlu0 %12282, %v11241
  %v12284 = vpop.permute.xlu0 %12283
  %12287 = vset.pattern.permute.xlu0 0
  %12288 = vperm.xlu0 %12287, %v11242
  %v12289 = vpop.permute.xlu0 %12288
  %12292 = vset.pattern.permute.xlu0 0
  %12293 = vperm.xlu0 %12292, %v11243
  %v12294 = vpop.permute.xlu0 %12293
  %12297 = vset.pattern.permute.xlu0 0
  %12298 = vperm.xlu0 %12297, %v11244
  %v12299 = vpop.permute.xlu0 %12298
  %12302 = vset.pattern.permute.xlu0 0
  %12303 = vperm.xlu0 %12302, %v11245
  %v12304 = vpop.permute.xlu0 %12303
  %12307 = vset.pattern.permute.xlu0 0
  %12308 = vperm.xlu0 %12307, %v11246
  %v12309 = vpop.permute.xlu0 %12308
  %12312 = vset.pattern.permute.xlu0 0
  %12313 = vperm.xlu0 %12312, %v11247
  %v12314 = vpop.permute.xlu0 %12313
  %12317 = vset.pattern.permute.xlu0 0
  %12318 = vperm.xlu0 %12317, %v11248
  %v12319 = vpop.permute.xlu0 %12318
  %12322 = vset.pattern.permute.xlu0 0
  %12323 = vperm.xlu0 %12322, %v11249
  %v12324 = vpop.permute.xlu0 %12323
  %12327 = vset.pattern.permute.xlu0 0
  %12328 = vperm.xlu0 %12327, %v11250
  %v12329 = vpop.permute.xlu0 %12328
  %12332 = vset.pattern.permute.xlu0 0
  %12333 = vperm.xlu0 %12332, %v11251
  %v12334 = vpop.permute.xlu0 %12333
  %12337 = vset.pattern.permute.xlu0 0
  %12338 = vperm.xlu0 %12337, %v11252
  %v12339 = vpop.permute.xlu0 %12338
  %12342 = vset.pattern.permute.xlu0 0
  %12343 = vperm.xlu0 %12342, %v11253
  %v12344 = vpop.permute.xlu0 %12343
  %12347 = vset.pattern.permute.xlu0 0
  %12348 = vperm.xlu0 %12347, %v11254
  %v12349 = vpop.permute.xlu0 %12348
  %12352 = vset.pattern.permute.xlu0 0
  %12353 = vperm.xlu0 %12352, %v11255
  %v12354 = vpop.permute.xlu0 %12353
  %12357 = vset.pattern.permute.xlu0 0
  %12358 = vperm.xlu0 %12357, %v11256
  %v12359 = vpop.permute.xlu0 %12358
  %12362 = vset.pattern.permute.xlu0 0
  %12363 = vperm.xlu0 %12362, %v11257
  %v12364 = vpop.permute.xlu0 %12363
  %12367 = vset.pattern.permute.xlu0 0
  %12368 = vperm.xlu0 %12367, %v11258
  %v12369 = vpop.permute.xlu0 %12368
  %12372 = vset.pattern.permute.xlu0 0
  %12373 = vperm.xlu0 %12372, %v11259
  %v12374 = vpop.permute.xlu0 %12373
  %12377 = vset.pattern.permute.xlu0 0
  %12378 = vperm.xlu0 %12377, %v11260
  %v12379 = vpop.permute.xlu0 %12378
  %12382 = vset.pattern.permute.xlu0 0
  %12383 = vperm.xlu0 %12382, %v11261
  %v12384 = vpop.permute.xlu0 %12383
  %12387 = vset.pattern.permute.xlu0 0
  %12388 = vperm.xlu0 %12387, %v11262
  %v12389 = vpop.permute.xlu0 %12388
  %12392 = vset.pattern.permute.xlu0 0
  %12393 = vperm.xlu0 %12392, %v11263
  %v12394 = vpop.permute.xlu0 %12393
  %12397 = vset.pattern.permute.xlu0 0
  %12398 = vperm.xlu0 %12397, %v11264
  %v12399 = vpop.permute.xlu0 %12398
  %12402 = vset.pattern.permute.xlu0 0
  %12403 = vperm.xlu0 %12402, %v11265
  %v12404 = vpop.permute.xlu0 %12403
  %12407 = vset.pattern.permute.xlu0 0
  %12408 = vperm.xlu0 %12407, %v11266
  %v12409 = vpop.permute.xlu0 %12408
  %12412 = vset.pattern.permute.xlu0 0
  %12413 = vperm.xlu0 %12412, %v11267
  %v12414 = vpop.permute.xlu0 %12413
  %12417 = vset.pattern.permute.xlu0 0
  %12418 = vperm.xlu0 %12417, %v11268
  %v12419 = vpop.permute.xlu0 %12418
  %12422 = vset.pattern.permute.xlu0 0
  %12423 = vperm.xlu0 %12422, %v11269
  %v12424 = vpop.permute.xlu0 %12423
  %12427 = vset.pattern.permute.xlu0 0
  %12428 = vperm.xlu0 %12427, %v11270
  %v12429 = vpop.permute.xlu0 %12428
  %12432 = vset.pattern.permute.xlu0 0
  %12433 = vperm.xlu0 %12432, %v11271
  %v12434 = vpop.permute.xlu0 %12433
  %12437 = vset.pattern.permute.xlu0 0
  %12438 = vperm.xlu0 %12437, %v11272
  %v12439 = vpop.permute.xlu0 %12438
  %12442 = vset.pattern.permute.xlu0 0
  %12443 = vperm.xlu0 %12442, %v11273
  %v12444 = vpop.permute.xlu0 %12443
  %12447 = vset.pattern.permute.xlu0 0
  %12448 = vperm.xlu0 %12447, %v11274
  %v12449 = vpop.permute.xlu0 %12448
  %12452 = vset.pattern.permute.xlu0 0
  %12453 = vperm.xlu0 %12452, %v11275
  %v12454 = vpop.permute.xlu0 %12453
  %12457 = vset.pattern.permute.xlu0 0
  %12458 = vperm.xlu0 %12457, %v11276
  %v12459 = vpop.permute.xlu0 %12458
  %12462 = vset.pattern.permute.xlu0 0
  %12463 = vperm.xlu0 %12462, %v11277
  %v12464 = vpop.permute.xlu0 %12463
  %12467 = vset.pattern.permute.xlu0 0
  %12468 = vperm.xlu0 %12467, %v11278
  %v12469 = vpop.permute.xlu0 %12468
  %12472 = vset.pattern.permute.xlu0 0
  %12473 = vperm.xlu0 %12472, %v11279
  %v12474 = vpop.permute.xlu0 %12473
  %12477 = vset.pattern.permute.xlu0 0
  %12478 = vperm.xlu0 %12477, %v11280
  %v12479 = vpop.permute.xlu0 %12478
  %12482 = vset.pattern.permute.xlu0 0
  %12483 = vperm.xlu0 %12482, %v11281
  %v12484 = vpop.permute.xlu0 %12483
  %12487 = vset.pattern.permute.xlu0 0
  %12488 = vperm.xlu0 %12487, %v11282
  %v12489 = vpop.permute.xlu0 %12488
  %12492 = vset.pattern.permute.xlu0 0
  %12493 = vperm.xlu0 %12492, %v11283
  %v12494 = vpop.permute.xlu0 %12493
  %12497 = vset.pattern.permute.xlu0 0
  %12498 = vperm.xlu0 %12497, %v11284
  %v12499 = vpop.permute.xlu0 %12498
  %12502 = vset.pattern.permute.xlu0 0
  %12503 = vperm.xlu0 %12502, %v11285
  %v12504 = vpop.permute.xlu0 %12503
  %12507 = vset.pattern.permute.xlu0 0
  %12508 = vperm.xlu0 %12507, %v11286
  %v12509 = vpop.permute.xlu0 %12508
  %12512 = vset.pattern.permute.xlu0 0
  %12513 = vperm.xlu0 %12512, %v11287
  %v12514 = vpop.permute.xlu0 %12513
  %12517 = vset.pattern.permute.xlu0 0
  %12518 = vperm.xlu0 %12517, %v11288
  %v12519 = vpop.permute.xlu0 %12518
  %12522 = vset.pattern.permute.xlu0 0
  %12523 = vperm.xlu0 %12522, %v11289
  %v12524 = vpop.permute.xlu0 %12523
  %12527 = vset.pattern.permute.xlu0 0
  %12528 = vperm.xlu0 %12527, %v11290
  %v12529 = vpop.permute.xlu0 %12528
  %12532 = vset.pattern.permute.xlu0 0
  %12533 = vperm.xlu0 %12532, %v11291
  %v12534 = vpop.permute.xlu0 %12533
  %12537 = vset.pattern.permute.xlu0 0
  %12538 = vperm.xlu0 %12537, %v11292
  %v12539 = vpop.permute.xlu0 %12538
  %12542 = vset.pattern.permute.xlu0 0
  %12543 = vperm.xlu0 %12542, %v11293
  %v12544 = vpop.permute.xlu0 %12543
  %12547 = vset.pattern.permute.xlu0 0
  %12548 = vperm.xlu0 %12547, %v11294
  %v12549 = vpop.permute.xlu0 %12548
  %12552 = vset.pattern.permute.xlu0 0
  %12553 = vperm.xlu0 %12552, %v11295
  %v12554 = vpop.permute.xlu0 %12553
  %12557 = vset.pattern.permute.xlu0 0
  %12558 = vperm.xlu0 %12557, %v11296
  %v12559 = vpop.permute.xlu0 %12558
  %12562 = vset.pattern.permute.xlu0 0
  %12563 = vperm.xlu0 %12562, %v11297
  %v12564 = vpop.permute.xlu0 %12563
  %12567 = vset.pattern.permute.xlu0 0
  %12568 = vperm.xlu0 %12567, %v11298
  %v12569 = vpop.permute.xlu0 %12568
  %12572 = vset.pattern.permute.xlu0 0
  %12573 = vperm.xlu0 %12572, %v11299
  %v12574 = vpop.permute.xlu0 %12573
  %12577 = vset.pattern.permute.xlu0 0
  %12578 = vperm.xlu0 %12577, %v11300
  %v12579 = vpop.permute.xlu0 %12578
  %12582 = vset.pattern.permute.xlu0 0
  %12583 = vperm.xlu0 %12582, %v11301
  %v12584 = vpop.permute.xlu0 %12583
  %12587 = vset.pattern.permute.xlu0 0
  %12588 = vperm.xlu0 %12587, %v11302
  %v12589 = vpop.permute.xlu0 %12588
  %12592 = vset.pattern.permute.xlu0 0
  %12593 = vperm.xlu0 %12592, %v11303
  %v12594 = vpop.permute.xlu0 %12593
  %12597 = vset.pattern.permute.xlu0 0
  %12598 = vperm.xlu0 %12597, %v11304
  %v12599 = vpop.permute.xlu0 %12598
  %12602 = vset.pattern.permute.xlu0 0
  %12603 = vperm.xlu0 %12602, %v11305
  %v12604 = vpop.permute.xlu0 %12603
  %12607 = vset.pattern.permute.xlu0 0
  %12608 = vperm.xlu0 %12607, %v11306
  %v12609 = vpop.permute.xlu0 %12608
  %12612 = vset.pattern.permute.xlu0 0
  %12613 = vperm.xlu0 %12612, %v11307
  %v12614 = vpop.permute.xlu0 %12613
  %12617 = vset.pattern.permute.xlu0 0
  %12618 = vperm.xlu0 %12617, %v11308
  %v12619 = vpop.permute.xlu0 %12618
  %12622 = vset.pattern.permute.xlu0 0
  %12623 = vperm.xlu0 %12622, %v11309
  %v12624 = vpop.permute.xlu0 %12623
  %12627 = vset.pattern.permute.xlu0 0
  %12628 = vperm.xlu0 %12627, %v11310
  %v12629 = vpop.permute.xlu0 %12628
  %12632 = vset.pattern.permute.xlu0 0
  %12633 = vperm.xlu0 %12632, %v11311
  %v12634 = vpop.permute.xlu0 %12633
  %12637 = vset.pattern.permute.xlu0 0
  %12638 = vperm.xlu0 %12637, %v11312
  %v12639 = vpop.permute.xlu0 %12638
  %12642 = vset.pattern.permute.xlu0 0
  %12643 = vperm.xlu0 %12642, %v11313
  %v12644 = vpop.permute.xlu0 %12643
  %12647 = vset.pattern.permute.xlu0 0
  %12648 = vperm.xlu0 %12647, %v11314
  %v12649 = vpop.permute.xlu0 %12648
  %12652 = vset.pattern.permute.xlu0 0
  %12653 = vperm.xlu0 %12652, %v11315
  %v12654 = vpop.permute.xlu0 %12653
  %12657 = vset.pattern.permute.xlu0 0
  %12658 = vperm.xlu0 %12657, %v11316
  %v12659 = vpop.permute.xlu0 %12658
  %12662 = vset.pattern.permute.xlu0 0
  %12663 = vperm.xlu0 %12662, %v11317
  %v12664 = vpop.permute.xlu0 %12663
  %12667 = vset.pattern.permute.xlu0 0
  %12668 = vperm.xlu0 %12667, %v11318
  %v12669 = vpop.permute.xlu0 %12668
  %12672 = vset.pattern.permute.xlu0 0
  %12673 = vperm.xlu0 %12672, %v11319
  %v12674 = vpop.permute.xlu0 %12673
  %12677 = vset.pattern.permute.xlu0 0
  %12678 = vperm.xlu0 %12677, %v11320
  %v12679 = vpop.permute.xlu0 %12678
  %12682 = vset.pattern.permute.xlu0 0
  %12683 = vperm.xlu0 %12682, %v11321
  %v12684 = vpop.permute.xlu0 %12683
  %12687 = vset.pattern.permute.xlu0 0
  %12688 = vperm.xlu0 %12687, %v11322
  %v12689 = vpop.permute.xlu0 %12688
  %12692 = vset.pattern.permute.xlu0 0
  %12693 = vperm.xlu0 %12692, %v11323
  %v12694 = vpop.permute.xlu0 %12693
  %12697 = vset.pattern.permute.xlu0 0
  %12698 = vperm.xlu0 %12697, %v11324
  %v12699 = vpop.permute.xlu0 %12698
  %12702 = vset.pattern.permute.xlu0 0
  %12703 = vperm.xlu0 %12702, %v11325
  %v12704 = vpop.permute.xlu0 %12703
  %12707 = vset.pattern.permute.xlu0 0
  %12708 = vperm.xlu0 %12707, %v11326
  %v12709 = vpop.permute.xlu0 %12708
  %12712 = vset.pattern.permute.xlu0 0
  %12713 = vperm.xlu0 %12712, %v11327
  %v12714 = vpop.permute.xlu0 %12713
  %12717 = vset.pattern.permute.xlu0 0
  %12718 = vperm.xlu0 %12717, %v11328
  %v12719 = vpop.permute.xlu0 %12718
  %12722 = vset.pattern.permute.xlu0 0
  %12723 = vperm.xlu0 %12722, %v11329
  %v12724 = vpop.permute.xlu0 %12723
  %12727 = vset.pattern.permute.xlu0 0
  %12728 = vperm.xlu0 %12727, %v11330
  %v12729 = vpop.permute.xlu0 %12728
  %12732 = vset.pattern.permute.xlu0 0
  %12733 = vperm.xlu0 %12732, %v11331
  %v12734 = vpop.permute.xlu0 %12733
  %12737 = vset.pattern.permute.xlu0 0
  %12738 = vperm.xlu0 %12737, %v11332
  %v12739 = vpop.permute.xlu0 %12738
  %12742 = vset.pattern.permute.xlu0 0
  %12743 = vperm.xlu0 %12742, %v11333
  %v12744 = vpop.permute.xlu0 %12743
  %12747 = vset.pattern.permute.xlu0 0
  %12748 = vperm.xlu0 %12747, %v11334
  %v12749 = vpop.permute.xlu0 %12748
  %12752 = vset.pattern.permute.xlu0 0
  %12753 = vperm.xlu0 %12752, %v11335
  %v12754 = vpop.permute.xlu0 %12753
  %12757 = vset.pattern.permute.xlu0 0
  %12758 = vperm.xlu0 %12757, %v11336
  %v12759 = vpop.permute.xlu0 %12758
  %12762 = vset.pattern.permute.xlu0 0
  %12763 = vperm.xlu0 %12762, %v11337
  %v12764 = vpop.permute.xlu0 %12763
  %12767 = vset.pattern.permute.xlu0 0
  %12768 = vperm.xlu0 %12767, %v11338
  %v12769 = vpop.permute.xlu0 %12768
  %12772 = vset.pattern.permute.xlu0 0
  %12773 = vperm.xlu0 %12772, %v11339
  %v12774 = vpop.permute.xlu0 %12773
  %12777 = vset.pattern.permute.xlu0 0
  %12778 = vperm.xlu0 %12777, %v11340
  %v12779 = vpop.permute.xlu0 %12778
  %12782 = vset.pattern.permute.xlu0 0
  %12783 = vperm.xlu0 %12782, %v11341
  %v12784 = vpop.permute.xlu0 %12783
  %12787 = vset.pattern.permute.xlu0 0
  %12788 = vperm.xlu0 %12787, %v11342
  %v12789 = vpop.permute.xlu0 %12788
  %12792 = vset.pattern.permute.xlu0 0
  %12793 = vperm.xlu0 %12792, %v11343
  %v12794 = vpop.permute.xlu0 %12793
  %12797 = vset.pattern.permute.xlu0 0
  %12798 = vperm.xlu0 %12797, %v11344
  %v12799 = vpop.permute.xlu0 %12798
  %12802 = vset.pattern.permute.xlu0 0
  %12803 = vperm.xlu0 %12802, %v11345
  %v12804 = vpop.permute.xlu0 %12803
  %12807 = vset.pattern.permute.xlu0 0
  %12808 = vperm.xlu0 %12807, %v11346
  %v12809 = vpop.permute.xlu0 %12808
  %12812 = vset.pattern.permute.xlu0 0
  %12813 = vperm.xlu0 %12812, %v11347
  %v12814 = vpop.permute.xlu0 %12813
  %12817 = vset.pattern.permute.xlu0 0
  %12818 = vperm.xlu0 %12817, %v11348
  %v12819 = vpop.permute.xlu0 %12818
  %12822 = vset.pattern.permute.xlu0 0
  %12823 = vperm.xlu0 %12822, %v11349
  %v12824 = vpop.permute.xlu0 %12823
  %12827 = vset.pattern.permute.xlu0 0
  %12828 = vperm.xlu0 %12827, %v11350
  %v12829 = vpop.permute.xlu0 %12828
  %12832 = vset.pattern.permute.xlu0 0
  %12833 = vperm.xlu0 %12832, %v11351
  %v12834 = vpop.permute.xlu0 %12833
  %12837 = vset.pattern.permute.xlu0 0
  %12838 = vperm.xlu0 %12837, %v11352
  %v12839 = vpop.permute.xlu0 %12838
  %12842 = vset.pattern.permute.xlu0 0
  %12843 = vperm.xlu0 %12842, %v11353
  %v12844 = vpop.permute.xlu0 %12843
  %12847 = vset.pattern.permute.xlu0 0
  %12848 = vperm.xlu0 %12847, %v11354
  %v12849 = vpop.permute.xlu0 %12848
  %12852 = vset.pattern.permute.xlu0 0
  %12853 = vperm.xlu0 %12852, %v11355
  %v12854 = vpop.permute.xlu0 %12853
  %12857 = vset.pattern.permute.xlu0 0
  %12858 = vperm.xlu0 %12857, %v11356
  %v12859 = vpop.permute.xlu0 %12858
  %12862 = vset.pattern.permute.xlu0 0
  %12863 = vperm.xlu0 %12862, %v11357
  %v12864 = vpop.permute.xlu0 %12863
  %12867 = vset.pattern.permute.xlu0 0
  %12868 = vperm.xlu0 %12867, %v11358
  %v12869 = vpop.permute.xlu0 %12868
  %12872 = vset.pattern.permute.xlu0 0
  %12873 = vperm.xlu0 %12872, %v11359
  %v12874 = vpop.permute.xlu0 %12873
  %12877 = vset.pattern.permute.xlu0 0
  %12878 = vperm.xlu0 %12877, %v11360
  %v12879 = vpop.permute.xlu0 %12878
  %12882 = vset.pattern.permute.xlu0 0
  %12883 = vperm.xlu0 %12882, %v11361
  %v12884 = vpop.permute.xlu0 %12883
  %12887 = vset.pattern.permute.xlu0 0
  %12888 = vperm.xlu0 %12887, %v11362
  %v12889 = vpop.permute.xlu0 %12888
  %12892 = vset.pattern.permute.xlu0 0
  %12893 = vperm.xlu0 %12892, %v11363
  %v12894 = vpop.permute.xlu0 %12893
  %12897 = vset.pattern.permute.xlu0 0
  %12898 = vperm.xlu0 %12897, %v11364
  %v12899 = vpop.permute.xlu0 %12898
  %v12901 = vadd.f32 %v12005, %v12264
  %v12902 = vadd.f32 %v12006, %v12264
  %v12903 = vadd.f32 %v12007, %v12269
  %v12904 = vadd.f32 %v12008, %v12269
  %v12905 = vadd.f32 %v12009, %v12274
  %v12906 = vadd.f32 %v12010, %v12274
  %v12907 = vadd.f32 %v12011, %v12279
  %v12908 = vadd.f32 %v12012, %v12279
  %v12909 = vadd.f32 %v12013, %v12284
  %v12910 = vadd.f32 %v12014, %v12284
  %v12911 = vadd.f32 %v12015, %v12289
  %v12912 = vadd.f32 %v12016, %v12289
  %v12913 = vadd.f32 %v12017, %v12294
  %v12914 = vadd.f32 %v12018, %v12294
  %v12915 = vadd.f32 %v12019, %v12299
  %v12916 = vadd.f32 %v12020, %v12299
  %v12917 = vadd.f32 %v12021, %v12304
  %v12918 = vadd.f32 %v12022, %v12304
  %v12919 = vadd.f32 %v12023, %v12309
  %v12920 = vadd.f32 %v12024, %v12309
  %v12921 = vadd.f32 %v12025, %v12314
  %v12922 = vadd.f32 %v12026, %v12314
  %v12923 = vadd.f32 %v12027, %v12319
  %v12924 = vadd.f32 %v12028, %v12319
  %v12925 = vadd.f32 %v12029, %v12324
  %v12926 = vadd.f32 %v12030, %v12324
  %v12927 = vadd.f32 %v12031, %v12329
  %v12928 = vadd.f32 %v12032, %v12329
  %v12929 = vadd.f32 %v12033, %v12334
  %v12930 = vadd.f32 %v12034, %v12334
  %v12931 = vadd.f32 %v12035, %v12339
  %v12932 = vadd.f32 %v12036, %v12339
  %v12933 = vadd.f32 %v12037, %v12344
  %v12934 = vadd.f32 %v12038, %v12344
  %v12935 = vadd.f32 %v12039, %v12349
  %v12936 = vadd.f32 %v12040, %v12349
  %v12937 = vadd.f32 %v12041, %v12354
  %v12938 = vadd.f32 %v12042, %v12354
  %v12939 = vadd.f32 %v12043, %v12359
  %v12940 = vadd.f32 %v12044, %v12359
  %v12941 = vadd.f32 %v12045, %v12364
  %v12942 = vadd.f32 %v12046, %v12364
  %v12943 = vadd.f32 %v12047, %v12369
  %v12944 = vadd.f32 %v12048, %v12369
  %v12945 = vadd.f32 %v12049, %v12374
  %v12946 = vadd.f32 %v12050, %v12374
  %v12947 = vadd.f32 %v12051, %v12379
  %v12948 = vadd.f32 %v12052, %v12379
  %v12949 = vadd.f32 %v12053, %v12384
  %v12950 = vadd.f32 %v12054, %v12384
  %v12951 = vadd.f32 %v12055, %v12389
  %v12952 = vadd.f32 %v12056, %v12389
  %v12953 = vadd.f32 %v12057, %v12394
  %v12954 = vadd.f32 %v12058, %v12394
  %v12955 = vadd.f32 %v12059, %v12399
  %v12956 = vadd.f32 %v12060, %v12399
  %v12957 = vadd.f32 %v12061, %v12404
  %v12958 = vadd.f32 %v12062, %v12404
  %v12959 = vadd.f32 %v12063, %v12409
  %v12960 = vadd.f32 %v12064, %v12409
  %v12961 = vadd.f32 %v12065, %v12414
  %v12962 = vadd.f32 %v12066, %v12414
  %v12963 = vadd.f32 %v12067, %v12419
  %v12964 = vadd.f32 %v12068, %v12419
  %v12965 = vadd.f32 %v12069, %v12424
  %v12966 = vadd.f32 %v12070, %v12424
  %v12967 = vadd.f32 %v12071, %v12429
  %v12968 = vadd.f32 %v12072, %v12429
  %v12969 = vadd.f32 %v12073, %v12434
  %v12970 = vadd.f32 %v12074, %v12434
  %v12971 = vadd.f32 %v12075, %v12439
  %v12972 = vadd.f32 %v12076, %v12439
  %v12973 = vadd.f32 %v12077, %v12444
  %v12974 = vadd.f32 %v12078, %v12444
  %v12975 = vadd.f32 %v12079, %v12449
  %v12976 = vadd.f32 %v12080, %v12449
  %v12977 = vadd.f32 %v12081, %v12454
  %v12978 = vadd.f32 %v12082, %v12454
  %v12979 = vadd.f32 %v12083, %v12459
  %v12980 = vadd.f32 %v12084, %v12459
  %v12981 = vadd.f32 %v12085, %v12464
  %v12982 = vadd.f32 %v12086, %v12464
  %v12983 = vadd.f32 %v12087, %v12469
  %v12984 = vadd.f32 %v12088, %v12469
  %v12985 = vadd.f32 %v12089, %v12474
  %v12986 = vadd.f32 %v12090, %v12474
  %v12987 = vadd.f32 %v12091, %v12479
  %v12988 = vadd.f32 %v12092, %v12479
  %v12989 = vadd.f32 %v12093, %v12484
  %v12990 = vadd.f32 %v12094, %v12484
  %v12991 = vadd.f32 %v12095, %v12489
  %v12992 = vadd.f32 %v12096, %v12489
  %v12993 = vadd.f32 %v12097, %v12494
  %v12994 = vadd.f32 %v12098, %v12494
  %v12995 = vadd.f32 %v12099, %v12499
  %v12996 = vadd.f32 %v12100, %v12499
  %v12997 = vadd.f32 %v12101, %v12504
  %v12998 = vadd.f32 %v12102, %v12504
  %v12999 = vadd.f32 %v12103, %v12509
  %v13000 = vadd.f32 %v12104, %v12509
  %v13001 = vadd.f32 %v12105, %v12514
  %v13002 = vadd.f32 %v12106, %v12514
  %v13003 = vadd.f32 %v12107, %v12519
  %v13004 = vadd.f32 %v12108, %v12519
  %v13005 = vadd.f32 %v12109, %v12524
  %v13006 = vadd.f32 %v12110, %v12524
  %v13007 = vadd.f32 %v12111, %v12529
  %v13008 = vadd.f32 %v12112, %v12529
  %v13009 = vadd.f32 %v12113, %v12534
  %v13010 = vadd.f32 %v12114, %v12534
  %v13011 = vadd.f32 %v12115, %v12539
  %v13012 = vadd.f32 %v12116, %v12539
  %v13013 = vadd.f32 %v12117, %v12544
  %v13014 = vadd.f32 %v12118, %v12544
  %v13015 = vadd.f32 %v12119, %v12549
  %v13016 = vadd.f32 %v12120, %v12549
  %v13017 = vadd.f32 %v12121, %v12554
  %v13018 = vadd.f32 %v12122, %v12554
  %v13019 = vadd.f32 %v12123, %v12559
  %v13020 = vadd.f32 %v12124, %v12559
  %v13021 = vadd.f32 %v12125, %v12564
  %v13022 = vadd.f32 %v12126, %v12564
  %v13023 = vadd.f32 %v12127, %v12569
  %v13024 = vadd.f32 %v12128, %v12569
  %v13025 = vadd.f32 %v12129, %v12574
  %v13026 = vadd.f32 %v12130, %v12574
  %v13027 = vadd.f32 %v12131, %v12579
  %v13028 = vadd.f32 %v12132, %v12579
  %v13029 = vadd.f32 %v12133, %v12584
  %v13030 = vadd.f32 %v12134, %v12584
  %v13031 = vadd.f32 %v12135, %v12589
  %v13032 = vadd.f32 %v12136, %v12589
  %v13033 = vadd.f32 %v12137, %v12594
  %v13034 = vadd.f32 %v12138, %v12594
  %v13035 = vadd.f32 %v12139, %v12599
  %v13036 = vadd.f32 %v12140, %v12599
  %v13037 = vadd.f32 %v12141, %v12604
  %v13038 = vadd.f32 %v12142, %v12604
  %v13039 = vadd.f32 %v12143, %v12609
  %v13040 = vadd.f32 %v12144, %v12609
  %v13041 = vadd.f32 %v12145, %v12614
  %v13042 = vadd.f32 %v12146, %v12614
  %v13043 = vadd.f32 %v12147, %v12619
  %v13044 = vadd.f32 %v12148, %v12619
  %v13045 = vadd.f32 %v12149, %v12624
  %v13046 = vadd.f32 %v12150, %v12624
  %v13047 = vadd.f32 %v12151, %v12629
  %v13048 = vadd.f32 %v12152, %v12629
  %v13049 = vadd.f32 %v12153, %v12634
  %v13050 = vadd.f32 %v12154, %v12634
  %v13051 = vadd.f32 %v12155, %v12639
  %v13052 = vadd.f32 %v12156, %v12639
  %v13053 = vadd.f32 %v12157, %v12644
  %v13054 = vadd.f32 %v12158, %v12644
  %v13055 = vadd.f32 %v12159, %v12649
  %v13056 = vadd.f32 %v12160, %v12649
  %v13057 = vadd.f32 %v12161, %v12654
  %v13058 = vadd.f32 %v12162, %v12654
  %v13059 = vadd.f32 %v12163, %v12659
  %v13060 = vadd.f32 %v12164, %v12659
  %v13061 = vadd.f32 %v12165, %v12664
  %v13062 = vadd.f32 %v12166, %v12664
  %v13063 = vadd.f32 %v12167, %v12669
  %v13064 = vadd.f32 %v12168, %v12669
  %v13065 = vadd.f32 %v12169, %v12674
  %v13066 = vadd.f32 %v12170, %v12674
  %v13067 = vadd.f32 %v12171, %v12679
  %v13068 = vadd.f32 %v12172, %v12679
  %v13069 = vadd.f32 %v12173, %v12684
  %v13070 = vadd.f32 %v12174, %v12684
  %v13071 = vadd.f32 %v12175, %v12689
  %v13072 = vadd.f32 %v12176, %v12689
  %v13073 = vadd.f32 %v12177, %v12694
  %v13074 = vadd.f32 %v12178, %v12694
  %v13075 = vadd.f32 %v12179, %v12699
  %v13076 = vadd.f32 %v12180, %v12699
  %v13077 = vadd.f32 %v12181, %v12704
  %v13078 = vadd.f32 %v12182, %v12704
  %v13079 = vadd.f32 %v12183, %v12709
  %v13080 = vadd.f32 %v12184, %v12709
  %v13081 = vadd.f32 %v12185, %v12714
  %v13082 = vadd.f32 %v12186, %v12714
  %v13083 = vadd.f32 %v12187, %v12719
  %v13084 = vadd.f32 %v12188, %v12719
  %v13085 = vadd.f32 %v12189, %v12724
  %v13086 = vadd.f32 %v12190, %v12724
  %v13087 = vadd.f32 %v12191, %v12729
  %v13088 = vadd.f32 %v12192, %v12729
  %v13089 = vadd.f32 %v12193, %v12734
  %v13090 = vadd.f32 %v12194, %v12734
  %v13091 = vadd.f32 %v12195, %v12739
  %v13092 = vadd.f32 %v12196, %v12739
  %v13093 = vadd.f32 %v12197, %v12744
  %v13094 = vadd.f32 %v12198, %v12744
  %v13095 = vadd.f32 %v12199, %v12749
  %v13096 = vadd.f32 %v12200, %v12749
  %v13097 = vadd.f32 %v12201, %v12754
  %v13098 = vadd.f32 %v12202, %v12754
  %v13099 = vadd.f32 %v12203, %v12759
  %v13100 = vadd.f32 %v12204, %v12759
  %v13101 = vadd.f32 %v12205, %v12764
  %v13102 = vadd.f32 %v12206, %v12764
  %v13103 = vadd.f32 %v12207, %v12769
  %v13104 = vadd.f32 %v12208, %v12769
  %v13105 = vadd.f32 %v12209, %v12774
  %v13106 = vadd.f32 %v12210, %v12774
  %v13107 = vadd.f32 %v12211, %v12779
  %v13108 = vadd.f32 %v12212, %v12779
  %v13109 = vadd.f32 %v12213, %v12784
  %v13110 = vadd.f32 %v12214, %v12784
  %v13111 = vadd.f32 %v12215, %v12789
  %v13112 = vadd.f32 %v12216, %v12789
  %v13113 = vadd.f32 %v12217, %v12794
  %v13114 = vadd.f32 %v12218, %v12794
  %v13115 = vadd.f32 %v12219, %v12799
  %v13116 = vadd.f32 %v12220, %v12799
  %v13117 = vadd.f32 %v12221, %v12804
  %v13118 = vadd.f32 %v12222, %v12804
  %v13119 = vadd.f32 %v12223, %v12809
  %v13120 = vadd.f32 %v12224, %v12809
  %v13121 = vadd.f32 %v12225, %v12814
  %v13122 = vadd.f32 %v12226, %v12814
  %v13123 = vadd.f32 %v12227, %v12819
  %v13124 = vadd.f32 %v12228, %v12819
  %v13125 = vadd.f32 %v12229, %v12824
  %v13126 = vadd.f32 %v12230, %v12824
  %v13127 = vadd.f32 %v12231, %v12829
  %v13128 = vadd.f32 %v12232, %v12829
  %v13129 = vadd.f32 %v12233, %v12834
  %v13130 = vadd.f32 %v12234, %v12834
  %v13131 = vadd.f32 %v12235, %v12839
  %v13132 = vadd.f32 %v12236, %v12839
  %v13133 = vadd.f32 %v12237, %v12844
  %v13134 = vadd.f32 %v12238, %v12844
  %v13135 = vadd.f32 %v12239, %v12849
  %v13136 = vadd.f32 %v12240, %v12849
  %v13137 = vadd.f32 %v12241, %v12854
  %v13138 = vadd.f32 %v12242, %v12854
  %v13139 = vadd.f32 %v12243, %v12859
  %v13140 = vadd.f32 %v12244, %v12859
  %v13141 = vadd.f32 %v12245, %v12864
  %v13142 = vadd.f32 %v12246, %v12864
  %v13143 = vadd.f32 %v12247, %v12869
  %v13144 = vadd.f32 %v12248, %v12869
  %v13145 = vadd.f32 %v12249, %v12874
  %v13146 = vadd.f32 %v12250, %v12874
  %v13147 = vadd.f32 %v12251, %v12879
  %v13148 = vadd.f32 %v12252, %v12879
  %v13149 = vadd.f32 %v12253, %v12884
  %v13150 = vadd.f32 %v12254, %v12884
  %v13151 = vadd.f32 %v12255, %v12889
  %v13152 = vadd.f32 %v12256, %v12889
  %v13153 = vadd.f32 %v12257, %v12894
  %v13154 = vadd.f32 %v12258, %v12894
  %v13155 = vadd.f32 %v12259, %v12899
  %v13156 = vadd.f32 %v12260, %v12899
  %v13157 = vpack.c.bf16 %v12903, %v12901
  %v13158 = vpack.c.bf16 %v12904, %v12902
  %v13159 = vpack.c.bf16 %v12907, %v12905
  %v13160 = vpack.c.bf16 %v12908, %v12906
  %v13161 = vpack.c.bf16 %v12911, %v12909
  %v13162 = vpack.c.bf16 %v12912, %v12910
  %v13163 = vpack.c.bf16 %v12915, %v12913
  %v13164 = vpack.c.bf16 %v12916, %v12914
  %v13165 = vpack.c.bf16 %v12919, %v12917
  %v13166 = vpack.c.bf16 %v12920, %v12918
  %v13167 = vpack.c.bf16 %v12923, %v12921
  %v13168 = vpack.c.bf16 %v12924, %v12922
  %v13169 = vpack.c.bf16 %v12927, %v12925
  %v13170 = vpack.c.bf16 %v12928, %v12926
  %v13171 = vpack.c.bf16 %v12931, %v12929
  %v13172 = vpack.c.bf16 %v12932, %v12930
  %v13173 = vpack.c.bf16 %v12935, %v12933
  %v13174 = vpack.c.bf16 %v12936, %v12934
  %v13175 = vpack.c.bf16 %v12939, %v12937
  %v13176 = vpack.c.bf16 %v12940, %v12938
  %v13177 = vpack.c.bf16 %v12943, %v12941
  %v13178 = vpack.c.bf16 %v12944, %v12942
  %v13179 = vpack.c.bf16 %v12947, %v12945
  %v13180 = vpack.c.bf16 %v12948, %v12946
  %v13181 = vpack.c.bf16 %v12951, %v12949
  %v13182 = vpack.c.bf16 %v12952, %v12950
  %v13183 = vpack.c.bf16 %v12955, %v12953
  %v13184 = vpack.c.bf16 %v12956, %v12954
  %v13185 = vpack.c.bf16 %v12959, %v12957
  %v13186 = vpack.c.bf16 %v12960, %v12958
  %v13187 = vpack.c.bf16 %v12963, %v12961
  %v13188 = vpack.c.bf16 %v12964, %v12962
  %v13189 = vpack.c.bf16 %v12967, %v12965
  %v13190 = vpack.c.bf16 %v12968, %v12966
  %v13191 = vpack.c.bf16 %v12971, %v12969
  %v13192 = vpack.c.bf16 %v12972, %v12970
  %v13193 = vpack.c.bf16 %v12975, %v12973
  %v13194 = vpack.c.bf16 %v12976, %v12974
  %v13195 = vpack.c.bf16 %v12979, %v12977
  %v13196 = vpack.c.bf16 %v12980, %v12978
  %v13197 = vpack.c.bf16 %v12983, %v12981
  %v13198 = vpack.c.bf16 %v12984, %v12982
  %v13199 = vpack.c.bf16 %v12987, %v12985
  %v13200 = vpack.c.bf16 %v12988, %v12986
  %v13201 = vpack.c.bf16 %v12991, %v12989
  %v13202 = vpack.c.bf16 %v12992, %v12990
  %v13203 = vpack.c.bf16 %v12995, %v12993
  %v13204 = vpack.c.bf16 %v12996, %v12994
  %v13205 = vpack.c.bf16 %v12999, %v12997
  %v13206 = vpack.c.bf16 %v13000, %v12998
  %v13207 = vpack.c.bf16 %v13003, %v13001
  %v13208 = vpack.c.bf16 %v13004, %v13002
  %v13209 = vpack.c.bf16 %v13007, %v13005
  %v13210 = vpack.c.bf16 %v13008, %v13006
  %v13211 = vpack.c.bf16 %v13011, %v13009
  %v13212 = vpack.c.bf16 %v13012, %v13010
  %v13213 = vpack.c.bf16 %v13015, %v13013
  %v13214 = vpack.c.bf16 %v13016, %v13014
  %v13215 = vpack.c.bf16 %v13019, %v13017
  %v13216 = vpack.c.bf16 %v13020, %v13018
  %v13217 = vpack.c.bf16 %v13023, %v13021
  %v13218 = vpack.c.bf16 %v13024, %v13022
  %v13219 = vpack.c.bf16 %v13027, %v13025
  %v13220 = vpack.c.bf16 %v13028, %v13026
  %v13221 = vpack.c.bf16 %v13031, %v13029
  %v13222 = vpack.c.bf16 %v13032, %v13030
  %v13223 = vpack.c.bf16 %v13035, %v13033
  %v13224 = vpack.c.bf16 %v13036, %v13034
  %v13225 = vpack.c.bf16 %v13039, %v13037
  %v13226 = vpack.c.bf16 %v13040, %v13038
  %v13227 = vpack.c.bf16 %v13043, %v13041
  %v13228 = vpack.c.bf16 %v13044, %v13042
  %v13229 = vpack.c.bf16 %v13047, %v13045
  %v13230 = vpack.c.bf16 %v13048, %v13046
  %v13231 = vpack.c.bf16 %v13051, %v13049
  %v13232 = vpack.c.bf16 %v13052, %v13050
  %v13233 = vpack.c.bf16 %v13055, %v13053
  %v13234 = vpack.c.bf16 %v13056, %v13054
  %v13235 = vpack.c.bf16 %v13059, %v13057
  %v13236 = vpack.c.bf16 %v13060, %v13058
  %v13237 = vpack.c.bf16 %v13063, %v13061
  %v13238 = vpack.c.bf16 %v13064, %v13062
  %v13239 = vpack.c.bf16 %v13067, %v13065
  %v13240 = vpack.c.bf16 %v13068, %v13066
  %v13241 = vpack.c.bf16 %v13071, %v13069
  %v13242 = vpack.c.bf16 %v13072, %v13070
  %v13243 = vpack.c.bf16 %v13075, %v13073
  %v13244 = vpack.c.bf16 %v13076, %v13074
  %v13245 = vpack.c.bf16 %v13079, %v13077
  %v13246 = vpack.c.bf16 %v13080, %v13078
  %v13247 = vpack.c.bf16 %v13083, %v13081
  %v13248 = vpack.c.bf16 %v13084, %v13082
  %v13249 = vpack.c.bf16 %v13087, %v13085
  %v13250 = vpack.c.bf16 %v13088, %v13086
  %v13251 = vpack.c.bf16 %v13091, %v13089
  %v13252 = vpack.c.bf16 %v13092, %v13090
  %v13253 = vpack.c.bf16 %v13095, %v13093
  %v13254 = vpack.c.bf16 %v13096, %v13094
  %v13255 = vpack.c.bf16 %v13099, %v13097
  %v13256 = vpack.c.bf16 %v13100, %v13098
  %v13257 = vpack.c.bf16 %v13103, %v13101
  %v13258 = vpack.c.bf16 %v13104, %v13102
  %v13259 = vpack.c.bf16 %v13107, %v13105
  %v13260 = vpack.c.bf16 %v13108, %v13106
  %v13261 = vpack.c.bf16 %v13111, %v13109
  %v13262 = vpack.c.bf16 %v13112, %v13110
  %v13263 = vpack.c.bf16 %v13115, %v13113
  %v13264 = vpack.c.bf16 %v13116, %v13114
  %v13265 = vpack.c.bf16 %v13119, %v13117
  %v13266 = vpack.c.bf16 %v13120, %v13118
  %v13267 = vpack.c.bf16 %v13123, %v13121
  %v13268 = vpack.c.bf16 %v13124, %v13122
  %v13269 = vpack.c.bf16 %v13127, %v13125
  %v13270 = vpack.c.bf16 %v13128, %v13126
  %v13271 = vpack.c.bf16 %v13131, %v13129
  %v13272 = vpack.c.bf16 %v13132, %v13130
  %v13273 = vpack.c.bf16 %v13135, %v13133
  %v13274 = vpack.c.bf16 %v13136, %v13134
  %v13275 = vpack.c.bf16 %v13139, %v13137
  %v13276 = vpack.c.bf16 %v13140, %v13138
  %v13277 = vpack.c.bf16 %v13143, %v13141
  %v13278 = vpack.c.bf16 %v13144, %v13142
  %v13279 = vpack.c.bf16 %v13147, %v13145
  %v13280 = vpack.c.bf16 %v13148, %v13146
  %v13281 = vpack.c.bf16 %v13151, %v13149
  %v13282 = vpack.c.bf16 %v13152, %v13150
  %v13283 = vpack.c.bf16 %v13155, %v13153
  %v13284 = vpack.c.bf16 %v13156, %v13154
  %v13413 = vunpack.c.l.b16 %v13157
  %v13414 = vunpack.c.l.b16 %v13158
  %v13415 = vunpack.c.h.b16 %v13157
  %v13416 = vunpack.c.h.b16 %v13158
  %v13417 = vunpack.c.l.b16 %v13159
  %v13418 = vunpack.c.l.b16 %v13160
  %v13419 = vunpack.c.h.b16 %v13159
  %v13420 = vunpack.c.h.b16 %v13160
  %v13421 = vunpack.c.l.b16 %v13161
  %v13422 = vunpack.c.l.b16 %v13162
  %v13423 = vunpack.c.h.b16 %v13161
  %v13424 = vunpack.c.h.b16 %v13162
  %v13425 = vunpack.c.l.b16 %v13163
  %v13426 = vunpack.c.l.b16 %v13164
  %v13427 = vunpack.c.h.b16 %v13163
  %v13428 = vunpack.c.h.b16 %v13164
  %v13429 = vunpack.c.l.b16 %v13165
  %v13430 = vunpack.c.l.b16 %v13166
  %v13431 = vunpack.c.h.b16 %v13165
  %v13432 = vunpack.c.h.b16 %v13166
  %v13433 = vunpack.c.l.b16 %v13167
  %v13434 = vunpack.c.l.b16 %v13168
  %v13435 = vunpack.c.h.b16 %v13167
  %v13436 = vunpack.c.h.b16 %v13168
  %v13437 = vunpack.c.l.b16 %v13169
  %v13438 = vunpack.c.l.b16 %v13170
  %v13439 = vunpack.c.h.b16 %v13169
  %v13440 = vunpack.c.h.b16 %v13170
  %v13441 = vunpack.c.l.b16 %v13171
  %v13442 = vunpack.c.l.b16 %v13172
  %v13443 = vunpack.c.h.b16 %v13171
  %v13444 = vunpack.c.h.b16 %v13172
  %v13445 = vunpack.c.l.b16 %v13173
  %v13446 = vunpack.c.l.b16 %v13174
  %v13447 = vunpack.c.h.b16 %v13173
  %v13448 = vunpack.c.h.b16 %v13174
  %v13449 = vunpack.c.l.b16 %v13175
  %v13450 = vunpack.c.l.b16 %v13176
  %v13451 = vunpack.c.h.b16 %v13175
  %v13452 = vunpack.c.h.b16 %v13176
  %v13453 = vunpack.c.l.b16 %v13177
  %v13454 = vunpack.c.l.b16 %v13178
  %v13455 = vunpack.c.h.b16 %v13177
  %v13456 = vunpack.c.h.b16 %v13178
  %v13457 = vunpack.c.l.b16 %v13179
  %v13458 = vunpack.c.l.b16 %v13180
  %v13459 = vunpack.c.h.b16 %v13179
  %v13460 = vunpack.c.h.b16 %v13180
  %v13461 = vunpack.c.l.b16 %v13181
  %v13462 = vunpack.c.l.b16 %v13182
  %v13463 = vunpack.c.h.b16 %v13181
  %v13464 = vunpack.c.h.b16 %v13182
  %v13465 = vunpack.c.l.b16 %v13183
  %v13466 = vunpack.c.l.b16 %v13184
  %v13467 = vunpack.c.h.b16 %v13183
  %v13468 = vunpack.c.h.b16 %v13184
  %v13469 = vunpack.c.l.b16 %v13185
  %v13470 = vunpack.c.l.b16 %v13186
  %v13471 = vunpack.c.h.b16 %v13185
  %v13472 = vunpack.c.h.b16 %v13186
  %v13473 = vunpack.c.l.b16 %v13187
  %v13474 = vunpack.c.l.b16 %v13188
  %v13475 = vunpack.c.h.b16 %v13187
  %v13476 = vunpack.c.h.b16 %v13188
  %v13477 = vunpack.c.l.b16 %v13189
  %v13478 = vunpack.c.l.b16 %v13190
  %v13479 = vunpack.c.h.b16 %v13189
  %v13480 = vunpack.c.h.b16 %v13190
  %v13481 = vunpack.c.l.b16 %v13191
  %v13482 = vunpack.c.l.b16 %v13192
  %v13483 = vunpack.c.h.b16 %v13191
  %v13484 = vunpack.c.h.b16 %v13192
  %v13485 = vunpack.c.l.b16 %v13193
  %v13486 = vunpack.c.l.b16 %v13194
  %v13487 = vunpack.c.h.b16 %v13193
  %v13488 = vunpack.c.h.b16 %v13194
  %v13489 = vunpack.c.l.b16 %v13195
  %v13490 = vunpack.c.l.b16 %v13196
  %v13491 = vunpack.c.h.b16 %v13195
  %v13492 = vunpack.c.h.b16 %v13196
  %v13493 = vunpack.c.l.b16 %v13197
  %v13494 = vunpack.c.l.b16 %v13198
  %v13495 = vunpack.c.h.b16 %v13197
  %v13496 = vunpack.c.h.b16 %v13198
  %v13497 = vunpack.c.l.b16 %v13199
  %v13498 = vunpack.c.l.b16 %v13200
  %v13499 = vunpack.c.h.b16 %v13199
  %v13500 = vunpack.c.h.b16 %v13200
  %v13501 = vunpack.c.l.b16 %v13201
  %v13502 = vunpack.c.l.b16 %v13202
  %v13503 = vunpack.c.h.b16 %v13201
  %v13504 = vunpack.c.h.b16 %v13202
  %v13505 = vunpack.c.l.b16 %v13203
  %v13506 = vunpack.c.l.b16 %v13204
  %v13507 = vunpack.c.h.b16 %v13203
  %v13508 = vunpack.c.h.b16 %v13204
  %v13509 = vunpack.c.l.b16 %v13205
  %v13510 = vunpack.c.l.b16 %v13206
  %v13511 = vunpack.c.h.b16 %v13205
  %v13512 = vunpack.c.h.b16 %v13206
  %v13513 = vunpack.c.l.b16 %v13207
  %v13514 = vunpack.c.l.b16 %v13208
  %v13515 = vunpack.c.h.b16 %v13207
  %v13516 = vunpack.c.h.b16 %v13208
  %v13517 = vunpack.c.l.b16 %v13209
  %v13518 = vunpack.c.l.b16 %v13210
  %v13519 = vunpack.c.h.b16 %v13209
  %v13520 = vunpack.c.h.b16 %v13210
  %v13521 = vunpack.c.l.b16 %v13211
  %v13522 = vunpack.c.l.b16 %v13212
  %v13523 = vunpack.c.h.b16 %v13211
  %v13524 = vunpack.c.h.b16 %v13212
  %v13525 = vunpack.c.l.b16 %v13213
  %v13526 = vunpack.c.l.b16 %v13214
  %v13527 = vunpack.c.h.b16 %v13213
  %v13528 = vunpack.c.h.b16 %v13214
  %v13529 = vunpack.c.l.b16 %v13215
  %v13530 = vunpack.c.l.b16 %v13216
  %v13531 = vunpack.c.h.b16 %v13215
  %v13532 = vunpack.c.h.b16 %v13216
  %v13533 = vunpack.c.l.b16 %v13217
  %v13534 = vunpack.c.l.b16 %v13218
  %v13535 = vunpack.c.h.b16 %v13217
  %v13536 = vunpack.c.h.b16 %v13218
  %v13537 = vunpack.c.l.b16 %v13219
  %v13538 = vunpack.c.l.b16 %v13220
  %v13539 = vunpack.c.h.b16 %v13219
  %v13540 = vunpack.c.h.b16 %v13220
  %v13541 = vunpack.c.l.b16 %v13221
  %v13542 = vunpack.c.l.b16 %v13222
  %v13543 = vunpack.c.h.b16 %v13221
  %v13544 = vunpack.c.h.b16 %v13222
  %v13545 = vunpack.c.l.b16 %v13223
  %v13546 = vunpack.c.l.b16 %v13224
  %v13547 = vunpack.c.h.b16 %v13223
  %v13548 = vunpack.c.h.b16 %v13224
  %v13549 = vunpack.c.l.b16 %v13225
  %v13550 = vunpack.c.l.b16 %v13226
  %v13551 = vunpack.c.h.b16 %v13225
  %v13552 = vunpack.c.h.b16 %v13226
  %v13553 = vunpack.c.l.b16 %v13227
  %v13554 = vunpack.c.l.b16 %v13228
  %v13555 = vunpack.c.h.b16 %v13227
  %v13556 = vunpack.c.h.b16 %v13228
  %v13557 = vunpack.c.l.b16 %v13229
  %v13558 = vunpack.c.l.b16 %v13230
  %v13559 = vunpack.c.h.b16 %v13229
  %v13560 = vunpack.c.h.b16 %v13230
  %v13561 = vunpack.c.l.b16 %v13231
  %v13562 = vunpack.c.l.b16 %v13232
  %v13563 = vunpack.c.h.b16 %v13231
  %v13564 = vunpack.c.h.b16 %v13232
  %v13565 = vunpack.c.l.b16 %v13233
  %v13566 = vunpack.c.l.b16 %v13234
  %v13567 = vunpack.c.h.b16 %v13233
  %v13568 = vunpack.c.h.b16 %v13234
  %v13569 = vunpack.c.l.b16 %v13235
  %v13570 = vunpack.c.l.b16 %v13236
  %v13571 = vunpack.c.h.b16 %v13235
  %v13572 = vunpack.c.h.b16 %v13236
  %v13573 = vunpack.c.l.b16 %v13237
  %v13574 = vunpack.c.l.b16 %v13238
  %v13575 = vunpack.c.h.b16 %v13237
  %v13576 = vunpack.c.h.b16 %v13238
  %v13577 = vunpack.c.l.b16 %v13239
  %v13578 = vunpack.c.l.b16 %v13240
  %v13579 = vunpack.c.h.b16 %v13239
  %v13580 = vunpack.c.h.b16 %v13240
  %v13581 = vunpack.c.l.b16 %v13241
  %v13582 = vunpack.c.l.b16 %v13242
  %v13583 = vunpack.c.h.b16 %v13241
  %v13584 = vunpack.c.h.b16 %v13242
  %v13585 = vunpack.c.l.b16 %v13243
  %v13586 = vunpack.c.l.b16 %v13244
  %v13587 = vunpack.c.h.b16 %v13243
  %v13588 = vunpack.c.h.b16 %v13244
  %v13589 = vunpack.c.l.b16 %v13245
  %v13590 = vunpack.c.l.b16 %v13246
  %v13591 = vunpack.c.h.b16 %v13245
  %v13592 = vunpack.c.h.b16 %v13246
  %v13593 = vunpack.c.l.b16 %v13247
  %v13594 = vunpack.c.l.b16 %v13248
  %v13595 = vunpack.c.h.b16 %v13247
  %v13596 = vunpack.c.h.b16 %v13248
  %v13597 = vunpack.c.l.b16 %v13249
  %v13598 = vunpack.c.l.b16 %v13250
  %v13599 = vunpack.c.h.b16 %v13249
  %v13600 = vunpack.c.h.b16 %v13250
  %v13601 = vunpack.c.l.b16 %v13251
  %v13602 = vunpack.c.l.b16 %v13252
  %v13603 = vunpack.c.h.b16 %v13251
  %v13604 = vunpack.c.h.b16 %v13252
  %v13605 = vunpack.c.l.b16 %v13253
  %v13606 = vunpack.c.l.b16 %v13254
  %v13607 = vunpack.c.h.b16 %v13253
  %v13608 = vunpack.c.h.b16 %v13254
  %v13609 = vunpack.c.l.b16 %v13255
  %v13610 = vunpack.c.l.b16 %v13256
  %v13611 = vunpack.c.h.b16 %v13255
  %v13612 = vunpack.c.h.b16 %v13256
  %v13613 = vunpack.c.l.b16 %v13257
  %v13614 = vunpack.c.l.b16 %v13258
  %v13615 = vunpack.c.h.b16 %v13257
  %v13616 = vunpack.c.h.b16 %v13258
  %v13617 = vunpack.c.l.b16 %v13259
  %v13618 = vunpack.c.l.b16 %v13260
  %v13619 = vunpack.c.h.b16 %v13259
  %v13620 = vunpack.c.h.b16 %v13260
  %v13621 = vunpack.c.l.b16 %v13261
  %v13622 = vunpack.c.l.b16 %v13262
  %v13623 = vunpack.c.h.b16 %v13261
  %v13624 = vunpack.c.h.b16 %v13262
  %v13625 = vunpack.c.l.b16 %v13263
  %v13626 = vunpack.c.l.b16 %v13264
  %v13627 = vunpack.c.h.b16 %v13263
  %v13628 = vunpack.c.h.b16 %v13264
  %v13629 = vunpack.c.l.b16 %v13265
  %v13630 = vunpack.c.l.b16 %v13266
  %v13631 = vunpack.c.h.b16 %v13265
  %v13632 = vunpack.c.h.b16 %v13266
  %v13633 = vunpack.c.l.b16 %v13267
  %v13634 = vunpack.c.l.b16 %v13268
  %v13635 = vunpack.c.h.b16 %v13267
  %v13636 = vunpack.c.h.b16 %v13268
  %v13637 = vunpack.c.l.b16 %v13269
  %v13638 = vunpack.c.l.b16 %v13270
  %v13639 = vunpack.c.h.b16 %v13269
  %v13640 = vunpack.c.h.b16 %v13270
  %v13641 = vunpack.c.l.b16 %v13271
  %v13642 = vunpack.c.l.b16 %v13272
  %v13643 = vunpack.c.h.b16 %v13271
  %v13644 = vunpack.c.h.b16 %v13272
  %v13645 = vunpack.c.l.b16 %v13273
  %v13646 = vunpack.c.l.b16 %v13274
  %v13647 = vunpack.c.h.b16 %v13273
  %v13648 = vunpack.c.h.b16 %v13274
  %v13649 = vunpack.c.l.b16 %v13275
  %v13650 = vunpack.c.l.b16 %v13276
  %v13651 = vunpack.c.h.b16 %v13275
  %v13652 = vunpack.c.h.b16 %v13276
  %v13653 = vunpack.c.l.b16 %v13277
  %v13654 = vunpack.c.l.b16 %v13278
  %v13655 = vunpack.c.h.b16 %v13277
  %v13656 = vunpack.c.h.b16 %v13278
  %v13657 = vunpack.c.l.b16 %v13279
  %v13658 = vunpack.c.l.b16 %v13280
  %v13659 = vunpack.c.h.b16 %v13279
  %v13660 = vunpack.c.h.b16 %v13280
  %v13661 = vunpack.c.l.b16 %v13281
  %v13662 = vunpack.c.l.b16 %v13282
  %v13663 = vunpack.c.h.b16 %v13281
  %v13664 = vunpack.c.h.b16 %v13282
  %v13665 = vunpack.c.l.b16 %v13283
  %v13666 = vunpack.c.l.b16 %v13284
  %v13667 = vunpack.c.h.b16 %v13283
  %v13668 = vunpack.c.h.b16 %v13284
  %v13669 = vpack.c.b16 %v13414, %v13413
  %v13670 = vpack.c.b16 %v13416, %v13415
  %v13671 = vpack.c.b16 %v13418, %v13417
  %v13672 = vpack.c.b16 %v13420, %v13419
  %v13673 = vpack.c.b16 %v13422, %v13421
  %v13674 = vpack.c.b16 %v13424, %v13423
  %v13675 = vpack.c.b16 %v13426, %v13425
  %v13676 = vpack.c.b16 %v13428, %v13427
  %v13677 = vpack.c.b16 %v13430, %v13429
  %v13678 = vpack.c.b16 %v13432, %v13431
  %v13679 = vpack.c.b16 %v13434, %v13433
  %v13680 = vpack.c.b16 %v13436, %v13435
  %v13681 = vpack.c.b16 %v13438, %v13437
  %v13682 = vpack.c.b16 %v13440, %v13439
  %v13683 = vpack.c.b16 %v13442, %v13441
  %v13684 = vpack.c.b16 %v13444, %v13443
  %v13685 = vpack.c.b16 %v13446, %v13445
  %v13686 = vpack.c.b16 %v13448, %v13447
  %v13687 = vpack.c.b16 %v13450, %v13449
  %v13688 = vpack.c.b16 %v13452, %v13451
  %v13689 = vpack.c.b16 %v13454, %v13453
  %v13690 = vpack.c.b16 %v13456, %v13455
  %v13691 = vpack.c.b16 %v13458, %v13457
  %v13692 = vpack.c.b16 %v13460, %v13459
  %v13693 = vpack.c.b16 %v13462, %v13461
  %v13694 = vpack.c.b16 %v13464, %v13463
  %v13695 = vpack.c.b16 %v13466, %v13465
  %v13696 = vpack.c.b16 %v13468, %v13467
  %v13697 = vpack.c.b16 %v13470, %v13469
  %v13698 = vpack.c.b16 %v13472, %v13471
  %v13699 = vpack.c.b16 %v13474, %v13473
  %v13700 = vpack.c.b16 %v13476, %v13475
  %v13701 = vpack.c.b16 %v13478, %v13477
  %v13702 = vpack.c.b16 %v13480, %v13479
  %v13703 = vpack.c.b16 %v13482, %v13481
  %v13704 = vpack.c.b16 %v13484, %v13483
  %v13705 = vpack.c.b16 %v13486, %v13485
  %v13706 = vpack.c.b16 %v13488, %v13487
  %v13707 = vpack.c.b16 %v13490, %v13489
  %v13708 = vpack.c.b16 %v13492, %v13491
  %v13709 = vpack.c.b16 %v13494, %v13493
  %v13710 = vpack.c.b16 %v13496, %v13495
  %v13711 = vpack.c.b16 %v13498, %v13497
  %v13712 = vpack.c.b16 %v13500, %v13499
  %v13713 = vpack.c.b16 %v13502, %v13501
  %v13714 = vpack.c.b16 %v13504, %v13503
  %v13715 = vpack.c.b16 %v13506, %v13505
  %v13716 = vpack.c.b16 %v13508, %v13507
  %v13717 = vpack.c.b16 %v13510, %v13509
  %v13718 = vpack.c.b16 %v13512, %v13511
  %v13719 = vpack.c.b16 %v13514, %v13513
  %v13720 = vpack.c.b16 %v13516, %v13515
  %v13721 = vpack.c.b16 %v13518, %v13517
  %v13722 = vpack.c.b16 %v13520, %v13519
  %v13723 = vpack.c.b16 %v13522, %v13521
  %v13724 = vpack.c.b16 %v13524, %v13523
  %v13725 = vpack.c.b16 %v13526, %v13525
  %v13726 = vpack.c.b16 %v13528, %v13527
  %v13727 = vpack.c.b16 %v13530, %v13529
  %v13728 = vpack.c.b16 %v13532, %v13531
  %v13729 = vpack.c.b16 %v13534, %v13533
  %v13730 = vpack.c.b16 %v13536, %v13535
  %v13731 = vpack.c.b16 %v13538, %v13537
  %v13732 = vpack.c.b16 %v13540, %v13539
  %v13733 = vpack.c.b16 %v13542, %v13541
  %v13734 = vpack.c.b16 %v13544, %v13543
  %v13735 = vpack.c.b16 %v13546, %v13545
  %v13736 = vpack.c.b16 %v13548, %v13547
  %v13737 = vpack.c.b16 %v13550, %v13549
  %v13738 = vpack.c.b16 %v13552, %v13551
  %v13739 = vpack.c.b16 %v13554, %v13553
  %v13740 = vpack.c.b16 %v13556, %v13555
  %v13741 = vpack.c.b16 %v13558, %v13557
  %v13742 = vpack.c.b16 %v13560, %v13559
  %v13743 = vpack.c.b16 %v13562, %v13561
  %v13744 = vpack.c.b16 %v13564, %v13563
  %v13745 = vpack.c.b16 %v13566, %v13565
  %v13746 = vpack.c.b16 %v13568, %v13567
  %v13747 = vpack.c.b16 %v13570, %v13569
  %v13748 = vpack.c.b16 %v13572, %v13571
  %v13749 = vpack.c.b16 %v13574, %v13573
  %v13750 = vpack.c.b16 %v13576, %v13575
  %v13751 = vpack.c.b16 %v13578, %v13577
  %v13752 = vpack.c.b16 %v13580, %v13579
  %v13753 = vpack.c.b16 %v13582, %v13581
  %v13754 = vpack.c.b16 %v13584, %v13583
  %v13755 = vpack.c.b16 %v13586, %v13585
  %v13756 = vpack.c.b16 %v13588, %v13587
  %v13757 = vpack.c.b16 %v13590, %v13589
  %v13758 = vpack.c.b16 %v13592, %v13591
  %v13759 = vpack.c.b16 %v13594, %v13593
  %v13760 = vpack.c.b16 %v13596, %v13595
  %v13761 = vpack.c.b16 %v13598, %v13597
  %v13762 = vpack.c.b16 %v13600, %v13599
  %v13763 = vpack.c.b16 %v13602, %v13601
  %v13764 = vpack.c.b16 %v13604, %v13603
  %v13765 = vpack.c.b16 %v13606, %v13605
  %v13766 = vpack.c.b16 %v13608, %v13607
  %v13767 = vpack.c.b16 %v13610, %v13609
  %v13768 = vpack.c.b16 %v13612, %v13611
  %v13769 = vpack.c.b16 %v13614, %v13613
  %v13770 = vpack.c.b16 %v13616, %v13615
  %v13771 = vpack.c.b16 %v13618, %v13617
  %v13772 = vpack.c.b16 %v13620, %v13619
  %v13773 = vpack.c.b16 %v13622, %v13621
  %v13774 = vpack.c.b16 %v13624, %v13623
  %v13775 = vpack.c.b16 %v13626, %v13625
  %v13776 = vpack.c.b16 %v13628, %v13627
  %v13777 = vpack.c.b16 %v13630, %v13629
  %v13778 = vpack.c.b16 %v13632, %v13631
  %v13779 = vpack.c.b16 %v13634, %v13633
  %v13780 = vpack.c.b16 %v13636, %v13635
  %v13781 = vpack.c.b16 %v13638, %v13637
  %v13782 = vpack.c.b16 %v13640, %v13639
  %v13783 = vpack.c.b16 %v13642, %v13641
  %v13784 = vpack.c.b16 %v13644, %v13643
  %v13785 = vpack.c.b16 %v13646, %v13645
  %v13786 = vpack.c.b16 %v13648, %v13647
  %v13787 = vpack.c.b16 %v13650, %v13649
  %v13788 = vpack.c.b16 %v13652, %v13651
  %v13789 = vpack.c.b16 %v13654, %v13653
  %v13790 = vpack.c.b16 %v13656, %v13655
  %v13791 = vpack.c.b16 %v13658, %v13657
  %v13792 = vpack.c.b16 %v13660, %v13659
  %v13793 = vpack.c.b16 %v13662, %v13661
  %v13794 = vpack.c.b16 %v13664, %v13663
  %v13795 = vpack.c.b16 %v13666, %v13665
  %v13796 = vpack.c.b16 %v13668, %v13667
  %13925 = vst [vmem:[%s8] sm:$0xff] %v13669
  %13926 = vst [vmem:[%s8 + $0x8] sm:$0xff] %v13670
  %13927 = vst [vmem:[%s8 + $0x10] sm:$0xff] %v13671
  %13928 = vst [vmem:[%s8 + $0x18] sm:$0xff] %v13672
  %13929 = vst [vmem:[%s8 + $0x20] sm:$0xff] %v13673
  %13930 = vst [vmem:[%s8 + $0x28] sm:$0xff] %v13674
  %13931 = vst [vmem:[%s8 + $0x30] sm:$0xff] %v13675
  %13932 = vst [vmem:[%s8 + $0x38] sm:$0xff] %v13676
  %13933 = vst [vmem:[%s8 + $0x40] sm:$0xff] %v13677
  %13934 = vst [vmem:[%s8 + $0x48] sm:$0xff] %v13678
  %13935 = vst [vmem:[%s8 + $0x50] sm:$0xff] %v13679
  %13936 = vst [vmem:[%s8 + $0x58] sm:$0xff] %v13680
  %13937 = vst [vmem:[%s8 + $0x60] sm:$0xff] %v13681
  %13938 = vst [vmem:[%s8 + $0x68] sm:$0xff] %v13682
  %13939 = vst [vmem:[%s8 + $0x70] sm:$0xff] %v13683
  %13940 = vst [vmem:[%s8 + $0x78] sm:$0xff] %v13684
  %13941 = vst [vmem:[%s8 + $0x80] sm:$0xff] %v13685
  %13942 = vst [vmem:[%s8 + $0x88] sm:$0xff] %v13686
  %13943 = vst [vmem:[%s8 + $0x90] sm:$0xff] %v13687
  %13944 = vst [vmem:[%s8 + $0x98] sm:$0xff] %v13688
  %13945 = vst [vmem:[%s8 + $0xa0] sm:$0xff] %v13689
  %13946 = vst [vmem:[%s8 + $0xa8] sm:$0xff] %v13690
  %13947 = vst [vmem:[%s8 + $0xb0] sm:$0xff] %v13691
  %13948 = vst [vmem:[%s8 + $0xb8] sm:$0xff] %v13692
  %13949 = vst [vmem:[%s8 + $0xc0] sm:$0xff] %v13693
  %13950 = vst [vmem:[%s8 + $0xc8] sm:$0xff] %v13694
  %13951 = vst [vmem:[%s8 + $0xd0] sm:$0xff] %v13695
  %13952 = vst [vmem:[%s8 + $0xd8] sm:$0xff] %v13696
  %13953 = vst [vmem:[%s8 + $0xe0] sm:$0xff] %v13697
  %13954 = vst [vmem:[%s8 + $0xe8] sm:$0xff] %v13698
  %13955 = vst [vmem:[%s8 + $0xf0] sm:$0xff] %v13699
  %13956 = vst [vmem:[%s8 + $0xf8] sm:$0xff] %v13700
  %13957 = vst [vmem:[%s8 + $0x100] sm:$0xff] %v13701
  %13958 = vst [vmem:[%s8 + $0x108] sm:$0xff] %v13702
  %13959 = vst [vmem:[%s8 + $0x110] sm:$0xff] %v13703
  %13960 = vst [vmem:[%s8 + $0x118] sm:$0xff] %v13704
  %13961 = vst [vmem:[%s8 + $0x120] sm:$0xff] %v13705
  %13962 = vst [vmem:[%s8 + $0x128] sm:$0xff] %v13706
  %13963 = vst [vmem:[%s8 + $0x130] sm:$0xff] %v13707
  %13964 = vst [vmem:[%s8 + $0x138] sm:$0xff] %v13708
  %13965 = vst [vmem:[%s8 + $0x140] sm:$0xff] %v13709
  %13966 = vst [vmem:[%s8 + $0x148] sm:$0xff] %v13710
  %13967 = vst [vmem:[%s8 + $0x150] sm:$0xff] %v13711
  %13968 = vst [vmem:[%s8 + $0x158] sm:$0xff] %v13712
  %13969 = vst [vmem:[%s8 + $0x160] sm:$0xff] %v13713
  %13970 = vst [vmem:[%s8 + $0x168] sm:$0xff] %v13714
  %13971 = vst [vmem:[%s8 + $0x170] sm:$0xff] %v13715
  %13972 = vst [vmem:[%s8 + $0x178] sm:$0xff] %v13716
  %13973 = vst [vmem:[%s8 + $0x180] sm:$0xff] %v13717
  %13974 = vst [vmem:[%s8 + $0x188] sm:$0xff] %v13718
  %13975 = vst [vmem:[%s8 + $0x190] sm:$0xff] %v13719
  %13976 = vst [vmem:[%s8 + $0x198] sm:$0xff] %v13720
  %13977 = vst [vmem:[%s8 + $0x1a0] sm:$0xff] %v13721
  %13978 = vst [vmem:[%s8 + $0x1a8] sm:$0xff] %v13722
  %13979 = vst [vmem:[%s8 + $0x1b0] sm:$0xff] %v13723
  %13980 = vst [vmem:[%s8 + $0x1b8] sm:$0xff] %v13724
  %13981 = vst [vmem:[%s8 + $0x1c0] sm:$0xff] %v13725
  %13982 = vst [vmem:[%s8 + $0x1c8] sm:$0xff] %v13726
  %13983 = vst [vmem:[%s8 + $0x1d0] sm:$0xff] %v13727
  %13984 = vst [vmem:[%s8 + $0x1d8] sm:$0xff] %v13728
  %13985 = vst [vmem:[%s8 + $0x1e0] sm:$0xff] %v13729
  %13986 = vst [vmem:[%s8 + $0x1e8] sm:$0xff] %v13730
  %13987 = vst [vmem:[%s8 + $0x1f0] sm:$0xff] %v13731
  %13988 = vst [vmem:[%s8 + $0x1f8] sm:$0xff] %v13732
  %13989 = vst [vmem:[%s8 + $0x200] sm:$0xff] %v13733
  %13990 = vst [vmem:[%s8 + $0x208] sm:$0xff] %v13734
  %13991 = vst [vmem:[%s8 + $0x210] sm:$0xff] %v13735
  %13992 = vst [vmem:[%s8 + $0x218] sm:$0xff] %v13736
  %13993 = vst [vmem:[%s8 + $0x220] sm:$0xff] %v13737
  %13994 = vst [vmem:[%s8 + $0x228] sm:$0xff] %v13738
  %13995 = vst [vmem:[%s8 + $0x230] sm:$0xff] %v13739
  %13996 = vst [vmem:[%s8 + $0x238] sm:$0xff] %v13740
  %13997 = vst [vmem:[%s8 + $0x240] sm:$0xff] %v13741
  %13998 = vst [vmem:[%s8 + $0x248] sm:$0xff] %v13742
  %13999 = vst [vmem:[%s8 + $0x250] sm:$0xff] %v13743
  %14000 = vst [vmem:[%s8 + $0x258] sm:$0xff] %v13744
  %14001 = vst [vmem:[%s8 + $0x260] sm:$0xff] %v13745
  %14002 = vst [vmem:[%s8 + $0x268] sm:$0xff] %v13746
  %14003 = vst [vmem:[%s8 + $0x270] sm:$0xff] %v13747
  %14004 = vst [vmem:[%s8 + $0x278] sm:$0xff] %v13748
  %14005 = vst [vmem:[%s8 + $0x280] sm:$0xff] %v13749
  %14006 = vst [vmem:[%s8 + $0x288] sm:$0xff] %v13750
  %14007 = vst [vmem:[%s8 + $0x290] sm:$0xff] %v13751
  %14008 = vst [vmem:[%s8 + $0x298] sm:$0xff] %v13752
  %14009 = vst [vmem:[%s8 + $0x2a0] sm:$0xff] %v13753
  %14010 = vst [vmem:[%s8 + $0x2a8] sm:$0xff] %v13754
  %14011 = vst [vmem:[%s8 + $0x2b0] sm:$0xff] %v13755
  %14012 = vst [vmem:[%s8 + $0x2b8] sm:$0xff] %v13756
  %14013 = vst [vmem:[%s8 + $0x2c0] sm:$0xff] %v13757
  %14014 = vst [vmem:[%s8 + $0x2c8] sm:$0xff] %v13758
  %14015 = vst [vmem:[%s8 + $0x2d0] sm:$0xff] %v13759
  %14016 = vst [vmem:[%s8 + $0x2d8] sm:$0xff] %v13760
  %14017 = vst [vmem:[%s8 + $0x2e0] sm:$0xff] %v13761
  %14018 = vst [vmem:[%s8 + $0x2e8] sm:$0xff] %v13762
  %14019 = vst [vmem:[%s8 + $0x2f0] sm:$0xff] %v13763
  %14020 = vst [vmem:[%s8 + $0x2f8] sm:$0xff] %v13764
  %14021 = vst [vmem:[%s8 + $0x300] sm:$0xff] %v13765
  %14022 = vst [vmem:[%s8 + $0x308] sm:$0xff] %v13766
  %14023 = vst [vmem:[%s8 + $0x310] sm:$0xff] %v13767
  %14024 = vst [vmem:[%s8 + $0x318] sm:$0xff] %v13768
  %14025 = vst [vmem:[%s8 + $0x320] sm:$0xff] %v13769
  %14026 = vst [vmem:[%s8 + $0x328] sm:$0xff] %v13770
  %14027 = vst [vmem:[%s8 + $0x330] sm:$0xff] %v13771
  %14028 = vst [vmem:[%s8 + $0x338] sm:$0xff] %v13772
  %14029 = vst [vmem:[%s8 + $0x340] sm:$0xff] %v13773
  %14030 = vst [vmem:[%s8 + $0x348] sm:$0xff] %v13774
  %14031 = vst [vmem:[%s8 + $0x350] sm:$0xff] %v13775
  %14032 = vst [vmem:[%s8 + $0x358] sm:$0xff] %v13776
  %14033 = vst [vmem:[%s8 + $0x360] sm:$0xff] %v13777
  %14034 = vst [vmem:[%s8 + $0x368] sm:$0xff] %v13778
  %14035 = vst [vmem:[%s8 + $0x370] sm:$0xff] %v13779
  %14036 = vst [vmem:[%s8 + $0x378] sm:$0xff] %v13780
  %14037 = vst [vmem:[%s8 + $0x380] sm:$0xff] %v13781
  %14038 = vst [vmem:[%s8 + $0x388] sm:$0xff] %v13782
  %14039 = vst [vmem:[%s8 + $0x390] sm:$0xff] %v13783
  %14040 = vst [vmem:[%s8 + $0x398] sm:$0xff] %v13784
  %14041 = vst [vmem:[%s8 + $0x3a0] sm:$0xff] %v13785
  %14042 = vst [vmem:[%s8 + $0x3a8] sm:$0xff] %v13786
  %14043 = vst [vmem:[%s8 + $0x3b0] sm:$0xff] %v13787
  %14044 = vst [vmem:[%s8 + $0x3b8] sm:$0xff] %v13788
  %14045 = vst [vmem:[%s8 + $0x3c0] sm:$0xff] %v13789
  %14046 = vst [vmem:[%s8 + $0x3c8] sm:$0xff] %v13790
  %14047 = vst [vmem:[%s8 + $0x3d0] sm:$0xff] %v13791
  %14048 = vst [vmem:[%s8 + $0x3d8] sm:$0xff] %v13792
  %14049 = vst [vmem:[%s8 + $0x3e0] sm:$0xff] %v13793
  %14050 = vst [vmem:[%s8 + $0x3e8] sm:$0xff] %v13794
  %14051 = vst [vmem:[%s8 + $0x3f0] sm:$0xff] %v13795
  %14052 = vst [vmem:[%s8 + $0x3f8] sm:$0xff] %v13796
  // Predicated region
  $region34: #{fused_forward.1} parent=0 // pred_check
    _
  $region35: #{fused_forward.1} parent=0 // pred_check_branch
    %14054 = sbr.rel (0) target = $region37
  $region36: #{fused_forward.1} parent=0 // pred_region
    _
  $region37: #{fused_forward.1} parent=0 // pred_fallthru
    _
  // Predicated region
  $region38: #{fused_forward.1} parent=0 // pred_check
    _
  $region39: #{fused_forward.1} parent=0 // pred_check_branch
    %14056 = sbr.rel (0) target = $region41
  $region40: #{fused_forward.1} parent=0 // pred_region
    _
  $region41: #{fused_forward.1} parent=0 // pred_fallthru
    _

</llo_original>
